<compile_context>
chip_gen: v7x
topology: tpu7x:2x2x1
jax: 0.10.0
libtpu: 0.0.40
codegen_flags: <defaults>
</compile_context>

<pallas_src>
import functools

import numpy as np
import jax
import jax.numpy as jnp
from jax.experimental import pallas as pl
from jax.experimental.pallas import tpu as pltpu

EPS = 1e-5                                   # BatchNorm2d default eps
PRIMS = ("none", "skip_connect", "sep_conv_3x3")   # DARTS-PT "s3" space
OFF_TAPS = (0, 1, 2, 3, 5, 6, 7, 8)          # 3x3 taps minus the center (t = ky*3+kx)


# ----------------------------------------------------------------------------
# Packed constant "shift matrix": column block c gathers spatial tap OFF_TAPS[c]
# of a 3x3 / stride-1 / pad-1 depthwise conv (zero-padding mask folded in):
#     z = y @ S      y: (R, M), S: (M, 8*M), M = N*H*W
#     z[r, c*M + flat(n,h,w)] == y[r, flat(n, h+dy-1, w+dx-1)]   (0 if OOB)
# 0/1 entries are exact in bf16, so the matrix is stored in bf16.
# ----------------------------------------------------------------------------
def build_shift_matrix_packed(N, H, W):
    M = N * H * W
    S = np.zeros((M, len(OFF_TAPS) * M), np.float32)
    for c, t in enumerate(OFF_TAPS):
        dy, dx = t // 3 - 1, t % 3 - 1
        for n in range(N):
            for h in range(H):
                for w in range(W):
                    hh, ww = h + dy, w + dx
                    if 0 <= hh < H and 0 <= ww < W:
                        m_out = (n * H + h) * W + w
                        m_in = (n * H + hh) * W + ww
                        S[m_in, c * M + m_out] = 1.0
    return S


# ----------------------------------------------------------------------------
# The fused whole-cell kernel.
# Ref layout (last dim = M = N*H*W = 128 lanes):
#   w_ref      : SMEM (num_edges*3,) f32   flat mixed-op weights (scalar reads)
#   s0/s1      : VMEM (Cpp, M), (Cp, M) f32
#   pre0/pre1  : VMEM (C, Cpp), (C, Cp) bf16   1x1 conv weights (Cout, Cin)
#   smat       : VMEM (M, 8*M) bf16           packed shift matrix
#   per step i : dw1 (k*C, 9) f32, pw1 (k*C, k*C) bf16, dw2, pw2   (k = 2+i edges)
#   out        : VMEM (multiplier*C, M) f32
#   scratch    : VMEM ((steps+2)*C, M) f32    all cell states, row block per state
# ----------------------------------------------------------------------------
def make_cell_kernel(steps, multiplier, C, M):
    n_states = steps + 2

    def kernel(w_ref, s0_ref, s1_ref, pre0_ref, pre1_ref, smat_ref, *rest):
        step_refs = [rest[4 * i:4 * i + 4] for i in range(steps)]
        out_ref = rest[4 * steps]
        st_ref = rest[4 * steps + 1]

        def bn(y):
            # BatchNorm2d(affine=False), training-mode batch stats, one pass,
            # variance clamped at 0 (one-pass E[y^2]-E[y]^2 can round negative).
            mean = jnp.mean(y, axis=1, keepdims=True)
            var = jnp.maximum(jnp.mean(y * y, axis=1, keepdims=True) - mean * mean, 0.0)
            return (y - mean) * jax.lax.rsqrt(var + EPS)

        def conv1x1_bn(x, w_bf16, relu):
            if relu:
                x = jnp.maximum(x, 0.0)
            y = jnp.dot(w_bf16, x.astype(jnp.bfloat16),
                        preferred_element_type=jnp.float32)
            return bn(y)

        def relu_dw3x3(x, taps):
            # x: (R, M) stacked channels; taps: (R, 9) per-channel 3x3 weights.
            y = jnp.maximum(x, 0.0)
            # All 8 off-center taps in ONE MXU dot against the packed shift matrix.
            z = jnp.dot(y.astype(jnp.bfloat16), smat_ref[...],
                        preferred_element_type=jnp.float32)          # (R, 8*M) f32
            acc = taps[:, 4:5] * y                                   # center tap, f32
            for c, t in enumerate(OFF_TAPS):
                acc = acc + taps[:, t:t + 1] * z[:, c * M:(c + 1) * M]
            return acc

        # preprocess0 / preprocess1 : ReLUConvBN(.., C, 1, 1, 0, affine=False)
        st_ref[0:C, :] = conv1x1_bn(s0_ref[...], pre0_ref[...], relu=True)
        st_ref[C:2 * C, :] = conv1x1_bn(s1_ref[...], pre1_ref[...], relu=True)

        offset = 0
        for i in range(steps):
            k = 2 + i
            dw1_t, pw1_b, dw2_t, pw2_b = (r[...] for r in step_refs[i])
            # Hoisted SMEM scalar reads for this step's mixed-op weights.
            w_id = [w_ref[3 * (offset + j) + 1] for j in range(k)]    # skip_connect
            w_sep = [w_ref[3 * (offset + j) + 2] for j in range(k)]   # sep_conv_3x3

            h_stack = st_ref[0:k * C, :]                              # (k*C, M)

            # SepConv(C, C, 3, 1, 1, affine=False) for all k edges of this step.
            y = relu_dw3x3(h_stack, dw1_t)
            y = conv1x1_bn(y, pw1_b, relu=False)                      # block-diag pw1 + BN
            y = relu_dw3x3(y, dw2_t)
            sep = conv1x1_bn(y, pw2_b, relu=False)                    # block-diag pw2 + BN

            # MixedOp epilogue: w0*Zero (==0, folded) + w1*Identity + w2*SepConv.
            s_new = w_id[0] * h_stack[0:C, :] + w_sep[0] * sep[0:C, :]
            for j in range(1, k):
                s_new = (s_new
                         + w_id[j] * h_stack[j * C:(j + 1) * C, :]
                         + w_sep[j] * sep[j * C:(j + 1) * C, :])
            st_ref[(2 + i) * C:(3 + i) * C, :] = s_new
            offset += k

        # torch.cat(states[-multiplier:], dim=1): contiguous row blocks of scratch.
        out_ref[...] = st_ref[(n_states - multiplier) * C:n_states * C, :]

    return kernel


# ----------------------------------------------------------------------------
# One-time parameter packing (hoisted out of the per-forward jitted path).
# ----------------------------------------------------------------------------
def _block_diag(mats):
    rows = sum(m.shape[0] for m in mats)
    cols = sum(m.shape[1] for m in mats)
    out = np.zeros((rows, cols), np.float32)
    r = c = 0
    for m in mats:
        m = np.asarray(m)
        out[r:r + m.shape[0], c:c + m.shape[1]] = m
        r += m.shape[0]
        c += m.shape[1]
    return out


def pack_cell_params(params, steps, C):
    packed_steps = []
    offset, k = 0, 2
    for _ in range(steps):
        edges = params["edges"][offset:offset + k]
        # dw (3,3,C) -> taps (C,9) with t = ky*3+kx; edges stacked along rows (f32).
        dw1 = jnp.concatenate([e["dw1"].reshape(9, C).T for e in edges], axis=0)
        dw2 = jnp.concatenate([e["dw2"].reshape(9, C).T for e in edges], axis=0)
        # 1x1 convs: block-diagonal, pre-cast to bf16 for the MXU.
        pw1 = jnp.asarray(_block_diag([e["pw1"] for e in edges]), jnp.bfloat16)
        pw2 = jnp.asarray(_block_diag([e["pw2"] for e in edges]), jnp.bfloat16)
        packed_steps.append((dw1, pw1, dw2, pw2))
        offset += k
        k += 1
    return {
        "pre0_w": params["pre0_w"].astype(jnp.bfloat16),
        "pre1_w": params["pre1_w"].astype(jnp.bfloat16),
        "steps": packed_steps,
    }


def make_cell_forward(steps, multiplier, C, N, H, W):
    M = N * H * W
    kernel = make_cell_kernel(steps, multiplier, C, M)
    n_step_inputs = 4 * steps

    @jax.jit
    def cell_forward(s0_nchw, s1_nchw, weights, smat, packed):
        step_inputs = [a for step in packed["steps"] for a in step]
        # NCHW -> (C, N*H*W): channels on sublanes, flattened batch*spatial on
        # the 128-lane axis.  Boundary-only transposes.
        s0 = jnp.transpose(s0_nchw, (1, 0, 2, 3)).reshape(s0_nchw.shape[1], M)
        s1 = jnp.transpose(s1_nchw, (1, 0, 2, 3)).reshape(s1_nchw.shape[1], M)
        out2d = pl.pallas_call(
            kernel,
            out_shape=jax.ShapeDtypeStruct((multiplier * C, M), jnp.float32),
            in_specs=(
                [pl.BlockSpec(memory_space=pltpu.MemorySpace.SMEM)]               # flat edge weights
                + [pl.BlockSpec(memory_space=pltpu.MemorySpace.VMEM)] * (5 + n_step_inputs)
            ),
            out_specs=pl.BlockSpec(memory_space=pltpu.MemorySpace.VMEM),
            scratch_shapes=[pltpu.VMEM(((steps + 2) * C, M), jnp.float32)],
        )(weights.reshape(-1), s0, s1, packed["pre0_w"], packed["pre1_w"], smat,
          *step_inputs)
        out = out2d.reshape(multiplier * C, s0_nchw.shape[0], H, W)
        return jnp.transpose(out, (1, 0, 2, 3))                                   # back to NCHW

    return cell_forward


# ----------------------------------------------------------------------------
# Deterministic synthetic parameters (shapes follow the module __init__)
# ----------------------------------------------------------------------------
def init_params(key, C_prev_prev, C_prev, C, num_edges):
    ks = jax.random.split(key, 2 + 4 * num_edges)
    params = {
        "pre0_w": 0.1 * jax.random.normal(ks[0], (C, C_prev_prev), jnp.float32),  # (Cout, Cin)
        "pre1_w": 0.1 * jax.random.normal(ks[1], (C, C_prev), jnp.float32),
        "edges": [],
    }
    for e in range(num_edges):
        k0, k1, k2, k3 = ks[2 + 4 * e: 6 + 4 * e]
        params["edges"].append({
            "dw1": 0.1 * jax.random.normal(k0, (3, 3, C), jnp.float32),   # (ky, kx, C)
            "pw1": 0.1 * jax.random.normal(k1, (C, C), jnp.float32),      # (Cout, Cin)
            "dw2": 0.1 * jax.random.normal(k2, (3, 3, C), jnp.float32),
            "pw2": 0.1 * jax.random.normal(k3, (C, C), jnp.float32),
        })
    return params


# ----------------------------------------------------------------------------
# Plain-JAX/XLA reference of the same module (f32, used as a correctness check)
# ----------------------------------------------------------------------------
def ref_cell_forward(s0, s1, weights, params, *, steps, multiplier):
    P = jax.lax.Precision.HIGHEST

    def bn(y):
        mean = y.mean(axis=(0, 2, 3), keepdims=True)
        var = ((y - mean) ** 2).mean(axis=(0, 2, 3), keepdims=True)
        return (y - mean) / jnp.sqrt(var + EPS)

    def relu_conv_bn(x, w):
        return bn(jnp.einsum("oi,nihw->nohw", w, jnp.maximum(x, 0.0), precision=P))

    def dw3x3(x, dw):
        w = jnp.transpose(dw, (2, 0, 1))[:, None]  # (C,1,3,3) OIHW, groups=C
        return jax.lax.conv_general_dilated(
            x, w, window_strides=(1, 1), padding=((1, 1), (1, 1)),
            dimension_numbers=("NCHW", "OIHW", "NCHW"),
            feature_group_count=x.shape[1], precision=P)

    def sep_conv(x, p):
        y = dw3x3(jnp.maximum(x, 0.0), p["dw1"])
        y = bn(jnp.einsum("oi,nihw->nohw", p["pw1"], y, precision=P))
        y = dw3x3(jnp.maximum(y, 0.0), p["dw2"])
        y = bn(jnp.einsum("oi,nihw->nohw", p["pw2"], y, precision=P))
        return y

    s0 = relu_conv_bn(s0, params["pre0_w"])
    s1 = relu_conv_bn(s1, params["pre1_w"])
    states = [s0, s1]
    offset = 0
    for _ in range(steps):
        s = 0.0
        for j, h in enumerate(states):
            e = offset + j
            s = s + weights[e, 1] * h + weights[e, 2] * sep_conv(h, params["edges"][e])
        offset += len(states)
        states.append(s)
    return jnp.concatenate(states[-multiplier:], axis=1)


if __name__ == "__main__":
    steps, multiplier = 4, 4
    N, H, W = 2, 8, 8                                  # M = N*H*W = 128 -> full 128-lane tiles
    C_prev_prev, C_prev, C = 16, 16, 8
    num_edges = sum(2 + i for i in range(steps))       # 14

    key = jax.random.PRNGKey(0)
    k_s0, k_s1, k_a, k_p = jax.random.split(key, 4)

    s0 = jax.random.normal(k_s0, (N, C_prev_prev, H, W), jnp.float32)  # NCHW
    s1 = jax.random.normal(k_s1, (N, C_prev, H, W), jnp.float32)       # NCHW
    alphas = jax.random.normal(k_a, (num_edges, len(PRIMS)), jnp.float32)
    weights = jax.nn.softmax(alphas, axis=-1)                          # (14, 3)

    params = init_params(k_p, C_prev_prev, C_prev, C, num_edges)
    # One-time host-side packing (hoisted out of the per-forward path).
    packed = pack_cell_params(params, steps, C)
    smat = jnp.asarray(build_shift_matrix_packed(N, H, W), jnp.bfloat16)  # (128, 1024)

    cell_forward = make_cell_forward(steps, multiplier, C, N, H, W)
    out = jax.block_until_ready(cell_forward(s0, s1, weights, smat, packed))

    assert out.shape == (N, multiplier * C, H, W), out.shape
    assert bool(jnp.all(jnp.isfinite(out)))

    # Correctness check against a plain-JAX f32 reference of the same module.
    # Tolerance accounts for the bf16 MXU operands (activations / pw / pre weights)
    # accumulating across two sep-conv stages and four steps.
    ref_fn = jax.jit(functools.partial(ref_cell_forward, steps=steps, multiplier=multiplier))
    ref = jax.block_until_ready(ref_fn(s0, s1, weights, params))
    np.testing.assert_allclose(np.asarray(out), np.asarray(ref), rtol=1e-1, atol=2e-1)

    print("KERNEL_OK")
</pallas_src>

<mosaic_0001>
module attributes {stable_mosaic.version = 11 : i64} {
  func.func @kernel(%arg0: memref<42xf32, #tpu.memory_space<smem>>, %arg1: memref<16x128xf32, #tpu.memory_space<vmem>>, %arg2: memref<16x128xf32, #tpu.memory_space<vmem>>, %arg3: memref<8x16xbf16, #tpu.memory_space<vmem>>, %arg4: memref<8x16xbf16, #tpu.memory_space<vmem>>, %arg5: memref<128x1024xbf16, #tpu.memory_space<vmem>>, %arg6: memref<16x9xf32, #tpu.memory_space<vmem>>, %arg7: memref<16x16xbf16, #tpu.memory_space<vmem>>, %arg8: memref<16x9xf32, #tpu.memory_space<vmem>>, %arg9: memref<16x16xbf16, #tpu.memory_space<vmem>>, %arg10: memref<24x9xf32, #tpu.memory_space<vmem>>, %arg11: memref<24x24xbf16, #tpu.memory_space<vmem>>, %arg12: memref<24x9xf32, #tpu.memory_space<vmem>>, %arg13: memref<24x24xbf16, #tpu.memory_space<vmem>>, %arg14: memref<32x9xf32, #tpu.memory_space<vmem>>, %arg15: memref<32x32xbf16, #tpu.memory_space<vmem>>, %arg16: memref<32x9xf32, #tpu.memory_space<vmem>>, %arg17: memref<32x32xbf16, #tpu.memory_space<vmem>>, %arg18: memref<40x9xf32, #tpu.memory_space<vmem>>, %arg19: memref<40x40xbf16, #tpu.memory_space<vmem>>, %arg20: memref<40x9xf32, #tpu.memory_space<vmem>>, %arg21: memref<40x40xbf16, #tpu.memory_space<vmem>>, %arg22: memref<32x128xf32, #tpu.memory_space<vmem>>, %arg23: memref<48x128xf32, #tpu.memory_space<vmem>>) attributes {dimension_semantics = [], scalar_prefetch = 0 : i64, scratch_operands = 1 : i64, tpu.core_type = #tpu.core_type<tc>} {
    %c0 = arith.constant 0 : index
    %c0_0 = arith.constant 0 : index
    %0 = vector.load %arg1[%c0, %c0_0] : memref<16x128xf32, #tpu.memory_space<vmem>>, vector<16x128xf32>
    %c0_1 = arith.constant 0 : index
    %c0_2 = arith.constant 0 : index
    %1 = vector.load %arg3[%c0_1, %c0_2] : memref<8x16xbf16, #tpu.memory_space<vmem>>, vector<8x16xbf16>
    %cst = arith.constant 0.000000e+00 : f32
    %2 = vector.broadcast %cst : f32 to vector<16x128xf32>
    %3 = arith.maximumf %0, %2 : vector<16x128xf32>
    %4 = arith.truncf %3 : vector<16x128xf32> to vector<16x128xbf16>
    %cst_3 = arith.constant dense<0.000000e+00> : vector<8x128xf32>
    %5 = tpu.matmul %1, %4, %cst_3 {dimension_numbers = #tpu.dot_dimension_numbers<[1], [0], [0], [1], [0, 0, 1, 1], [], []>} : vector<8x16xbf16>, vector<16x128xbf16>, vector<8x128xf32> -> vector<8x128xf32>
    %cst_4 = arith.constant dense<0.000000e+00> : vector<8xf32>
    %6 = vector.multi_reduction <add>, %5, %cst_4 [1] : vector<8x128xf32> to vector<8xf32>
    %7 = vector.shape_cast %6 : vector<8xf32> to vector<8x1xf32>
    %cst_5 = arith.constant 1.280000e+02 : f32
    %8 = vector.broadcast %cst_5 : f32 to vector<8x1xf32>
    %9 = arith.divf %7, %8 : vector<8x1xf32>
    %10 = arith.mulf %5, %5 : vector<8x128xf32>
    %cst_6 = arith.constant dense<0.000000e+00> : vector<8xf32>
    %11 = vector.multi_reduction <add>, %10, %cst_6 [1] : vector<8x128xf32> to vector<8xf32>
    %12 = vector.shape_cast %11 : vector<8xf32> to vector<8x1xf32>
    %cst_7 = arith.constant 1.280000e+02 : f32
    %13 = vector.broadcast %cst_7 : f32 to vector<8x1xf32>
    %14 = arith.divf %12, %13 : vector<8x1xf32>
    %15 = arith.mulf %9, %9 : vector<8x1xf32>
    %16 = arith.subf %14, %15 : vector<8x1xf32>
    %cst_8 = arith.constant 0.000000e+00 : f32
    %17 = vector.broadcast %cst_8 : f32 to vector<8x1xf32>
    %18 = arith.maximumf %16, %17 : vector<8x1xf32>
    %19 = vector.broadcast %9 : vector<8x1xf32> to vector<8x128xf32>
    %20 = arith.subf %5, %19 : vector<8x128xf32>
    %cst_9 = arith.constant 9.99999974E-6 : f32
    %21 = vector.broadcast %cst_9 : f32 to vector<8x1xf32>
    %22 = arith.addf %18, %21 : vector<8x1xf32>
    %23 = math.rsqrt %22 : vector<8x1xf32>
    %24 = vector.broadcast %23 : vector<8x1xf32> to vector<8x128xf32>
    %25 = arith.mulf %20, %24 : vector<8x128xf32>
    %c0_10 = arith.constant 0 : index
    %c0_11 = arith.constant 0 : index
    %26 = vector.load %arg23[%c0_10, %c0_11] : memref<48x128xf32, #tpu.memory_space<vmem>>, vector<8x128xf32>
    tpu.vector_store %arg23[%c0_10, %c0_11], %25 {strides = array<i32>} : memref<48x128xf32, #tpu.memory_space<vmem>>, vector<8x128xf32>,
    %c0_12 = arith.constant 0 : index
    %c0_13 = arith.constant 0 : index
    %27 = vector.load %arg2[%c0_12, %c0_13] : memref<16x128xf32, #tpu.memory_space<vmem>>, vector<16x128xf32>
    %c0_14 = arith.constant 0 : index
    %c0_15 = arith.constant 0 : index
    %28 = vector.load %arg4[%c0_14, %c0_15] : memref<8x16xbf16, #tpu.memory_space<vmem>>, vector<8x16xbf16>
    %cst_16 = arith.constant 0.000000e+00 : f32
    %29 = vector.broadcast %cst_16 : f32 to vector<16x128xf32>
    %30 = arith.maximumf %27, %29 : vector<16x128xf32>
    %31 = arith.truncf %30 : vector<16x128xf32> to vector<16x128xbf16>
    %cst_17 = arith.constant dense<0.000000e+00> : vector<8x128xf32>
    %32 = tpu.matmul %28, %31, %cst_17 {dimension_numbers = #tpu.dot_dimension_numbers<[1], [0], [0], [1], [0, 0, 1, 1], [], []>} : vector<8x16xbf16>, vector<16x128xbf16>, vector<8x128xf32> -> vector<8x128xf32>
    %cst_18 = arith.constant dense<0.000000e+00> : vector<8xf32>
    %33 = vector.multi_reduction <add>, %32, %cst_18 [1] : vector<8x128xf32> to vector<8xf32>
    %34 = vector.shape_cast %33 : vector<8xf32> to vector<8x1xf32>
    %cst_19 = arith.constant 1.280000e+02 : f32
    %35 = vector.broadcast %cst_19 : f32 to vector<8x1xf32>
    %36 = arith.divf %34, %35 : vector<8x1xf32>
    %37 = arith.mulf %32, %32 : vector<8x128xf32>
    %cst_20 = arith.constant dense<0.000000e+00> : vector<8xf32>
    %38 = vector.multi_reduction <add>, %37, %cst_20 [1] : vector<8x128xf32> to vector<8xf32>
    %39 = vector.shape_cast %38 : vector<8xf32> to vector<8x1xf32>
    %cst_21 = arith.constant 1.280000e+02 : f32
    %40 = vector.broadcast %cst_21 : f32 to vector<8x1xf32>
    %41 = arith.divf %39, %40 : vector<8x1xf32>
    %42 = arith.mulf %36, %36 : vector<8x1xf32>
    %43 = arith.subf %41, %42 : vector<8x1xf32>
    %cst_22 = arith.constant 0.000000e+00 : f32
    %44 = vector.broadcast %cst_22 : f32 to vector<8x1xf32>
    %45 = arith.maximumf %43, %44 : vector<8x1xf32>
    %46 = vector.broadcast %36 : vector<8x1xf32> to vector<8x128xf32>
    %47 = arith.subf %32, %46 : vector<8x128xf32>
    %cst_23 = arith.constant 9.99999974E-6 : f32
    %48 = vector.broadcast %cst_23 : f32 to vector<8x1xf32>
    %49 = arith.addf %45, %48 : vector<8x1xf32>
    %50 = math.rsqrt %49 : vector<8x1xf32>
    %51 = vector.broadcast %50 : vector<8x1xf32> to vector<8x128xf32>
    %52 = arith.mulf %47, %51 : vector<8x128xf32>
    %c8 = arith.constant 8 : index
    %c0_24 = arith.constant 0 : index
    %53 = vector.load %arg23[%c8, %c0_24] : memref<48x128xf32, #tpu.memory_space<vmem>>, vector<8x128xf32>
    tpu.vector_store %arg23[%c8, %c0_24], %52 {strides = array<i32>} : memref<48x128xf32, #tpu.memory_space<vmem>>, vector<8x128xf32>,
    %c0_25 = arith.constant 0 : index
    %c0_26 = arith.constant 0 : index
    %54 = vector.load %arg6[%c0_25, %c0_26] : memref<16x9xf32, #tpu.memory_space<vmem>>, vector<16x9xf32>
    %c0_27 = arith.constant 0 : index
    %c0_28 = arith.constant 0 : index
    %55 = vector.load %arg7[%c0_27, %c0_28] : memref<16x16xbf16, #tpu.memory_space<vmem>>, vector<16x16xbf16>
    %c0_29 = arith.constant 0 : index
    %c0_30 = arith.constant 0 : index
    %56 = vector.load %arg8[%c0_29, %c0_30] : memref<16x9xf32, #tpu.memory_space<vmem>>, vector<16x9xf32>
    %c0_31 = arith.constant 0 : index
    %c0_32 = arith.constant 0 : index
    %57 = vector.load %arg9[%c0_31, %c0_32] : memref<16x16xbf16, #tpu.memory_space<vmem>>, vector<16x16xbf16>
    %c1 = arith.constant 1 : index
    %58 = memref.load %arg0[%c1] : memref<42xf32, #tpu.memory_space<smem>>
    %c4 = arith.constant 4 : index
    %59 = memref.load %arg0[%c4] : memref<42xf32, #tpu.memory_space<smem>>
    %c2 = arith.constant 2 : index
    %60 = memref.load %arg0[%c2] : memref<42xf32, #tpu.memory_space<smem>>
    %c5 = arith.constant 5 : index
    %61 = memref.load %arg0[%c5] : memref<42xf32, #tpu.memory_space<smem>>
    %c0_33 = arith.constant 0 : index
    %c0_34 = arith.constant 0 : index
    %62 = vector.load %arg23[%c0_33, %c0_34] : memref<48x128xf32, #tpu.memory_space<vmem>>, vector<16x128xf32>
    %cst_35 = arith.constant 0.000000e+00 : f32
    %63 = vector.broadcast %cst_35 : f32 to vector<16x128xf32>
    %64 = arith.maximumf %62, %63 : vector<16x128xf32>
    %65 = arith.truncf %64 : vector<16x128xf32> to vector<16x128xbf16>
    %c0_36 = arith.constant 0 : index
    %c0_37 = arith.constant 0 : index
    %66 = vector.load %arg5[%c0_36, %c0_37] : memref<128x1024xbf16, #tpu.memory_space<vmem>>, vector<128x1024xbf16>
    %cst_38 = arith.constant dense<0.000000e+00> : vector<16x1024xf32>
    %67 = tpu.matmul %65, %66, %cst_38 {dimension_numbers = #tpu.dot_dimension_numbers<[1], [0], [0], [1], [0, 0, 1, 1], [], []>} : vector<16x128xbf16>, vector<128x1024xbf16>, vector<16x1024xf32> -> vector<16x1024xf32>
    %68 = vector.extract_strided_slice %54 {offsets = [0, 4], sizes = [16, 1], strides = [1, 1]} : vector<16x9xf32> to vector<16x1xf32>
    %69 = vector.broadcast %68 : vector<16x1xf32> to vector<16x128xf32>
    %70 = arith.mulf %69, %64 : vector<16x128xf32>
    %71 = vector.extract_strided_slice %54 {offsets = [0, 0], sizes = [16, 1], strides = [1, 1]} : vector<16x9xf32> to vector<16x1xf32>
    %72 = vector.extract_strided_slice %67 {offsets = [0, 0], sizes = [16, 128], strides = [1, 1]} : vector<16x1024xf32> to vector<16x128xf32>
    %73 = vector.broadcast %71 : vector<16x1xf32> to vector<16x128xf32>
    %74 = arith.mulf %73, %72 : vector<16x128xf32>
    %75 = arith.addf %70, %74 : vector<16x128xf32>
    %76 = vector.extract_strided_slice %54 {offsets = [0, 1], sizes = [16, 1], strides = [1, 1]} : vector<16x9xf32> to vector<16x1xf32>
    %77 = vector.extract_strided_slice %67 {offsets = [0, 128], sizes = [16, 128], strides = [1, 1]} : vector<16x1024xf32> to vector<16x128xf32>
    %78 = vector.broadcast %76 : vector<16x1xf32> to vector<16x128xf32>
    %79 = arith.mulf %78, %77 : vector<16x128xf32>
    %80 = arith.addf %75, %79 : vector<16x128xf32>
    %81 = vector.extract_strided_slice %54 {offsets = [0, 2], sizes = [16, 1], strides = [1, 1]} : vector<16x9xf32> to vector<16x1xf32>
    %82 = vector.extract_strided_slice %67 {offsets = [0, 256], sizes = [16, 128], strides = [1, 1]} : vector<16x1024xf32> to vector<16x128xf32>
    %83 = vector.broadcast %81 : vector<16x1xf32> to vector<16x128xf32>
    %84 = arith.mulf %83, %82 : vector<16x128xf32>
    %85 = arith.addf %80, %84 : vector<16x128xf32>
    %86 = vector.extract_strided_slice %54 {offsets = [0, 3], sizes = [16, 1], strides = [1, 1]} : vector<16x9xf32> to vector<16x1xf32>
    %87 = vector.extract_strided_slice %67 {offsets = [0, 384], sizes = [16, 128], strides = [1, 1]} : vector<16x1024xf32> to vector<16x128xf32>
    %88 = vector.broadcast %86 : vector<16x1xf32> to vector<16x128xf32>
    %89 = arith.mulf %88, %87 : vector<16x128xf32>
    %90 = arith.addf %85, %89 : vector<16x128xf32>
    %91 = vector.extract_strided_slice %54 {offsets = [0, 5], sizes = [16, 1], strides = [1, 1]} : vector<16x9xf32> to vector<16x1xf32>
    %92 = vector.extract_strided_slice %67 {offsets = [0, 512], sizes = [16, 128], strides = [1, 1]} : vector<16x1024xf32> to vector<16x128xf32>
    %93 = vector.broadcast %91 : vector<16x1xf32> to vector<16x128xf32>
    %94 = arith.mulf %93, %92 : vector<16x128xf32>
    %95 = arith.addf %90, %94 : vector<16x128xf32>
    %96 = vector.extract_strided_slice %54 {offsets = [0, 6], sizes = [16, 1], strides = [1, 1]} : vector<16x9xf32> to vector<16x1xf32>
    %97 = vector.extract_strided_slice %67 {offsets = [0, 640], sizes = [16, 128], strides = [1, 1]} : vector<16x1024xf32> to vector<16x128xf32>
    %98 = vector.broadcast %96 : vector<16x1xf32> to vector<16x128xf32>
    %99 = arith.mulf %98, %97 : vector<16x128xf32>
    %100 = arith.addf %95, %99 : vector<16x128xf32>
    %101 = vector.extract_strided_slice %54 {offsets = [0, 7], sizes = [16, 1], strides = [1, 1]} : vector<16x9xf32> to vector<16x1xf32>
    %102 = vector.extract_strided_slice %67 {offsets = [0, 768], sizes = [16, 128], strides = [1, 1]} : vector<16x1024xf32> to vector<16x128xf32>
    %103 = vector.broadcast %101 : vector<16x1xf32> to vector<16x128xf32>
    %104 = arith.mulf %103, %102 : vector<16x128xf32>
    %105 = arith.addf %100, %104 : vector<16x128xf32>
    %106 = vector.extract_strided_slice %54 {offsets = [0, 8], sizes = [16, 1], strides = [1, 1]} : vector<16x9xf32> to vector<16x1xf32>
    %107 = vector.extract_strided_slice %67 {offsets = [0, 896], sizes = [16, 128], strides = [1, 1]} : vector<16x1024xf32> to vector<16x128xf32>
    %108 = vector.broadcast %106 : vector<16x1xf32> to vector<16x128xf32>
    %109 = arith.mulf %108, %107 : vector<16x128xf32>
    %110 = arith.addf %105, %109 : vector<16x128xf32>
    %111 = arith.truncf %110 : vector<16x128xf32> to vector<16x128xbf16>
    %cst_39 = arith.constant dense<0.000000e+00> : vector<16x128xf32>
    %112 = tpu.matmul %55, %111, %cst_39 {dimension_numbers = #tpu.dot_dimension_numbers<[1], [0], [0], [1], [0, 0, 1, 1], [], []>} : vector<16x16xbf16>, vector<16x128xbf16>, vector<16x128xf32> -> vector<16x128xf32>
    %cst_40 = arith.constant dense<0.000000e+00> : vector<16xf32>
    %113 = vector.multi_reduction <add>, %112, %cst_40 [1] : vector<16x128xf32> to vector<16xf32>
    %114 = vector.shape_cast %113 : vector<16xf32> to vector<16x1xf32>
    %cst_41 = arith.constant 1.280000e+02 : f32
    %115 = vector.broadcast %cst_41 : f32 to vector<16x1xf32>
    %116 = arith.divf %114, %115 : vector<16x1xf32>
    %117 = arith.mulf %112, %112 : vector<16x128xf32>
    %cst_42 = arith.constant dense<0.000000e+00> : vector<16xf32>
    %118 = vector.multi_reduction <add>, %117, %cst_42 [1] : vector<16x128xf32> to vector<16xf32>
    %119 = vector.shape_cast %118 : vector<16xf32> to vector<16x1xf32>
    %cst_43 = arith.constant 1.280000e+02 : f32
    %120 = vector.broadcast %cst_43 : f32 to vector<16x1xf32>
    %121 = arith.divf %119, %120 : vector<16x1xf32>
    %122 = arith.mulf %116, %116 : vector<16x1xf32>
    %123 = arith.subf %121, %122 : vector<16x1xf32>
    %cst_44 = arith.constant 0.000000e+00 : f32
    %124 = vector.broadcast %cst_44 : f32 to vector<16x1xf32>
    %125 = arith.maximumf %123, %124 : vector<16x1xf32>
    %126 = vector.broadcast %116 : vector<16x1xf32> to vector<16x128xf32>
    %127 = arith.subf %112, %126 : vector<16x128xf32>
    %cst_45 = arith.constant 9.99999974E-6 : f32
    %128 = vector.broadcast %cst_45 : f32 to vector<16x1xf32>
    %129 = arith.addf %125, %128 : vector<16x1xf32>
    %130 = math.rsqrt %129 : vector<16x1xf32>
    %131 = vector.broadcast %130 : vector<16x1xf32> to vector<16x128xf32>
    %132 = arith.mulf %127, %131 : vector<16x128xf32>
    %cst_46 = arith.constant 0.000000e+00 : f32
    %133 = vector.broadcast %cst_46 : f32 to vector<16x128xf32>
    %134 = arith.maximumf %132, %133 : vector<16x128xf32>
    %135 = arith.truncf %134 : vector<16x128xf32> to vector<16x128xbf16>
    %c0_47 = arith.constant 0 : index
    %c0_48 = arith.constant 0 : index
    %136 = vector.load %arg5[%c0_47, %c0_48] : memref<128x1024xbf16, #tpu.memory_space<vmem>>, vector<128x1024xbf16>
    %cst_49 = arith.constant dense<0.000000e+00> : vector<16x1024xf32>
    %137 = tpu.matmul %135, %136, %cst_49 {dimension_numbers = #tpu.dot_dimension_numbers<[1], [0], [0], [1], [0, 0, 1, 1], [], []>} : vector<16x128xbf16>, vector<128x1024xbf16>, vector<16x1024xf32> -> vector<16x1024xf32>
    %138 = vector.extract_strided_slice %56 {offsets = [0, 4], sizes = [16, 1], strides = [1, 1]} : vector<16x9xf32> to vector<16x1xf32>
    %139 = vector.broadcast %138 : vector<16x1xf32> to vector<16x128xf32>
    %140 = arith.mulf %139, %134 : vector<16x128xf32>
    %141 = vector.extract_strided_slice %56 {offsets = [0, 0], sizes = [16, 1], strides = [1, 1]} : vector<16x9xf32> to vector<16x1xf32>
    %142 = vector.extract_strided_slice %137 {offsets = [0, 0], sizes = [16, 128], strides = [1, 1]} : vector<16x1024xf32> to vector<16x128xf32>
    %143 = vector.broadcast %141 : vector<16x1xf32> to vector<16x128xf32>
    %144 = arith.mulf %143, %142 : vector<16x128xf32>
    %145 = arith.addf %140, %144 : vector<16x128xf32>
    %146 = vector.extract_strided_slice %56 {offsets = [0, 1], sizes = [16, 1], strides = [1, 1]} : vector<16x9xf32> to vector<16x1xf32>
    %147 = vector.extract_strided_slice %137 {offsets = [0, 128], sizes = [16, 128], strides = [1, 1]} : vector<16x1024xf32> to vector<16x128xf32>
    %148 = vector.broadcast %146 : vector<16x1xf32> to vector<16x128xf32>
    %149 = arith.mulf %148, %147 : vector<16x128xf32>
    %150 = arith.addf %145, %149 : vector<16x128xf32>
    %151 = vector.extract_strided_slice %56 {offsets = [0, 2], sizes = [16, 1], strides = [1, 1]} : vector<16x9xf32> to vector<16x1xf32>
    %152 = vector.extract_strided_slice %137 {offsets = [0, 256], sizes = [16, 128], strides = [1, 1]} : vector<16x1024xf32> to vector<16x128xf32>
    %153 = vector.broadcast %151 : vector<16x1xf32> to vector<16x128xf32>
    %154 = arith.mulf %153, %152 : vector<16x128xf32>
    %155 = arith.addf %150, %154 : vector<16x128xf32>
    %156 = vector.extract_strided_slice %56 {offsets = [0, 3], sizes = [16, 1], strides = [1, 1]} : vector<16x9xf32> to vector<16x1xf32>
    %157 = vector.extract_strided_slice %137 {offsets = [0, 384], sizes = [16, 128], strides = [1, 1]} : vector<16x1024xf32> to vector<16x128xf32>
    %158 = vector.broadcast %156 : vector<16x1xf32> to vector<16x128xf32>
    %159 = arith.mulf %158, %157 : vector<16x128xf32>
    %160 = arith.addf %155, %159 : vector<16x128xf32>
    %161 = vector.extract_strided_slice %56 {offsets = [0, 5], sizes = [16, 1], strides = [1, 1]} : vector<16x9xf32> to vector<16x1xf32>
    %162 = vector.extract_strided_slice %137 {offsets = [0, 512], sizes = [16, 128], strides = [1, 1]} : vector<16x1024xf32> to vector<16x128xf32>
    %163 = vector.broadcast %161 : vector<16x1xf32> to vector<16x128xf32>
    %164 = arith.mulf %163, %162 : vector<16x128xf32>
    %165 = arith.addf %160, %164 : vector<16x128xf32>
    %166 = vector.extract_strided_slice %56 {offsets = [0, 6], sizes = [16, 1], strides = [1, 1]} : vector<16x9xf32> to vector<16x1xf32>
    %167 = vector.extract_strided_slice %137 {offsets = [0, 640], sizes = [16, 128], strides = [1, 1]} : vector<16x1024xf32> to vector<16x128xf32>
    %168 = vector.broadcast %166 : vector<16x1xf32> to vector<16x128xf32>
    %169 = arith.mulf %168, %167 : vector<16x128xf32>
    %170 = arith.addf %165, %169 : vector<16x128xf32>
    %171 = vector.extract_strided_slice %56 {offsets = [0, 7], sizes = [16, 1], strides = [1, 1]} : vector<16x9xf32> to vector<16x1xf32>
    %172 = vector.extract_strided_slice %137 {offsets = [0, 768], sizes = [16, 128], strides = [1, 1]} : vector<16x1024xf32> to vector<16x128xf32>
    %173 = vector.broadcast %171 : vector<16x1xf32> to vector<16x128xf32>
    %174 = arith.mulf %173, %172 : vector<16x128xf32>
    %175 = arith.addf %170, %174 : vector<16x128xf32>
    %176 = vector.extract_strided_slice %56 {offsets = [0, 8], sizes = [16, 1], strides = [1, 1]} : vector<16x9xf32> to vector<16x1xf32>
    %177 = vector.extract_strided_slice %137 {offsets = [0, 896], sizes = [16, 128], strides = [1, 1]} : vector<16x1024xf32> to vector<16x128xf32>
    %178 = vector.broadcast %176 : vector<16x1xf32> to vector<16x128xf32>
    %179 = arith.mulf %178, %177 : vector<16x128xf32>
    %180 = arith.addf %175, %179 : vector<16x128xf32>
    %181 = arith.truncf %180 : vector<16x128xf32> to vector<16x128xbf16>
    %cst_50 = arith.constant dense<0.000000e+00> : vector<16x128xf32>
    %182 = tpu.matmul %57, %181, %cst_50 {dimension_numbers = #tpu.dot_dimension_numbers<[1], [0], [0], [1], [0, 0, 1, 1], [], []>} : vector<16x16xbf16>, vector<16x128xbf16>, vector<16x128xf32> -> vector<16x128xf32>
    %cst_51 = arith.constant dense<0.000000e+00> : vector<16xf32>
    %183 = vector.multi_reduction <add>, %182, %cst_51 [1] : vector<16x128xf32> to vector<16xf32>
    %184 = vector.shape_cast %183 : vector<16xf32> to vector<16x1xf32>
    %cst_52 = arith.constant 1.280000e+02 : f32
    %185 = vector.broadcast %cst_52 : f32 to vector<16x1xf32>
    %186 = arith.divf %184, %185 : vector<16x1xf32>
    %187 = arith.mulf %182, %182 : vector<16x128xf32>
    %cst_53 = arith.constant dense<0.000000e+00> : vector<16xf32>
    %188 = vector.multi_reduction <add>, %187, %cst_53 [1] : vector<16x128xf32> to vector<16xf32>
    %189 = vector.shape_cast %188 : vector<16xf32> to vector<16x1xf32>
    %cst_54 = arith.constant 1.280000e+02 : f32
    %190 = vector.broadcast %cst_54 : f32 to vector<16x1xf32>
    %191 = arith.divf %189, %190 : vector<16x1xf32>
    %192 = arith.mulf %186, %186 : vector<16x1xf32>
    %193 = arith.subf %191, %192 : vector<16x1xf32>
    %cst_55 = arith.constant 0.000000e+00 : f32
    %194 = vector.broadcast %cst_55 : f32 to vector<16x1xf32>
    %195 = arith.maximumf %193, %194 : vector<16x1xf32>
    %196 = vector.broadcast %186 : vector<16x1xf32> to vector<16x128xf32>
    %197 = arith.subf %182, %196 : vector<16x128xf32>
    %cst_56 = arith.constant 9.99999974E-6 : f32
    %198 = vector.broadcast %cst_56 : f32 to vector<16x1xf32>
    %199 = arith.addf %195, %198 : vector<16x1xf32>
    %200 = math.rsqrt %199 : vector<16x1xf32>
    %201 = vector.broadcast %200 : vector<16x1xf32> to vector<16x128xf32>
    %202 = arith.mulf %197, %201 : vector<16x128xf32>
    %203 = vector.extract_strided_slice %62 {offsets = [0, 0], sizes = [8, 128], strides = [1, 1]} : vector<16x128xf32> to vector<8x128xf32>
    %204 = vector.broadcast %58 : f32 to vector<8x128xf32>
    %205 = arith.mulf %204, %203 : vector<8x128xf32>
    %206 = vector.extract_strided_slice %202 {offsets = [0, 0], sizes = [8, 128], strides = [1, 1]} : vector<16x128xf32> to vector<8x128xf32>
    %207 = vector.broadcast %60 : f32 to vector<8x128xf32>
    %208 = arith.mulf %207, %206 : vector<8x128xf32>
    %209 = arith.addf %205, %208 : vector<8x128xf32>
    %210 = vector.extract_strided_slice %62 {offsets = [8, 0], sizes = [8, 128], strides = [1, 1]} : vector<16x128xf32> to vector<8x128xf32>
    %211 = vector.broadcast %59 : f32 to vector<8x128xf32>
    %212 = arith.mulf %211, %210 : vector<8x128xf32>
    %213 = arith.addf %209, %212 : vector<8x128xf32>
    %214 = vector.extract_strided_slice %202 {offsets = [8, 0], sizes = [8, 128], strides = [1, 1]} : vector<16x128xf32> to vector<8x128xf32>
    %215 = vector.broadcast %61 : f32 to vector<8x128xf32>
    %216 = arith.mulf %215, %214 : vector<8x128xf32>
    %217 = arith.addf %213, %216 : vector<8x128xf32>
    %c16 = arith.constant 16 : index
    %c0_57 = arith.constant 0 : index
    %218 = vector.load %arg23[%c16, %c0_57] : memref<48x128xf32, #tpu.memory_space<vmem>>, vector<8x128xf32>
    tpu.vector_store %arg23[%c16, %c0_57], %217 {strides = array<i32>} : memref<48x128xf32, #tpu.memory_space<vmem>>, vector<8x128xf32>,
    %c0_58 = arith.constant 0 : index
    %c0_59 = arith.constant 0 : index
    %219 = vector.load %arg10[%c0_58, %c0_59] : memref<24x9xf32, #tpu.memory_space<vmem>>, vector<24x9xf32>
    %c0_60 = arith.constant 0 : index
    %c0_61 = arith.constant 0 : index
    %220 = vector.load %arg11[%c0_60, %c0_61] : memref<24x24xbf16, #tpu.memory_space<vmem>>, vector<24x24xbf16>
    %c0_62 = arith.constant 0 : index
    %c0_63 = arith.constant 0 : index
    %221 = vector.load %arg12[%c0_62, %c0_63] : memref<24x9xf32, #tpu.memory_space<vmem>>, vector<24x9xf32>
    %c0_64 = arith.constant 0 : index
    %c0_65 = arith.constant 0 : index
    %222 = vector.load %arg13[%c0_64, %c0_65] : memref<24x24xbf16, #tpu.memory_space<vmem>>, vector<24x24xbf16>
    %c7 = arith.constant 7 : index
    %223 = memref.load %arg0[%c7] : memref<42xf32, #tpu.memory_space<smem>>
    %c10 = arith.constant 10 : index
    %224 = memref.load %arg0[%c10] : memref<42xf32, #tpu.memory_space<smem>>
    %c13 = arith.constant 13 : index
    %225 = memref.load %arg0[%c13] : memref<42xf32, #tpu.memory_space<smem>>
    %c8_66 = arith.constant 8 : index
    %226 = memref.load %arg0[%c8_66] : memref<42xf32, #tpu.memory_space<smem>>
    %c11 = arith.constant 11 : index
    %227 = memref.load %arg0[%c11] : memref<42xf32, #tpu.memory_space<smem>>
    %c14 = arith.constant 14 : index
    %228 = memref.load %arg0[%c14] : memref<42xf32, #tpu.memory_space<smem>>
    %c0_67 = arith.constant 0 : index
    %c0_68 = arith.constant 0 : index
    %229 = vector.load %arg23[%c0_67, %c0_68] : memref<48x128xf32, #tpu.memory_space<vmem>>, vector<24x128xf32>
    %cst_69 = arith.constant 0.000000e+00 : f32
    %230 = vector.broadcast %cst_69 : f32 to vector<24x128xf32>
    %231 = arith.maximumf %229, %230 : vector<24x128xf32>
    %232 = arith.truncf %231 : vector<24x128xf32> to vector<24x128xbf16>
    %c0_70 = arith.constant 0 : index
    %c0_71 = arith.constant 0 : index
    %233 = vector.load %arg5[%c0_70, %c0_71] : memref<128x1024xbf16, #tpu.memory_space<vmem>>, vector<128x1024xbf16>
    %cst_72 = arith.constant dense<0.000000e+00> : vector<24x1024xf32>
    %234 = tpu.matmul %232, %233, %cst_72 {dimension_numbers = #tpu.dot_dimension_numbers<[1], [0], [0], [1], [0, 0, 1, 1], [], []>} : vector<24x128xbf16>, vector<128x1024xbf16>, vector<24x1024xf32> -> vector<24x1024xf32>
    %235 = vector.extract_strided_slice %219 {offsets = [0, 4], sizes = [24, 1], strides = [1, 1]} : vector<24x9xf32> to vector<24x1xf32>
    %236 = vector.broadcast %235 : vector<24x1xf32> to vector<24x128xf32>
    %237 = arith.mulf %236, %231 : vector<24x128xf32>
    %238 = vector.extract_strided_slice %219 {offsets = [0, 0], sizes = [24, 1], strides = [1, 1]} : vector<24x9xf32> to vector<24x1xf32>
    %239 = vector.extract_strided_slice %234 {offsets = [0, 0], sizes = [24, 128], strides = [1, 1]} : vector<24x1024xf32> to vector<24x128xf32>
    %240 = vector.broadcast %238 : vector<24x1xf32> to vector<24x128xf32>
    %241 = arith.mulf %240, %239 : vector<24x128xf32>
    %242 = arith.addf %237, %241 : vector<24x128xf32>
    %243 = vector.extract_strided_slice %219 {offsets = [0, 1], sizes = [24, 1], strides = [1, 1]} : vector<24x9xf32> to vector<24x1xf32>
    %244 = vector.extract_strided_slice %234 {offsets = [0, 128], sizes = [24, 128], strides = [1, 1]} : vector<24x1024xf32> to vector<24x128xf32>
    %245 = vector.broadcast %243 : vector<24x1xf32> to vector<24x128xf32>
    %246 = arith.mulf %245, %244 : vector<24x128xf32>
    %247 = arith.addf %242, %246 : vector<24x128xf32>
    %248 = vector.extract_strided_slice %219 {offsets = [0, 2], sizes = [24, 1], strides = [1, 1]} : vector<24x9xf32> to vector<24x1xf32>
    %249 = vector.extract_strided_slice %234 {offsets = [0, 256], sizes = [24, 128], strides = [1, 1]} : vector<24x1024xf32> to vector<24x128xf32>
    %250 = vector.broadcast %248 : vector<24x1xf32> to vector<24x128xf32>
    %251 = arith.mulf %250, %249 : vector<24x128xf32>
    %252 = arith.addf %247, %251 : vector<24x128xf32>
    %253 = vector.extract_strided_slice %219 {offsets = [0, 3], sizes = [24, 1], strides = [1, 1]} : vector<24x9xf32> to vector<24x1xf32>
    %254 = vector.extract_strided_slice %234 {offsets = [0, 384], sizes = [24, 128], strides = [1, 1]} : vector<24x1024xf32> to vector<24x128xf32>
    %255 = vector.broadcast %253 : vector<24x1xf32> to vector<24x128xf32>
    %256 = arith.mulf %255, %254 : vector<24x128xf32>
    %257 = arith.addf %252, %256 : vector<24x128xf32>
    %258 = vector.extract_strided_slice %219 {offsets = [0, 5], sizes = [24, 1], strides = [1, 1]} : vector<24x9xf32> to vector<24x1xf32>
    %259 = vector.extract_strided_slice %234 {offsets = [0, 512], sizes = [24, 128], strides = [1, 1]} : vector<24x1024xf32> to vector<24x128xf32>
    %260 = vector.broadcast %258 : vector<24x1xf32> to vector<24x128xf32>
    %261 = arith.mulf %260, %259 : vector<24x128xf32>
    %262 = arith.addf %257, %261 : vector<24x128xf32>
    %263 = vector.extract_strided_slice %219 {offsets = [0, 6], sizes = [24, 1], strides = [1, 1]} : vector<24x9xf32> to vector<24x1xf32>
    %264 = vector.extract_strided_slice %234 {offsets = [0, 640], sizes = [24, 128], strides = [1, 1]} : vector<24x1024xf32> to vector<24x128xf32>
    %265 = vector.broadcast %263 : vector<24x1xf32> to vector<24x128xf32>
    %266 = arith.mulf %265, %264 : vector<24x128xf32>
    %267 = arith.addf %262, %266 : vector<24x128xf32>
    %268 = vector.extract_strided_slice %219 {offsets = [0, 7], sizes = [24, 1], strides = [1, 1]} : vector<24x9xf32> to vector<24x1xf32>
    %269 = vector.extract_strided_slice %234 {offsets = [0, 768], sizes = [24, 128], strides = [1, 1]} : vector<24x1024xf32> to vector<24x128xf32>
    %270 = vector.broadcast %268 : vector<24x1xf32> to vector<24x128xf32>
    %271 = arith.mulf %270, %269 : vector<24x128xf32>
    %272 = arith.addf %267, %271 : vector<24x128xf32>
    %273 = vector.extract_strided_slice %219 {offsets = [0, 8], sizes = [24, 1], strides = [1, 1]} : vector<24x9xf32> to vector<24x1xf32>
    %274 = vector.extract_strided_slice %234 {offsets = [0, 896], sizes = [24, 128], strides = [1, 1]} : vector<24x1024xf32> to vector<24x128xf32>
    %275 = vector.broadcast %273 : vector<24x1xf32> to vector<24x128xf32>
    %276 = arith.mulf %275, %274 : vector<24x128xf32>
    %277 = arith.addf %272, %276 : vector<24x128xf32>
    %278 = arith.truncf %277 : vector<24x128xf32> to vector<24x128xbf16>
    %cst_73 = arith.constant dense<0.000000e+00> : vector<24x128xf32>
    %279 = tpu.matmul %220, %278, %cst_73 {dimension_numbers = #tpu.dot_dimension_numbers<[1], [0], [0], [1], [0, 0, 1, 1], [], []>} : vector<24x24xbf16>, vector<24x128xbf16>, vector<24x128xf32> -> vector<24x128xf32>
    %cst_74 = arith.constant dense<0.000000e+00> : vector<24xf32>
    %280 = vector.multi_reduction <add>, %279, %cst_74 [1] : vector<24x128xf32> to vector<24xf32>
    %281 = vector.shape_cast %280 : vector<24xf32> to vector<24x1xf32>
    %cst_75 = arith.constant 1.280000e+02 : f32
    %282 = vector.broadcast %cst_75 : f32 to vector<24x1xf32>
    %283 = arith.divf %281, %282 : vector<24x1xf32>
    %284 = arith.mulf %279, %279 : vector<24x128xf32>
    %cst_76 = arith.constant dense<0.000000e+00> : vector<24xf32>
    %285 = vector.multi_reduction <add>, %284, %cst_76 [1] : vector<24x128xf32> to vector<24xf32>
    %286 = vector.shape_cast %285 : vector<24xf32> to vector<24x1xf32>
    %cst_77 = arith.constant 1.280000e+02 : f32
    %287 = vector.broadcast %cst_77 : f32 to vector<24x1xf32>
    %288 = arith.divf %286, %287 : vector<24x1xf32>
    %289 = arith.mulf %283, %283 : vector<24x1xf32>
    %290 = arith.subf %288, %289 : vector<24x1xf32>
    %cst_78 = arith.constant 0.000000e+00 : f32
    %291 = vector.broadcast %cst_78 : f32 to vector<24x1xf32>
    %292 = arith.maximumf %290, %291 : vector<24x1xf32>
    %293 = vector.broadcast %283 : vector<24x1xf32> to vector<24x128xf32>
    %294 = arith.subf %279, %293 : vector<24x128xf32>
    %cst_79 = arith.constant 9.99999974E-6 : f32
    %295 = vector.broadcast %cst_79 : f32 to vector<24x1xf32>
    %296 = arith.addf %292, %295 : vector<24x1xf32>
    %297 = math.rsqrt %296 : vector<24x1xf32>
    %298 = vector.broadcast %297 : vector<24x1xf32> to vector<24x128xf32>
    %299 = arith.mulf %294, %298 : vector<24x128xf32>
    %cst_80 = arith.constant 0.000000e+00 : f32
    %300 = vector.broadcast %cst_80 : f32 to vector<24x128xf32>
    %301 = arith.maximumf %299, %300 : vector<24x128xf32>
    %302 = arith.truncf %301 : vector<24x128xf32> to vector<24x128xbf16>
    %c0_81 = arith.constant 0 : index
    %c0_82 = arith.constant 0 : index
    %303 = vector.load %arg5[%c0_81, %c0_82] : memref<128x1024xbf16, #tpu.memory_space<vmem>>, vector<128x1024xbf16>
    %cst_83 = arith.constant dense<0.000000e+00> : vector<24x1024xf32>
    %304 = tpu.matmul %302, %303, %cst_83 {dimension_numbers = #tpu.dot_dimension_numbers<[1], [0], [0], [1], [0, 0, 1, 1], [], []>} : vector<24x128xbf16>, vector<128x1024xbf16>, vector<24x1024xf32> -> vector<24x1024xf32>
    %305 = vector.extract_strided_slice %221 {offsets = [0, 4], sizes = [24, 1], strides = [1, 1]} : vector<24x9xf32> to vector<24x1xf32>
    %306 = vector.broadcast %305 : vector<24x1xf32> to vector<24x128xf32>
    %307 = arith.mulf %306, %301 : vector<24x128xf32>
    %308 = vector.extract_strided_slice %221 {offsets = [0, 0], sizes = [24, 1], strides = [1, 1]} : vector<24x9xf32> to vector<24x1xf32>
    %309 = vector.extract_strided_slice %304 {offsets = [0, 0], sizes = [24, 128], strides = [1, 1]} : vector<24x1024xf32> to vector<24x128xf32>
    %310 = vector.broadcast %308 : vector<24x1xf32> to vector<24x128xf32>
    %311 = arith.mulf %310, %309 : vector<24x128xf32>
    %312 = arith.addf %307, %311 : vector<24x128xf32>
    %313 = vector.extract_strided_slice %221 {offsets = [0, 1], sizes = [24, 1], strides = [1, 1]} : vector<24x9xf32> to vector<24x1xf32>
    %314 = vector.extract_strided_slice %304 {offsets = [0, 128], sizes = [24, 128], strides = [1, 1]} : vector<24x1024xf32> to vector<24x128xf32>
    %315 = vector.broadcast %313 : vector<24x1xf32> to vector<24x128xf32>
    %316 = arith.mulf %315, %314 : vector<24x128xf32>
    %317 = arith.addf %312, %316 : vector<24x128xf32>
    %318 = vector.extract_strided_slice %221 {offsets = [0, 2], sizes = [24, 1], strides = [1, 1]} : vector<24x9xf32> to vector<24x1xf32>
    %319 = vector.extract_strided_slice %304 {offsets = [0, 256], sizes = [24, 128], strides = [1, 1]} : vector<24x1024xf32> to vector<24x128xf32>
    %320 = vector.broadcast %318 : vector<24x1xf32> to vector<24x128xf32>
    %321 = arith.mulf %320, %319 : vector<24x128xf32>
    %322 = arith.addf %317, %321 : vector<24x128xf32>
    %323 = vector.extract_strided_slice %221 {offsets = [0, 3], sizes = [24, 1], strides = [1, 1]} : vector<24x9xf32> to vector<24x1xf32>
    %324 = vector.extract_strided_slice %304 {offsets = [0, 384], sizes = [24, 128], strides = [1, 1]} : vector<24x1024xf32> to vector<24x128xf32>
    %325 = vector.broadcast %323 : vector<24x1xf32> to vector<24x128xf32>
    %326 = arith.mulf %325, %324 : vector<24x128xf32>
    %327 = arith.addf %322, %326 : vector<24x128xf32>
    %328 = vector.extract_strided_slice %221 {offsets = [0, 5], sizes = [24, 1], strides = [1, 1]} : vector<24x9xf32> to vector<24x1xf32>
    %329 = vector.extract_strided_slice %304 {offsets = [0, 512], sizes = [24, 128], strides = [1, 1]} : vector<24x1024xf32> to vector<24x128xf32>
    %330 = vector.broadcast %328 : vector<24x1xf32> to vector<24x128xf32>
    %331 = arith.mulf %330, %329 : vector<24x128xf32>
    %332 = arith.addf %327, %331 : vector<24x128xf32>
    %333 = vector.extract_strided_slice %221 {offsets = [0, 6], sizes = [24, 1], strides = [1, 1]} : vector<24x9xf32> to vector<24x1xf32>
    %334 = vector.extract_strided_slice %304 {offsets = [0, 640], sizes = [24, 128], strides = [1, 1]} : vector<24x1024xf32> to vector<24x128xf32>
    %335 = vector.broadcast %333 : vector<24x1xf32> to vector<24x128xf32>
    %336 = arith.mulf %335, %334 : vector<24x128xf32>
    %337 = arith.addf %332, %336 : vector<24x128xf32>
    %338 = vector.extract_strided_slice %221 {offsets = [0, 7], sizes = [24, 1], strides = [1, 1]} : vector<24x9xf32> to vector<24x1xf32>
    %339 = vector.extract_strided_slice %304 {offsets = [0, 768], sizes = [24, 128], strides = [1, 1]} : vector<24x1024xf32> to vector<24x128xf32>
    %340 = vector.broadcast %338 : vector<24x1xf32> to vector<24x128xf32>
    %341 = arith.mulf %340, %339 : vector<24x128xf32>
    %342 = arith.addf %337, %341 : vector<24x128xf32>
    %343 = vector.extract_strided_slice %221 {offsets = [0, 8], sizes = [24, 1], strides = [1, 1]} : vector<24x9xf32> to vector<24x1xf32>
    %344 = vector.extract_strided_slice %304 {offsets = [0, 896], sizes = [24, 128], strides = [1, 1]} : vector<24x1024xf32> to vector<24x128xf32>
    %345 = vector.broadcast %343 : vector<24x1xf32> to vector<24x128xf32>
    %346 = arith.mulf %345, %344 : vector<24x128xf32>
    %347 = arith.addf %342, %346 : vector<24x128xf32>
    %348 = arith.truncf %347 : vector<24x128xf32> to vector<24x128xbf16>
    %cst_84 = arith.constant dense<0.000000e+00> : vector<24x128xf32>
    %349 = tpu.matmul %222, %348, %cst_84 {dimension_numbers = #tpu.dot_dimension_numbers<[1], [0], [0], [1], [0, 0, 1, 1], [], []>} : vector<24x24xbf16>, vector<24x128xbf16>, vector<24x128xf32> -> vector<24x128xf32>
    %cst_85 = arith.constant dense<0.000000e+00> : vector<24xf32>
    %350 = vector.multi_reduction <add>, %349, %cst_85 [1] : vector<24x128xf32> to vector<24xf32>
    %351 = vector.shape_cast %350 : vector<24xf32> to vector<24x1xf32>
    %cst_86 = arith.constant 1.280000e+02 : f32
    %352 = vector.broadcast %cst_86 : f32 to vector<24x1xf32>
    %353 = arith.divf %351, %352 : vector<24x1xf32>
    %354 = arith.mulf %349, %349 : vector<24x128xf32>
    %cst_87 = arith.constant dense<0.000000e+00> : vector<24xf32>
    %355 = vector.multi_reduction <add>, %354, %cst_87 [1] : vector<24x128xf32> to vector<24xf32>
    %356 = vector.shape_cast %355 : vector<24xf32> to vector<24x1xf32>
    %cst_88 = arith.constant 1.280000e+02 : f32
    %357 = vector.broadcast %cst_88 : f32 to vector<24x1xf32>
    %358 = arith.divf %356, %357 : vector<24x1xf32>
    %359 = arith.mulf %353, %353 : vector<24x1xf32>
    %360 = arith.subf %358, %359 : vector<24x1xf32>
    %cst_89 = arith.constant 0.000000e+00 : f32
    %361 = vector.broadcast %cst_89 : f32 to vector<24x1xf32>
    %362 = arith.maximumf %360, %361 : vector<24x1xf32>
    %363 = vector.broadcast %353 : vector<24x1xf32> to vector<24x128xf32>
    %364 = arith.subf %349, %363 : vector<24x128xf32>
    %cst_90 = arith.constant 9.99999974E-6 : f32
    %365 = vector.broadcast %cst_90 : f32 to vector<24x1xf32>
    %366 = arith.addf %362, %365 : vector<24x1xf32>
    %367 = math.rsqrt %366 : vector<24x1xf32>
    %368 = vector.broadcast %367 : vector<24x1xf32> to vector<24x128xf32>
    %369 = arith.mulf %364, %368 : vector<24x128xf32>
    %370 = vector.extract_strided_slice %229 {offsets = [0, 0], sizes = [8, 128], strides = [1, 1]} : vector<24x128xf32> to vector<8x128xf32>
    %371 = vector.broadcast %223 : f32 to vector<8x128xf32>
    %372 = arith.mulf %371, %370 : vector<8x128xf32>
    %373 = vector.extract_strided_slice %369 {offsets = [0, 0], sizes = [8, 128], strides = [1, 1]} : vector<24x128xf32> to vector<8x128xf32>
    %374 = vector.broadcast %226 : f32 to vector<8x128xf32>
    %375 = arith.mulf %374, %373 : vector<8x128xf32>
    %376 = arith.addf %372, %375 : vector<8x128xf32>
    %377 = vector.extract_strided_slice %229 {offsets = [8, 0], sizes = [8, 128], strides = [1, 1]} : vector<24x128xf32> to vector<8x128xf32>
    %378 = vector.broadcast %224 : f32 to vector<8x128xf32>
    %379 = arith.mulf %378, %377 : vector<8x128xf32>
    %380 = arith.addf %376, %379 : vector<8x128xf32>
    %381 = vector.extract_strided_slice %369 {offsets = [8, 0], sizes = [8, 128], strides = [1, 1]} : vector<24x128xf32> to vector<8x128xf32>
    %382 = vector.broadcast %227 : f32 to vector<8x128xf32>
    %383 = arith.mulf %382, %381 : vector<8x128xf32>
    %384 = arith.addf %380, %383 : vector<8x128xf32>
    %385 = vector.extract_strided_slice %229 {offsets = [16, 0], sizes = [8, 128], strides = [1, 1]} : vector<24x128xf32> to vector<8x128xf32>
    %386 = vector.broadcast %225 : f32 to vector<8x128xf32>
    %387 = arith.mulf %386, %385 : vector<8x128xf32>
    %388 = arith.addf %384, %387 : vector<8x128xf32>
    %389 = vector.extract_strided_slice %369 {offsets = [16, 0], sizes = [8, 128], strides = [1, 1]} : vector<24x128xf32> to vector<8x128xf32>
    %390 = vector.broadcast %228 : f32 to vector<8x128xf32>
    %391 = arith.mulf %390, %389 : vector<8x128xf32>
    %392 = arith.addf %388, %391 : vector<8x128xf32>
    %c24 = arith.constant 24 : index
    %c0_91 = arith.constant 0 : index
    %393 = vector.load %arg23[%c24, %c0_91] : memref<48x128xf32, #tpu.memory_space<vmem>>, vector<8x128xf32>
    tpu.vector_store %arg23[%c24, %c0_91], %392 {strides = array<i32>} : memref<48x128xf32, #tpu.memory_space<vmem>>, vector<8x128xf32>,
    %c0_92 = arith.constant 0 : index
    %c0_93 = arith.constant 0 : index
    %394 = vector.load %arg14[%c0_92, %c0_93] : memref<32x9xf32, #tpu.memory_space<vmem>>, vector<32x9xf32>
    %c0_94 = arith.constant 0 : index
    %c0_95 = arith.constant 0 : index
    %395 = vector.load %arg15[%c0_94, %c0_95] : memref<32x32xbf16, #tpu.memory_space<vmem>>, vector<32x32xbf16>
    %c0_96 = arith.constant 0 : index
    %c0_97 = arith.constant 0 : index
    %396 = vector.load %arg16[%c0_96, %c0_97] : memref<32x9xf32, #tpu.memory_space<vmem>>, vector<32x9xf32>
    %c0_98 = arith.constant 0 : index
    %c0_99 = arith.constant 0 : index
    %397 = vector.load %arg17[%c0_98, %c0_99] : memref<32x32xbf16, #tpu.memory_space<vmem>>, vector<32x32xbf16>
    %c16_100 = arith.constant 16 : index
    %398 = memref.load %arg0[%c16_100] : memref<42xf32, #tpu.memory_space<smem>>
    %c19 = arith.constant 19 : index
    %399 = memref.load %arg0[%c19] : memref<42xf32, #tpu.memory_space<smem>>
    %c22 = arith.constant 22 : index
    %400 = memref.load %arg0[%c22] : memref<42xf32, #tpu.memory_space<smem>>
    %c25 = arith.constant 25 : index
    %401 = memref.load %arg0[%c25] : memref<42xf32, #tpu.memory_space<smem>>
    %c17 = arith.constant 17 : index
    %402 = memref.load %arg0[%c17] : memref<42xf32, #tpu.memory_space<smem>>
    %c20 = arith.constant 20 : index
    %403 = memref.load %arg0[%c20] : memref<42xf32, #tpu.memory_space<smem>>
    %c23 = arith.constant 23 : index
    %404 = memref.load %arg0[%c23] : memref<42xf32, #tpu.memory_space<smem>>
    %c26 = arith.constant 26 : index
    %405 = memref.load %arg0[%c26] : memref<42xf32, #tpu.memory_space<smem>>
    %c0_101 = arith.constant 0 : index
    %c0_102 = arith.constant 0 : index
    %406 = vector.load %arg23[%c0_101, %c0_102] : memref<48x128xf32, #tpu.memory_space<vmem>>, vector<32x128xf32>
    %cst_103 = arith.constant 0.000000e+00 : f32
    %407 = vector.broadcast %cst_103 : f32 to vector<32x128xf32>
    %408 = arith.maximumf %406, %407 : vector<32x128xf32>
    %409 = arith.truncf %408 : vector<32x128xf32> to vector<32x128xbf16>
    %c0_104 = arith.constant 0 : index
    %c0_105 = arith.constant 0 : index
    %410 = vector.load %arg5[%c0_104, %c0_105] : memref<128x1024xbf16, #tpu.memory_space<vmem>>, vector<128x1024xbf16>
    %cst_106 = arith.constant dense<0.000000e+00> : vector<32x1024xf32>
    %411 = tpu.matmul %409, %410, %cst_106 {dimension_numbers = #tpu.dot_dimension_numbers<[1], [0], [0], [1], [0, 0, 1, 1], [], []>} : vector<32x128xbf16>, vector<128x1024xbf16>, vector<32x1024xf32> -> vector<32x1024xf32>
    %412 = vector.extract_strided_slice %394 {offsets = [0, 4], sizes = [32, 1], strides = [1, 1]} : vector<32x9xf32> to vector<32x1xf32>
    %413 = vector.broadcast %412 : vector<32x1xf32> to vector<32x128xf32>
    %414 = arith.mulf %413, %408 : vector<32x128xf32>
    %415 = vector.extract_strided_slice %394 {offsets = [0, 0], sizes = [32, 1], strides = [1, 1]} : vector<32x9xf32> to vector<32x1xf32>
    %416 = vector.extract_strided_slice %411 {offsets = [0, 0], sizes = [32, 128], strides = [1, 1]} : vector<32x1024xf32> to vector<32x128xf32>
    %417 = vector.broadcast %415 : vector<32x1xf32> to vector<32x128xf32>
    %418 = arith.mulf %417, %416 : vector<32x128xf32>
    %419 = arith.addf %414, %418 : vector<32x128xf32>
    %420 = vector.extract_strided_slice %394 {offsets = [0, 1], sizes = [32, 1], strides = [1, 1]} : vector<32x9xf32> to vector<32x1xf32>
    %421 = vector.extract_strided_slice %411 {offsets = [0, 128], sizes = [32, 128], strides = [1, 1]} : vector<32x1024xf32> to vector<32x128xf32>
    %422 = vector.broadcast %420 : vector<32x1xf32> to vector<32x128xf32>
    %423 = arith.mulf %422, %421 : vector<32x128xf32>
    %424 = arith.addf %419, %423 : vector<32x128xf32>
    %425 = vector.extract_strided_slice %394 {offsets = [0, 2], sizes = [32, 1], strides = [1, 1]} : vector<32x9xf32> to vector<32x1xf32>
    %426 = vector.extract_strided_slice %411 {offsets = [0, 256], sizes = [32, 128], strides = [1, 1]} : vector<32x1024xf32> to vector<32x128xf32>
    %427 = vector.broadcast %425 : vector<32x1xf32> to vector<32x128xf32>
    %428 = arith.mulf %427, %426 : vector<32x128xf32>
    %429 = arith.addf %424, %428 : vector<32x128xf32>
    %430 = vector.extract_strided_slice %394 {offsets = [0, 3], sizes = [32, 1], strides = [1, 1]} : vector<32x9xf32> to vector<32x1xf32>
    %431 = vector.extract_strided_slice %411 {offsets = [0, 384], sizes = [32, 128], strides = [1, 1]} : vector<32x1024xf32> to vector<32x128xf32>
    %432 = vector.broadcast %430 : vector<32x1xf32> to vector<32x128xf32>
    %433 = arith.mulf %432, %431 : vector<32x128xf32>
    %434 = arith.addf %429, %433 : vector<32x128xf32>
    %435 = vector.extract_strided_slice %394 {offsets = [0, 5], sizes = [32, 1], strides = [1, 1]} : vector<32x9xf32> to vector<32x1xf32>
    %436 = vector.extract_strided_slice %411 {offsets = [0, 512], sizes = [32, 128], strides = [1, 1]} : vector<32x1024xf32> to vector<32x128xf32>
    %437 = vector.broadcast %435 : vector<32x1xf32> to vector<32x128xf32>
    %438 = arith.mulf %437, %436 : vector<32x128xf32>
    %439 = arith.addf %434, %438 : vector<32x128xf32>
    %440 = vector.extract_strided_slice %394 {offsets = [0, 6], sizes = [32, 1], strides = [1, 1]} : vector<32x9xf32> to vector<32x1xf32>
    %441 = vector.extract_strided_slice %411 {offsets = [0, 640], sizes = [32, 128], strides = [1, 1]} : vector<32x1024xf32> to vector<32x128xf32>
    %442 = vector.broadcast %440 : vector<32x1xf32> to vector<32x128xf32>
    %443 = arith.mulf %442, %441 : vector<32x128xf32>
    %444 = arith.addf %439, %443 : vector<32x128xf32>
    %445 = vector.extract_strided_slice %394 {offsets = [0, 7], sizes = [32, 1], strides = [1, 1]} : vector<32x9xf32> to vector<32x1xf32>
    %446 = vector.extract_strided_slice %411 {offsets = [0, 768], sizes = [32, 128], strides = [1, 1]} : vector<32x1024xf32> to vector<32x128xf32>
    %447 = vector.broadcast %445 : vector<32x1xf32> to vector<32x128xf32>
    %448 = arith.mulf %447, %446 : vector<32x128xf32>
    %449 = arith.addf %444, %448 : vector<32x128xf32>
    %450 = vector.extract_strided_slice %394 {offsets = [0, 8], sizes = [32, 1], strides = [1, 1]} : vector<32x9xf32> to vector<32x1xf32>
    %451 = vector.extract_strided_slice %411 {offsets = [0, 896], sizes = [32, 128], strides = [1, 1]} : vector<32x1024xf32> to vector<32x128xf32>
    %452 = vector.broadcast %450 : vector<32x1xf32> to vector<32x128xf32>
    %453 = arith.mulf %452, %451 : vector<32x128xf32>
    %454 = arith.addf %449, %453 : vector<32x128xf32>
    %455 = arith.truncf %454 : vector<32x128xf32> to vector<32x128xbf16>
    %cst_107 = arith.constant dense<0.000000e+00> : vector<32x128xf32>
    %456 = tpu.matmul %395, %455, %cst_107 {dimension_numbers = #tpu.dot_dimension_numbers<[1], [0], [0], [1], [0, 0, 1, 1], [], []>} : vector<32x32xbf16>, vector<32x128xbf16>, vector<32x128xf32> -> vector<32x128xf32>
    %cst_108 = arith.constant dense<0.000000e+00> : vector<32xf32>
    %457 = vector.multi_reduction <add>, %456, %cst_108 [1] : vector<32x128xf32> to vector<32xf32>
    %458 = vector.shape_cast %457 : vector<32xf32> to vector<32x1xf32>
    %cst_109 = arith.constant 1.280000e+02 : f32
    %459 = vector.broadcast %cst_109 : f32 to vector<32x1xf32>
    %460 = arith.divf %458, %459 : vector<32x1xf32>
    %461 = arith.mulf %456, %456 : vector<32x128xf32>
    %cst_110 = arith.constant dense<0.000000e+00> : vector<32xf32>
    %462 = vector.multi_reduction <add>, %461, %cst_110 [1] : vector<32x128xf32> to vector<32xf32>
    %463 = vector.shape_cast %462 : vector<32xf32> to vector<32x1xf32>
    %cst_111 = arith.constant 1.280000e+02 : f32
    %464 = vector.broadcast %cst_111 : f32 to vector<32x1xf32>
    %465 = arith.divf %463, %464 : vector<32x1xf32>
    %466 = arith.mulf %460, %460 : vector<32x1xf32>
    %467 = arith.subf %465, %466 : vector<32x1xf32>
    %cst_112 = arith.constant 0.000000e+00 : f32
    %468 = vector.broadcast %cst_112 : f32 to vector<32x1xf32>
    %469 = arith.maximumf %467, %468 : vector<32x1xf32>
    %470 = vector.broadcast %460 : vector<32x1xf32> to vector<32x128xf32>
    %471 = arith.subf %456, %470 : vector<32x128xf32>
    %cst_113 = arith.constant 9.99999974E-6 : f32
    %472 = vector.broadcast %cst_113 : f32 to vector<32x1xf32>
    %473 = arith.addf %469, %472 : vector<32x1xf32>
    %474 = math.rsqrt %473 : vector<32x1xf32>
    %475 = vector.broadcast %474 : vector<32x1xf32> to vector<32x128xf32>
    %476 = arith.mulf %471, %475 : vector<32x128xf32>
    %cst_114 = arith.constant 0.000000e+00 : f32
    %477 = vector.broadcast %cst_114 : f32 to vector<32x128xf32>
    %478 = arith.maximumf %476, %477 : vector<32x128xf32>
    %479 = arith.truncf %478 : vector<32x128xf32> to vector<32x128xbf16>
    %c0_115 = arith.constant 0 : index
    %c0_116 = arith.constant 0 : index
    %480 = vector.load %arg5[%c0_115, %c0_116] : memref<128x1024xbf16, #tpu.memory_space<vmem>>, vector<128x1024xbf16>
    %cst_117 = arith.constant dense<0.000000e+00> : vector<32x1024xf32>
    %481 = tpu.matmul %479, %480, %cst_117 {dimension_numbers = #tpu.dot_dimension_numbers<[1], [0], [0], [1], [0, 0, 1, 1], [], []>} : vector<32x128xbf16>, vector<128x1024xbf16>, vector<32x1024xf32> -> vector<32x1024xf32>
    %482 = vector.extract_strided_slice %396 {offsets = [0, 4], sizes = [32, 1], strides = [1, 1]} : vector<32x9xf32> to vector<32x1xf32>
    %483 = vector.broadcast %482 : vector<32x1xf32> to vector<32x128xf32>
    %484 = arith.mulf %483, %478 : vector<32x128xf32>
    %485 = vector.extract_strided_slice %396 {offsets = [0, 0], sizes = [32, 1], strides = [1, 1]} : vector<32x9xf32> to vector<32x1xf32>
    %486 = vector.extract_strided_slice %481 {offsets = [0, 0], sizes = [32, 128], strides = [1, 1]} : vector<32x1024xf32> to vector<32x128xf32>
    %487 = vector.broadcast %485 : vector<32x1xf32> to vector<32x128xf32>
    %488 = arith.mulf %487, %486 : vector<32x128xf32>
    %489 = arith.addf %484, %488 : vector<32x128xf32>
    %490 = vector.extract_strided_slice %396 {offsets = [0, 1], sizes = [32, 1], strides = [1, 1]} : vector<32x9xf32> to vector<32x1xf32>
    %491 = vector.extract_strided_slice %481 {offsets = [0, 128], sizes = [32, 128], strides = [1, 1]} : vector<32x1024xf32> to vector<32x128xf32>
    %492 = vector.broadcast %490 : vector<32x1xf32> to vector<32x128xf32>
    %493 = arith.mulf %492, %491 : vector<32x128xf32>
    %494 = arith.addf %489, %493 : vector<32x128xf32>
    %495 = vector.extract_strided_slice %396 {offsets = [0, 2], sizes = [32, 1], strides = [1, 1]} : vector<32x9xf32> to vector<32x1xf32>
    %496 = vector.extract_strided_slice %481 {offsets = [0, 256], sizes = [32, 128], strides = [1, 1]} : vector<32x1024xf32> to vector<32x128xf32>
    %497 = vector.broadcast %495 : vector<32x1xf32> to vector<32x128xf32>
    %498 = arith.mulf %497, %496 : vector<32x128xf32>
    %499 = arith.addf %494, %498 : vector<32x128xf32>
    %500 = vector.extract_strided_slice %396 {offsets = [0, 3], sizes = [32, 1], strides = [1, 1]} : vector<32x9xf32> to vector<32x1xf32>
    %501 = vector.extract_strided_slice %481 {offsets = [0, 384], sizes = [32, 128], strides = [1, 1]} : vector<32x1024xf32> to vector<32x128xf32>
    %502 = vector.broadcast %500 : vector<32x1xf32> to vector<32x128xf32>
    %503 = arith.mulf %502, %501 : vector<32x128xf32>
    %504 = arith.addf %499, %503 : vector<32x128xf32>
    %505 = vector.extract_strided_slice %396 {offsets = [0, 5], sizes = [32, 1], strides = [1, 1]} : vector<32x9xf32> to vector<32x1xf32>
    %506 = vector.extract_strided_slice %481 {offsets = [0, 512], sizes = [32, 128], strides = [1, 1]} : vector<32x1024xf32> to vector<32x128xf32>
    %507 = vector.broadcast %505 : vector<32x1xf32> to vector<32x128xf32>
    %508 = arith.mulf %507, %506 : vector<32x128xf32>
    %509 = arith.addf %504, %508 : vector<32x128xf32>
    %510 = vector.extract_strided_slice %396 {offsets = [0, 6], sizes = [32, 1], strides = [1, 1]} : vector<32x9xf32> to vector<32x1xf32>
    %511 = vector.extract_strided_slice %481 {offsets = [0, 640], sizes = [32, 128], strides = [1, 1]} : vector<32x1024xf32> to vector<32x128xf32>
    %512 = vector.broadcast %510 : vector<32x1xf32> to vector<32x128xf32>
    %513 = arith.mulf %512, %511 : vector<32x128xf32>
    %514 = arith.addf %509, %513 : vector<32x128xf32>
    %515 = vector.extract_strided_slice %396 {offsets = [0, 7], sizes = [32, 1], strides = [1, 1]} : vector<32x9xf32> to vector<32x1xf32>
    %516 = vector.extract_strided_slice %481 {offsets = [0, 768], sizes = [32, 128], strides = [1, 1]} : vector<32x1024xf32> to vector<32x128xf32>
    %517 = vector.broadcast %515 : vector<32x1xf32> to vector<32x128xf32>
    %518 = arith.mulf %517, %516 : vector<32x128xf32>
    %519 = arith.addf %514, %518 : vector<32x128xf32>
    %520 = vector.extract_strided_slice %396 {offsets = [0, 8], sizes = [32, 1], strides = [1, 1]} : vector<32x9xf32> to vector<32x1xf32>
    %521 = vector.extract_strided_slice %481 {offsets = [0, 896], sizes = [32, 128], strides = [1, 1]} : vector<32x1024xf32> to vector<32x128xf32>
    %522 = vector.broadcast %520 : vector<32x1xf32> to vector<32x128xf32>
    %523 = arith.mulf %522, %521 : vector<32x128xf32>
    %524 = arith.addf %519, %523 : vector<32x128xf32>
    %525 = arith.truncf %524 : vector<32x128xf32> to vector<32x128xbf16>
    %cst_118 = arith.constant dense<0.000000e+00> : vector<32x128xf32>
    %526 = tpu.matmul %397, %525, %cst_118 {dimension_numbers = #tpu.dot_dimension_numbers<[1], [0], [0], [1], [0, 0, 1, 1], [], []>} : vector<32x32xbf16>, vector<32x128xbf16>, vector<32x128xf32> -> vector<32x128xf32>
    %cst_119 = arith.constant dense<0.000000e+00> : vector<32xf32>
    %527 = vector.multi_reduction <add>, %526, %cst_119 [1] : vector<32x128xf32> to vector<32xf32>
    %528 = vector.shape_cast %527 : vector<32xf32> to vector<32x1xf32>
    %cst_120 = arith.constant 1.280000e+02 : f32
    %529 = vector.broadcast %cst_120 : f32 to vector<32x1xf32>
    %530 = arith.divf %528, %529 : vector<32x1xf32>
    %531 = arith.mulf %526, %526 : vector<32x128xf32>
    %cst_121 = arith.constant dense<0.000000e+00> : vector<32xf32>
    %532 = vector.multi_reduction <add>, %531, %cst_121 [1] : vector<32x128xf32> to vector<32xf32>
    %533 = vector.shape_cast %532 : vector<32xf32> to vector<32x1xf32>
    %cst_122 = arith.constant 1.280000e+02 : f32
    %534 = vector.broadcast %cst_122 : f32 to vector<32x1xf32>
    %535 = arith.divf %533, %534 : vector<32x1xf32>
    %536 = arith.mulf %530, %530 : vector<32x1xf32>
    %537 = arith.subf %535, %536 : vector<32x1xf32>
    %cst_123 = arith.constant 0.000000e+00 : f32
    %538 = vector.broadcast %cst_123 : f32 to vector<32x1xf32>
    %539 = arith.maximumf %537, %538 : vector<32x1xf32>
    %540 = vector.broadcast %530 : vector<32x1xf32> to vector<32x128xf32>
    %541 = arith.subf %526, %540 : vector<32x128xf32>
    %cst_124 = arith.constant 9.99999974E-6 : f32
    %542 = vector.broadcast %cst_124 : f32 to vector<32x1xf32>
    %543 = arith.addf %539, %542 : vector<32x1xf32>
    %544 = math.rsqrt %543 : vector<32x1xf32>
    %545 = vector.broadcast %544 : vector<32x1xf32> to vector<32x128xf32>
    %546 = arith.mulf %541, %545 : vector<32x128xf32>
    %547 = vector.extract_strided_slice %406 {offsets = [0, 0], sizes = [8, 128], strides = [1, 1]} : vector<32x128xf32> to vector<8x128xf32>
    %548 = vector.broadcast %398 : f32 to vector<8x128xf32>
    %549 = arith.mulf %548, %547 : vector<8x128xf32>
    %550 = vector.extract_strided_slice %546 {offsets = [0, 0], sizes = [8, 128], strides = [1, 1]} : vector<32x128xf32> to vector<8x128xf32>
    %551 = vector.broadcast %402 : f32 to vector<8x128xf32>
    %552 = arith.mulf %551, %550 : vector<8x128xf32>
    %553 = arith.addf %549, %552 : vector<8x128xf32>
    %554 = vector.extract_strided_slice %406 {offsets = [8, 0], sizes = [8, 128], strides = [1, 1]} : vector<32x128xf32> to vector<8x128xf32>
    %555 = vector.broadcast %399 : f32 to vector<8x128xf32>
    %556 = arith.mulf %555, %554 : vector<8x128xf32>
    %557 = arith.addf %553, %556 : vector<8x128xf32>
    %558 = vector.extract_strided_slice %546 {offsets = [8, 0], sizes = [8, 128], strides = [1, 1]} : vector<32x128xf32> to vector<8x128xf32>
    %559 = vector.broadcast %403 : f32 to vector<8x128xf32>
    %560 = arith.mulf %559, %558 : vector<8x128xf32>
    %561 = arith.addf %557, %560 : vector<8x128xf32>
    %562 = vector.extract_strided_slice %406 {offsets = [16, 0], sizes = [8, 128], strides = [1, 1]} : vector<32x128xf32> to vector<8x128xf32>
    %563 = vector.broadcast %400 : f32 to vector<8x128xf32>
    %564 = arith.mulf %563, %562 : vector<8x128xf32>
    %565 = arith.addf %561, %564 : vector<8x128xf32>
    %566 = vector.extract_strided_slice %546 {offsets = [16, 0], sizes = [8, 128], strides = [1, 1]} : vector<32x128xf32> to vector<8x128xf32>
    %567 = vector.broadcast %404 : f32 to vector<8x128xf32>
    %568 = arith.mulf %567, %566 : vector<8x128xf32>
    %569 = arith.addf %565, %568 : vector<8x128xf32>
    %570 = vector.extract_strided_slice %406 {offsets = [24, 0], sizes = [8, 128], strides = [1, 1]} : vector<32x128xf32> to vector<8x128xf32>
    %571 = vector.broadcast %401 : f32 to vector<8x128xf32>
    %572 = arith.mulf %571, %570 : vector<8x128xf32>
    %573 = arith.addf %569, %572 : vector<8x128xf32>
    %574 = vector.extract_strided_slice %546 {offsets = [24, 0], sizes = [8, 128], strides = [1, 1]} : vector<32x128xf32> to vector<8x128xf32>
    %575 = vector.broadcast %405 : f32 to vector<8x128xf32>
    %576 = arith.mulf %575, %574 : vector<8x128xf32>
    %577 = arith.addf %573, %576 : vector<8x128xf32>
    %c32 = arith.constant 32 : index
    %c0_125 = arith.constant 0 : index
    %578 = vector.load %arg23[%c32, %c0_125] : memref<48x128xf32, #tpu.memory_space<vmem>>, vector<8x128xf32>
    tpu.vector_store %arg23[%c32, %c0_125], %577 {strides = array<i32>} : memref<48x128xf32, #tpu.memory_space<vmem>>, vector<8x128xf32>,
    %c0_126 = arith.constant 0 : index
    %c0_127 = arith.constant 0 : index
    %579 = vector.load %arg18[%c0_126, %c0_127] : memref<40x9xf32, #tpu.memory_space<vmem>>, vector<40x9xf32>
    %c0_128 = arith.constant 0 : index
    %c0_129 = arith.constant 0 : index
    %580 = vector.load %arg19[%c0_128, %c0_129] : memref<40x40xbf16, #tpu.memory_space<vmem>>, vector<40x40xbf16>
    %c0_130 = arith.constant 0 : index
    %c0_131 = arith.constant 0 : index
    %581 = vector.load %arg20[%c0_130, %c0_131] : memref<40x9xf32, #tpu.memory_space<vmem>>, vector<40x9xf32>
    %c0_132 = arith.constant 0 : index
    %c0_133 = arith.constant 0 : index
    %582 = vector.load %arg21[%c0_132, %c0_133] : memref<40x40xbf16, #tpu.memory_space<vmem>>, vector<40x40xbf16>
    %c28 = arith.constant 28 : index
    %583 = memref.load %arg0[%c28] : memref<42xf32, #tpu.memory_space<smem>>
    %c31 = arith.constant 31 : index
    %584 = memref.load %arg0[%c31] : memref<42xf32, #tpu.memory_space<smem>>
    %c34 = arith.constant 34 : index
    %585 = memref.load %arg0[%c34] : memref<42xf32, #tpu.memory_space<smem>>
    %c37 = arith.constant 37 : index
    %586 = memref.load %arg0[%c37] : memref<42xf32, #tpu.memory_space<smem>>
    %c40 = arith.constant 40 : index
    %587 = memref.load %arg0[%c40] : memref<42xf32, #tpu.memory_space<smem>>
    %c29 = arith.constant 29 : index
    %588 = memref.load %arg0[%c29] : memref<42xf32, #tpu.memory_space<smem>>
    %c32_134 = arith.constant 32 : index
    %589 = memref.load %arg0[%c32_134] : memref<42xf32, #tpu.memory_space<smem>>
    %c35 = arith.constant 35 : index
    %590 = memref.load %arg0[%c35] : memref<42xf32, #tpu.memory_space<smem>>
    %c38 = arith.constant 38 : index
    %591 = memref.load %arg0[%c38] : memref<42xf32, #tpu.memory_space<smem>>
    %c41 = arith.constant 41 : index
    %592 = memref.load %arg0[%c41] : memref<42xf32, #tpu.memory_space<smem>>
    %c0_135 = arith.constant 0 : index
    %c0_136 = arith.constant 0 : index
    %593 = vector.load %arg23[%c0_135, %c0_136] : memref<48x128xf32, #tpu.memory_space<vmem>>, vector<40x128xf32>
    %cst_137 = arith.constant 0.000000e+00 : f32
    %594 = vector.broadcast %cst_137 : f32 to vector<40x128xf32>
    %595 = arith.maximumf %593, %594 : vector<40x128xf32>
    %596 = arith.truncf %595 : vector<40x128xf32> to vector<40x128xbf16>
    %c0_138 = arith.constant 0 : index
    %c0_139 = arith.constant 0 : index
    %597 = vector.load %arg5[%c0_138, %c0_139] : memref<128x1024xbf16, #tpu.memory_space<vmem>>, vector<128x1024xbf16>
    %cst_140 = arith.constant dense<0.000000e+00> : vector<40x1024xf32>
    %598 = tpu.matmul %596, %597, %cst_140 {dimension_numbers = #tpu.dot_dimension_numbers<[1], [0], [0], [1], [0, 0, 1, 1], [], []>} : vector<40x128xbf16>, vector<128x1024xbf16>, vector<40x1024xf32> -> vector<40x1024xf32>
    %599 = vector.extract_strided_slice %579 {offsets = [0, 4], sizes = [40, 1], strides = [1, 1]} : vector<40x9xf32> to vector<40x1xf32>
    %600 = vector.broadcast %599 : vector<40x1xf32> to vector<40x128xf32>
    %601 = arith.mulf %600, %595 : vector<40x128xf32>
    %602 = vector.extract_strided_slice %579 {offsets = [0, 0], sizes = [40, 1], strides = [1, 1]} : vector<40x9xf32> to vector<40x1xf32>
    %603 = vector.extract_strided_slice %598 {offsets = [0, 0], sizes = [40, 128], strides = [1, 1]} : vector<40x1024xf32> to vector<40x128xf32>
    %604 = vector.broadcast %602 : vector<40x1xf32> to vector<40x128xf32>
    %605 = arith.mulf %604, %603 : vector<40x128xf32>
    %606 = arith.addf %601, %605 : vector<40x128xf32>
    %607 = vector.extract_strided_slice %579 {offsets = [0, 1], sizes = [40, 1], strides = [1, 1]} : vector<40x9xf32> to vector<40x1xf32>
    %608 = vector.extract_strided_slice %598 {offsets = [0, 128], sizes = [40, 128], strides = [1, 1]} : vector<40x1024xf32> to vector<40x128xf32>
    %609 = vector.broadcast %607 : vector<40x1xf32> to vector<40x128xf32>
    %610 = arith.mulf %609, %608 : vector<40x128xf32>
    %611 = arith.addf %606, %610 : vector<40x128xf32>
    %612 = vector.extract_strided_slice %579 {offsets = [0, 2], sizes = [40, 1], strides = [1, 1]} : vector<40x9xf32> to vector<40x1xf32>
    %613 = vector.extract_strided_slice %598 {offsets = [0, 256], sizes = [40, 128], strides = [1, 1]} : vector<40x1024xf32> to vector<40x128xf32>
    %614 = vector.broadcast %612 : vector<40x1xf32> to vector<40x128xf32>
    %615 = arith.mulf %614, %613 : vector<40x128xf32>
    %616 = arith.addf %611, %615 : vector<40x128xf32>
    %617 = vector.extract_strided_slice %579 {offsets = [0, 3], sizes = [40, 1], strides = [1, 1]} : vector<40x9xf32> to vector<40x1xf32>
    %618 = vector.extract_strided_slice %598 {offsets = [0, 384], sizes = [40, 128], strides = [1, 1]} : vector<40x1024xf32> to vector<40x128xf32>
    %619 = vector.broadcast %617 : vector<40x1xf32> to vector<40x128xf32>
    %620 = arith.mulf %619, %618 : vector<40x128xf32>
    %621 = arith.addf %616, %620 : vector<40x128xf32>
    %622 = vector.extract_strided_slice %579 {offsets = [0, 5], sizes = [40, 1], strides = [1, 1]} : vector<40x9xf32> to vector<40x1xf32>
    %623 = vector.extract_strided_slice %598 {offsets = [0, 512], sizes = [40, 128], strides = [1, 1]} : vector<40x1024xf32> to vector<40x128xf32>
    %624 = vector.broadcast %622 : vector<40x1xf32> to vector<40x128xf32>
    %625 = arith.mulf %624, %623 : vector<40x128xf32>
    %626 = arith.addf %621, %625 : vector<40x128xf32>
    %627 = vector.extract_strided_slice %579 {offsets = [0, 6], sizes = [40, 1], strides = [1, 1]} : vector<40x9xf32> to vector<40x1xf32>
    %628 = vector.extract_strided_slice %598 {offsets = [0, 640], sizes = [40, 128], strides = [1, 1]} : vector<40x1024xf32> to vector<40x128xf32>
    %629 = vector.broadcast %627 : vector<40x1xf32> to vector<40x128xf32>
    %630 = arith.mulf %629, %628 : vector<40x128xf32>
    %631 = arith.addf %626, %630 : vector<40x128xf32>
    %632 = vector.extract_strided_slice %579 {offsets = [0, 7], sizes = [40, 1], strides = [1, 1]} : vector<40x9xf32> to vector<40x1xf32>
    %633 = vector.extract_strided_slice %598 {offsets = [0, 768], sizes = [40, 128], strides = [1, 1]} : vector<40x1024xf32> to vector<40x128xf32>
    %634 = vector.broadcast %632 : vector<40x1xf32> to vector<40x128xf32>
    %635 = arith.mulf %634, %633 : vector<40x128xf32>
    %636 = arith.addf %631, %635 : vector<40x128xf32>
    %637 = vector.extract_strided_slice %579 {offsets = [0, 8], sizes = [40, 1], strides = [1, 1]} : vector<40x9xf32> to vector<40x1xf32>
    %638 = vector.extract_strided_slice %598 {offsets = [0, 896], sizes = [40, 128], strides = [1, 1]} : vector<40x1024xf32> to vector<40x128xf32>
    %639 = vector.broadcast %637 : vector<40x1xf32> to vector<40x128xf32>
    %640 = arith.mulf %639, %638 : vector<40x128xf32>
    %641 = arith.addf %636, %640 : vector<40x128xf32>
    %642 = arith.truncf %641 : vector<40x128xf32> to vector<40x128xbf16>
    %cst_141 = arith.constant dense<0.000000e+00> : vector<40x128xf32>
    %643 = tpu.matmul %580, %642, %cst_141 {dimension_numbers = #tpu.dot_dimension_numbers<[1], [0], [0], [1], [0, 0, 1, 1], [], []>} : vector<40x40xbf16>, vector<40x128xbf16>, vector<40x128xf32> -> vector<40x128xf32>
    %cst_142 = arith.constant dense<0.000000e+00> : vector<40xf32>
    %644 = vector.multi_reduction <add>, %643, %cst_142 [1] : vector<40x128xf32> to vector<40xf32>
    %645 = vector.shape_cast %644 : vector<40xf32> to vector<40x1xf32>
    %cst_143 = arith.constant 1.280000e+02 : f32
    %646 = vector.broadcast %cst_143 : f32 to vector<40x1xf32>
    %647 = arith.divf %645, %646 : vector<40x1xf32>
    %648 = arith.mulf %643, %643 : vector<40x128xf32>
    %cst_144 = arith.constant dense<0.000000e+00> : vector<40xf32>
    %649 = vector.multi_reduction <add>, %648, %cst_144 [1] : vector<40x128xf32> to vector<40xf32>
    %650 = vector.shape_cast %649 : vector<40xf32> to vector<40x1xf32>
    %cst_145 = arith.constant 1.280000e+02 : f32
    %651 = vector.broadcast %cst_145 : f32 to vector<40x1xf32>
    %652 = arith.divf %650, %651 : vector<40x1xf32>
    %653 = arith.mulf %647, %647 : vector<40x1xf32>
    %654 = arith.subf %652, %653 : vector<40x1xf32>
    %cst_146 = arith.constant 0.000000e+00 : f32
    %655 = vector.broadcast %cst_146 : f32 to vector<40x1xf32>
    %656 = arith.maximumf %654, %655 : vector<40x1xf32>
    %657 = vector.broadcast %647 : vector<40x1xf32> to vector<40x128xf32>
    %658 = arith.subf %643, %657 : vector<40x128xf32>
    %cst_147 = arith.constant 9.99999974E-6 : f32
    %659 = vector.broadcast %cst_147 : f32 to vector<40x1xf32>
    %660 = arith.addf %656, %659 : vector<40x1xf32>
    %661 = math.rsqrt %660 : vector<40x1xf32>
    %662 = vector.broadcast %661 : vector<40x1xf32> to vector<40x128xf32>
    %663 = arith.mulf %658, %662 : vector<40x128xf32>
    %cst_148 = arith.constant 0.000000e+00 : f32
    %664 = vector.broadcast %cst_148 : f32 to vector<40x128xf32>
    %665 = arith.maximumf %663, %664 : vector<40x128xf32>
    %666 = arith.truncf %665 : vector<40x128xf32> to vector<40x128xbf16>
    %c0_149 = arith.constant 0 : index
    %c0_150 = arith.constant 0 : index
    %667 = vector.load %arg5[%c0_149, %c0_150] : memref<128x1024xbf16, #tpu.memory_space<vmem>>, vector<128x1024xbf16>
    %cst_151 = arith.constant dense<0.000000e+00> : vector<40x1024xf32>
    %668 = tpu.matmul %666, %667, %cst_151 {dimension_numbers = #tpu.dot_dimension_numbers<[1], [0], [0], [1], [0, 0, 1, 1], [], []>} : vector<40x128xbf16>, vector<128x1024xbf16>, vector<40x1024xf32> -> vector<40x1024xf32>
    %669 = vector.extract_strided_slice %581 {offsets = [0, 4], sizes = [40, 1], strides = [1, 1]} : vector<40x9xf32> to vector<40x1xf32>
    %670 = vector.broadcast %669 : vector<40x1xf32> to vector<40x128xf32>
    %671 = arith.mulf %670, %665 : vector<40x128xf32>
    %672 = vector.extract_strided_slice %581 {offsets = [0, 0], sizes = [40, 1], strides = [1, 1]} : vector<40x9xf32> to vector<40x1xf32>
    %673 = vector.extract_strided_slice %668 {offsets = [0, 0], sizes = [40, 128], strides = [1, 1]} : vector<40x1024xf32> to vector<40x128xf32>
    %674 = vector.broadcast %672 : vector<40x1xf32> to vector<40x128xf32>
    %675 = arith.mulf %674, %673 : vector<40x128xf32>
    %676 = arith.addf %671, %675 : vector<40x128xf32>
    %677 = vector.extract_strided_slice %581 {offsets = [0, 1], sizes = [40, 1], strides = [1, 1]} : vector<40x9xf32> to vector<40x1xf32>
    %678 = vector.extract_strided_slice %668 {offsets = [0, 128], sizes = [40, 128], strides = [1, 1]} : vector<40x1024xf32> to vector<40x128xf32>
    %679 = vector.broadcast %677 : vector<40x1xf32> to vector<40x128xf32>
    %680 = arith.mulf %679, %678 : vector<40x128xf32>
    %681 = arith.addf %676, %680 : vector<40x128xf32>
    %682 = vector.extract_strided_slice %581 {offsets = [0, 2], sizes = [40, 1], strides = [1, 1]} : vector<40x9xf32> to vector<40x1xf32>
    %683 = vector.extract_strided_slice %668 {offsets = [0, 256], sizes = [40, 128], strides = [1, 1]} : vector<40x1024xf32> to vector<40x128xf32>
    %684 = vector.broadcast %682 : vector<40x1xf32> to vector<40x128xf32>
    %685 = arith.mulf %684, %683 : vector<40x128xf32>
    %686 = arith.addf %681, %685 : vector<40x128xf32>
    %687 = vector.extract_strided_slice %581 {offsets = [0, 3], sizes = [40, 1], strides = [1, 1]} : vector<40x9xf32> to vector<40x1xf32>
    %688 = vector.extract_strided_slice %668 {offsets = [0, 384], sizes = [40, 128], strides = [1, 1]} : vector<40x1024xf32> to vector<40x128xf32>
    %689 = vector.broadcast %687 : vector<40x1xf32> to vector<40x128xf32>
    %690 = arith.mulf %689, %688 : vector<40x128xf32>
    %691 = arith.addf %686, %690 : vector<40x128xf32>
    %692 = vector.extract_strided_slice %581 {offsets = [0, 5], sizes = [40, 1], strides = [1, 1]} : vector<40x9xf32> to vector<40x1xf32>
    %693 = vector.extract_strided_slice %668 {offsets = [0, 512], sizes = [40, 128], strides = [1, 1]} : vector<40x1024xf32> to vector<40x128xf32>
    %694 = vector.broadcast %692 : vector<40x1xf32> to vector<40x128xf32>
    %695 = arith.mulf %694, %693 : vector<40x128xf32>
    %696 = arith.addf %691, %695 : vector<40x128xf32>
    %697 = vector.extract_strided_slice %581 {offsets = [0, 6], sizes = [40, 1], strides = [1, 1]} : vector<40x9xf32> to vector<40x1xf32>
    %698 = vector.extract_strided_slice %668 {offsets = [0, 640], sizes = [40, 128], strides = [1, 1]} : vector<40x1024xf32> to vector<40x128xf32>
    %699 = vector.broadcast %697 : vector<40x1xf32> to vector<40x128xf32>
    %700 = arith.mulf %699, %698 : vector<40x128xf32>
    %701 = arith.addf %696, %700 : vector<40x128xf32>
    %702 = vector.extract_strided_slice %581 {offsets = [0, 7], sizes = [40, 1], strides = [1, 1]} : vector<40x9xf32> to vector<40x1xf32>
    %703 = vector.extract_strided_slice %668 {offsets = [0, 768], sizes = [40, 128], strides = [1, 1]} : vector<40x1024xf32> to vector<40x128xf32>
    %704 = vector.broadcast %702 : vector<40x1xf32> to vector<40x128xf32>
    %705 = arith.mulf %704, %703 : vector<40x128xf32>
    %706 = arith.addf %701, %705 : vector<40x128xf32>
    %707 = vector.extract_strided_slice %581 {offsets = [0, 8], sizes = [40, 1], strides = [1, 1]} : vector<40x9xf32> to vector<40x1xf32>
    %708 = vector.extract_strided_slice %668 {offsets = [0, 896], sizes = [40, 128], strides = [1, 1]} : vector<40x1024xf32> to vector<40x128xf32>
    %709 = vector.broadcast %707 : vector<40x1xf32> to vector<40x128xf32>
    %710 = arith.mulf %709, %708 : vector<40x128xf32>
    %711 = arith.addf %706, %710 : vector<40x128xf32>
    %712 = arith.truncf %711 : vector<40x128xf32> to vector<40x128xbf16>
    %cst_152 = arith.constant dense<0.000000e+00> : vector<40x128xf32>
    %713 = tpu.matmul %582, %712, %cst_152 {dimension_numbers = #tpu.dot_dimension_numbers<[1], [0], [0], [1], [0, 0, 1, 1], [], []>} : vector<40x40xbf16>, vector<40x128xbf16>, vector<40x128xf32> -> vector<40x128xf32>
    %cst_153 = arith.constant dense<0.000000e+00> : vector<40xf32>
    %714 = vector.multi_reduction <add>, %713, %cst_153 [1] : vector<40x128xf32> to vector<40xf32>
    %715 = vector.shape_cast %714 : vector<40xf32> to vector<40x1xf32>
    %cst_154 = arith.constant 1.280000e+02 : f32
    %716 = vector.broadcast %cst_154 : f32 to vector<40x1xf32>
    %717 = arith.divf %715, %716 : vector<40x1xf32>
    %718 = arith.mulf %713, %713 : vector<40x128xf32>
    %cst_155 = arith.constant dense<0.000000e+00> : vector<40xf32>
    %719 = vector.multi_reduction <add>, %718, %cst_155 [1] : vector<40x128xf32> to vector<40xf32>
    %720 = vector.shape_cast %719 : vector<40xf32> to vector<40x1xf32>
    %cst_156 = arith.constant 1.280000e+02 : f32
    %721 = vector.broadcast %cst_156 : f32 to vector<40x1xf32>
    %722 = arith.divf %720, %721 : vector<40x1xf32>
    %723 = arith.mulf %717, %717 : vector<40x1xf32>
    %724 = arith.subf %722, %723 : vector<40x1xf32>
    %cst_157 = arith.constant 0.000000e+00 : f32
    %725 = vector.broadcast %cst_157 : f32 to vector<40x1xf32>
    %726 = arith.maximumf %724, %725 : vector<40x1xf32>
    %727 = vector.broadcast %717 : vector<40x1xf32> to vector<40x128xf32>
    %728 = arith.subf %713, %727 : vector<40x128xf32>
    %cst_158 = arith.constant 9.99999974E-6 : f32
    %729 = vector.broadcast %cst_158 : f32 to vector<40x1xf32>
    %730 = arith.addf %726, %729 : vector<40x1xf32>
    %731 = math.rsqrt %730 : vector<40x1xf32>
    %732 = vector.broadcast %731 : vector<40x1xf32> to vector<40x128xf32>
    %733 = arith.mulf %728, %732 : vector<40x128xf32>
    %734 = vector.extract_strided_slice %593 {offsets = [0, 0], sizes = [8, 128], strides = [1, 1]} : vector<40x128xf32> to vector<8x128xf32>
    %735 = vector.broadcast %583 : f32 to vector<8x128xf32>
    %736 = arith.mulf %735, %734 : vector<8x128xf32>
    %737 = vector.extract_strided_slice %733 {offsets = [0, 0], sizes = [8, 128], strides = [1, 1]} : vector<40x128xf32> to vector<8x128xf32>
    %738 = vector.broadcast %588 : f32 to vector<8x128xf32>
    %739 = arith.mulf %738, %737 : vector<8x128xf32>
    %740 = arith.addf %736, %739 : vector<8x128xf32>
    %741 = vector.extract_strided_slice %593 {offsets = [8, 0], sizes = [8, 128], strides = [1, 1]} : vector<40x128xf32> to vector<8x128xf32>
    %742 = vector.broadcast %584 : f32 to vector<8x128xf32>
    %743 = arith.mulf %742, %741 : vector<8x128xf32>
    %744 = arith.addf %740, %743 : vector<8x128xf32>
    %745 = vector.extract_strided_slice %733 {offsets = [8, 0], sizes = [8, 128], strides = [1, 1]} : vector<40x128xf32> to vector<8x128xf32>
    %746 = vector.broadcast %589 : f32 to vector<8x128xf32>
    %747 = arith.mulf %746, %745 : vector<8x128xf32>
    %748 = arith.addf %744, %747 : vector<8x128xf32>
    %749 = vector.extract_strided_slice %593 {offsets = [16, 0], sizes = [8, 128], strides = [1, 1]} : vector<40x128xf32> to vector<8x128xf32>
    %750 = vector.broadcast %585 : f32 to vector<8x128xf32>
    %751 = arith.mulf %750, %749 : vector<8x128xf32>
    %752 = arith.addf %748, %751 : vector<8x128xf32>
    %753 = vector.extract_strided_slice %733 {offsets = [16, 0], sizes = [8, 128], strides = [1, 1]} : vector<40x128xf32> to vector<8x128xf32>
    %754 = vector.broadcast %590 : f32 to vector<8x128xf32>
    %755 = arith.mulf %754, %753 : vector<8x128xf32>
    %756 = arith.addf %752, %755 : vector<8x128xf32>
    %757 = vector.extract_strided_slice %593 {offsets = [24, 0], sizes = [8, 128], strides = [1, 1]} : vector<40x128xf32> to vector<8x128xf32>
    %758 = vector.broadcast %586 : f32 to vector<8x128xf32>
    %759 = arith.mulf %758, %757 : vector<8x128xf32>
    %760 = arith.addf %756, %759 : vector<8x128xf32>
    %761 = vector.extract_strided_slice %733 {offsets = [24, 0], sizes = [8, 128], strides = [1, 1]} : vector<40x128xf32> to vector<8x128xf32>
    %762 = vector.broadcast %591 : f32 to vector<8x128xf32>
    %763 = arith.mulf %762, %761 : vector<8x128xf32>
    %764 = arith.addf %760, %763 : vector<8x128xf32>
    %765 = vector.extract_strided_slice %593 {offsets = [32, 0], sizes = [8, 128], strides = [1, 1]} : vector<40x128xf32> to vector<8x128xf32>
    %766 = vector.broadcast %587 : f32 to vector<8x128xf32>
    %767 = arith.mulf %766, %765 : vector<8x128xf32>
    %768 = arith.addf %764, %767 : vector<8x128xf32>
    %769 = vector.extract_strided_slice %733 {offsets = [32, 0], sizes = [8, 128], strides = [1, 1]} : vector<40x128xf32> to vector<8x128xf32>
    %770 = vector.broadcast %592 : f32 to vector<8x128xf32>
    %771 = arith.mulf %770, %769 : vector<8x128xf32>
    %772 = arith.addf %768, %771 : vector<8x128xf32>
    %c40_159 = arith.constant 40 : index
    %c0_160 = arith.constant 0 : index
    %773 = vector.load %arg23[%c40_159, %c0_160] : memref<48x128xf32, #tpu.memory_space<vmem>>, vector<8x128xf32>
    tpu.vector_store %arg23[%c40_159, %c0_160], %772 {strides = array<i32>} : memref<48x128xf32, #tpu.memory_space<vmem>>, vector<8x128xf32>,
    %c16_161 = arith.constant 16 : index
    %c0_162 = arith.constant 0 : index
    %774 = vector.load %arg23[%c16_161, %c0_162] : memref<48x128xf32, #tpu.memory_space<vmem>>, vector<32x128xf32>
    %c0_163 = arith.constant 0 : index
    %c0_164 = arith.constant 0 : index
    %775 = vector.load %arg22[%c0_163, %c0_164] : memref<32x128xf32, #tpu.memory_space<vmem>>, vector<32x128xf32>
    tpu.vector_store %arg22[%c0_163, %c0_164], %774 {strides = array<i32>} : memref<32x128xf32, #tpu.memory_space<vmem>>, vector<32x128xf32>,
    return
  }
}

</mosaic_0001>

<llo_original>
// kernel: cell_forward.1
$region0: #{cell_forward.1}
  #allocation0 [shape = 'u32[]', space=smem, size = 0x4, offset = 0x4, fixed_abs, tag = 'smem constant byte address 0x4 - core index']
  #allocation1 [shape = 'u32[144,128]{1,0:T(1,128)}', space=vmem, size = 0x12000, scoped, tag = 'internal scratch']
  #allocation2 [shape = 'f32[48,128]{1,0:T(8,128)}', space=vmem, size = 0x6000, scoped, tag = 'scratch operand']
  %s0 = inlined_call_operand.vmem [shape: f32[42], index: 0, kind: input, shape index: {}]
  %s1 = inlined_call_operand.vmem [shape: f32[16,128], index: 1, kind: input, shape index: {}]
  %s2 = inlined_call_operand.vmem [shape: f32[16,128], index: 2, kind: input, shape index: {}]
  %s3 = inlined_call_operand.hbm [shape: bf16[8,16], index: 3, kind: input, shape index: {}]
  %s4 = inlined_call_operand.hbm [shape: bf16[8,16], index: 4, kind: input, shape index: {}]
  %s5 = inlined_call_operand.vmem [shape: bf16[128,1024], index: 5, kind: input, shape index: {}]
  %s6 = inlined_call_operand.vmem [shape: f32[16,9], index: 6, kind: input, shape index: {}]
  %s7 = inlined_call_operand.hbm [shape: bf16[16,16], index: 7, kind: input, shape index: {}]
  %s8 = inlined_call_operand.vmem [shape: f32[16,9], index: 8, kind: input, shape index: {}]
  %s9 = inlined_call_operand.hbm [shape: bf16[16,16], index: 9, kind: input, shape index: {}]
  %s10 = inlined_call_operand.vmem [shape: f32[24,9], index: 10, kind: input, shape index: {}]
  %s11 = inlined_call_operand.hbm [shape: bf16[24,24], index: 11, kind: input, shape index: {}]
  %s12 = inlined_call_operand.vmem [shape: f32[24,9], index: 12, kind: input, shape index: {}]
  %s13 = inlined_call_operand.hbm [shape: bf16[24,24], index: 13, kind: input, shape index: {}]
  %s14 = inlined_call_operand.vmem [shape: f32[32,9], index: 14, kind: input, shape index: {}]
  %s15 = inlined_call_operand.vmem [shape: bf16[32,32], index: 15, kind: input, shape index: {}]
  %s16 = inlined_call_operand.vmem [shape: f32[32,9], index: 16, kind: input, shape index: {}]
  %s17 = inlined_call_operand.vmem [shape: bf16[32,32], index: 17, kind: input, shape index: {}]
  %s18 = inlined_call_operand.vmem [shape: f32[40,9], index: 18, kind: input, shape index: {}]
  %s19 = inlined_call_operand.vmem [shape: bf16[40,40], index: 19, kind: input, shape index: {}]
  %s20 = inlined_call_operand.vmem [shape: f32[40,9], index: 20, kind: input, shape index: {}]
  %s21 = inlined_call_operand.vmem [shape: bf16[40,40], index: 21, kind: input, shape index: {}]
  %s22 = inlined_call_operand.vmem [shape: f32[32,128], index: 22, kind: output, shape index: {}]
  %s23 = sld [smem:[#allocation0]]
  $region126: #{cell_forward.1} parent=0
    _
  %s25 = ssub.s32 1, %s23
  %s26 = scalar_select 0, %s25, %s23
  $region1: #{cell_forward.1} parent=0
    #allocation3 [shape = 'u8[512]{0}', space=smem, size = 0x200, scoped, tag = 'input window, operand 0, single buffered']
    #allocation4 [shape = 's32[1]{0}', space=sflag, size = 0x4, scoped, tag = 'scoped memory for cell_forward.1']
    #allocation5 [shape = 's32[1]{0}', space=sflag, size = 0x4, scoped, tag = 'scoped memory for cell_forward.1']
    #allocation6 [shape = 'u8[2048]{0}', space=vmem, size = 0x800, scoped, tag = 'input window, operand 3, single buffered']
    #allocation7 [shape = 'u8[2048]{0}', space=vmem, size = 0x800, scoped, tag = 'input window, operand 4, single buffered']
    #allocation8 [shape = 's32[1]{0}', space=sflag, size = 0x4, scoped, tag = 'scoped memory for cell_forward.1']
    #allocation9 [shape = 'u8[4096]{0}', space=vmem, size = 0x1000, scoped, tag = 'input window, operand 7, single buffered']
    #allocation10 [shape = 'u8[4096]{0}', space=vmem, size = 0x1000, scoped, tag = 'input window, operand 9, single buffered']
    #allocation11 [shape = 's32[1]{0}', space=sflag, size = 0x4, scoped, tag = 'scoped memory for cell_forward.1']
    #allocation12 [shape = 'u8[6144]{0}', space=vmem, size = 0x1800, scoped, tag = 'input window, operand 11, single buffered']
    #allocation13 [shape = 'u8[6144]{0}', space=vmem, size = 0x1800, scoped, tag = 'input window, operand 13, single buffered']
    #allocation14 [shape = 's32[1]{0}', space=sflag, size = 0x4, scoped, tag = 'scoped memory for cell_forward.1']
    %27 = vsyncpa [#allocation5], 0
    %28 = vsyncpa [#allocation4], 0
    %29 = vsyncpa [#allocation8], 0
    %30 = vsyncpa [#allocation11], 0
    %31 = vsyncpa [#allocation14], 0
    // Predicated region
    $region2: #{cell_forward.1} parent=1 // pred_check
      _
    $region3: #{cell_forward.1} parent=1 // pred_check_branch
      %33 = sbr.rel (0) target = $region5
    $region4: #{cell_forward.1} parent=1 // pred_region
      %s35 = ssub.s32 16, 16
      %36 = vsyncadd [#allocation5], %s35
      %s38 = sshll.u32 %s0, 4
      %s39 = int_to_ptr.vmem [resolvable:$true] %s38
      %41 = dma.vmem_to_smem %s39, 16, [#allocation3], [#allocation5]
    $region5: #{cell_forward.1} parent=1 // pred_fallthru
      _
    // Predicated region
    $region6: #{cell_forward.1} parent=1 // pred_check
      _
    $region7: #{cell_forward.1} parent=1 // pred_check_branch
      %43 = sbr.rel (0) target = $region9
    $region8: #{cell_forward.1} parent=1 // pred_region
      _
    $region9: #{cell_forward.1} parent=1 // pred_fallthru
      _
    // Predicated region
    $region10: #{cell_forward.1} parent=1 // pred_check
      _
    $region11: #{cell_forward.1} parent=1 // pred_check_branch
      %45 = sbr.rel (0) target = $region13
    $region12: #{cell_forward.1} parent=1 // pred_region
      _
    $region13: #{cell_forward.1} parent=1 // pred_fallthru
      _
    // Predicated region
    $region14: #{cell_forward.1} parent=1 // pred_check
      _
    $region15: #{cell_forward.1} parent=1 // pred_check_branch
      %47 = sbr.rel (0) target = $region17
    $region16: #{cell_forward.1} parent=1 // pred_region
      %s49 = ssub.s32 64, 64
      %50 = vsyncadd [#allocation4], %s49
      %s52 = sshll.u32 [#allocation6], 4
      %s53 = int_to_ptr.vmem [resolvable:$true] %s52
      %55 = dma.hbm_to_vmem [thread:$0]  %s3, 64, %s53, [#allocation4]
    $region17: #{cell_forward.1} parent=1 // pred_fallthru
      _
    // Predicated region
    $region18: #{cell_forward.1} parent=1 // pred_check
      _
    $region19: #{cell_forward.1} parent=1 // pred_check_branch
      %57 = sbr.rel (0) target = $region21
    $region20: #{cell_forward.1} parent=1 // pred_region
      %s59 = ssub.s32 64, 64
      %60 = vsyncadd [#allocation8], %s59
      %s62 = sshll.u32 [#allocation7], 4
      %s63 = int_to_ptr.vmem [resolvable:$true] %s62
      %65 = dma.hbm_to_vmem [thread:$0]  %s4, 64, %s63, [#allocation8]
    $region21: #{cell_forward.1} parent=1 // pred_fallthru
      _
    // Predicated region
    $region22: #{cell_forward.1} parent=1 // pred_check
      _
    $region23: #{cell_forward.1} parent=1 // pred_check_branch
      %67 = sbr.rel (0) target = $region25
    $region24: #{cell_forward.1} parent=1 // pred_region
      _
    $region25: #{cell_forward.1} parent=1 // pred_fallthru
      _
    // Predicated region
    $region26: #{cell_forward.1} parent=1 // pred_check
      _
    $region27: #{cell_forward.1} parent=1 // pred_check_branch
      %69 = sbr.rel (0) target = $region29
    $region28: #{cell_forward.1} parent=1 // pred_region
      _
    $region29: #{cell_forward.1} parent=1 // pred_fallthru
      _
    // Predicated region
    $region30: #{cell_forward.1} parent=1 // pred_check
      _
    $region31: #{cell_forward.1} parent=1 // pred_check_branch
      %71 = sbr.rel (0) target = $region33
    $region32: #{cell_forward.1} parent=1 // pred_region
      %s73 = ssub.s32 128, 128
      %74 = vsyncadd [#allocation8], %s73
      %s75 = sshll.u32 [#allocation9], 4
      %s76 = int_to_ptr.vmem [resolvable:$true] %s75
      %81 = dma.hbm_to_vmem [thread:$0]  %s7, 128, %s76, [#allocation8], 64, 64, 4
    $region33: #{cell_forward.1} parent=1 // pred_fallthru
      _
    // Predicated region
    $region34: #{cell_forward.1} parent=1 // pred_check
      _
    $region35: #{cell_forward.1} parent=1 // pred_check_branch
      %83 = sbr.rel (0) target = $region37
    $region36: #{cell_forward.1} parent=1 // pred_region
      _
    $region37: #{cell_forward.1} parent=1 // pred_fallthru
      _
    // Predicated region
    $region38: #{cell_forward.1} parent=1 // pred_check
      _
    $region39: #{cell_forward.1} parent=1 // pred_check_branch
      %85 = sbr.rel (0) target = $region41
    $region40: #{cell_forward.1} parent=1 // pred_region
      %s87 = ssub.s32 128, 128
      %88 = vsyncadd [#allocation11], %s87
      %s89 = sshll.u32 [#allocation10], 4
      %s90 = int_to_ptr.vmem [resolvable:$true] %s89
      %95 = dma.hbm_to_vmem [thread:$0]  %s9, 128, %s90, [#allocation11], 64, 64, 4
    $region41: #{cell_forward.1} parent=1 // pred_fallthru
      _
    // Predicated region
    $region42: #{cell_forward.1} parent=1 // pred_check
      _
    $region43: #{cell_forward.1} parent=1 // pred_check_branch
      %97 = sbr.rel (0) target = $region45
    $region44: #{cell_forward.1} parent=1 // pred_region
      _
    $region45: #{cell_forward.1} parent=1 // pred_fallthru
      _
    // Predicated region
    $region46: #{cell_forward.1} parent=1 // pred_check
      _
    $region47: #{cell_forward.1} parent=1 // pred_check_branch
      %99 = sbr.rel (0) target = $region49
    $region48: #{cell_forward.1} parent=1 // pred_region
      %s101 = ssub.s32 192, 192
      %102 = vsyncadd [#allocation11], %s101
      %s103 = sshll.u32 [#allocation12], 4
      %s104 = int_to_ptr.vmem [resolvable:$true] %s103
      %109 = dma.hbm_to_vmem [thread:$0]  %s11, 192, %s104, [#allocation11], 64, 64, 4
    $region49: #{cell_forward.1} parent=1 // pred_fallthru
      _
    // Predicated region
    $region50: #{cell_forward.1} parent=1 // pred_check
      _
    $region51: #{cell_forward.1} parent=1 // pred_check_branch
      %111 = sbr.rel (0) target = $region53
    $region52: #{cell_forward.1} parent=1 // pred_region
      _
    $region53: #{cell_forward.1} parent=1 // pred_fallthru
      _
    // Predicated region
    $region54: #{cell_forward.1} parent=1 // pred_check
      _
    $region55: #{cell_forward.1} parent=1 // pred_check_branch
      %113 = sbr.rel (0) target = $region57
    $region56: #{cell_forward.1} parent=1 // pred_region
      %s115 = ssub.s32 192, 192
      %116 = vsyncadd [#allocation14], %s115
      %s117 = sshll.u32 [#allocation13], 4
      %s118 = int_to_ptr.vmem [resolvable:$true] %s117
      %123 = dma.hbm_to_vmem [thread:$0]  %s13, 192, %s118, [#allocation14], 64, 64, 4
    $region57: #{cell_forward.1} parent=1 // pred_fallthru
      _
    // Predicated region
    $region58: #{cell_forward.1} parent=1 // pred_check
      _
    $region59: #{cell_forward.1} parent=1 // pred_check_branch
      %125 = sbr.rel (0) target = $region61
    $region60: #{cell_forward.1} parent=1 // pred_region
      _
    $region61: #{cell_forward.1} parent=1 // pred_fallthru
      _
    // Predicated region
    $region62: #{cell_forward.1} parent=1 // pred_check
      _
    $region63: #{cell_forward.1} parent=1 // pred_check_branch
      %127 = sbr.rel (0) target = $region65
    $region64: #{cell_forward.1} parent=1 // pred_region
      _
    $region65: #{cell_forward.1} parent=1 // pred_fallthru
      _
    // Predicated region
    $region66: #{cell_forward.1} parent=1 // pred_check
      _
    $region67: #{cell_forward.1} parent=1 // pred_check_branch
      %129 = sbr.rel (0) target = $region69
    $region68: #{cell_forward.1} parent=1 // pred_region
      _
    $region69: #{cell_forward.1} parent=1 // pred_fallthru
      _
    // Predicated region
    $region70: #{cell_forward.1} parent=1 // pred_check
      _
    $region71: #{cell_forward.1} parent=1 // pred_check_branch
      %131 = sbr.rel (0) target = $region73
    $region72: #{cell_forward.1} parent=1 // pred_region
      _
    $region73: #{cell_forward.1} parent=1 // pred_fallthru
      _
    // Predicated region
    $region74: #{cell_forward.1} parent=1 // pred_check
      _
    $region75: #{cell_forward.1} parent=1 // pred_check_branch
      %133 = sbr.rel (0) target = $region77
    $region76: #{cell_forward.1} parent=1 // pred_region
      _
    $region77: #{cell_forward.1} parent=1 // pred_fallthru
      _
    // Predicated region
    $region78: #{cell_forward.1} parent=1 // pred_check
      _
    $region79: #{cell_forward.1} parent=1 // pred_check_branch
      %135 = sbr.rel (0) target = $region81
    $region80: #{cell_forward.1} parent=1 // pred_region
      _
    $region81: #{cell_forward.1} parent=1 // pred_fallthru
      _
    // Predicated region
    $region82: #{cell_forward.1} parent=1 // pred_check
      _
    $region83: #{cell_forward.1} parent=1 // pred_check_branch
      %137 = sbr.rel (0) target = $region85
    $region84: #{cell_forward.1} parent=1 // pred_region
      _
    $region85: #{cell_forward.1} parent=1 // pred_fallthru
      _
    // Predicated region
    $region86: #{cell_forward.1} parent=1 // pred_check
      _
    $region87: #{cell_forward.1} parent=1 // pred_check_branch
      %139 = sbr.rel (0) target = $region89
    $region88: #{cell_forward.1} parent=1 // pred_region
      _
    $region89: #{cell_forward.1} parent=1 // pred_fallthru
      _
    // Predicated region
    $region90: #{cell_forward.1} parent=1 // pred_check
      _
    $region91: #{cell_forward.1} parent=1 // pred_check_branch
      %141 = sbr.rel (0) target = $region93
    $region92: #{cell_forward.1} parent=1 // pred_region
      %142 = dma.done [#allocation5], 16
    $region93: #{cell_forward.1} parent=1 // pred_fallthru
      _
    // Predicated region
    $region94: #{cell_forward.1} parent=1 // pred_check
      _
    $region95: #{cell_forward.1} parent=1 // pred_check_branch
      %144 = sbr.rel (0) target = $region97
    $region96: #{cell_forward.1} parent=1 // pred_region
      %145 = dma.done [#allocation4], 64
    $region97: #{cell_forward.1} parent=1 // pred_fallthru
      _
    // Predicated region
    $region98: #{cell_forward.1} parent=1 // pred_check
      _
    $region99: #{cell_forward.1} parent=1 // pred_check_branch
      %147 = sbr.rel (0) target = $region101
    $region100: #{cell_forward.1} parent=1 // pred_region
      %148 = dma.done [#allocation8], 64
    $region101: #{cell_forward.1} parent=1 // pred_fallthru
      _
    // Predicated region
    $region102: #{cell_forward.1} parent=1 // pred_check
      _
    $region103: #{cell_forward.1} parent=1 // pred_check_branch
      %150 = sbr.rel (0) target = $region105
    $region104: #{cell_forward.1} parent=1 // pred_region
      %151 = dma.done [#allocation8], 128
    $region105: #{cell_forward.1} parent=1 // pred_fallthru
      _
    // Predicated region
    $region106: #{cell_forward.1} parent=1 // pred_check
      _
    $region107: #{cell_forward.1} parent=1 // pred_check_branch
      %153 = sbr.rel (0) target = $region109
    $region108: #{cell_forward.1} parent=1 // pred_region
      %154 = dma.done [#allocation11], 128
    $region109: #{cell_forward.1} parent=1 // pred_fallthru
      _
    // Predicated region
    $region110: #{cell_forward.1} parent=1 // pred_check
      _
    $region111: #{cell_forward.1} parent=1 // pred_check_branch
      %156 = sbr.rel (0) target = $region113
    $region112: #{cell_forward.1} parent=1 // pred_region
      %157 = dma.done [#allocation11], 192
    $region113: #{cell_forward.1} parent=1 // pred_fallthru
      _
    // Predicated region
    $region114: #{cell_forward.1} parent=1 // pred_check
      _
    $region115: #{cell_forward.1} parent=1 // pred_check_branch
      %159 = sbr.rel (0) target = $region117
    $region116: #{cell_forward.1} parent=1 // pred_region
      %160 = dma.done [#allocation14], 192
    $region117: #{cell_forward.1} parent=1 // pred_fallthru
      _
    %161 = sfence
    %v163 = vld [vmem:[%s1] sm:$0xff]
    %v164 = vld [vmem:[%s1 + $0x8] sm:$0xff]
    %v165 = vld [vmem:[#allocation6] sm:$0xf]
    %v166 = vmax.f32 %v163, 0.0
    %v167 = vmax.f32 %v164, 0.0
    %v168 = vpack.c.bf16 %v167, %v166
    %vm169 = vcmask 130048
    %v171 = vsel %vm169, %v165, 0
    %173 = vmatprep.subr.bf16.mxu0 0
    %174 = vmatpush1.bf16.msra.mxu0 %v168
    %175 = vmatprep.subr.bf16.mxu0 0
    %176 = vmatpush1.bf16.msra.mxu0 0
    %177 = vmatprep.subr.bf16.mxu0 0
    %178 = vmatpush1.bf16.msra.mxu0 0
    %179 = vmatprep.subr.bf16.mxu0 0
    %180 = vmatpush1.bf16.msra.mxu0 0
    %181 = vmatprep.subr.bf16.mxu0 0
    %182 = vmatpush1.bf16.msra.mxu0 0
    %183 = vmatprep.subr.bf16.mxu0 0
    %184 = vmatpush1.bf16.msra.mxu0 0
    %185 = vmatprep.subr.bf16.mxu0 0
    %186 = vmatpush1.bf16.msra.mxu0 0
    %187 = vmatprep.subr.bf16.mxu0 0
    %188 = vmatpush1.bf16.msra.mxu0 0
    %189 = vmatprep.subr.bf16.mxu0 0
    %190 = vmatpush1.bf16.msra.mxu0 0
    %191 = vmatprep.subr.bf16.mxu0 0
    %192 = vmatpush1.bf16.msra.mxu0 0
    %193 = vmatprep.subr.bf16.mxu0 0
    %194 = vmatpush1.bf16.msra.mxu0 0
    %195 = vmatprep.subr.bf16.mxu0 0
    %196 = vmatpush1.bf16.msra.mxu0 0
    %197 = vmatprep.subr.bf16.mxu0 0
    %198 = vmatpush1.bf16.msra.mxu0 0
    %199 = vmatprep.subr.bf16.mxu0 0
    %200 = vmatpush1.bf16.msra.mxu0 0
    %201 = vmatprep.subr.bf16.mxu0 0
    %202 = vmatpush1.bf16.msra.mxu0 0
    %203 = vmatprep.subr.bf16.mxu0 0
    %204 = vmatpush1.bf16.msra.mxu0 0
    %205 = vmatprep.mubr.bf16.mxu0 0
    %206 = vmatmul.mubr.bf16.gmra.mrb[0].mxu0 %v171
    %v207 = vpop.f32.mrb[0].mxu0
    %v208 = vadd.f32 0.0, %v207
    %v209 = vpop.f32.mrb[0].mxu0
    %v210 = vpop.f32.mrb[0].mxu0
    %v211 = vpop.f32.mrb[0].mxu0
    %212 = vdwg.mxu0
    %213 = vadd.xlane.f32.xlu0 %v208
    %v214 = vpop.xlane.xlu0 %213
    %v215 = vrcp.pop 128.0
    %v216 = vmul.f32 %v214, %v215
    %v217 = vmul.f32 %v208, %v208
    %218 = vadd.xlane.f32.xlu0 %v217
    %v219 = vpop.xlane.xlu0 %218
    %v220 = vmul.f32 %v219, %v215
    %v221 = vmul.f32 %v216, %v216
    %v222 = vsub.f32 %v220, %v221
    %v223 = vmax.f32 %v222, 0.0
    %v224 = vsub.f32 %v208, %v216
    %v225 = vadd.f32 %v223, 1e-05
    %v226 = vrsqrt.pop %v225
    %v227 = vmul.f32 %v224, %v226
    %228 = vst [vmem:[#allocation2] sm:$0xff] %v227
    %v229 = vld [vmem:[%s2] sm:$0xff]
    %v230 = vld [vmem:[%s2 + $0x8] sm:$0xff]
    %v231 = vld [vmem:[#allocation7] sm:$0xf]
    %v232 = vmax.f32 %v229, 0.0
    %v233 = vmax.f32 %v230, 0.0
    %v234 = vpack.c.bf16 %v233, %v232
    %v236 = vsel %vm169, %v231, 0
    %238 = vmatprep.subr.bf16.mxu0 0
    %239 = vmatpush1.bf16.msra.mxu0 %v234
    %240 = vmatprep.subr.bf16.mxu0 0
    %241 = vmatpush1.bf16.msra.mxu0 0
    %242 = vmatprep.subr.bf16.mxu0 0
    %243 = vmatpush1.bf16.msra.mxu0 0
    %244 = vmatprep.subr.bf16.mxu0 0
    %245 = vmatpush1.bf16.msra.mxu0 0
    %246 = vmatprep.subr.bf16.mxu0 0
    %247 = vmatpush1.bf16.msra.mxu0 0
    %248 = vmatprep.subr.bf16.mxu0 0
    %249 = vmatpush1.bf16.msra.mxu0 0
    %250 = vmatprep.subr.bf16.mxu0 0
    %251 = vmatpush1.bf16.msra.mxu0 0
    %252 = vmatprep.subr.bf16.mxu0 0
    %253 = vmatpush1.bf16.msra.mxu0 0
    %254 = vmatprep.subr.bf16.mxu0 0
    %255 = vmatpush1.bf16.msra.mxu0 0
    %256 = vmatprep.subr.bf16.mxu0 0
    %257 = vmatpush1.bf16.msra.mxu0 0
    %258 = vmatprep.subr.bf16.mxu0 0
    %259 = vmatpush1.bf16.msra.mxu0 0
    %260 = vmatprep.subr.bf16.mxu0 0
    %261 = vmatpush1.bf16.msra.mxu0 0
    %262 = vmatprep.subr.bf16.mxu0 0
    %263 = vmatpush1.bf16.msra.mxu0 0
    %264 = vmatprep.subr.bf16.mxu0 0
    %265 = vmatpush1.bf16.msra.mxu0 0
    %266 = vmatprep.subr.bf16.mxu0 0
    %267 = vmatpush1.bf16.msra.mxu0 0
    %268 = vmatprep.subr.bf16.mxu0 0
    %269 = vmatpush1.bf16.msra.mxu0 0
    %270 = vmatprep.mubr.bf16.mxu0 0
    %271 = vmatmul.mubr.bf16.gmra.mrb[0].mxu0 %v236
    %v272 = vpop.f32.mrb[0].mxu0
    %v273 = vadd.f32 0.0, %v272
    %v274 = vpop.f32.mrb[0].mxu0
    %v275 = vpop.f32.mrb[0].mxu0
    %v276 = vpop.f32.mrb[0].mxu0
    %277 = vdwg.mxu0
    %278 = vadd.xlane.f32.xlu0 %v273
    %v279 = vpop.xlane.xlu0 %278
    %v280 = vmul.f32 %v279, %v215
    %v281 = vmul.f32 %v273, %v273
    %282 = vadd.xlane.f32.xlu0 %v281
    %v283 = vpop.xlane.xlu0 %282
    %v284 = vmul.f32 %v283, %v215
    %v285 = vmul.f32 %v280, %v280
    %v286 = vsub.f32 %v284, %v285
    %v287 = vmax.f32 %v286, 0.0
    %v288 = vsub.f32 %v273, %v280
    %v289 = vadd.f32 %v287, 1e-05
    %v290 = vrsqrt.pop %v289
    %v291 = vmul.f32 %v288, %v290
    %292 = vst [vmem:[#allocation2 + $0x8] sm:$0xff] %v291
    %v293 = vld [vmem:[%s6] sm:$0xff]
    %v294 = vld [vmem:[%s6 + $0x8] sm:$0xff]
    %v295 = vld [vmem:[#allocation9] sm:$0xf]
    %v296 = vld [vmem:[#allocation9 + $0x4] sm:$0xf]
    %v297 = vld [vmem:[%s8] sm:$0xff]
    %v298 = vld [vmem:[%s8 + $0x8] sm:$0xff]
    %v299 = vld [vmem:[#allocation10] sm:$0xf]
    %v300 = vld [vmem:[#allocation10 + $0x4] sm:$0xf]
    %s301 = sld [smem:[#allocation3 + $0x1]]
    %s302 = sld [smem:[#allocation3 + $0x4]]
    %s303 = sld [smem:[#allocation3 + $0x2]]
    %s304 = sld [smem:[#allocation3 + $0x5]]
    %v305 = vld [vmem:[#allocation2] sm:$0xff]
    %v306 = vld [vmem:[#allocation2 + $0x8] sm:$0xff]
    %v307 = vmax.f32 %v305, 0.0
    %v308 = vmax.f32 %v306, 0.0
    %v309 = vpack.c.bf16 %v308, %v307
    %v310 = vld [vmem:[%s5] sm:$0xff]
    %v311 = vld [vmem:[%s5 + $0x8] sm:$0xff]
    %v312 = vld [vmem:[%s5 + $0x10] sm:$0xff]
    %v313 = vld [vmem:[%s5 + $0x18] sm:$0xff]
    %v314 = vld [vmem:[%s5 + $0x20] sm:$0xff]
    %v315 = vld [vmem:[%s5 + $0x28] sm:$0xff]
    %v316 = vld [vmem:[%s5 + $0x30] sm:$0xff]
    %v317 = vld [vmem:[%s5 + $0x38] sm:$0xff]
    %v318 = vld [vmem:[%s5 + $0x40] sm:$0xff]
    %v319 = vld [vmem:[%s5 + $0x48] sm:$0xff]
    %v320 = vld [vmem:[%s5 + $0x50] sm:$0xff]
    %v321 = vld [vmem:[%s5 + $0x58] sm:$0xff]
    %v322 = vld [vmem:[%s5 + $0x60] sm:$0xff]
    %v323 = vld [vmem:[%s5 + $0x68] sm:$0xff]
    %v324 = vld [vmem:[%s5 + $0x70] sm:$0xff]
    %v325 = vld [vmem:[%s5 + $0x78] sm:$0xff]
    %v326 = vld [vmem:[%s5 + $0x80] sm:$0xff]
    %v327 = vld [vmem:[%s5 + $0x88] sm:$0xff]
    %v328 = vld [vmem:[%s5 + $0x90] sm:$0xff]
    %v329 = vld [vmem:[%s5 + $0x98] sm:$0xff]
    %v330 = vld [vmem:[%s5 + $0xa0] sm:$0xff]
    %v331 = vld [vmem:[%s5 + $0xa8] sm:$0xff]
    %v332 = vld [vmem:[%s5 + $0xb0] sm:$0xff]
    %v333 = vld [vmem:[%s5 + $0xb8] sm:$0xff]
    %v334 = vld [vmem:[%s5 + $0xc0] sm:$0xff]
    %v335 = vld [vmem:[%s5 + $0xc8] sm:$0xff]
    %v336 = vld [vmem:[%s5 + $0xd0] sm:$0xff]
    %v337 = vld [vmem:[%s5 + $0xd8] sm:$0xff]
    %v338 = vld [vmem:[%s5 + $0xe0] sm:$0xff]
    %v339 = vld [vmem:[%s5 + $0xe8] sm:$0xff]
    %v340 = vld [vmem:[%s5 + $0xf0] sm:$0xff]
    %v341 = vld [vmem:[%s5 + $0xf8] sm:$0xff]
    %v342 = vld [vmem:[%s5 + $0x100] sm:$0xff]
    %v343 = vld [vmem:[%s5 + $0x108] sm:$0xff]
    %v344 = vld [vmem:[%s5 + $0x110] sm:$0xff]
    %v345 = vld [vmem:[%s5 + $0x118] sm:$0xff]
    %v346 = vld [vmem:[%s5 + $0x120] sm:$0xff]
    %v347 = vld [vmem:[%s5 + $0x128] sm:$0xff]
    %v348 = vld [vmem:[%s5 + $0x130] sm:$0xff]
    %v349 = vld [vmem:[%s5 + $0x138] sm:$0xff]
    %v350 = vld [vmem:[%s5 + $0x140] sm:$0xff]
    %v351 = vld [vmem:[%s5 + $0x148] sm:$0xff]
    %v352 = vld [vmem:[%s5 + $0x150] sm:$0xff]
    %v353 = vld [vmem:[%s5 + $0x158] sm:$0xff]
    %v354 = vld [vmem:[%s5 + $0x160] sm:$0xff]
    %v355 = vld [vmem:[%s5 + $0x168] sm:$0xff]
    %v356 = vld [vmem:[%s5 + $0x170] sm:$0xff]
    %v357 = vld [vmem:[%s5 + $0x178] sm:$0xff]
    %v358 = vld [vmem:[%s5 + $0x180] sm:$0xff]
    %v359 = vld [vmem:[%s5 + $0x188] sm:$0xff]
    %v360 = vld [vmem:[%s5 + $0x190] sm:$0xff]
    %v361 = vld [vmem:[%s5 + $0x198] sm:$0xff]
    %v362 = vld [vmem:[%s5 + $0x1a0] sm:$0xff]
    %v363 = vld [vmem:[%s5 + $0x1a8] sm:$0xff]
    %v364 = vld [vmem:[%s5 + $0x1b0] sm:$0xff]
    %v365 = vld [vmem:[%s5 + $0x1b8] sm:$0xff]
    %v366 = vld [vmem:[%s5 + $0x1c0] sm:$0xff]
    %v367 = vld [vmem:[%s5 + $0x1c8] sm:$0xff]
    %v368 = vld [vmem:[%s5 + $0x1d0] sm:$0xff]
    %v369 = vld [vmem:[%s5 + $0x1d8] sm:$0xff]
    %v370 = vld [vmem:[%s5 + $0x1e0] sm:$0xff]
    %v371 = vld [vmem:[%s5 + $0x1e8] sm:$0xff]
    %v372 = vld [vmem:[%s5 + $0x1f0] sm:$0xff]
    %v373 = vld [vmem:[%s5 + $0x1f8] sm:$0xff]
    %v438 = vunpack.c.l.b16 %v310
    %v439 = vunpack.c.h.b16 %v310
    %v440 = vunpack.c.l.b16 %v311
    %v441 = vunpack.c.h.b16 %v311
    %v442 = vunpack.c.l.b16 %v312
    %v443 = vunpack.c.h.b16 %v312
    %v444 = vunpack.c.l.b16 %v313
    %v445 = vunpack.c.h.b16 %v313
    %v446 = vunpack.c.l.b16 %v314
    %v447 = vunpack.c.h.b16 %v314
    %v448 = vunpack.c.l.b16 %v315
    %v449 = vunpack.c.h.b16 %v315
    %v450 = vunpack.c.l.b16 %v316
    %v451 = vunpack.c.h.b16 %v316
    %v452 = vunpack.c.l.b16 %v317
    %v453 = vunpack.c.h.b16 %v317
    %v454 = vunpack.c.l.b16 %v318
    %v455 = vunpack.c.h.b16 %v318
    %v456 = vunpack.c.l.b16 %v319
    %v457 = vunpack.c.h.b16 %v319
    %v458 = vunpack.c.l.b16 %v320
    %v459 = vunpack.c.h.b16 %v320
    %v460 = vunpack.c.l.b16 %v321
    %v461 = vunpack.c.h.b16 %v321
    %v462 = vunpack.c.l.b16 %v322
    %v463 = vunpack.c.h.b16 %v322
    %v464 = vunpack.c.l.b16 %v323
    %v465 = vunpack.c.h.b16 %v323
    %v466 = vunpack.c.l.b16 %v324
    %v467 = vunpack.c.h.b16 %v324
    %v468 = vunpack.c.l.b16 %v325
    %v469 = vunpack.c.h.b16 %v325
    %v470 = vunpack.c.l.b16 %v326
    %v471 = vunpack.c.h.b16 %v326
    %v472 = vunpack.c.l.b16 %v327
    %v473 = vunpack.c.h.b16 %v327
    %v474 = vunpack.c.l.b16 %v328
    %v475 = vunpack.c.h.b16 %v328
    %v476 = vunpack.c.l.b16 %v329
    %v477 = vunpack.c.h.b16 %v329
    %v478 = vunpack.c.l.b16 %v330
    %v479 = vunpack.c.h.b16 %v330
    %v480 = vunpack.c.l.b16 %v331
    %v481 = vunpack.c.h.b16 %v331
    %v482 = vunpack.c.l.b16 %v332
    %v483 = vunpack.c.h.b16 %v332
    %v484 = vunpack.c.l.b16 %v333
    %v485 = vunpack.c.h.b16 %v333
    %v486 = vunpack.c.l.b16 %v334
    %v487 = vunpack.c.h.b16 %v334
    %v488 = vunpack.c.l.b16 %v335
    %v489 = vunpack.c.h.b16 %v335
    %v490 = vunpack.c.l.b16 %v336
    %v491 = vunpack.c.h.b16 %v336
    %v492 = vunpack.c.l.b16 %v337
    %v493 = vunpack.c.h.b16 %v337
    %v494 = vunpack.c.l.b16 %v338
    %v495 = vunpack.c.h.b16 %v338
    %v496 = vunpack.c.l.b16 %v339
    %v497 = vunpack.c.h.b16 %v339
    %v498 = vunpack.c.l.b16 %v340
    %v499 = vunpack.c.h.b16 %v340
    %v500 = vunpack.c.l.b16 %v341
    %v501 = vunpack.c.h.b16 %v341
    %v502 = vunpack.c.l.b16 %v342
    %v503 = vunpack.c.h.b16 %v342
    %v504 = vunpack.c.l.b16 %v343
    %v505 = vunpack.c.h.b16 %v343
    %v506 = vunpack.c.l.b16 %v344
    %v507 = vunpack.c.h.b16 %v344
    %v508 = vunpack.c.l.b16 %v345
    %v509 = vunpack.c.h.b16 %v345
    %v510 = vunpack.c.l.b16 %v346
    %v511 = vunpack.c.h.b16 %v346
    %v512 = vunpack.c.l.b16 %v347
    %v513 = vunpack.c.h.b16 %v347
    %v514 = vunpack.c.l.b16 %v348
    %v515 = vunpack.c.h.b16 %v348
    %v516 = vunpack.c.l.b16 %v349
    %v517 = vunpack.c.h.b16 %v349
    %v518 = vunpack.c.l.b16 %v350
    %v519 = vunpack.c.h.b16 %v350
    %v520 = vunpack.c.l.b16 %v351
    %v521 = vunpack.c.h.b16 %v351
    %v522 = vunpack.c.l.b16 %v352
    %v523 = vunpack.c.h.b16 %v352
    %v524 = vunpack.c.l.b16 %v353
    %v525 = vunpack.c.h.b16 %v353
    %v526 = vunpack.c.l.b16 %v354
    %v527 = vunpack.c.h.b16 %v354
    %v528 = vunpack.c.l.b16 %v355
    %v529 = vunpack.c.h.b16 %v355
    %v530 = vunpack.c.l.b16 %v356
    %v531 = vunpack.c.h.b16 %v356
    %v532 = vunpack.c.l.b16 %v357
    %v533 = vunpack.c.h.b16 %v357
    %v534 = vunpack.c.l.b16 %v358
    %v535 = vunpack.c.h.b16 %v358
    %v536 = vunpack.c.l.b16 %v359
    %v537 = vunpack.c.h.b16 %v359
    %v538 = vunpack.c.l.b16 %v360
    %v539 = vunpack.c.h.b16 %v360
    %v540 = vunpack.c.l.b16 %v361
    %v541 = vunpack.c.h.b16 %v361
    %v542 = vunpack.c.l.b16 %v362
    %v543 = vunpack.c.h.b16 %v362
    %v544 = vunpack.c.l.b16 %v363
    %v545 = vunpack.c.h.b16 %v363
    %v546 = vunpack.c.l.b16 %v364
    %v547 = vunpack.c.h.b16 %v364
    %v548 = vunpack.c.l.b16 %v365
    %v549 = vunpack.c.h.b16 %v365
    %v550 = vunpack.c.l.b16 %v366
    %v551 = vunpack.c.h.b16 %v366
    %v552 = vunpack.c.l.b16 %v367
    %v553 = vunpack.c.h.b16 %v367
    %v554 = vunpack.c.l.b16 %v368
    %v555 = vunpack.c.h.b16 %v368
    %v556 = vunpack.c.l.b16 %v369
    %v557 = vunpack.c.h.b16 %v369
    %v558 = vunpack.c.l.b16 %v370
    %v559 = vunpack.c.h.b16 %v370
    %v560 = vunpack.c.l.b16 %v371
    %v561 = vunpack.c.h.b16 %v371
    %v562 = vunpack.c.l.b16 %v372
    %v563 = vunpack.c.h.b16 %v372
    %v564 = vunpack.c.l.b16 %v373
    %v565 = vunpack.c.h.b16 %v373
    %v566 = vpack.c.b16 %v446, %v438
    %v567 = vpack.c.b16 %v447, %v439
    %v568 = vpack.c.b16 %v448, %v440
    %v569 = vpack.c.b16 %v449, %v441
    %v570 = vpack.c.b16 %v450, %v442
    %v571 = vpack.c.b16 %v451, %v443
    %v572 = vpack.c.b16 %v452, %v444
    %v573 = vpack.c.b16 %v453, %v445
    %v574 = vpack.c.b16 %v462, %v454
    %v575 = vpack.c.b16 %v463, %v455
    %v576 = vpack.c.b16 %v464, %v456
    %v577 = vpack.c.b16 %v465, %v457
    %v578 = vpack.c.b16 %v466, %v458
    %v579 = vpack.c.b16 %v467, %v459
    %v580 = vpack.c.b16 %v468, %v460
    %v581 = vpack.c.b16 %v469, %v461
    %v582 = vpack.c.b16 %v478, %v470
    %v583 = vpack.c.b16 %v479, %v471
    %v584 = vpack.c.b16 %v480, %v472
    %v585 = vpack.c.b16 %v481, %v473
    %v586 = vpack.c.b16 %v482, %v474
    %v587 = vpack.c.b16 %v483, %v475
    %v588 = vpack.c.b16 %v484, %v476
    %v589 = vpack.c.b16 %v485, %v477
    %v590 = vpack.c.b16 %v494, %v486
    %v591 = vpack.c.b16 %v495, %v487
    %v592 = vpack.c.b16 %v496, %v488
    %v593 = vpack.c.b16 %v497, %v489
    %v594 = vpack.c.b16 %v498, %v490
    %v595 = vpack.c.b16 %v499, %v491
    %v596 = vpack.c.b16 %v500, %v492
    %v597 = vpack.c.b16 %v501, %v493
    %v598 = vpack.c.b16 %v510, %v502
    %v599 = vpack.c.b16 %v511, %v503
    %v600 = vpack.c.b16 %v512, %v504
    %v601 = vpack.c.b16 %v513, %v505
    %v602 = vpack.c.b16 %v514, %v506
    %v603 = vpack.c.b16 %v515, %v507
    %v604 = vpack.c.b16 %v516, %v508
    %v605 = vpack.c.b16 %v517, %v509
    %v606 = vpack.c.b16 %v526, %v518
    %v607 = vpack.c.b16 %v527, %v519
    %v608 = vpack.c.b16 %v528, %v520
    %v609 = vpack.c.b16 %v529, %v521
    %v610 = vpack.c.b16 %v530, %v522
    %v611 = vpack.c.b16 %v531, %v523
    %v612 = vpack.c.b16 %v532, %v524
    %v613 = vpack.c.b16 %v533, %v525
    %v614 = vpack.c.b16 %v542, %v534
    %v615 = vpack.c.b16 %v543, %v535
    %v616 = vpack.c.b16 %v544, %v536
    %v617 = vpack.c.b16 %v545, %v537
    %v618 = vpack.c.b16 %v546, %v538
    %v619 = vpack.c.b16 %v547, %v539
    %v620 = vpack.c.b16 %v548, %v540
    %v621 = vpack.c.b16 %v549, %v541
    %v622 = vpack.c.b16 %v558, %v550
    %v623 = vpack.c.b16 %v559, %v551
    %v624 = vpack.c.b16 %v560, %v552
    %v625 = vpack.c.b16 %v561, %v553
    %v626 = vpack.c.b16 %v562, %v554
    %v627 = vpack.c.b16 %v563, %v555
    %v628 = vpack.c.b16 %v564, %v556
    %v629 = vpack.c.b16 %v565, %v557
    %694 = vmatprep.subr.bf16.mxu0 %v567
    %695 = vmatpush1.bf16.msra.mxu0 %v566
    %696 = vmatprep.subr.bf16.mxu0 %v575
    %697 = vmatpush1.bf16.msra.mxu0 %v574
    %698 = vmatprep.subr.bf16.mxu0 %v583
    %699 = vmatpush1.bf16.msra.mxu0 %v582
    %700 = vmatprep.subr.bf16.mxu0 %v591
    %701 = vmatpush1.bf16.msra.mxu0 %v590
    %702 = vmatprep.subr.bf16.mxu0 %v599
    %703 = vmatpush1.bf16.msra.mxu0 %v598
    %704 = vmatprep.subr.bf16.mxu0 %v607
    %705 = vmatpush1.bf16.msra.mxu0 %v606
    %706 = vmatprep.subr.bf16.mxu0 %v615
    %707 = vmatpush1.bf16.msra.mxu0 %v614
    %708 = vmatprep.subr.bf16.mxu0 %v623
    %709 = vmatpush1.bf16.msra.mxu0 %v622
    %710 = vmatprep.subr.bf16.mxu0 0
    %711 = vmatpush1.bf16.msra.mxu0 0
    %712 = vmatprep.subr.bf16.mxu0 0
    %713 = vmatpush1.bf16.msra.mxu0 0
    %714 = vmatprep.subr.bf16.mxu0 0
    %715 = vmatpush1.bf16.msra.mxu0 0
    %716 = vmatprep.subr.bf16.mxu0 0
    %717 = vmatpush1.bf16.msra.mxu0 0
    %718 = vmatprep.subr.bf16.mxu0 0
    %719 = vmatpush1.bf16.msra.mxu0 0
    %720 = vmatprep.subr.bf16.mxu0 0
    %721 = vmatpush1.bf16.msra.mxu0 0
    %722 = vmatprep.subr.bf16.mxu0 0
    %723 = vmatpush1.bf16.msra.mxu0 0
    %724 = vmatprep.subr.bf16.mxu0 0
    %725 = vmatpush1.bf16.msra.mxu0 0
    %726 = vmatprep.mubr.bf16.mxu0 0
    %727 = vmatmul.mubr.bf16.gmra.mrb[0].mxu0 %v309
    %v728 = vpop.f32.mrb[0].mxu0
    %v729 = vadd.f32 0.0, %v728
    %v730 = vpop.f32.mrb[0].mxu0
    %v731 = vadd.f32 0.0, %v730
    %v732 = vpop.f32.mrb[0].mxu0
    %v733 = vadd.f32 0.0, %v732
    %v734 = vpop.f32.mrb[0].mxu0
    %v735 = vadd.f32 0.0, %v734
    %736 = vdwg.mxu0
    %737 = vmatprep.subr.bf16.mxu0 %v569
    %738 = vmatpush1.bf16.msra.mxu0 %v568
    %739 = vmatprep.subr.bf16.mxu0 %v577
    %740 = vmatpush1.bf16.msra.mxu0 %v576
    %741 = vmatprep.subr.bf16.mxu0 %v585
    %742 = vmatpush1.bf16.msra.mxu0 %v584
    %743 = vmatprep.subr.bf16.mxu0 %v593
    %744 = vmatpush1.bf16.msra.mxu0 %v592
    %745 = vmatprep.subr.bf16.mxu0 %v601
    %746 = vmatpush1.bf16.msra.mxu0 %v600
    %747 = vmatprep.subr.bf16.mxu0 %v609
    %748 = vmatpush1.bf16.msra.mxu0 %v608
    %749 = vmatprep.subr.bf16.mxu0 %v617
    %750 = vmatpush1.bf16.msra.mxu0 %v616
    %751 = vmatprep.subr.bf16.mxu0 %v625
    %752 = vmatpush1.bf16.msra.mxu0 %v624
    %753 = vmatprep.subr.bf16.mxu0 0
    %754 = vmatpush1.bf16.msra.mxu0 0
    %755 = vmatprep.subr.bf16.mxu0 0
    %756 = vmatpush1.bf16.msra.mxu0 0
    %757 = vmatprep.subr.bf16.mxu0 0
    %758 = vmatpush1.bf16.msra.mxu0 0
    %759 = vmatprep.subr.bf16.mxu0 0
    %760 = vmatpush1.bf16.msra.mxu0 0
    %761 = vmatprep.subr.bf16.mxu0 0
    %762 = vmatpush1.bf16.msra.mxu0 0
    %763 = vmatprep.subr.bf16.mxu0 0
    %764 = vmatpush1.bf16.msra.mxu0 0
    %765 = vmatprep.subr.bf16.mxu0 0
    %766 = vmatpush1.bf16.msra.mxu0 0
    %767 = vmatprep.subr.bf16.mxu0 0
    %768 = vmatpush1.bf16.msra.mxu0 0
    %769 = vmatprep.mubr.bf16.mxu0 0
    %770 = vmatmul.mubr.bf16.gmra.mrb[0].mxu0 %v309
    %v771 = vpop.f32.mrb[0].mxu0
    %v772 = vadd.f32 0.0, %v771
    %v773 = vpop.f32.mrb[0].mxu0
    %v774 = vadd.f32 0.0, %v773
    %v775 = vpop.f32.mrb[0].mxu0
    %v776 = vadd.f32 0.0, %v775
    %v777 = vpop.f32.mrb[0].mxu0
    %v778 = vadd.f32 0.0, %v777
    %779 = vdwg.mxu0
    %780 = vmatprep.subr.bf16.mxu0 %v571
    %781 = vmatpush1.bf16.msra.mxu0 %v570
    %782 = vmatprep.subr.bf16.mxu0 %v579
    %783 = vmatpush1.bf16.msra.mxu0 %v578
    %784 = vmatprep.subr.bf16.mxu0 %v587
    %785 = vmatpush1.bf16.msra.mxu0 %v586
    %786 = vmatprep.subr.bf16.mxu0 %v595
    %787 = vmatpush1.bf16.msra.mxu0 %v594
    %788 = vmatprep.subr.bf16.mxu0 %v603
    %789 = vmatpush1.bf16.msra.mxu0 %v602
    %790 = vmatprep.subr.bf16.mxu0 %v611
    %791 = vmatpush1.bf16.msra.mxu0 %v610
    %792 = vmatprep.subr.bf16.mxu0 %v619
    %793 = vmatpush1.bf16.msra.mxu0 %v618
    %794 = vmatprep.subr.bf16.mxu0 %v627
    %795 = vmatpush1.bf16.msra.mxu0 %v626
    %796 = vmatprep.subr.bf16.mxu0 0
    %797 = vmatpush1.bf16.msra.mxu0 0
    %798 = vmatprep.subr.bf16.mxu0 0
    %799 = vmatpush1.bf16.msra.mxu0 0
    %800 = vmatprep.subr.bf16.mxu0 0
    %801 = vmatpush1.bf16.msra.mxu0 0
    %802 = vmatprep.subr.bf16.mxu0 0
    %803 = vmatpush1.bf16.msra.mxu0 0
    %804 = vmatprep.subr.bf16.mxu0 0
    %805 = vmatpush1.bf16.msra.mxu0 0
    %806 = vmatprep.subr.bf16.mxu0 0
    %807 = vmatpush1.bf16.msra.mxu0 0
    %808 = vmatprep.subr.bf16.mxu0 0
    %809 = vmatpush1.bf16.msra.mxu0 0
    %810 = vmatprep.subr.bf16.mxu0 0
    %811 = vmatpush1.bf16.msra.mxu0 0
    %812 = vmatprep.mubr.bf16.mxu0 0
    %813 = vmatmul.mubr.bf16.gmra.mrb[0].mxu0 %v309
    %v814 = vpop.f32.mrb[0].mxu0
    %v815 = vadd.f32 0.0, %v814
    %v816 = vpop.f32.mrb[0].mxu0
    %v817 = vadd.f32 0.0, %v816
    %v818 = vpop.f32.mrb[0].mxu0
    %v819 = vadd.f32 0.0, %v818
    %v820 = vpop.f32.mrb[0].mxu0
    %v821 = vadd.f32 0.0, %v820
    %822 = vdwg.mxu0
    %823 = vmatprep.subr.bf16.mxu0 %v573
    %824 = vmatpush1.bf16.msra.mxu0 %v572
    %825 = vmatprep.subr.bf16.mxu0 %v581
    %826 = vmatpush1.bf16.msra.mxu0 %v580
    %827 = vmatprep.subr.bf16.mxu0 %v589
    %828 = vmatpush1.bf16.msra.mxu0 %v588
    %829 = vmatprep.subr.bf16.mxu0 %v597
    %830 = vmatpush1.bf16.msra.mxu0 %v596
    %831 = vmatprep.subr.bf16.mxu0 %v605
    %832 = vmatpush1.bf16.msra.mxu0 %v604
    %833 = vmatprep.subr.bf16.mxu0 %v613
    %834 = vmatpush1.bf16.msra.mxu0 %v612
    %835 = vmatprep.subr.bf16.mxu0 %v621
    %836 = vmatpush1.bf16.msra.mxu0 %v620
    %837 = vmatprep.subr.bf16.mxu0 %v629
    %838 = vmatpush1.bf16.msra.mxu0 %v628
    %839 = vmatprep.subr.bf16.mxu0 0
    %840 = vmatpush1.bf16.msra.mxu0 0
    %841 = vmatprep.subr.bf16.mxu0 0
    %842 = vmatpush1.bf16.msra.mxu0 0
    %843 = vmatprep.subr.bf16.mxu0 0
    %844 = vmatpush1.bf16.msra.mxu0 0
    %845 = vmatprep.subr.bf16.mxu0 0
    %846 = vmatpush1.bf16.msra.mxu0 0
    %847 = vmatprep.subr.bf16.mxu0 0
    %848 = vmatpush1.bf16.msra.mxu0 0
    %849 = vmatprep.subr.bf16.mxu0 0
    %850 = vmatpush1.bf16.msra.mxu0 0
    %851 = vmatprep.subr.bf16.mxu0 0
    %852 = vmatpush1.bf16.msra.mxu0 0
    %853 = vmatprep.subr.bf16.mxu0 0
    %854 = vmatpush1.bf16.msra.mxu0 0
    %855 = vmatprep.mubr.bf16.mxu0 0
    %856 = vmatmul.mubr.bf16.gmra.mrb[0].mxu0 %v309
    %v857 = vpop.f32.mrb[0].mxu0
    %v858 = vadd.f32 0.0, %v857
    %v859 = vpop.f32.mrb[0].mxu0
    %v860 = vadd.f32 0.0, %v859
    %v861 = vpop.f32.mrb[0].mxu0
    %v862 = vadd.f32 0.0, %v861
    %v863 = vpop.f32.mrb[0].mxu0
    %v864 = vadd.f32 0.0, %v863
    %865 = vdwg.mxu0
    %867 = vset.pattern.permute.xlu0 4
    %868 = vperm.xlu0 %867, %v293
    %v869 = vpop.permute.xlu0 %868
    %872 = vset.pattern.permute.xlu0 4
    %873 = vperm.xlu0 %872, %v294
    %v874 = vpop.permute.xlu0 %873
    %v876 = vmul.f32 %v869, %v307
    %v877 = vmul.f32 %v874, %v308
    %878 = vset.pattern.permute.xlu0 0
    %879 = vperm.xlu0 %878, %v293
    %v880 = vpop.permute.xlu0 %879
    %882 = vset.pattern.permute.xlu0 0
    %883 = vperm.xlu0 %882, %v294
    %v884 = vpop.permute.xlu0 %883
    %v886 = vmul.f32 %v880, %v729
    %v887 = vmul.f32 %v884, %v733
    %v888 = vadd.f32 %v876, %v886
    %v889 = vadd.f32 %v877, %v887
    %890 = vset.pattern.permute.xlu0 1
    %891 = vperm.xlu0 %890, %v293
    %v892 = vpop.permute.xlu0 %891
    %894 = vset.pattern.permute.xlu0 1
    %895 = vperm.xlu0 %894, %v294
    %v896 = vpop.permute.xlu0 %895
    %v898 = vmul.f32 %v892, %v731
    %v899 = vmul.f32 %v896, %v735
    %v900 = vadd.f32 %v888, %v898
    %v901 = vadd.f32 %v889, %v899
    %902 = vset.pattern.permute.xlu0 2
    %903 = vperm.xlu0 %902, %v293
    %v904 = vpop.permute.xlu0 %903
    %906 = vset.pattern.permute.xlu0 2
    %907 = vperm.xlu0 %906, %v294
    %v908 = vpop.permute.xlu0 %907
    %v910 = vmul.f32 %v904, %v772
    %v911 = vmul.f32 %v908, %v776
    %v912 = vadd.f32 %v900, %v910
    %v913 = vadd.f32 %v901, %v911
    %914 = vset.pattern.permute.xlu0 3
    %915 = vperm.xlu0 %914, %v293
    %v916 = vpop.permute.xlu0 %915
    %918 = vset.pattern.permute.xlu0 3
    %919 = vperm.xlu0 %918, %v294
    %v920 = vpop.permute.xlu0 %919
    %v922 = vmul.f32 %v916, %v774
    %v923 = vmul.f32 %v920, %v778
    %v924 = vadd.f32 %v912, %v922
    %v925 = vadd.f32 %v913, %v923
    %926 = vset.pattern.permute.xlu0 5
    %927 = vperm.xlu0 %926, %v293
    %v928 = vpop.permute.xlu0 %927
    %930 = vset.pattern.permute.xlu0 5
    %931 = vperm.xlu0 %930, %v294
    %v932 = vpop.permute.xlu0 %931
    %v934 = vmul.f32 %v928, %v815
    %v935 = vmul.f32 %v932, %v819
    %v936 = vadd.f32 %v924, %v934
    %v937 = vadd.f32 %v925, %v935
    %938 = vset.pattern.permute.xlu0 6
    %939 = vperm.xlu0 %938, %v293
    %v940 = vpop.permute.xlu0 %939
    %942 = vset.pattern.permute.xlu0 6
    %943 = vperm.xlu0 %942, %v294
    %v944 = vpop.permute.xlu0 %943
    %v946 = vmul.f32 %v940, %v817
    %v947 = vmul.f32 %v944, %v821
    %v948 = vadd.f32 %v936, %v946
    %v949 = vadd.f32 %v937, %v947
    %950 = vset.pattern.permute.xlu0 7
    %951 = vperm.xlu0 %950, %v293
    %v952 = vpop.permute.xlu0 %951
    %954 = vset.pattern.permute.xlu0 7
    %955 = vperm.xlu0 %954, %v294
    %v956 = vpop.permute.xlu0 %955
    %v958 = vmul.f32 %v952, %v858
    %v959 = vmul.f32 %v956, %v862
    %v960 = vadd.f32 %v948, %v958
    %v961 = vadd.f32 %v949, %v959
    %962 = vset.pattern.permute.xlu0 8
    %963 = vperm.xlu0 %962, %v293
    %v964 = vpop.permute.xlu0 %963
    %966 = vset.pattern.permute.xlu0 8
    %967 = vperm.xlu0 %966, %v294
    %v968 = vpop.permute.xlu0 %967
    %v970 = vmul.f32 %v964, %v860
    %v971 = vmul.f32 %v968, %v864
    %v972 = vadd.f32 %v960, %v970
    %v973 = vadd.f32 %v961, %v971
    %v974 = vpack.c.bf16 %v973, %v972
    %v977 = vunpack.c.l.b16 %v295
    %v978 = vunpack.c.l.b16 %v296
    %v979 = vpack.c.b16 %v978, %v977
    %v981 = vsel %vm169, %v979, 0
    %983 = vmatprep.subr.bf16.mxu0 0
    %984 = vmatpush1.bf16.msra.mxu0 %v974
    %985 = vmatprep.subr.bf16.mxu0 0
    %986 = vmatpush1.bf16.msra.mxu0 0
    %987 = vmatprep.subr.bf16.mxu0 0
    %988 = vmatpush1.bf16.msra.mxu0 0
    %989 = vmatprep.subr.bf16.mxu0 0
    %990 = vmatpush1.bf16.msra.mxu0 0
    %991 = vmatprep.subr.bf16.mxu0 0
    %992 = vmatpush1.bf16.msra.mxu0 0
    %993 = vmatprep.subr.bf16.mxu0 0
    %994 = vmatpush1.bf16.msra.mxu0 0
    %995 = vmatprep.subr.bf16.mxu0 0
    %996 = vmatpush1.bf16.msra.mxu0 0
    %997 = vmatprep.subr.bf16.mxu0 0
    %998 = vmatpush1.bf16.msra.mxu0 0
    %999 = vmatprep.subr.bf16.mxu0 0
    %1000 = vmatpush1.bf16.msra.mxu0 0
    %1001 = vmatprep.subr.bf16.mxu0 0
    %1002 = vmatpush1.bf16.msra.mxu0 0
    %1003 = vmatprep.subr.bf16.mxu0 0
    %1004 = vmatpush1.bf16.msra.mxu0 0
    %1005 = vmatprep.subr.bf16.mxu0 0
    %1006 = vmatpush1.bf16.msra.mxu0 0
    %1007 = vmatprep.subr.bf16.mxu0 0
    %1008 = vmatpush1.bf16.msra.mxu0 0
    %1009 = vmatprep.subr.bf16.mxu0 0
    %1010 = vmatpush1.bf16.msra.mxu0 0
    %1011 = vmatprep.subr.bf16.mxu0 0
    %1012 = vmatpush1.bf16.msra.mxu0 0
    %1013 = vmatprep.subr.bf16.mxu0 0
    %1014 = vmatpush1.bf16.msra.mxu0 0
    %1015 = vmatprep.mubr.bf16.mxu0 0
    %1016 = vmatmul.mubr.bf16.gmra.mrb[0].mxu0 %v981
    %v1017 = vpop.f32.mrb[0].mxu0
    %v1018 = vadd.f32 0.0, %v1017
    %v1019 = vpop.f32.mrb[0].mxu0
    %v1020 = vpop.f32.mrb[0].mxu0
    %v1021 = vadd.f32 0.0, %v1020
    %v1022 = vpop.f32.mrb[0].mxu0
    %1023 = vdwg.mxu0
    %1024 = vadd.xlane.f32.xlu0 %v1018
    %v1025 = vpop.xlane.xlu0 %1024
    %1026 = vadd.xlane.f32.xlu0 %v1021
    %v1027 = vpop.xlane.xlu0 %1026
    %v1028 = vmul.f32 %v1025, %v215
    %v1029 = vmul.f32 %v1027, %v215
    %v1030 = vmul.f32 %v1018, %v1018
    %v1031 = vmul.f32 %v1021, %v1021
    %1032 = vadd.xlane.f32.xlu0 %v1030
    %v1033 = vpop.xlane.xlu0 %1032
    %1034 = vadd.xlane.f32.xlu0 %v1031
    %v1035 = vpop.xlane.xlu0 %1034
    %v1036 = vmul.f32 %v1033, %v215
    %v1037 = vmul.f32 %v1035, %v215
    %v1038 = vmul.f32 %v1028, %v1028
    %v1039 = vmul.f32 %v1029, %v1029
    %v1040 = vsub.f32 %v1036, %v1038
    %v1041 = vsub.f32 %v1037, %v1039
    %v1042 = vmax.f32 %v1040, 0.0
    %v1043 = vmax.f32 %v1041, 0.0
    %v1044 = vsub.f32 %v1018, %v1028
    %v1045 = vsub.f32 %v1021, %v1029
    %v1046 = vadd.f32 %v1042, 1e-05
    %v1047 = vadd.f32 %v1043, 1e-05
    %v1048 = vrsqrt.pop %v1046
    %v1049 = vrsqrt.pop %v1047
    %v1050 = vmul.f32 %v1044, %v1048
    %v1051 = vmul.f32 %v1045, %v1049
    %v1052 = vmax.f32 %v1050, 0.0
    %v1053 = vmax.f32 %v1051, 0.0
    %v1054 = vpack.c.bf16 %v1053, %v1052
    %1055 = vmatprep.subr.bf16.mxu0 %v567
    %1056 = vmatpush1.bf16.msra.mxu0 %v566
    %1057 = vmatprep.subr.bf16.mxu0 %v575
    %1058 = vmatpush1.bf16.msra.mxu0 %v574
    %1059 = vmatprep.subr.bf16.mxu0 %v583
    %1060 = vmatpush1.bf16.msra.mxu0 %v582
    %1061 = vmatprep.subr.bf16.mxu0 %v591
    %1062 = vmatpush1.bf16.msra.mxu0 %v590
    %1063 = vmatprep.subr.bf16.mxu0 %v599
    %1064 = vmatpush1.bf16.msra.mxu0 %v598
    %1065 = vmatprep.subr.bf16.mxu0 %v607
    %1066 = vmatpush1.bf16.msra.mxu0 %v606
    %1067 = vmatprep.subr.bf16.mxu0 %v615
    %1068 = vmatpush1.bf16.msra.mxu0 %v614
    %1069 = vmatprep.subr.bf16.mxu0 %v623
    %1070 = vmatpush1.bf16.msra.mxu0 %v622
    %1071 = vmatprep.subr.bf16.mxu0 0
    %1072 = vmatpush1.bf16.msra.mxu0 0
    %1073 = vmatprep.subr.bf16.mxu0 0
    %1074 = vmatpush1.bf16.msra.mxu0 0
    %1075 = vmatprep.subr.bf16.mxu0 0
    %1076 = vmatpush1.bf16.msra.mxu0 0
    %1077 = vmatprep.subr.bf16.mxu0 0
    %1078 = vmatpush1.bf16.msra.mxu0 0
    %1079 = vmatprep.subr.bf16.mxu0 0
    %1080 = vmatpush1.bf16.msra.mxu0 0
    %1081 = vmatprep.subr.bf16.mxu0 0
    %1082 = vmatpush1.bf16.msra.mxu0 0
    %1083 = vmatprep.subr.bf16.mxu0 0
    %1084 = vmatpush1.bf16.msra.mxu0 0
    %1085 = vmatprep.subr.bf16.mxu0 0
    %1086 = vmatpush1.bf16.msra.mxu0 0
    %1087 = vmatprep.mubr.bf16.mxu0 0
    %1088 = vmatmul.mubr.bf16.gmra.mrb[0].mxu0 %v1054
    %v1089 = vpop.f32.mrb[0].mxu0
    %v1090 = vadd.f32 0.0, %v1089
    %v1091 = vpop.f32.mrb[0].mxu0
    %v1092 = vadd.f32 0.0, %v1091
    %v1093 = vpop.f32.mrb[0].mxu0
    %v1094 = vadd.f32 0.0, %v1093
    %v1095 = vpop.f32.mrb[0].mxu0
    %v1096 = vadd.f32 0.0, %v1095
    %1097 = vdwg.mxu0
    %1098 = vmatprep.subr.bf16.mxu0 %v569
    %1099 = vmatpush1.bf16.msra.mxu0 %v568
    %1100 = vmatprep.subr.bf16.mxu0 %v577
    %1101 = vmatpush1.bf16.msra.mxu0 %v576
    %1102 = vmatprep.subr.bf16.mxu0 %v585
    %1103 = vmatpush1.bf16.msra.mxu0 %v584
    %1104 = vmatprep.subr.bf16.mxu0 %v593
    %1105 = vmatpush1.bf16.msra.mxu0 %v592
    %1106 = vmatprep.subr.bf16.mxu0 %v601
    %1107 = vmatpush1.bf16.msra.mxu0 %v600
    %1108 = vmatprep.subr.bf16.mxu0 %v609
    %1109 = vmatpush1.bf16.msra.mxu0 %v608
    %1110 = vmatprep.subr.bf16.mxu0 %v617
    %1111 = vmatpush1.bf16.msra.mxu0 %v616
    %1112 = vmatprep.subr.bf16.mxu0 %v625
    %1113 = vmatpush1.bf16.msra.mxu0 %v624
    %1114 = vmatprep.subr.bf16.mxu0 0
    %1115 = vmatpush1.bf16.msra.mxu0 0
    %1116 = vmatprep.subr.bf16.mxu0 0
    %1117 = vmatpush1.bf16.msra.mxu0 0
    %1118 = vmatprep.subr.bf16.mxu0 0
    %1119 = vmatpush1.bf16.msra.mxu0 0
    %1120 = vmatprep.subr.bf16.mxu0 0
    %1121 = vmatpush1.bf16.msra.mxu0 0
    %1122 = vmatprep.subr.bf16.mxu0 0
    %1123 = vmatpush1.bf16.msra.mxu0 0
    %1124 = vmatprep.subr.bf16.mxu0 0
    %1125 = vmatpush1.bf16.msra.mxu0 0
    %1126 = vmatprep.subr.bf16.mxu0 0
    %1127 = vmatpush1.bf16.msra.mxu0 0
    %1128 = vmatprep.subr.bf16.mxu0 0
    %1129 = vmatpush1.bf16.msra.mxu0 0
    %1130 = vmatprep.mubr.bf16.mxu0 0
    %1131 = vmatmul.mubr.bf16.gmra.mrb[0].mxu0 %v1054
    %v1132 = vpop.f32.mrb[0].mxu0
    %v1133 = vadd.f32 0.0, %v1132
    %v1134 = vpop.f32.mrb[0].mxu0
    %v1135 = vadd.f32 0.0, %v1134
    %v1136 = vpop.f32.mrb[0].mxu0
    %v1137 = vadd.f32 0.0, %v1136
    %v1138 = vpop.f32.mrb[0].mxu0
    %v1139 = vadd.f32 0.0, %v1138
    %1140 = vdwg.mxu0
    %1141 = vmatprep.subr.bf16.mxu0 %v571
    %1142 = vmatpush1.bf16.msra.mxu0 %v570
    %1143 = vmatprep.subr.bf16.mxu0 %v579
    %1144 = vmatpush1.bf16.msra.mxu0 %v578
    %1145 = vmatprep.subr.bf16.mxu0 %v587
    %1146 = vmatpush1.bf16.msra.mxu0 %v586
    %1147 = vmatprep.subr.bf16.mxu0 %v595
    %1148 = vmatpush1.bf16.msra.mxu0 %v594
    %1149 = vmatprep.subr.bf16.mxu0 %v603
    %1150 = vmatpush1.bf16.msra.mxu0 %v602
    %1151 = vmatprep.subr.bf16.mxu0 %v611
    %1152 = vmatpush1.bf16.msra.mxu0 %v610
    %1153 = vmatprep.subr.bf16.mxu0 %v619
    %1154 = vmatpush1.bf16.msra.mxu0 %v618
    %1155 = vmatprep.subr.bf16.mxu0 %v627
    %1156 = vmatpush1.bf16.msra.mxu0 %v626
    %1157 = vmatprep.subr.bf16.mxu0 0
    %1158 = vmatpush1.bf16.msra.mxu0 0
    %1159 = vmatprep.subr.bf16.mxu0 0
    %1160 = vmatpush1.bf16.msra.mxu0 0
    %1161 = vmatprep.subr.bf16.mxu0 0
    %1162 = vmatpush1.bf16.msra.mxu0 0
    %1163 = vmatprep.subr.bf16.mxu0 0
    %1164 = vmatpush1.bf16.msra.mxu0 0
    %1165 = vmatprep.subr.bf16.mxu0 0
    %1166 = vmatpush1.bf16.msra.mxu0 0
    %1167 = vmatprep.subr.bf16.mxu0 0
    %1168 = vmatpush1.bf16.msra.mxu0 0
    %1169 = vmatprep.subr.bf16.mxu0 0
    %1170 = vmatpush1.bf16.msra.mxu0 0
    %1171 = vmatprep.subr.bf16.mxu0 0
    %1172 = vmatpush1.bf16.msra.mxu0 0
    %1173 = vmatprep.mubr.bf16.mxu0 0
    %1174 = vmatmul.mubr.bf16.gmra.mrb[0].mxu0 %v1054
    %v1175 = vpop.f32.mrb[0].mxu0
    %v1176 = vadd.f32 0.0, %v1175
    %v1177 = vpop.f32.mrb[0].mxu0
    %v1178 = vadd.f32 0.0, %v1177
    %v1179 = vpop.f32.mrb[0].mxu0
    %v1180 = vadd.f32 0.0, %v1179
    %v1181 = vpop.f32.mrb[0].mxu0
    %v1182 = vadd.f32 0.0, %v1181
    %1183 = vdwg.mxu0
    %1184 = vmatprep.subr.bf16.mxu0 %v573
    %1185 = vmatpush1.bf16.msra.mxu0 %v572
    %1186 = vmatprep.subr.bf16.mxu0 %v581
    %1187 = vmatpush1.bf16.msra.mxu0 %v580
    %1188 = vmatprep.subr.bf16.mxu0 %v589
    %1189 = vmatpush1.bf16.msra.mxu0 %v588
    %1190 = vmatprep.subr.bf16.mxu0 %v597
    %1191 = vmatpush1.bf16.msra.mxu0 %v596
    %1192 = vmatprep.subr.bf16.mxu0 %v605
    %1193 = vmatpush1.bf16.msra.mxu0 %v604
    %1194 = vmatprep.subr.bf16.mxu0 %v613
    %1195 = vmatpush1.bf16.msra.mxu0 %v612
    %1196 = vmatprep.subr.bf16.mxu0 %v621
    %1197 = vmatpush1.bf16.msra.mxu0 %v620
    %1198 = vmatprep.subr.bf16.mxu0 %v629
    %1199 = vmatpush1.bf16.msra.mxu0 %v628
    %1200 = vmatprep.subr.bf16.mxu0 0
    %1201 = vmatpush1.bf16.msra.mxu0 0
    %1202 = vmatprep.subr.bf16.mxu0 0
    %1203 = vmatpush1.bf16.msra.mxu0 0
    %1204 = vmatprep.subr.bf16.mxu0 0
    %1205 = vmatpush1.bf16.msra.mxu0 0
    %1206 = vmatprep.subr.bf16.mxu0 0
    %1207 = vmatpush1.bf16.msra.mxu0 0
    %1208 = vmatprep.subr.bf16.mxu0 0
    %1209 = vmatpush1.bf16.msra.mxu0 0
    %1210 = vmatprep.subr.bf16.mxu0 0
    %1211 = vmatpush1.bf16.msra.mxu0 0
    %1212 = vmatprep.subr.bf16.mxu0 0
    %1213 = vmatpush1.bf16.msra.mxu0 0
    %1214 = vmatprep.subr.bf16.mxu0 0
    %1215 = vmatpush1.bf16.msra.mxu0 0
    %1216 = vmatprep.mubr.bf16.mxu0 0
    %1217 = vmatmul.mubr.bf16.gmra.mrb[0].mxu0 %v1054
    %v1218 = vpop.f32.mrb[0].mxu0
    %v1219 = vadd.f32 0.0, %v1218
    %v1220 = vpop.f32.mrb[0].mxu0
    %v1221 = vadd.f32 0.0, %v1220
    %v1222 = vpop.f32.mrb[0].mxu0
    %v1223 = vadd.f32 0.0, %v1222
    %v1224 = vpop.f32.mrb[0].mxu0
    %v1225 = vadd.f32 0.0, %v1224
    %1226 = vdwg.mxu0
    %1228 = vset.pattern.permute.xlu0 4
    %1229 = vperm.xlu0 %1228, %v297
    %v1230 = vpop.permute.xlu0 %1229
    %1233 = vset.pattern.permute.xlu0 4
    %1234 = vperm.xlu0 %1233, %v298
    %v1235 = vpop.permute.xlu0 %1234
    %v1237 = vmul.f32 %v1230, %v1052
    %v1238 = vmul.f32 %v1235, %v1053
    %1239 = vset.pattern.permute.xlu0 0
    %1240 = vperm.xlu0 %1239, %v297
    %v1241 = vpop.permute.xlu0 %1240
    %1243 = vset.pattern.permute.xlu0 0
    %1244 = vperm.xlu0 %1243, %v298
    %v1245 = vpop.permute.xlu0 %1244
    %v1247 = vmul.f32 %v1241, %v1090
    %v1248 = vmul.f32 %v1245, %v1094
    %v1249 = vadd.f32 %v1237, %v1247
    %v1250 = vadd.f32 %v1238, %v1248
    %1251 = vset.pattern.permute.xlu0 1
    %1252 = vperm.xlu0 %1251, %v297
    %v1253 = vpop.permute.xlu0 %1252
    %1255 = vset.pattern.permute.xlu0 1
    %1256 = vperm.xlu0 %1255, %v298
    %v1257 = vpop.permute.xlu0 %1256
    %v1259 = vmul.f32 %v1253, %v1092
    %v1260 = vmul.f32 %v1257, %v1096
    %v1261 = vadd.f32 %v1249, %v1259
    %v1262 = vadd.f32 %v1250, %v1260
    %1263 = vset.pattern.permute.xlu0 2
    %1264 = vperm.xlu0 %1263, %v297
    %v1265 = vpop.permute.xlu0 %1264
    %1267 = vset.pattern.permute.xlu0 2
    %1268 = vperm.xlu0 %1267, %v298
    %v1269 = vpop.permute.xlu0 %1268
    %v1271 = vmul.f32 %v1265, %v1133
    %v1272 = vmul.f32 %v1269, %v1137
    %v1273 = vadd.f32 %v1261, %v1271
    %v1274 = vadd.f32 %v1262, %v1272
    %1275 = vset.pattern.permute.xlu0 3
    %1276 = vperm.xlu0 %1275, %v297
    %v1277 = vpop.permute.xlu0 %1276
    %1279 = vset.pattern.permute.xlu0 3
    %1280 = vperm.xlu0 %1279, %v298
    %v1281 = vpop.permute.xlu0 %1280
    %v1283 = vmul.f32 %v1277, %v1135
    %v1284 = vmul.f32 %v1281, %v1139
    %v1285 = vadd.f32 %v1273, %v1283
    %v1286 = vadd.f32 %v1274, %v1284
    %1287 = vset.pattern.permute.xlu0 5
    %1288 = vperm.xlu0 %1287, %v297
    %v1289 = vpop.permute.xlu0 %1288
    %1291 = vset.pattern.permute.xlu0 5
    %1292 = vperm.xlu0 %1291, %v298
    %v1293 = vpop.permute.xlu0 %1292
    %v1295 = vmul.f32 %v1289, %v1176
    %v1296 = vmul.f32 %v1293, %v1180
    %v1297 = vadd.f32 %v1285, %v1295
    %v1298 = vadd.f32 %v1286, %v1296
    %1299 = vset.pattern.permute.xlu0 6
    %1300 = vperm.xlu0 %1299, %v297
    %v1301 = vpop.permute.xlu0 %1300
    %1303 = vset.pattern.permute.xlu0 6
    %1304 = vperm.xlu0 %1303, %v298
    %v1305 = vpop.permute.xlu0 %1304
    %v1307 = vmul.f32 %v1301, %v1178
    %v1308 = vmul.f32 %v1305, %v1182
    %v1309 = vadd.f32 %v1297, %v1307
    %v1310 = vadd.f32 %v1298, %v1308
    %1311 = vset.pattern.permute.xlu0 7
    %1312 = vperm.xlu0 %1311, %v297
    %v1313 = vpop.permute.xlu0 %1312
    %1315 = vset.pattern.permute.xlu0 7
    %1316 = vperm.xlu0 %1315, %v298
    %v1317 = vpop.permute.xlu0 %1316
    %v1319 = vmul.f32 %v1313, %v1219
    %v1320 = vmul.f32 %v1317, %v1223
    %v1321 = vadd.f32 %v1309, %v1319
    %v1322 = vadd.f32 %v1310, %v1320
    %1323 = vset.pattern.permute.xlu0 8
    %1324 = vperm.xlu0 %1323, %v297
    %v1325 = vpop.permute.xlu0 %1324
    %1327 = vset.pattern.permute.xlu0 8
    %1328 = vperm.xlu0 %1327, %v298
    %v1329 = vpop.permute.xlu0 %1328
    %v1331 = vmul.f32 %v1325, %v1221
    %v1332 = vmul.f32 %v1329, %v1225
    %v1333 = vadd.f32 %v1321, %v1331
    %v1334 = vadd.f32 %v1322, %v1332
    %v1335 = vpack.c.bf16 %v1334, %v1333
    %v1338 = vunpack.c.l.b16 %v299
    %v1339 = vunpack.c.l.b16 %v300
    %v1340 = vpack.c.b16 %v1339, %v1338
    %v1342 = vsel %vm169, %v1340, 0
    %1344 = vmatprep.subr.bf16.mxu0 0
    %1345 = vmatpush1.bf16.msra.mxu0 %v1335
    %1346 = vmatprep.subr.bf16.mxu0 0
    %1347 = vmatpush1.bf16.msra.mxu0 0
    %1348 = vmatprep.subr.bf16.mxu0 0
    %1349 = vmatpush1.bf16.msra.mxu0 0
    %1350 = vmatprep.subr.bf16.mxu0 0
    %1351 = vmatpush1.bf16.msra.mxu0 0
    %1352 = vmatprep.subr.bf16.mxu0 0
    %1353 = vmatpush1.bf16.msra.mxu0 0
    %1354 = vmatprep.subr.bf16.mxu0 0
    %1355 = vmatpush1.bf16.msra.mxu0 0
    %1356 = vmatprep.subr.bf16.mxu0 0
    %1357 = vmatpush1.bf16.msra.mxu0 0
    %1358 = vmatprep.subr.bf16.mxu0 0
    %1359 = vmatpush1.bf16.msra.mxu0 0
    %1360 = vmatprep.subr.bf16.mxu0 0
    %1361 = vmatpush1.bf16.msra.mxu0 0
    %1362 = vmatprep.subr.bf16.mxu0 0
    %1363 = vmatpush1.bf16.msra.mxu0 0
    %1364 = vmatprep.subr.bf16.mxu0 0
    %1365 = vmatpush1.bf16.msra.mxu0 0
    %1366 = vmatprep.subr.bf16.mxu0 0
    %1367 = vmatpush1.bf16.msra.mxu0 0
    %1368 = vmatprep.subr.bf16.mxu0 0
    %1369 = vmatpush1.bf16.msra.mxu0 0
    %1370 = vmatprep.subr.bf16.mxu0 0
    %1371 = vmatpush1.bf16.msra.mxu0 0
    %1372 = vmatprep.subr.bf16.mxu0 0
    %1373 = vmatpush1.bf16.msra.mxu0 0
    %1374 = vmatprep.subr.bf16.mxu0 0
    %1375 = vmatpush1.bf16.msra.mxu0 0
    %1376 = vmatprep.mubr.bf16.mxu0 0
    %1377 = vmatmul.mubr.bf16.gmra.mrb[0].mxu0 %v1342
    %v1378 = vpop.f32.mrb[0].mxu0
    %v1379 = vadd.f32 0.0, %v1378
    %v1380 = vpop.f32.mrb[0].mxu0
    %v1381 = vpop.f32.mrb[0].mxu0
    %v1382 = vadd.f32 0.0, %v1381
    %v1383 = vpop.f32.mrb[0].mxu0
    %1384 = vdwg.mxu0
    %1385 = vadd.xlane.f32.xlu0 %v1379
    %v1386 = vpop.xlane.xlu0 %1385
    %1387 = vadd.xlane.f32.xlu0 %v1382
    %v1388 = vpop.xlane.xlu0 %1387
    %v1389 = vmul.f32 %v1386, %v215
    %v1390 = vmul.f32 %v1388, %v215
    %v1391 = vmul.f32 %v1379, %v1379
    %v1392 = vmul.f32 %v1382, %v1382
    %1393 = vadd.xlane.f32.xlu0 %v1391
    %v1394 = vpop.xlane.xlu0 %1393
    %1395 = vadd.xlane.f32.xlu0 %v1392
    %v1396 = vpop.xlane.xlu0 %1395
    %v1397 = vmul.f32 %v1394, %v215
    %v1398 = vmul.f32 %v1396, %v215
    %v1399 = vmul.f32 %v1389, %v1389
    %v1400 = vmul.f32 %v1390, %v1390
    %v1401 = vsub.f32 %v1397, %v1399
    %v1402 = vsub.f32 %v1398, %v1400
    %v1403 = vmax.f32 %v1401, 0.0
    %v1404 = vmax.f32 %v1402, 0.0
    %v1405 = vsub.f32 %v1379, %v1389
    %v1406 = vsub.f32 %v1382, %v1390
    %v1407 = vadd.f32 %v1403, 1e-05
    %v1408 = vadd.f32 %v1404, 1e-05
    %v1409 = vrsqrt.pop %v1407
    %v1410 = vrsqrt.pop %v1408
    %v1411 = vmul.f32 %v1405, %v1409
    %v1412 = vmul.f32 %v1406, %v1410
    %v1413 = vstv %s301
    %v1414 = vmul.f32 %v1413, %v305
    %v1415 = vstv %s303
    %v1416 = vmul.f32 %v1415, %v1411
    %v1417 = vadd.f32 %v1414, %v1416
    %v1418 = vstv %s302
    %v1419 = vmul.f32 %v1418, %v306
    %v1420 = vadd.f32 %v1417, %v1419
    %v1421 = vstv %s304
    %v1422 = vmul.f32 %v1421, %v1412
    %v1423 = vadd.f32 %v1420, %v1422
    %1424 = vst [vmem:[#allocation2 + $0x10] sm:$0xff] %v1423
    %v1425 = vld [vmem:[%s10] sm:$0xff]
    %v1426 = vld [vmem:[%s10 + $0x8] sm:$0xff]
    %v1427 = vld [vmem:[%s10 + $0x10] sm:$0xff]
    %v1428 = vld [vmem:[#allocation12] sm:$0xf]
    %v1429 = vld [vmem:[#allocation12 + $0x4] sm:$0xf]
    %v1430 = vld [vmem:[#allocation12 + $0x8] sm:$0xf]
    %v1431 = vld [vmem:[%s12] sm:$0xff]
    %v1432 = vld [vmem:[%s12 + $0x8] sm:$0xff]
    %v1433 = vld [vmem:[%s12 + $0x10] sm:$0xff]
    %v1434 = vld [vmem:[#allocation13] sm:$0xf]
    %v1435 = vld [vmem:[#allocation13 + $0x4] sm:$0xf]
    %v1436 = vld [vmem:[#allocation13 + $0x8] sm:$0xf]
    %s1437 = sld [smem:[#allocation3 + $0x7]]
    %s1438 = sld [smem:[#allocation3 + $0xa]]
    %s1439 = sld [smem:[#allocation3 + $0xd]]
    %s1440 = sld [smem:[#allocation3 + $0x8]]
    %s1441 = sld [smem:[#allocation3 + $0xb]]
    %s1442 = sld [smem:[#allocation3 + $0xe]]
    %v1443 = vld [vmem:[#allocation2] sm:$0xff]
    %v1444 = vld [vmem:[#allocation2 + $0x8] sm:$0xff]
    %v1445 = vld [vmem:[#allocation2 + $0x10] sm:$0xff]
    %v1446 = vmax.f32 %v1443, 0.0
    %v1447 = vmax.f32 %v1444, 0.0
    %v1448 = vmax.f32 %v1445, 0.0
    %v1449 = vpack.c.bf16 %v1447, %v1446
    %v1450 = vpack.c.bf16 %v1448, %v1448
    %v1451 = vld [vmem:[%s5] sm:$0xff]
    %v1452 = vld [vmem:[%s5 + $0x8] sm:$0xff]
    %v1453 = vld [vmem:[%s5 + $0x10] sm:$0xff]
    %v1454 = vld [vmem:[%s5 + $0x18] sm:$0xff]
    %v1455 = vld [vmem:[%s5 + $0x20] sm:$0xff]
    %v1456 = vld [vmem:[%s5 + $0x28] sm:$0xff]
    %v1457 = vld [vmem:[%s5 + $0x30] sm:$0xff]
    %v1458 = vld [vmem:[%s5 + $0x38] sm:$0xff]
    %v1459 = vld [vmem:[%s5 + $0x40] sm:$0xff]
    %v1460 = vld [vmem:[%s5 + $0x48] sm:$0xff]
    %v1461 = vld [vmem:[%s5 + $0x50] sm:$0xff]
    %v1462 = vld [vmem:[%s5 + $0x58] sm:$0xff]
    %v1463 = vld [vmem:[%s5 + $0x60] sm:$0xff]
    %v1464 = vld [vmem:[%s5 + $0x68] sm:$0xff]
    %v1465 = vld [vmem:[%s5 + $0x70] sm:$0xff]
    %v1466 = vld [vmem:[%s5 + $0x78] sm:$0xff]
    %v1467 = vld [vmem:[%s5 + $0x80] sm:$0xff]
    %v1468 = vld [vmem:[%s5 + $0x88] sm:$0xff]
    %v1469 = vld [vmem:[%s5 + $0x90] sm:$0xff]
    %v1470 = vld [vmem:[%s5 + $0x98] sm:$0xff]
    %v1471 = vld [vmem:[%s5 + $0xa0] sm:$0xff]
    %v1472 = vld [vmem:[%s5 + $0xa8] sm:$0xff]
    %v1473 = vld [vmem:[%s5 + $0xb0] sm:$0xff]
    %v1474 = vld [vmem:[%s5 + $0xb8] sm:$0xff]
    %v1475 = vld [vmem:[%s5 + $0xc0] sm:$0xff]
    %v1476 = vld [vmem:[%s5 + $0xc8] sm:$0xff]
    %v1477 = vld [vmem:[%s5 + $0xd0] sm:$0xff]
    %v1478 = vld [vmem:[%s5 + $0xd8] sm:$0xff]
    %v1479 = vld [vmem:[%s5 + $0xe0] sm:$0xff]
    %v1480 = vld [vmem:[%s5 + $0xe8] sm:$0xff]
    %v1481 = vld [vmem:[%s5 + $0xf0] sm:$0xff]
    %v1482 = vld [vmem:[%s5 + $0xf8] sm:$0xff]
    %v1483 = vld [vmem:[%s5 + $0x100] sm:$0xff]
    %v1484 = vld [vmem:[%s5 + $0x108] sm:$0xff]
    %v1485 = vld [vmem:[%s5 + $0x110] sm:$0xff]
    %v1486 = vld [vmem:[%s5 + $0x118] sm:$0xff]
    %v1487 = vld [vmem:[%s5 + $0x120] sm:$0xff]
    %v1488 = vld [vmem:[%s5 + $0x128] sm:$0xff]
    %v1489 = vld [vmem:[%s5 + $0x130] sm:$0xff]
    %v1490 = vld [vmem:[%s5 + $0x138] sm:$0xff]
    %v1491 = vld [vmem:[%s5 + $0x140] sm:$0xff]
    %v1492 = vld [vmem:[%s5 + $0x148] sm:$0xff]
    %v1493 = vld [vmem:[%s5 + $0x150] sm:$0xff]
    %v1494 = vld [vmem:[%s5 + $0x158] sm:$0xff]
    %v1495 = vld [vmem:[%s5 + $0x160] sm:$0xff]
    %v1496 = vld [vmem:[%s5 + $0x168] sm:$0xff]
    %v1497 = vld [vmem:[%s5 + $0x170] sm:$0xff]
    %v1498 = vld [vmem:[%s5 + $0x178] sm:$0xff]
    %v1499 = vld [vmem:[%s5 + $0x180] sm:$0xff]
    %v1500 = vld [vmem:[%s5 + $0x188] sm:$0xff]
    %v1501 = vld [vmem:[%s5 + $0x190] sm:$0xff]
    %v1502 = vld [vmem:[%s5 + $0x198] sm:$0xff]
    %v1503 = vld [vmem:[%s5 + $0x1a0] sm:$0xff]
    %v1504 = vld [vmem:[%s5 + $0x1a8] sm:$0xff]
    %v1505 = vld [vmem:[%s5 + $0x1b0] sm:$0xff]
    %v1506 = vld [vmem:[%s5 + $0x1b8] sm:$0xff]
    %v1507 = vld [vmem:[%s5 + $0x1c0] sm:$0xff]
    %v1508 = vld [vmem:[%s5 + $0x1c8] sm:$0xff]
    %v1509 = vld [vmem:[%s5 + $0x1d0] sm:$0xff]
    %v1510 = vld [vmem:[%s5 + $0x1d8] sm:$0xff]
    %v1511 = vld [vmem:[%s5 + $0x1e0] sm:$0xff]
    %v1512 = vld [vmem:[%s5 + $0x1e8] sm:$0xff]
    %v1513 = vld [vmem:[%s5 + $0x1f0] sm:$0xff]
    %v1514 = vld [vmem:[%s5 + $0x1f8] sm:$0xff]
    %v1579 = vunpack.c.l.b16 %v1451
    %v1580 = vunpack.c.h.b16 %v1451
    %v1581 = vunpack.c.l.b16 %v1452
    %v1582 = vunpack.c.h.b16 %v1452
    %v1583 = vunpack.c.l.b16 %v1453
    %v1584 = vunpack.c.h.b16 %v1453
    %v1585 = vunpack.c.l.b16 %v1454
    %v1586 = vunpack.c.h.b16 %v1454
    %v1587 = vunpack.c.l.b16 %v1455
    %v1588 = vunpack.c.h.b16 %v1455
    %v1589 = vunpack.c.l.b16 %v1456
    %v1590 = vunpack.c.h.b16 %v1456
    %v1591 = vunpack.c.l.b16 %v1457
    %v1592 = vunpack.c.h.b16 %v1457
    %v1593 = vunpack.c.l.b16 %v1458
    %v1594 = vunpack.c.h.b16 %v1458
    %v1595 = vunpack.c.l.b16 %v1459
    %v1596 = vunpack.c.h.b16 %v1459
    %v1597 = vunpack.c.l.b16 %v1460
    %v1598 = vunpack.c.h.b16 %v1460
    %v1599 = vunpack.c.l.b16 %v1461
    %v1600 = vunpack.c.h.b16 %v1461
    %v1601 = vunpack.c.l.b16 %v1462
    %v1602 = vunpack.c.h.b16 %v1462
    %v1603 = vunpack.c.l.b16 %v1463
    %v1604 = vunpack.c.h.b16 %v1463
    %v1605 = vunpack.c.l.b16 %v1464
    %v1606 = vunpack.c.h.b16 %v1464
    %v1607 = vunpack.c.l.b16 %v1465
    %v1608 = vunpack.c.h.b16 %v1465
    %v1609 = vunpack.c.l.b16 %v1466
    %v1610 = vunpack.c.h.b16 %v1466
    %v1611 = vunpack.c.l.b16 %v1467
    %v1612 = vunpack.c.h.b16 %v1467
    %v1613 = vunpack.c.l.b16 %v1468
    %v1614 = vunpack.c.h.b16 %v1468
    %v1615 = vunpack.c.l.b16 %v1469
    %v1616 = vunpack.c.h.b16 %v1469
    %v1617 = vunpack.c.l.b16 %v1470
    %v1618 = vunpack.c.h.b16 %v1470
    %v1619 = vunpack.c.l.b16 %v1471
    %v1620 = vunpack.c.h.b16 %v1471
    %v1621 = vunpack.c.l.b16 %v1472
    %v1622 = vunpack.c.h.b16 %v1472
    %v1623 = vunpack.c.l.b16 %v1473
    %v1624 = vunpack.c.h.b16 %v1473
    %v1625 = vunpack.c.l.b16 %v1474
    %v1626 = vunpack.c.h.b16 %v1474
    %v1627 = vunpack.c.l.b16 %v1475
    %v1628 = vunpack.c.h.b16 %v1475
    %v1629 = vunpack.c.l.b16 %v1476
    %v1630 = vunpack.c.h.b16 %v1476
    %v1631 = vunpack.c.l.b16 %v1477
    %v1632 = vunpack.c.h.b16 %v1477
    %v1633 = vunpack.c.l.b16 %v1478
    %v1634 = vunpack.c.h.b16 %v1478
    %v1635 = vunpack.c.l.b16 %v1479
    %v1636 = vunpack.c.h.b16 %v1479
    %v1637 = vunpack.c.l.b16 %v1480
    %v1638 = vunpack.c.h.b16 %v1480
    %v1639 = vunpack.c.l.b16 %v1481
    %v1640 = vunpack.c.h.b16 %v1481
    %v1641 = vunpack.c.l.b16 %v1482
    %v1642 = vunpack.c.h.b16 %v1482
    %v1643 = vunpack.c.l.b16 %v1483
    %v1644 = vunpack.c.h.b16 %v1483
    %v1645 = vunpack.c.l.b16 %v1484
    %v1646 = vunpack.c.h.b16 %v1484
    %v1647 = vunpack.c.l.b16 %v1485
    %v1648 = vunpack.c.h.b16 %v1485
    %v1649 = vunpack.c.l.b16 %v1486
    %v1650 = vunpack.c.h.b16 %v1486
    %v1651 = vunpack.c.l.b16 %v1487
    %v1652 = vunpack.c.h.b16 %v1487
    %v1653 = vunpack.c.l.b16 %v1488
    %v1654 = vunpack.c.h.b16 %v1488
    %v1655 = vunpack.c.l.b16 %v1489
    %v1656 = vunpack.c.h.b16 %v1489
    %v1657 = vunpack.c.l.b16 %v1490
    %v1658 = vunpack.c.h.b16 %v1490
    %v1659 = vunpack.c.l.b16 %v1491
    %v1660 = vunpack.c.h.b16 %v1491
    %v1661 = vunpack.c.l.b16 %v1492
    %v1662 = vunpack.c.h.b16 %v1492
    %v1663 = vunpack.c.l.b16 %v1493
    %v1664 = vunpack.c.h.b16 %v1493
    %v1665 = vunpack.c.l.b16 %v1494
    %v1666 = vunpack.c.h.b16 %v1494
    %v1667 = vunpack.c.l.b16 %v1495
    %v1668 = vunpack.c.h.b16 %v1495
    %v1669 = vunpack.c.l.b16 %v1496
    %v1670 = vunpack.c.h.b16 %v1496
    %v1671 = vunpack.c.l.b16 %v1497
    %v1672 = vunpack.c.h.b16 %v1497
    %v1673 = vunpack.c.l.b16 %v1498
    %v1674 = vunpack.c.h.b16 %v1498
    %v1675 = vunpack.c.l.b16 %v1499
    %v1676 = vunpack.c.h.b16 %v1499
    %v1677 = vunpack.c.l.b16 %v1500
    %v1678 = vunpack.c.h.b16 %v1500
    %v1679 = vunpack.c.l.b16 %v1501
    %v1680 = vunpack.c.h.b16 %v1501
    %v1681 = vunpack.c.l.b16 %v1502
    %v1682 = vunpack.c.h.b16 %v1502
    %v1683 = vunpack.c.l.b16 %v1503
    %v1684 = vunpack.c.h.b16 %v1503
    %v1685 = vunpack.c.l.b16 %v1504
    %v1686 = vunpack.c.h.b16 %v1504
    %v1687 = vunpack.c.l.b16 %v1505
    %v1688 = vunpack.c.h.b16 %v1505
    %v1689 = vunpack.c.l.b16 %v1506
    %v1690 = vunpack.c.h.b16 %v1506
    %v1691 = vunpack.c.l.b16 %v1507
    %v1692 = vunpack.c.h.b16 %v1507
    %v1693 = vunpack.c.l.b16 %v1508
    %v1694 = vunpack.c.h.b16 %v1508
    %v1695 = vunpack.c.l.b16 %v1509
    %v1696 = vunpack.c.h.b16 %v1509
    %v1697 = vunpack.c.l.b16 %v1510
    %v1698 = vunpack.c.h.b16 %v1510
    %v1699 = vunpack.c.l.b16 %v1511
    %v1700 = vunpack.c.h.b16 %v1511
    %v1701 = vunpack.c.l.b16 %v1512
    %v1702 = vunpack.c.h.b16 %v1512
    %v1703 = vunpack.c.l.b16 %v1513
    %v1704 = vunpack.c.h.b16 %v1513
    %v1705 = vunpack.c.l.b16 %v1514
    %v1706 = vunpack.c.h.b16 %v1514
    %v1707 = vpack.c.b16 %v1587, %v1579
    %v1708 = vpack.c.b16 %v1588, %v1580
    %v1709 = vpack.c.b16 %v1589, %v1581
    %v1710 = vpack.c.b16 %v1590, %v1582
    %v1711 = vpack.c.b16 %v1591, %v1583
    %v1712 = vpack.c.b16 %v1592, %v1584
    %v1713 = vpack.c.b16 %v1593, %v1585
    %v1714 = vpack.c.b16 %v1594, %v1586
    %v1715 = vpack.c.b16 %v1603, %v1595
    %v1716 = vpack.c.b16 %v1604, %v1596
    %v1717 = vpack.c.b16 %v1605, %v1597
    %v1718 = vpack.c.b16 %v1606, %v1598
    %v1719 = vpack.c.b16 %v1607, %v1599
    %v1720 = vpack.c.b16 %v1608, %v1600
    %v1721 = vpack.c.b16 %v1609, %v1601
    %v1722 = vpack.c.b16 %v1610, %v1602
    %v1723 = vpack.c.b16 %v1619, %v1611
    %v1724 = vpack.c.b16 %v1620, %v1612
    %v1725 = vpack.c.b16 %v1621, %v1613
    %v1726 = vpack.c.b16 %v1622, %v1614
    %v1727 = vpack.c.b16 %v1623, %v1615
    %v1728 = vpack.c.b16 %v1624, %v1616
    %v1729 = vpack.c.b16 %v1625, %v1617
    %v1730 = vpack.c.b16 %v1626, %v1618
    %v1731 = vpack.c.b16 %v1635, %v1627
    %v1732 = vpack.c.b16 %v1636, %v1628
    %v1733 = vpack.c.b16 %v1637, %v1629
    %v1734 = vpack.c.b16 %v1638, %v1630
    %v1735 = vpack.c.b16 %v1639, %v1631
    %v1736 = vpack.c.b16 %v1640, %v1632
    %v1737 = vpack.c.b16 %v1641, %v1633
    %v1738 = vpack.c.b16 %v1642, %v1634
    %v1739 = vpack.c.b16 %v1651, %v1643
    %v1740 = vpack.c.b16 %v1652, %v1644
    %v1741 = vpack.c.b16 %v1653, %v1645
    %v1742 = vpack.c.b16 %v1654, %v1646
    %v1743 = vpack.c.b16 %v1655, %v1647
    %v1744 = vpack.c.b16 %v1656, %v1648
    %v1745 = vpack.c.b16 %v1657, %v1649
    %v1746 = vpack.c.b16 %v1658, %v1650
    %v1747 = vpack.c.b16 %v1667, %v1659
    %v1748 = vpack.c.b16 %v1668, %v1660
    %v1749 = vpack.c.b16 %v1669, %v1661
    %v1750 = vpack.c.b16 %v1670, %v1662
    %v1751 = vpack.c.b16 %v1671, %v1663
    %v1752 = vpack.c.b16 %v1672, %v1664
    %v1753 = vpack.c.b16 %v1673, %v1665
    %v1754 = vpack.c.b16 %v1674, %v1666
    %v1755 = vpack.c.b16 %v1683, %v1675
    %v1756 = vpack.c.b16 %v1684, %v1676
    %v1757 = vpack.c.b16 %v1685, %v1677
    %v1758 = vpack.c.b16 %v1686, %v1678
    %v1759 = vpack.c.b16 %v1687, %v1679
    %v1760 = vpack.c.b16 %v1688, %v1680
    %v1761 = vpack.c.b16 %v1689, %v1681
    %v1762 = vpack.c.b16 %v1690, %v1682
    %v1763 = vpack.c.b16 %v1699, %v1691
    %v1764 = vpack.c.b16 %v1700, %v1692
    %v1765 = vpack.c.b16 %v1701, %v1693
    %v1766 = vpack.c.b16 %v1702, %v1694
    %v1767 = vpack.c.b16 %v1703, %v1695
    %v1768 = vpack.c.b16 %v1704, %v1696
    %v1769 = vpack.c.b16 %v1705, %v1697
    %v1770 = vpack.c.b16 %v1706, %v1698
    %1835 = vmatprep.subr.bf16.mxu0 %v1708
    %1836 = vmatpush1.bf16.msra.mxu0 %v1707
    %1837 = vmatprep.subr.bf16.mxu0 %v1716
    %1838 = vmatpush1.bf16.msra.mxu0 %v1715
    %1839 = vmatprep.subr.bf16.mxu0 %v1724
    %1840 = vmatpush1.bf16.msra.mxu0 %v1723
    %1841 = vmatprep.subr.bf16.mxu0 %v1732
    %1842 = vmatpush1.bf16.msra.mxu0 %v1731
    %1843 = vmatprep.subr.bf16.mxu0 %v1740
    %1844 = vmatpush1.bf16.msra.mxu0 %v1739
    %1845 = vmatprep.subr.bf16.mxu0 %v1748
    %1846 = vmatpush1.bf16.msra.mxu0 %v1747
    %1847 = vmatprep.subr.bf16.mxu0 %v1756
    %1848 = vmatpush1.bf16.msra.mxu0 %v1755
    %1849 = vmatprep.subr.bf16.mxu0 %v1764
    %1850 = vmatpush1.bf16.msra.mxu0 %v1763
    %1851 = vmatprep.subr.bf16.mxu0 0
    %1852 = vmatpush1.bf16.msra.mxu0 0
    %1853 = vmatprep.subr.bf16.mxu0 0
    %1854 = vmatpush1.bf16.msra.mxu0 0
    %1855 = vmatprep.subr.bf16.mxu0 0
    %1856 = vmatpush1.bf16.msra.mxu0 0
    %1857 = vmatprep.subr.bf16.mxu0 0
    %1858 = vmatpush1.bf16.msra.mxu0 0
    %1859 = vmatprep.subr.bf16.mxu0 0
    %1860 = vmatpush1.bf16.msra.mxu0 0
    %1861 = vmatprep.subr.bf16.mxu0 0
    %1862 = vmatpush1.bf16.msra.mxu0 0
    %1863 = vmatprep.subr.bf16.mxu0 0
    %1864 = vmatpush1.bf16.msra.mxu0 0
    %1865 = vmatprep.subr.bf16.mxu0 0
    %1866 = vmatpush1.bf16.msra.mxu0 0
    %1867 = vmatprep.mubr.bf16.mxu0 0
    %1868 = vmatmul.mubr.bf16.gmra.mrb[0].mxu0 %v1449
    %v1869 = vpop.f32.mrb[0].mxu0
    %v1870 = vadd.f32 0.0, %v1869
    %v1871 = vpop.f32.mrb[0].mxu0
    %v1872 = vadd.f32 0.0, %v1871
    %v1873 = vpop.f32.mrb[0].mxu0
    %v1874 = vadd.f32 0.0, %v1873
    %v1875 = vpop.f32.mrb[0].mxu0
    %v1876 = vadd.f32 0.0, %v1875
    %1877 = vmatprep.mubr.bf16.mxu0 0
    %1878 = vmatmul.mubr.bf16.gmra.mrb[0].mxu0 %v1450
    %v1879 = vpop.f32.mrb[0].mxu0
    %v1880 = vadd.f32 0.0, %v1879
    %v1881 = vpop.f32.mrb[0].mxu0
    %v1882 = vadd.f32 0.0, %v1881
    %v1883 = vpop.f32.mrb[0].mxu0
    %v1884 = vpop.f32.mrb[0].mxu0
    %1885 = vdwg.mxu0
    %1886 = vmatprep.subr.bf16.mxu0 %v1710
    %1887 = vmatpush1.bf16.msra.mxu0 %v1709
    %1888 = vmatprep.subr.bf16.mxu0 %v1718
    %1889 = vmatpush1.bf16.msra.mxu0 %v1717
    %1890 = vmatprep.subr.bf16.mxu0 %v1726
    %1891 = vmatpush1.bf16.msra.mxu0 %v1725
    %1892 = vmatprep.subr.bf16.mxu0 %v1734
    %1893 = vmatpush1.bf16.msra.mxu0 %v1733
    %1894 = vmatprep.subr.bf16.mxu0 %v1742
    %1895 = vmatpush1.bf16.msra.mxu0 %v1741
    %1896 = vmatprep.subr.bf16.mxu0 %v1750
    %1897 = vmatpush1.bf16.msra.mxu0 %v1749
    %1898 = vmatprep.subr.bf16.mxu0 %v1758
    %1899 = vmatpush1.bf16.msra.mxu0 %v1757
    %1900 = vmatprep.subr.bf16.mxu0 %v1766
    %1901 = vmatpush1.bf16.msra.mxu0 %v1765
    %1902 = vmatprep.subr.bf16.mxu0 0
    %1903 = vmatpush1.bf16.msra.mxu0 0
    %1904 = vmatprep.subr.bf16.mxu0 0
    %1905 = vmatpush1.bf16.msra.mxu0 0
    %1906 = vmatprep.subr.bf16.mxu0 0
    %1907 = vmatpush1.bf16.msra.mxu0 0
    %1908 = vmatprep.subr.bf16.mxu0 0
    %1909 = vmatpush1.bf16.msra.mxu0 0
    %1910 = vmatprep.subr.bf16.mxu0 0
    %1911 = vmatpush1.bf16.msra.mxu0 0
    %1912 = vmatprep.subr.bf16.mxu0 0
    %1913 = vmatpush1.bf16.msra.mxu0 0
    %1914 = vmatprep.subr.bf16.mxu0 0
    %1915 = vmatpush1.bf16.msra.mxu0 0
    %1916 = vmatprep.subr.bf16.mxu0 0
    %1917 = vmatpush1.bf16.msra.mxu0 0
    %1918 = vmatprep.mubr.bf16.mxu0 0
    %1919 = vmatmul.mubr.bf16.gmra.mrb[0].mxu0 %v1449
    %v1920 = vpop.f32.mrb[0].mxu0
    %v1921 = vadd.f32 0.0, %v1920
    %v1922 = vpop.f32.mrb[0].mxu0
    %v1923 = vadd.f32 0.0, %v1922
    %v1924 = vpop.f32.mrb[0].mxu0
    %v1925 = vadd.f32 0.0, %v1924
    %v1926 = vpop.f32.mrb[0].mxu0
    %v1927 = vadd.f32 0.0, %v1926
    %1928 = vmatprep.mubr.bf16.mxu0 0
    %1929 = vmatmul.mubr.bf16.gmra.mrb[0].mxu0 %v1450
    %v1930 = vpop.f32.mrb[0].mxu0
    %v1931 = vadd.f32 0.0, %v1930
    %v1932 = vpop.f32.mrb[0].mxu0
    %v1933 = vadd.f32 0.0, %v1932
    %v1934 = vpop.f32.mrb[0].mxu0
    %v1935 = vpop.f32.mrb[0].mxu0
    %1936 = vdwg.mxu0
    %1937 = vmatprep.subr.bf16.mxu0 %v1712
    %1938 = vmatpush1.bf16.msra.mxu0 %v1711
    %1939 = vmatprep.subr.bf16.mxu0 %v1720
    %1940 = vmatpush1.bf16.msra.mxu0 %v1719
    %1941 = vmatprep.subr.bf16.mxu0 %v1728
    %1942 = vmatpush1.bf16.msra.mxu0 %v1727
    %1943 = vmatprep.subr.bf16.mxu0 %v1736
    %1944 = vmatpush1.bf16.msra.mxu0 %v1735
    %1945 = vmatprep.subr.bf16.mxu0 %v1744
    %1946 = vmatpush1.bf16.msra.mxu0 %v1743
    %1947 = vmatprep.subr.bf16.mxu0 %v1752
    %1948 = vmatpush1.bf16.msra.mxu0 %v1751
    %1949 = vmatprep.subr.bf16.mxu0 %v1760
    %1950 = vmatpush1.bf16.msra.mxu0 %v1759
    %1951 = vmatprep.subr.bf16.mxu0 %v1768
    %1952 = vmatpush1.bf16.msra.mxu0 %v1767
    %1953 = vmatprep.subr.bf16.mxu0 0
    %1954 = vmatpush1.bf16.msra.mxu0 0
    %1955 = vmatprep.subr.bf16.mxu0 0
    %1956 = vmatpush1.bf16.msra.mxu0 0
    %1957 = vmatprep.subr.bf16.mxu0 0
    %1958 = vmatpush1.bf16.msra.mxu0 0
    %1959 = vmatprep.subr.bf16.mxu0 0
    %1960 = vmatpush1.bf16.msra.mxu0 0
    %1961 = vmatprep.subr.bf16.mxu0 0
    %1962 = vmatpush1.bf16.msra.mxu0 0
    %1963 = vmatprep.subr.bf16.mxu0 0
    %1964 = vmatpush1.bf16.msra.mxu0 0
    %1965 = vmatprep.subr.bf16.mxu0 0
    %1966 = vmatpush1.bf16.msra.mxu0 0
    %1967 = vmatprep.subr.bf16.mxu0 0
    %1968 = vmatpush1.bf16.msra.mxu0 0
    %1969 = vmatprep.mubr.bf16.mxu0 0
    %1970 = vmatmul.mubr.bf16.gmra.mrb[0].mxu0 %v1449
    %v1971 = vpop.f32.mrb[0].mxu0
    %v1972 = vadd.f32 0.0, %v1971
    %v1973 = vpop.f32.mrb[0].mxu0
    %v1974 = vadd.f32 0.0, %v1973
    %v1975 = vpop.f32.mrb[0].mxu0
    %v1976 = vadd.f32 0.0, %v1975
    %v1977 = vpop.f32.mrb[0].mxu0
    %v1978 = vadd.f32 0.0, %v1977
    %1979 = vmatprep.mubr.bf16.mxu0 0
    %1980 = vmatmul.mubr.bf16.gmra.mrb[0].mxu0 %v1450
    %v1981 = vpop.f32.mrb[0].mxu0
    %v1982 = vadd.f32 0.0, %v1981
    %v1983 = vpop.f32.mrb[0].mxu0
    %v1984 = vadd.f32 0.0, %v1983
    %v1985 = vpop.f32.mrb[0].mxu0
    %v1986 = vpop.f32.mrb[0].mxu0
    %1987 = vdwg.mxu0
    %1988 = vmatprep.subr.bf16.mxu0 %v1714
    %1989 = vmatpush1.bf16.msra.mxu0 %v1713
    %1990 = vmatprep.subr.bf16.mxu0 %v1722
    %1991 = vmatpush1.bf16.msra.mxu0 %v1721
    %1992 = vmatprep.subr.bf16.mxu0 %v1730
    %1993 = vmatpush1.bf16.msra.mxu0 %v1729
    %1994 = vmatprep.subr.bf16.mxu0 %v1738
    %1995 = vmatpush1.bf16.msra.mxu0 %v1737
    %1996 = vmatprep.subr.bf16.mxu0 %v1746
    %1997 = vmatpush1.bf16.msra.mxu0 %v1745
    %1998 = vmatprep.subr.bf16.mxu0 %v1754
    %1999 = vmatpush1.bf16.msra.mxu0 %v1753
    %2000 = vmatprep.subr.bf16.mxu0 %v1762
    %2001 = vmatpush1.bf16.msra.mxu0 %v1761
    %2002 = vmatprep.subr.bf16.mxu0 %v1770
    %2003 = vmatpush1.bf16.msra.mxu0 %v1769
    %2004 = vmatprep.subr.bf16.mxu0 0
    %2005 = vmatpush1.bf16.msra.mxu0 0
    %2006 = vmatprep.subr.bf16.mxu0 0
    %2007 = vmatpush1.bf16.msra.mxu0 0
    %2008 = vmatprep.subr.bf16.mxu0 0
    %2009 = vmatpush1.bf16.msra.mxu0 0
    %2010 = vmatprep.subr.bf16.mxu0 0
    %2011 = vmatpush1.bf16.msra.mxu0 0
    %2012 = vmatprep.subr.bf16.mxu0 0
    %2013 = vmatpush1.bf16.msra.mxu0 0
    %2014 = vmatprep.subr.bf16.mxu0 0
    %2015 = vmatpush1.bf16.msra.mxu0 0
    %2016 = vmatprep.subr.bf16.mxu0 0
    %2017 = vmatpush1.bf16.msra.mxu0 0
    %2018 = vmatprep.subr.bf16.mxu0 0
    %2019 = vmatpush1.bf16.msra.mxu0 0
    %2020 = vmatprep.mubr.bf16.mxu0 0
    %2021 = vmatmul.mubr.bf16.gmra.mrb[0].mxu0 %v1449
    %v2022 = vpop.f32.mrb[0].mxu0
    %v2023 = vadd.f32 0.0, %v2022
    %v2024 = vpop.f32.mrb[0].mxu0
    %v2025 = vadd.f32 0.0, %v2024
    %v2026 = vpop.f32.mrb[0].mxu0
    %v2027 = vadd.f32 0.0, %v2026
    %v2028 = vpop.f32.mrb[0].mxu0
    %v2029 = vadd.f32 0.0, %v2028
    %2030 = vmatprep.mubr.bf16.mxu0 0
    %2031 = vmatmul.mubr.bf16.gmra.mrb[0].mxu0 %v1450
    %v2032 = vpop.f32.mrb[0].mxu0
    %v2033 = vadd.f32 0.0, %v2032
    %v2034 = vpop.f32.mrb[0].mxu0
    %v2035 = vadd.f32 0.0, %v2034
    %v2036 = vpop.f32.mrb[0].mxu0
    %v2037 = vpop.f32.mrb[0].mxu0
    %2038 = vdwg.mxu0
    %2040 = vset.pattern.permute.xlu0 4
    %2041 = vperm.xlu0 %2040, %v1425
    %v2042 = vpop.permute.xlu0 %2041
    %2045 = vset.pattern.permute.xlu0 4
    %2046 = vperm.xlu0 %2045, %v1426
    %v2047 = vpop.permute.xlu0 %2046
    %2050 = vset.pattern.permute.xlu0 4
    %2051 = vperm.xlu0 %2050, %v1427
    %v2052 = vpop.permute.xlu0 %2051
    %v2054 = vmul.f32 %v2042, %v1446
    %v2055 = vmul.f32 %v2047, %v1447
    %v2056 = vmul.f32 %v2052, %v1448
    %2057 = vset.pattern.permute.xlu0 0
    %2058 = vperm.xlu0 %2057, %v1425
    %v2059 = vpop.permute.xlu0 %2058
    %2061 = vset.pattern.permute.xlu0 0
    %2062 = vperm.xlu0 %2061, %v1426
    %v2063 = vpop.permute.xlu0 %2062
    %2065 = vset.pattern.permute.xlu0 0
    %2066 = vperm.xlu0 %2065, %v1427
    %v2067 = vpop.permute.xlu0 %2066
    %v2069 = vmul.f32 %v2059, %v1870
    %v2070 = vmul.f32 %v2063, %v1874
    %v2071 = vmul.f32 %v2067, %v1880
    %v2072 = vadd.f32 %v2054, %v2069
    %v2073 = vadd.f32 %v2055, %v2070
    %v2074 = vadd.f32 %v2056, %v2071
    %2075 = vset.pattern.permute.xlu0 1
    %2076 = vperm.xlu0 %2075, %v1425
    %v2077 = vpop.permute.xlu0 %2076
    %2079 = vset.pattern.permute.xlu0 1
    %2080 = vperm.xlu0 %2079, %v1426
    %v2081 = vpop.permute.xlu0 %2080
    %2083 = vset.pattern.permute.xlu0 1
    %2084 = vperm.xlu0 %2083, %v1427
    %v2085 = vpop.permute.xlu0 %2084
    %v2087 = vmul.f32 %v2077, %v1872
    %v2088 = vmul.f32 %v2081, %v1876
    %v2089 = vmul.f32 %v2085, %v1882
    %v2090 = vadd.f32 %v2072, %v2087
    %v2091 = vadd.f32 %v2073, %v2088
    %v2092 = vadd.f32 %v2074, %v2089
    %2093 = vset.pattern.permute.xlu0 2
    %2094 = vperm.xlu0 %2093, %v1425
    %v2095 = vpop.permute.xlu0 %2094
    %2097 = vset.pattern.permute.xlu0 2
    %2098 = vperm.xlu0 %2097, %v1426
    %v2099 = vpop.permute.xlu0 %2098
    %2101 = vset.pattern.permute.xlu0 2
    %2102 = vperm.xlu0 %2101, %v1427
    %v2103 = vpop.permute.xlu0 %2102
    %v2105 = vmul.f32 %v2095, %v1921
    %v2106 = vmul.f32 %v2099, %v1925
    %v2107 = vmul.f32 %v2103, %v1931
    %v2108 = vadd.f32 %v2090, %v2105
    %v2109 = vadd.f32 %v2091, %v2106
    %v2110 = vadd.f32 %v2092, %v2107
    %2111 = vset.pattern.permute.xlu0 3
    %2112 = vperm.xlu0 %2111, %v1425
    %v2113 = vpop.permute.xlu0 %2112
    %2115 = vset.pattern.permute.xlu0 3
    %2116 = vperm.xlu0 %2115, %v1426
    %v2117 = vpop.permute.xlu0 %2116
    %2119 = vset.pattern.permute.xlu0 3
    %2120 = vperm.xlu0 %2119, %v1427
    %v2121 = vpop.permute.xlu0 %2120
    %v2123 = vmul.f32 %v2113, %v1923
    %v2124 = vmul.f32 %v2117, %v1927
    %v2125 = vmul.f32 %v2121, %v1933
    %v2126 = vadd.f32 %v2108, %v2123
    %v2127 = vadd.f32 %v2109, %v2124
    %v2128 = vadd.f32 %v2110, %v2125
    %2129 = vset.pattern.permute.xlu0 5
    %2130 = vperm.xlu0 %2129, %v1425
    %v2131 = vpop.permute.xlu0 %2130
    %2133 = vset.pattern.permute.xlu0 5
    %2134 = vperm.xlu0 %2133, %v1426
    %v2135 = vpop.permute.xlu0 %2134
    %2137 = vset.pattern.permute.xlu0 5
    %2138 = vperm.xlu0 %2137, %v1427
    %v2139 = vpop.permute.xlu0 %2138
    %v2141 = vmul.f32 %v2131, %v1972
    %v2142 = vmul.f32 %v2135, %v1976
    %v2143 = vmul.f32 %v2139, %v1982
    %v2144 = vadd.f32 %v2126, %v2141
    %v2145 = vadd.f32 %v2127, %v2142
    %v2146 = vadd.f32 %v2128, %v2143
    %2147 = vset.pattern.permute.xlu0 6
    %2148 = vperm.xlu0 %2147, %v1425
    %v2149 = vpop.permute.xlu0 %2148
    %2151 = vset.pattern.permute.xlu0 6
    %2152 = vperm.xlu0 %2151, %v1426
    %v2153 = vpop.permute.xlu0 %2152
    %2155 = vset.pattern.permute.xlu0 6
    %2156 = vperm.xlu0 %2155, %v1427
    %v2157 = vpop.permute.xlu0 %2156
    %v2159 = vmul.f32 %v2149, %v1974
    %v2160 = vmul.f32 %v2153, %v1978
    %v2161 = vmul.f32 %v2157, %v1984
    %v2162 = vadd.f32 %v2144, %v2159
    %v2163 = vadd.f32 %v2145, %v2160
    %v2164 = vadd.f32 %v2146, %v2161
    %2165 = vset.pattern.permute.xlu0 7
    %2166 = vperm.xlu0 %2165, %v1425
    %v2167 = vpop.permute.xlu0 %2166
    %2169 = vset.pattern.permute.xlu0 7
    %2170 = vperm.xlu0 %2169, %v1426
    %v2171 = vpop.permute.xlu0 %2170
    %2173 = vset.pattern.permute.xlu0 7
    %2174 = vperm.xlu0 %2173, %v1427
    %v2175 = vpop.permute.xlu0 %2174
    %v2177 = vmul.f32 %v2167, %v2023
    %v2178 = vmul.f32 %v2171, %v2027
    %v2179 = vmul.f32 %v2175, %v2033
    %v2180 = vadd.f32 %v2162, %v2177
    %v2181 = vadd.f32 %v2163, %v2178
    %v2182 = vadd.f32 %v2164, %v2179
    %2183 = vset.pattern.permute.xlu0 8
    %2184 = vperm.xlu0 %2183, %v1425
    %v2185 = vpop.permute.xlu0 %2184
    %2187 = vset.pattern.permute.xlu0 8
    %2188 = vperm.xlu0 %2187, %v1426
    %v2189 = vpop.permute.xlu0 %2188
    %2191 = vset.pattern.permute.xlu0 8
    %2192 = vperm.xlu0 %2191, %v1427
    %v2193 = vpop.permute.xlu0 %2192
    %v2195 = vmul.f32 %v2185, %v2025
    %v2196 = vmul.f32 %v2189, %v2029
    %v2197 = vmul.f32 %v2193, %v2035
    %v2198 = vadd.f32 %v2180, %v2195
    %v2199 = vadd.f32 %v2181, %v2196
    %v2200 = vadd.f32 %v2182, %v2197
    %v2201 = vpack.c.bf16 %v2199, %v2198
    %v2202 = vpack.c.bf16 %v2200, %v2200
    %v2206 = vunpack.c.l.b16 %v1428
    %v2207 = vunpack.c.l.b16 %v1429
    %v2208 = vunpack.c.l.b16 %v1430
    %v2209 = vpack.c.b16 %v2207, %v2206
    %v2210 = vpack.c.b16 %v2208, %v2208
    %vm2211 = vcmask 195584
    %v2213 = vsel %vm2211, %v2209, 0
    %v2216 = vsel %vm2211, %v2210, 0
    %vm2218 = vcmask 1043456
    %v2220 = vsel %vm2218, %v2202, 0
    %2222 = vmatprep.subr.bf16.mxu0 0
    %2223 = vmatpush1.bf16.msra.mxu0 %v2201
    %2224 = vmatprep.subr.bf16.mxu0 0
    %2225 = vmatpush1.bf16.msra.mxu0 %v2220
    %2226 = vmatprep.subr.bf16.mxu0 0
    %2227 = vmatpush1.bf16.msra.mxu0 0
    %2228 = vmatprep.subr.bf16.mxu0 0
    %2229 = vmatpush1.bf16.msra.mxu0 0
    %2230 = vmatprep.subr.bf16.mxu0 0
    %2231 = vmatpush1.bf16.msra.mxu0 0
    %2232 = vmatprep.subr.bf16.mxu0 0
    %2233 = vmatpush1.bf16.msra.mxu0 0
    %2234 = vmatprep.subr.bf16.mxu0 0
    %2235 = vmatpush1.bf16.msra.mxu0 0
    %2236 = vmatprep.subr.bf16.mxu0 0
    %2237 = vmatpush1.bf16.msra.mxu0 0
    %2238 = vmatprep.subr.bf16.mxu0 0
    %2239 = vmatpush1.bf16.msra.mxu0 0
    %2240 = vmatprep.subr.bf16.mxu0 0
    %2241 = vmatpush1.bf16.msra.mxu0 0
    %2242 = vmatprep.subr.bf16.mxu0 0
    %2243 = vmatpush1.bf16.msra.mxu0 0
    %2244 = vmatprep.subr.bf16.mxu0 0
    %2245 = vmatpush1.bf16.msra.mxu0 0
    %2246 = vmatprep.subr.bf16.mxu0 0
    %2247 = vmatpush1.bf16.msra.mxu0 0
    %2248 = vmatprep.subr.bf16.mxu0 0
    %2249 = vmatpush1.bf16.msra.mxu0 0
    %2250 = vmatprep.subr.bf16.mxu0 0
    %2251 = vmatpush1.bf16.msra.mxu0 0
    %2252 = vmatprep.subr.bf16.mxu0 0
    %2253 = vmatpush1.bf16.msra.mxu0 0
    %2254 = vmatprep.mubr.bf16.mxu0 0
    %2255 = vmatmul.mubr.bf16.gmra.mrb[0].mxu0 %v2213
    %v2256 = vpop.f32.mrb[0].mxu0
    %v2257 = vadd.f32 0.0, %v2256
    %v2258 = vpop.f32.mrb[0].mxu0
    %v2259 = vpop.f32.mrb[0].mxu0
    %v2260 = vadd.f32 0.0, %v2259
    %v2261 = vpop.f32.mrb[0].mxu0
    %2262 = vmatprep.mubr.bf16.mxu0 0
    %2263 = vmatmul.mubr.bf16.gmra.mrb[0].mxu0 %v2216
    %v2264 = vpop.f32.mrb[0].mxu0
    %v2265 = vadd.f32 0.0, %v2264
    %v2266 = vpop.f32.mrb[0].mxu0
    %v2267 = vpop.f32.mrb[0].mxu0
    %v2268 = vpop.f32.mrb[0].mxu0
    %2269 = vdwg.mxu0
    %2270 = vadd.xlane.f32.xlu0 %v2257
    %v2271 = vpop.xlane.xlu0 %2270
    %2272 = vadd.xlane.f32.xlu0 %v2260
    %v2273 = vpop.xlane.xlu0 %2272
    %2274 = vadd.xlane.f32.xlu0 %v2265
    %v2275 = vpop.xlane.xlu0 %2274
    %v2276 = vmul.f32 %v2271, %v215
    %v2277 = vmul.f32 %v2273, %v215
    %v2278 = vmul.f32 %v2275, %v215
    %v2279 = vmul.f32 %v2257, %v2257
    %v2280 = vmul.f32 %v2260, %v2260
    %v2281 = vmul.f32 %v2265, %v2265
    %2282 = vadd.xlane.f32.xlu0 %v2279
    %v2283 = vpop.xlane.xlu0 %2282
    %2284 = vadd.xlane.f32.xlu0 %v2280
    %v2285 = vpop.xlane.xlu0 %2284
    %2286 = vadd.xlane.f32.xlu0 %v2281
    %v2287 = vpop.xlane.xlu0 %2286
    %v2288 = vmul.f32 %v2283, %v215
    %v2289 = vmul.f32 %v2285, %v215
    %v2290 = vmul.f32 %v2287, %v215
    %v2291 = vmul.f32 %v2276, %v2276
    %v2292 = vmul.f32 %v2277, %v2277
    %v2293 = vmul.f32 %v2278, %v2278
    %v2294 = vsub.f32 %v2288, %v2291
    %v2295 = vsub.f32 %v2289, %v2292
    %v2296 = vsub.f32 %v2290, %v2293
    %v2297 = vmax.f32 %v2294, 0.0
    %v2298 = vmax.f32 %v2295, 0.0
    %v2299 = vmax.f32 %v2296, 0.0
    %v2300 = vsub.f32 %v2257, %v2276
    %v2301 = vsub.f32 %v2260, %v2277
    %v2302 = vsub.f32 %v2265, %v2278
    %v2303 = vadd.f32 %v2297, 1e-05
    %v2304 = vadd.f32 %v2298, 1e-05
    %v2305 = vadd.f32 %v2299, 1e-05
    %v2306 = vrsqrt.pop %v2303
    %v2307 = vrsqrt.pop %v2304
    %v2308 = vrsqrt.pop %v2305
    %v2309 = vmul.f32 %v2300, %v2306
    %v2310 = vmul.f32 %v2301, %v2307
    %v2311 = vmul.f32 %v2302, %v2308
    %v2312 = vmax.f32 %v2309, 0.0
    %v2313 = vmax.f32 %v2310, 0.0
    %v2314 = vmax.f32 %v2311, 0.0
    %v2315 = vpack.c.bf16 %v2313, %v2312
    %v2316 = vpack.c.bf16 %v2314, %v2314
    %2317 = vmatprep.subr.bf16.mxu0 %v1708
    %2318 = vmatpush1.bf16.msra.mxu0 %v1707
    %2319 = vmatprep.subr.bf16.mxu0 %v1716
    %2320 = vmatpush1.bf16.msra.mxu0 %v1715
    %2321 = vmatprep.subr.bf16.mxu0 %v1724
    %2322 = vmatpush1.bf16.msra.mxu0 %v1723
    %2323 = vmatprep.subr.bf16.mxu0 %v1732
    %2324 = vmatpush1.bf16.msra.mxu0 %v1731
    %2325 = vmatprep.subr.bf16.mxu0 %v1740
    %2326 = vmatpush1.bf16.msra.mxu0 %v1739
    %2327 = vmatprep.subr.bf16.mxu0 %v1748
    %2328 = vmatpush1.bf16.msra.mxu0 %v1747
    %2329 = vmatprep.subr.bf16.mxu0 %v1756
    %2330 = vmatpush1.bf16.msra.mxu0 %v1755
    %2331 = vmatprep.subr.bf16.mxu0 %v1764
    %2332 = vmatpush1.bf16.msra.mxu0 %v1763
    %2333 = vmatprep.subr.bf16.mxu0 0
    %2334 = vmatpush1.bf16.msra.mxu0 0
    %2335 = vmatprep.subr.bf16.mxu0 0
    %2336 = vmatpush1.bf16.msra.mxu0 0
    %2337 = vmatprep.subr.bf16.mxu0 0
    %2338 = vmatpush1.bf16.msra.mxu0 0
    %2339 = vmatprep.subr.bf16.mxu0 0
    %2340 = vmatpush1.bf16.msra.mxu0 0
    %2341 = vmatprep.subr.bf16.mxu0 0
    %2342 = vmatpush1.bf16.msra.mxu0 0
    %2343 = vmatprep.subr.bf16.mxu0 0
    %2344 = vmatpush1.bf16.msra.mxu0 0
    %2345 = vmatprep.subr.bf16.mxu0 0
    %2346 = vmatpush1.bf16.msra.mxu0 0
    %2347 = vmatprep.subr.bf16.mxu0 0
    %2348 = vmatpush1.bf16.msra.mxu0 0
    %2349 = vmatprep.mubr.bf16.mxu0 0
    %2350 = vmatmul.mubr.bf16.gmra.mrb[0].mxu0 %v2315
    %v2351 = vpop.f32.mrb[0].mxu0
    %v2352 = vadd.f32 0.0, %v2351
    %v2353 = vpop.f32.mrb[0].mxu0
    %v2354 = vadd.f32 0.0, %v2353
    %v2355 = vpop.f32.mrb[0].mxu0
    %v2356 = vadd.f32 0.0, %v2355
    %v2357 = vpop.f32.mrb[0].mxu0
    %v2358 = vadd.f32 0.0, %v2357
    %2359 = vmatprep.mubr.bf16.mxu0 0
    %2360 = vmatmul.mubr.bf16.gmra.mrb[0].mxu0 %v2316
    %v2361 = vpop.f32.mrb[0].mxu0
    %v2362 = vadd.f32 0.0, %v2361
    %v2363 = vpop.f32.mrb[0].mxu0
    %v2364 = vadd.f32 0.0, %v2363
    %v2365 = vpop.f32.mrb[0].mxu0
    %v2366 = vpop.f32.mrb[0].mxu0
    %2367 = vdwg.mxu0
    %2368 = vmatprep.subr.bf16.mxu0 %v1710
    %2369 = vmatpush1.bf16.msra.mxu0 %v1709
    %2370 = vmatprep.subr.bf16.mxu0 %v1718
    %2371 = vmatpush1.bf16.msra.mxu0 %v1717
    %2372 = vmatprep.subr.bf16.mxu0 %v1726
    %2373 = vmatpush1.bf16.msra.mxu0 %v1725
    %2374 = vmatprep.subr.bf16.mxu0 %v1734
    %2375 = vmatpush1.bf16.msra.mxu0 %v1733
    %2376 = vmatprep.subr.bf16.mxu0 %v1742
    %2377 = vmatpush1.bf16.msra.mxu0 %v1741
    %2378 = vmatprep.subr.bf16.mxu0 %v1750
    %2379 = vmatpush1.bf16.msra.mxu0 %v1749
    %2380 = vmatprep.subr.bf16.mxu0 %v1758
    %2381 = vmatpush1.bf16.msra.mxu0 %v1757
    %2382 = vmatprep.subr.bf16.mxu0 %v1766
    %2383 = vmatpush1.bf16.msra.mxu0 %v1765
    %2384 = vmatprep.subr.bf16.mxu0 0
    %2385 = vmatpush1.bf16.msra.mxu0 0
    %2386 = vmatprep.subr.bf16.mxu0 0
    %2387 = vmatpush1.bf16.msra.mxu0 0
    %2388 = vmatprep.subr.bf16.mxu0 0
    %2389 = vmatpush1.bf16.msra.mxu0 0
    %2390 = vmatprep.subr.bf16.mxu0 0
    %2391 = vmatpush1.bf16.msra.mxu0 0
    %2392 = vmatprep.subr.bf16.mxu0 0
    %2393 = vmatpush1.bf16.msra.mxu0 0
    %2394 = vmatprep.subr.bf16.mxu0 0
    %2395 = vmatpush1.bf16.msra.mxu0 0
    %2396 = vmatprep.subr.bf16.mxu0 0
    %2397 = vmatpush1.bf16.msra.mxu0 0
    %2398 = vmatprep.subr.bf16.mxu0 0
    %2399 = vmatpush1.bf16.msra.mxu0 0
    %2400 = vmatprep.mubr.bf16.mxu0 0
    %2401 = vmatmul.mubr.bf16.gmra.mrb[0].mxu0 %v2315
    %v2402 = vpop.f32.mrb[0].mxu0
    %v2403 = vadd.f32 0.0, %v2402
    %v2404 = vpop.f32.mrb[0].mxu0
    %v2405 = vadd.f32 0.0, %v2404
    %v2406 = vpop.f32.mrb[0].mxu0
    %v2407 = vadd.f32 0.0, %v2406
    %v2408 = vpop.f32.mrb[0].mxu0
    %v2409 = vadd.f32 0.0, %v2408
    %2410 = vmatprep.mubr.bf16.mxu0 0
    %2411 = vmatmul.mubr.bf16.gmra.mrb[0].mxu0 %v2316
    %v2412 = vpop.f32.mrb[0].mxu0
    %v2413 = vadd.f32 0.0, %v2412
    %v2414 = vpop.f32.mrb[0].mxu0
    %v2415 = vadd.f32 0.0, %v2414
    %v2416 = vpop.f32.mrb[0].mxu0
    %v2417 = vpop.f32.mrb[0].mxu0
    %2418 = vdwg.mxu0
    %2419 = vmatprep.subr.bf16.mxu0 %v1712
    %2420 = vmatpush1.bf16.msra.mxu0 %v1711
    %2421 = vmatprep.subr.bf16.mxu0 %v1720
    %2422 = vmatpush1.bf16.msra.mxu0 %v1719
    %2423 = vmatprep.subr.bf16.mxu0 %v1728
    %2424 = vmatpush1.bf16.msra.mxu0 %v1727
    %2425 = vmatprep.subr.bf16.mxu0 %v1736
    %2426 = vmatpush1.bf16.msra.mxu0 %v1735
    %2427 = vmatprep.subr.bf16.mxu0 %v1744
    %2428 = vmatpush1.bf16.msra.mxu0 %v1743
    %2429 = vmatprep.subr.bf16.mxu0 %v1752
    %2430 = vmatpush1.bf16.msra.mxu0 %v1751
    %2431 = vmatprep.subr.bf16.mxu0 %v1760
    %2432 = vmatpush1.bf16.msra.mxu0 %v1759
    %2433 = vmatprep.subr.bf16.mxu0 %v1768
    %2434 = vmatpush1.bf16.msra.mxu0 %v1767
    %2435 = vmatprep.subr.bf16.mxu0 0
    %2436 = vmatpush1.bf16.msra.mxu0 0
    %2437 = vmatprep.subr.bf16.mxu0 0
    %2438 = vmatpush1.bf16.msra.mxu0 0
    %2439 = vmatprep.subr.bf16.mxu0 0
    %2440 = vmatpush1.bf16.msra.mxu0 0
    %2441 = vmatprep.subr.bf16.mxu0 0
    %2442 = vmatpush1.bf16.msra.mxu0 0
    %2443 = vmatprep.subr.bf16.mxu0 0
    %2444 = vmatpush1.bf16.msra.mxu0 0
    %2445 = vmatprep.subr.bf16.mxu0 0
    %2446 = vmatpush1.bf16.msra.mxu0 0
    %2447 = vmatprep.subr.bf16.mxu0 0
    %2448 = vmatpush1.bf16.msra.mxu0 0
    %2449 = vmatprep.subr.bf16.mxu0 0
    %2450 = vmatpush1.bf16.msra.mxu0 0
    %2451 = vmatprep.mubr.bf16.mxu0 0
    %2452 = vmatmul.mubr.bf16.gmra.mrb[0].mxu0 %v2315
    %v2453 = vpop.f32.mrb[0].mxu0
    %v2454 = vadd.f32 0.0, %v2453
    %v2455 = vpop.f32.mrb[0].mxu0
    %v2456 = vadd.f32 0.0, %v2455
    %v2457 = vpop.f32.mrb[0].mxu0
    %v2458 = vadd.f32 0.0, %v2457
    %v2459 = vpop.f32.mrb[0].mxu0
    %v2460 = vadd.f32 0.0, %v2459
    %2461 = vmatprep.mubr.bf16.mxu0 0
    %2462 = vmatmul.mubr.bf16.gmra.mrb[0].mxu0 %v2316
    %v2463 = vpop.f32.mrb[0].mxu0
    %v2464 = vadd.f32 0.0, %v2463
    %v2465 = vpop.f32.mrb[0].mxu0
    %v2466 = vadd.f32 0.0, %v2465
    %v2467 = vpop.f32.mrb[0].mxu0
    %v2468 = vpop.f32.mrb[0].mxu0
    %2469 = vdwg.mxu0
    %2470 = vmatprep.subr.bf16.mxu0 %v1714
    %2471 = vmatpush1.bf16.msra.mxu0 %v1713
    %2472 = vmatprep.subr.bf16.mxu0 %v1722
    %2473 = vmatpush1.bf16.msra.mxu0 %v1721
    %2474 = vmatprep.subr.bf16.mxu0 %v1730
    %2475 = vmatpush1.bf16.msra.mxu0 %v1729
    %2476 = vmatprep.subr.bf16.mxu0 %v1738
    %2477 = vmatpush1.bf16.msra.mxu0 %v1737
    %2478 = vmatprep.subr.bf16.mxu0 %v1746
    %2479 = vmatpush1.bf16.msra.mxu0 %v1745
    %2480 = vmatprep.subr.bf16.mxu0 %v1754
    %2481 = vmatpush1.bf16.msra.mxu0 %v1753
    %2482 = vmatprep.subr.bf16.mxu0 %v1762
    %2483 = vmatpush1.bf16.msra.mxu0 %v1761
    %2484 = vmatprep.subr.bf16.mxu0 %v1770
    %2485 = vmatpush1.bf16.msra.mxu0 %v1769
    %2486 = vmatprep.subr.bf16.mxu0 0
    %2487 = vmatpush1.bf16.msra.mxu0 0
    %2488 = vmatprep.subr.bf16.mxu0 0
    %2489 = vmatpush1.bf16.msra.mxu0 0
    %2490 = vmatprep.subr.bf16.mxu0 0
    %2491 = vmatpush1.bf16.msra.mxu0 0
    %2492 = vmatprep.subr.bf16.mxu0 0
    %2493 = vmatpush1.bf16.msra.mxu0 0
    %2494 = vmatprep.subr.bf16.mxu0 0
    %2495 = vmatpush1.bf16.msra.mxu0 0
    %2496 = vmatprep.subr.bf16.mxu0 0
    %2497 = vmatpush1.bf16.msra.mxu0 0
    %2498 = vmatprep.subr.bf16.mxu0 0
    %2499 = vmatpush1.bf16.msra.mxu0 0
    %2500 = vmatprep.subr.bf16.mxu0 0
    %2501 = vmatpush1.bf16.msra.mxu0 0
    %2502 = vmatprep.mubr.bf16.mxu0 0
    %2503 = vmatmul.mubr.bf16.gmra.mrb[0].mxu0 %v2315
    %v2504 = vpop.f32.mrb[0].mxu0
    %v2505 = vadd.f32 0.0, %v2504
    %v2506 = vpop.f32.mrb[0].mxu0
    %v2507 = vadd.f32 0.0, %v2506
    %v2508 = vpop.f32.mrb[0].mxu0
    %v2509 = vadd.f32 0.0, %v2508
    %v2510 = vpop.f32.mrb[0].mxu0
    %v2511 = vadd.f32 0.0, %v2510
    %2512 = vmatprep.mubr.bf16.mxu0 0
    %2513 = vmatmul.mubr.bf16.gmra.mrb[0].mxu0 %v2316
    %v2514 = vpop.f32.mrb[0].mxu0
    %v2515 = vadd.f32 0.0, %v2514
    %v2516 = vpop.f32.mrb[0].mxu0
    %v2517 = vadd.f32 0.0, %v2516
    %v2518 = vpop.f32.mrb[0].mxu0
    %v2519 = vpop.f32.mrb[0].mxu0
    %2520 = vdwg.mxu0
    %2522 = vset.pattern.permute.xlu0 4
    %2523 = vperm.xlu0 %2522, %v1431
    %v2524 = vpop.permute.xlu0 %2523
    %2527 = vset.pattern.permute.xlu0 4
    %2528 = vperm.xlu0 %2527, %v1432
    %v2529 = vpop.permute.xlu0 %2528
    %2532 = vset.pattern.permute.xlu0 4
    %2533 = vperm.xlu0 %2532, %v1433
    %v2534 = vpop.permute.xlu0 %2533
    %v2536 = vmul.f32 %v2524, %v2312
    %v2537 = vmul.f32 %v2529, %v2313
    %v2538 = vmul.f32 %v2534, %v2314
    %2539 = vset.pattern.permute.xlu0 0
    %2540 = vperm.xlu0 %2539, %v1431
    %v2541 = vpop.permute.xlu0 %2540
    %2543 = vset.pattern.permute.xlu0 0
    %2544 = vperm.xlu0 %2543, %v1432
    %v2545 = vpop.permute.xlu0 %2544
    %2547 = vset.pattern.permute.xlu0 0
    %2548 = vperm.xlu0 %2547, %v1433
    %v2549 = vpop.permute.xlu0 %2548
    %v2551 = vmul.f32 %v2541, %v2352
    %v2552 = vmul.f32 %v2545, %v2356
    %v2553 = vmul.f32 %v2549, %v2362
    %v2554 = vadd.f32 %v2536, %v2551
    %v2555 = vadd.f32 %v2537, %v2552
    %v2556 = vadd.f32 %v2538, %v2553
    %2557 = vset.pattern.permute.xlu0 1
    %2558 = vperm.xlu0 %2557, %v1431
    %v2559 = vpop.permute.xlu0 %2558
    %2561 = vset.pattern.permute.xlu0 1
    %2562 = vperm.xlu0 %2561, %v1432
    %v2563 = vpop.permute.xlu0 %2562
    %2565 = vset.pattern.permute.xlu0 1
    %2566 = vperm.xlu0 %2565, %v1433
    %v2567 = vpop.permute.xlu0 %2566
    %v2569 = vmul.f32 %v2559, %v2354
    %v2570 = vmul.f32 %v2563, %v2358
    %v2571 = vmul.f32 %v2567, %v2364
    %v2572 = vadd.f32 %v2554, %v2569
    %v2573 = vadd.f32 %v2555, %v2570
    %v2574 = vadd.f32 %v2556, %v2571
    %2575 = vset.pattern.permute.xlu0 2
    %2576 = vperm.xlu0 %2575, %v1431
    %v2577 = vpop.permute.xlu0 %2576
    %2579 = vset.pattern.permute.xlu0 2
    %2580 = vperm.xlu0 %2579, %v1432
    %v2581 = vpop.permute.xlu0 %2580
    %2583 = vset.pattern.permute.xlu0 2
    %2584 = vperm.xlu0 %2583, %v1433
    %v2585 = vpop.permute.xlu0 %2584
    %v2587 = vmul.f32 %v2577, %v2403
    %v2588 = vmul.f32 %v2581, %v2407
    %v2589 = vmul.f32 %v2585, %v2413
    %v2590 = vadd.f32 %v2572, %v2587
    %v2591 = vadd.f32 %v2573, %v2588
    %v2592 = vadd.f32 %v2574, %v2589
    %2593 = vset.pattern.permute.xlu0 3
    %2594 = vperm.xlu0 %2593, %v1431
    %v2595 = vpop.permute.xlu0 %2594
    %2597 = vset.pattern.permute.xlu0 3
    %2598 = vperm.xlu0 %2597, %v1432
    %v2599 = vpop.permute.xlu0 %2598
    %2601 = vset.pattern.permute.xlu0 3
    %2602 = vperm.xlu0 %2601, %v1433
    %v2603 = vpop.permute.xlu0 %2602
    %v2605 = vmul.f32 %v2595, %v2405
    %v2606 = vmul.f32 %v2599, %v2409
    %v2607 = vmul.f32 %v2603, %v2415
    %v2608 = vadd.f32 %v2590, %v2605
    %v2609 = vadd.f32 %v2591, %v2606
    %v2610 = vadd.f32 %v2592, %v2607
    %2611 = vset.pattern.permute.xlu0 5
    %2612 = vperm.xlu0 %2611, %v1431
    %v2613 = vpop.permute.xlu0 %2612
    %2615 = vset.pattern.permute.xlu0 5
    %2616 = vperm.xlu0 %2615, %v1432
    %v2617 = vpop.permute.xlu0 %2616
    %2619 = vset.pattern.permute.xlu0 5
    %2620 = vperm.xlu0 %2619, %v1433
    %v2621 = vpop.permute.xlu0 %2620
    %v2623 = vmul.f32 %v2613, %v2454
    %v2624 = vmul.f32 %v2617, %v2458
    %v2625 = vmul.f32 %v2621, %v2464
    %v2626 = vadd.f32 %v2608, %v2623
    %v2627 = vadd.f32 %v2609, %v2624
    %v2628 = vadd.f32 %v2610, %v2625
    %2629 = vset.pattern.permute.xlu0 6
    %2630 = vperm.xlu0 %2629, %v1431
    %v2631 = vpop.permute.xlu0 %2630
    %2633 = vset.pattern.permute.xlu0 6
    %2634 = vperm.xlu0 %2633, %v1432
    %v2635 = vpop.permute.xlu0 %2634
    %2637 = vset.pattern.permute.xlu0 6
    %2638 = vperm.xlu0 %2637, %v1433
    %v2639 = vpop.permute.xlu0 %2638
    %v2641 = vmul.f32 %v2631, %v2456
    %v2642 = vmul.f32 %v2635, %v2460
    %v2643 = vmul.f32 %v2639, %v2466
    %v2644 = vadd.f32 %v2626, %v2641
    %v2645 = vadd.f32 %v2627, %v2642
    %v2646 = vadd.f32 %v2628, %v2643
    %2647 = vset.pattern.permute.xlu0 7
    %2648 = vperm.xlu0 %2647, %v1431
    %v2649 = vpop.permute.xlu0 %2648
    %2651 = vset.pattern.permute.xlu0 7
    %2652 = vperm.xlu0 %2651, %v1432
    %v2653 = vpop.permute.xlu0 %2652
    %2655 = vset.pattern.permute.xlu0 7
    %2656 = vperm.xlu0 %2655, %v1433
    %v2657 = vpop.permute.xlu0 %2656
    %v2659 = vmul.f32 %v2649, %v2505
    %v2660 = vmul.f32 %v2653, %v2509
    %v2661 = vmul.f32 %v2657, %v2515
    %v2662 = vadd.f32 %v2644, %v2659
    %v2663 = vadd.f32 %v2645, %v2660
    %v2664 = vadd.f32 %v2646, %v2661
    %2665 = vset.pattern.permute.xlu0 8
    %2666 = vperm.xlu0 %2665, %v1431
    %v2667 = vpop.permute.xlu0 %2666
    %2669 = vset.pattern.permute.xlu0 8
    %2670 = vperm.xlu0 %2669, %v1432
    %v2671 = vpop.permute.xlu0 %2670
    %2673 = vset.pattern.permute.xlu0 8
    %2674 = vperm.xlu0 %2673, %v1433
    %v2675 = vpop.permute.xlu0 %2674
    %v2677 = vmul.f32 %v2667, %v2507
    %v2678 = vmul.f32 %v2671, %v2511
    %v2679 = vmul.f32 %v2675, %v2517
    %v2680 = vadd.f32 %v2662, %v2677
    %v2681 = vadd.f32 %v2663, %v2678
    %v2682 = vadd.f32 %v2664, %v2679
    %v2683 = vpack.c.bf16 %v2681, %v2680
    %v2684 = vpack.c.bf16 %v2682, %v2682
    %v2688 = vunpack.c.l.b16 %v1434
    %v2689 = vunpack.c.l.b16 %v1435
    %v2690 = vunpack.c.l.b16 %v1436
    %v2691 = vpack.c.b16 %v2689, %v2688
    %v2692 = vpack.c.b16 %v2690, %v2690
    %v2694 = vsel %vm2211, %v2691, 0
    %v2697 = vsel %vm2211, %v2692, 0
    %v2700 = vsel %vm2218, %v2684, 0
    %2702 = vmatprep.subr.bf16.mxu0 0
    %2703 = vmatpush1.bf16.msra.mxu0 %v2683
    %2704 = vmatprep.subr.bf16.mxu0 0
    %2705 = vmatpush1.bf16.msra.mxu0 %v2700
    %2706 = vmatprep.subr.bf16.mxu0 0
    %2707 = vmatpush1.bf16.msra.mxu0 0
    %2708 = vmatprep.subr.bf16.mxu0 0
    %2709 = vmatpush1.bf16.msra.mxu0 0
    %2710 = vmatprep.subr.bf16.mxu0 0
    %2711 = vmatpush1.bf16.msra.mxu0 0
    %2712 = vmatprep.subr.bf16.mxu0 0
    %2713 = vmatpush1.bf16.msra.mxu0 0
    %2714 = vmatprep.subr.bf16.mxu0 0
    %2715 = vmatpush1.bf16.msra.mxu0 0
    %2716 = vmatprep.subr.bf16.mxu0 0
    %2717 = vmatpush1.bf16.msra.mxu0 0
    %2718 = vmatprep.subr.bf16.mxu0 0
    %2719 = vmatpush1.bf16.msra.mxu0 0
    %2720 = vmatprep.subr.bf16.mxu0 0
    %2721 = vmatpush1.bf16.msra.mxu0 0
    %2722 = vmatprep.subr.bf16.mxu0 0
    %2723 = vmatpush1.bf16.msra.mxu0 0
    %2724 = vmatprep.subr.bf16.mxu0 0
    %2725 = vmatpush1.bf16.msra.mxu0 0
    %2726 = vmatprep.subr.bf16.mxu0 0
    %2727 = vmatpush1.bf16.msra.mxu0 0
    %2728 = vmatprep.subr.bf16.mxu0 0
    %2729 = vmatpush1.bf16.msra.mxu0 0
    %2730 = vmatprep.subr.bf16.mxu0 0
    %2731 = vmatpush1.bf16.msra.mxu0 0
    %2732 = vmatprep.subr.bf16.mxu0 0
    %2733 = vmatpush1.bf16.msra.mxu0 0
    %2734 = vmatprep.mubr.bf16.mxu0 0
    %2735 = vmatmul.mubr.bf16.gmra.mrb[0].mxu0 %v2694
    %v2736 = vpop.f32.mrb[0].mxu0
    %v2737 = vadd.f32 0.0, %v2736
    %v2738 = vpop.f32.mrb[0].mxu0
    %v2739 = vpop.f32.mrb[0].mxu0
    %v2740 = vadd.f32 0.0, %v2739
    %v2741 = vpop.f32.mrb[0].mxu0
    %2742 = vmatprep.mubr.bf16.mxu0 0
    %2743 = vmatmul.mubr.bf16.gmra.mrb[0].mxu0 %v2697
    %v2744 = vpop.f32.mrb[0].mxu0
    %v2745 = vadd.f32 0.0, %v2744
    %v2746 = vpop.f32.mrb[0].mxu0
    %v2747 = vpop.f32.mrb[0].mxu0
    %v2748 = vpop.f32.mrb[0].mxu0
    %2749 = vdwg.mxu0
    %2750 = vadd.xlane.f32.xlu0 %v2737
    %v2751 = vpop.xlane.xlu0 %2750
    %2752 = vadd.xlane.f32.xlu0 %v2740
    %v2753 = vpop.xlane.xlu0 %2752
    %2754 = vadd.xlane.f32.xlu0 %v2745
    %v2755 = vpop.xlane.xlu0 %2754
    %v2756 = vmul.f32 %v2751, %v215
    %v2757 = vmul.f32 %v2753, %v215
    %v2758 = vmul.f32 %v2755, %v215
    %v2759 = vmul.f32 %v2737, %v2737
    %v2760 = vmul.f32 %v2740, %v2740
    %v2761 = vmul.f32 %v2745, %v2745
    %2762 = vadd.xlane.f32.xlu0 %v2759
    %v2763 = vpop.xlane.xlu0 %2762
    %2764 = vadd.xlane.f32.xlu0 %v2760
    %v2765 = vpop.xlane.xlu0 %2764
    %2766 = vadd.xlane.f32.xlu0 %v2761
    %v2767 = vpop.xlane.xlu0 %2766
    %v2768 = vmul.f32 %v2763, %v215
    %v2769 = vmul.f32 %v2765, %v215
    %v2770 = vmul.f32 %v2767, %v215
    %v2771 = vmul.f32 %v2756, %v2756
    %v2772 = vmul.f32 %v2757, %v2757
    %v2773 = vmul.f32 %v2758, %v2758
    %v2774 = vsub.f32 %v2768, %v2771
    %v2775 = vsub.f32 %v2769, %v2772
    %v2776 = vsub.f32 %v2770, %v2773
    %v2777 = vmax.f32 %v2774, 0.0
    %v2778 = vmax.f32 %v2775, 0.0
    %v2779 = vmax.f32 %v2776, 0.0
    %v2780 = vsub.f32 %v2737, %v2756
    %v2781 = vsub.f32 %v2740, %v2757
    %v2782 = vsub.f32 %v2745, %v2758
    %v2783 = vadd.f32 %v2777, 1e-05
    %v2784 = vadd.f32 %v2778, 1e-05
    %v2785 = vadd.f32 %v2779, 1e-05
    %v2786 = vrsqrt.pop %v2783
    %v2787 = vrsqrt.pop %v2784
    %v2788 = vrsqrt.pop %v2785
    %v2789 = vmul.f32 %v2780, %v2786
    %v2790 = vmul.f32 %v2781, %v2787
    %v2791 = vmul.f32 %v2782, %v2788
    %v2792 = vstv %s1437
    %v2793 = vmul.f32 %v2792, %v1443
    %v2794 = vstv %s1440
    %v2795 = vmul.f32 %v2794, %v2789
    %v2796 = vadd.f32 %v2793, %v2795
    %v2797 = vstv %s1438
    %v2798 = vmul.f32 %v2797, %v1444
    %v2799 = vadd.f32 %v2796, %v2798
    %v2800 = vstv %s1441
    %v2801 = vmul.f32 %v2800, %v2790
    %v2802 = vadd.f32 %v2799, %v2801
    %v2803 = vstv %s1439
    %v2804 = vmul.f32 %v2803, %v1445
    %v2805 = vadd.f32 %v2802, %v2804
    %v2806 = vstv %s1442
    %v2807 = vmul.f32 %v2806, %v2791
    %v2808 = vadd.f32 %v2805, %v2807
    %2809 = vst [vmem:[#allocation2 + $0x18] sm:$0xff] %v2808
    %v2810 = vld [vmem:[%s14] sm:$0xff]
    %v2811 = vld [vmem:[%s14 + $0x8] sm:$0xff]
    %v2812 = vld [vmem:[%s14 + $0x10] sm:$0xff]
    %v2813 = vld [vmem:[%s14 + $0x18] sm:$0xff]
    %v2814 = vld [vmem:[%s15] sm:$0xf]
    %v2815 = vld [vmem:[%s15 + $0x4] sm:$0xf]
    %v2816 = vld [vmem:[%s15 + $0x8] sm:$0xf]
    %v2817 = vld [vmem:[%s15 + $0xc] sm:$0xf]
    %v2818 = vld [vmem:[%s16] sm:$0xff]
    %v2819 = vld [vmem:[%s16 + $0x8] sm:$0xff]
    %v2820 = vld [vmem:[%s16 + $0x10] sm:$0xff]
    %v2821 = vld [vmem:[%s16 + $0x18] sm:$0xff]
    %v2822 = vld [vmem:[%s17] sm:$0xf]
    %v2823 = vld [vmem:[%s17 + $0x4] sm:$0xf]
    %v2824 = vld [vmem:[%s17 + $0x8] sm:$0xf]
    %v2825 = vld [vmem:[%s17 + $0xc] sm:$0xf]
    %s2826 = sld [smem:[#allocation3 + $0x10]]
    %s2827 = sld [smem:[#allocation3 + $0x13]]
    %s2828 = sld [smem:[#allocation3 + $0x16]]
    %s2829 = sld [smem:[#allocation3 + $0x19]]
    %s2830 = sld [smem:[#allocation3 + $0x11]]
    %s2831 = sld [smem:[#allocation3 + $0x14]]
    %s2832 = sld [smem:[#allocation3 + $0x17]]
    %s2833 = sld [smem:[#allocation3 + $0x1a]]
    %v2834 = vld [vmem:[#allocation2] sm:$0xff]
    %v2835 = vld [vmem:[#allocation2 + $0x8] sm:$0xff]
    %v2836 = vld [vmem:[#allocation2 + $0x10] sm:$0xff]
    %v2837 = vld [vmem:[#allocation2 + $0x18] sm:$0xff]
    %v2838 = vmax.f32 %v2834, 0.0
    %v2839 = vmax.f32 %v2835, 0.0
    %v2840 = vmax.f32 %v2836, 0.0
    %v2841 = vmax.f32 %v2837, 0.0
    %v2842 = vpack.c.bf16 %v2839, %v2838
    %v2843 = vpack.c.bf16 %v2841, %v2840
    %v2844 = vld [vmem:[%s5] sm:$0xff]
    %v2845 = vld [vmem:[%s5 + $0x8] sm:$0xff]
    %v2846 = vld [vmem:[%s5 + $0x10] sm:$0xff]
    %v2847 = vld [vmem:[%s5 + $0x18] sm:$0xff]
    %v2848 = vld [vmem:[%s5 + $0x20] sm:$0xff]
    %v2849 = vld [vmem:[%s5 + $0x28] sm:$0xff]
    %v2850 = vld [vmem:[%s5 + $0x30] sm:$0xff]
    %v2851 = vld [vmem:[%s5 + $0x38] sm:$0xff]
    %v2852 = vld [vmem:[%s5 + $0x40] sm:$0xff]
    %v2853 = vld [vmem:[%s5 + $0x48] sm:$0xff]
    %v2854 = vld [vmem:[%s5 + $0x50] sm:$0xff]
    %v2855 = vld [vmem:[%s5 + $0x58] sm:$0xff]
    %v2856 = vld [vmem:[%s5 + $0x60] sm:$0xff]
    %v2857 = vld [vmem:[%s5 + $0x68] sm:$0xff]
    %v2858 = vld [vmem:[%s5 + $0x70] sm:$0xff]
    %v2859 = vld [vmem:[%s5 + $0x78] sm:$0xff]
    %v2860 = vld [vmem:[%s5 + $0x80] sm:$0xff]
    %v2861 = vld [vmem:[%s5 + $0x88] sm:$0xff]
    %v2862 = vld [vmem:[%s5 + $0x90] sm:$0xff]
    %v2863 = vld [vmem:[%s5 + $0x98] sm:$0xff]
    %v2864 = vld [vmem:[%s5 + $0xa0] sm:$0xff]
    %v2865 = vld [vmem:[%s5 + $0xa8] sm:$0xff]
    %v2866 = vld [vmem:[%s5 + $0xb0] sm:$0xff]
    %v2867 = vld [vmem:[%s5 + $0xb8] sm:$0xff]
    %v2868 = vld [vmem:[%s5 + $0xc0] sm:$0xff]
    %v2869 = vld [vmem:[%s5 + $0xc8] sm:$0xff]
    %v2870 = vld [vmem:[%s5 + $0xd0] sm:$0xff]
    %v2871 = vld [vmem:[%s5 + $0xd8] sm:$0xff]
    %v2872 = vld [vmem:[%s5 + $0xe0] sm:$0xff]
    %v2873 = vld [vmem:[%s5 + $0xe8] sm:$0xff]
    %v2874 = vld [vmem:[%s5 + $0xf0] sm:$0xff]
    %v2875 = vld [vmem:[%s5 + $0xf8] sm:$0xff]
    %v2876 = vld [vmem:[%s5 + $0x100] sm:$0xff]
    %v2877 = vld [vmem:[%s5 + $0x108] sm:$0xff]
    %v2878 = vld [vmem:[%s5 + $0x110] sm:$0xff]
    %v2879 = vld [vmem:[%s5 + $0x118] sm:$0xff]
    %v2880 = vld [vmem:[%s5 + $0x120] sm:$0xff]
    %v2881 = vld [vmem:[%s5 + $0x128] sm:$0xff]
    %v2882 = vld [vmem:[%s5 + $0x130] sm:$0xff]
    %v2883 = vld [vmem:[%s5 + $0x138] sm:$0xff]
    %v2884 = vld [vmem:[%s5 + $0x140] sm:$0xff]
    %v2885 = vld [vmem:[%s5 + $0x148] sm:$0xff]
    %v2886 = vld [vmem:[%s5 + $0x150] sm:$0xff]
    %v2887 = vld [vmem:[%s5 + $0x158] sm:$0xff]
    %v2888 = vld [vmem:[%s5 + $0x160] sm:$0xff]
    %v2889 = vld [vmem:[%s5 + $0x168] sm:$0xff]
    %v2890 = vld [vmem:[%s5 + $0x170] sm:$0xff]
    %v2891 = vld [vmem:[%s5 + $0x178] sm:$0xff]
    %v2892 = vld [vmem:[%s5 + $0x180] sm:$0xff]
    %v2893 = vld [vmem:[%s5 + $0x188] sm:$0xff]
    %v2894 = vld [vmem:[%s5 + $0x190] sm:$0xff]
    %v2895 = vld [vmem:[%s5 + $0x198] sm:$0xff]
    %v2896 = vld [vmem:[%s5 + $0x1a0] sm:$0xff]
    %v2897 = vld [vmem:[%s5 + $0x1a8] sm:$0xff]
    %v2898 = vld [vmem:[%s5 + $0x1b0] sm:$0xff]
    %v2899 = vld [vmem:[%s5 + $0x1b8] sm:$0xff]
    %v2900 = vld [vmem:[%s5 + $0x1c0] sm:$0xff]
    %v2901 = vld [vmem:[%s5 + $0x1c8] sm:$0xff]
    %v2902 = vld [vmem:[%s5 + $0x1d0] sm:$0xff]
    %v2903 = vld [vmem:[%s5 + $0x1d8] sm:$0xff]
    %v2904 = vld [vmem:[%s5 + $0x1e0] sm:$0xff]
    %v2905 = vld [vmem:[%s5 + $0x1e8] sm:$0xff]
    %v2906 = vld [vmem:[%s5 + $0x1f0] sm:$0xff]
    %v2907 = vld [vmem:[%s5 + $0x1f8] sm:$0xff]
    %v2972 = vunpack.c.l.b16 %v2844
    %v2973 = vunpack.c.h.b16 %v2844
    %v2974 = vunpack.c.l.b16 %v2845
    %v2975 = vunpack.c.h.b16 %v2845
    %v2976 = vunpack.c.l.b16 %v2846
    %v2977 = vunpack.c.h.b16 %v2846
    %v2978 = vunpack.c.l.b16 %v2847
    %v2979 = vunpack.c.h.b16 %v2847
    %v2980 = vunpack.c.l.b16 %v2848
    %v2981 = vunpack.c.h.b16 %v2848
    %v2982 = vunpack.c.l.b16 %v2849
    %v2983 = vunpack.c.h.b16 %v2849
    %v2984 = vunpack.c.l.b16 %v2850
    %v2985 = vunpack.c.h.b16 %v2850
    %v2986 = vunpack.c.l.b16 %v2851
    %v2987 = vunpack.c.h.b16 %v2851
    %v2988 = vunpack.c.l.b16 %v2852
    %v2989 = vunpack.c.h.b16 %v2852
    %v2990 = vunpack.c.l.b16 %v2853
    %v2991 = vunpack.c.h.b16 %v2853
    %v2992 = vunpack.c.l.b16 %v2854
    %v2993 = vunpack.c.h.b16 %v2854
    %v2994 = vunpack.c.l.b16 %v2855
    %v2995 = vunpack.c.h.b16 %v2855
    %v2996 = vunpack.c.l.b16 %v2856
    %v2997 = vunpack.c.h.b16 %v2856
    %v2998 = vunpack.c.l.b16 %v2857
    %v2999 = vunpack.c.h.b16 %v2857
    %v3000 = vunpack.c.l.b16 %v2858
    %v3001 = vunpack.c.h.b16 %v2858
    %v3002 = vunpack.c.l.b16 %v2859
    %v3003 = vunpack.c.h.b16 %v2859
    %v3004 = vunpack.c.l.b16 %v2860
    %v3005 = vunpack.c.h.b16 %v2860
    %v3006 = vunpack.c.l.b16 %v2861
    %v3007 = vunpack.c.h.b16 %v2861
    %v3008 = vunpack.c.l.b16 %v2862
    %v3009 = vunpack.c.h.b16 %v2862
    %v3010 = vunpack.c.l.b16 %v2863
    %v3011 = vunpack.c.h.b16 %v2863
    %v3012 = vunpack.c.l.b16 %v2864
    %v3013 = vunpack.c.h.b16 %v2864
    %v3014 = vunpack.c.l.b16 %v2865
    %v3015 = vunpack.c.h.b16 %v2865
    %v3016 = vunpack.c.l.b16 %v2866
    %v3017 = vunpack.c.h.b16 %v2866
    %v3018 = vunpack.c.l.b16 %v2867
    %v3019 = vunpack.c.h.b16 %v2867
    %v3020 = vunpack.c.l.b16 %v2868
    %v3021 = vunpack.c.h.b16 %v2868
    %v3022 = vunpack.c.l.b16 %v2869
    %v3023 = vunpack.c.h.b16 %v2869
    %v3024 = vunpack.c.l.b16 %v2870
    %v3025 = vunpack.c.h.b16 %v2870
    %v3026 = vunpack.c.l.b16 %v2871
    %v3027 = vunpack.c.h.b16 %v2871
    %v3028 = vunpack.c.l.b16 %v2872
    %v3029 = vunpack.c.h.b16 %v2872
    %v3030 = vunpack.c.l.b16 %v2873
    %v3031 = vunpack.c.h.b16 %v2873
    %v3032 = vunpack.c.l.b16 %v2874
    %v3033 = vunpack.c.h.b16 %v2874
    %v3034 = vunpack.c.l.b16 %v2875
    %v3035 = vunpack.c.h.b16 %v2875
    %v3036 = vunpack.c.l.b16 %v2876
    %v3037 = vunpack.c.h.b16 %v2876
    %v3038 = vunpack.c.l.b16 %v2877
    %v3039 = vunpack.c.h.b16 %v2877
    %v3040 = vunpack.c.l.b16 %v2878
    %v3041 = vunpack.c.h.b16 %v2878
    %v3042 = vunpack.c.l.b16 %v2879
    %v3043 = vunpack.c.h.b16 %v2879
    %v3044 = vunpack.c.l.b16 %v2880
    %v3045 = vunpack.c.h.b16 %v2880
    %v3046 = vunpack.c.l.b16 %v2881
    %v3047 = vunpack.c.h.b16 %v2881
    %v3048 = vunpack.c.l.b16 %v2882
    %v3049 = vunpack.c.h.b16 %v2882
    %v3050 = vunpack.c.l.b16 %v2883
    %v3051 = vunpack.c.h.b16 %v2883
    %v3052 = vunpack.c.l.b16 %v2884
    %v3053 = vunpack.c.h.b16 %v2884
    %v3054 = vunpack.c.l.b16 %v2885
    %v3055 = vunpack.c.h.b16 %v2885
    %v3056 = vunpack.c.l.b16 %v2886
    %v3057 = vunpack.c.h.b16 %v2886
    %v3058 = vunpack.c.l.b16 %v2887
    %v3059 = vunpack.c.h.b16 %v2887
    %v3060 = vunpack.c.l.b16 %v2888
    %v3061 = vunpack.c.h.b16 %v2888
    %v3062 = vunpack.c.l.b16 %v2889
    %v3063 = vunpack.c.h.b16 %v2889
    %v3064 = vunpack.c.l.b16 %v2890
    %v3065 = vunpack.c.h.b16 %v2890
    %v3066 = vunpack.c.l.b16 %v2891
    %v3067 = vunpack.c.h.b16 %v2891
    %v3068 = vunpack.c.l.b16 %v2892
    %v3069 = vunpack.c.h.b16 %v2892
    %v3070 = vunpack.c.l.b16 %v2893
    %v3071 = vunpack.c.h.b16 %v2893
    %v3072 = vunpack.c.l.b16 %v2894
    %v3073 = vunpack.c.h.b16 %v2894
    %v3074 = vunpack.c.l.b16 %v2895
    %v3075 = vunpack.c.h.b16 %v2895
    %v3076 = vunpack.c.l.b16 %v2896
    %v3077 = vunpack.c.h.b16 %v2896
    %v3078 = vunpack.c.l.b16 %v2897
    %v3079 = vunpack.c.h.b16 %v2897
    %v3080 = vunpack.c.l.b16 %v2898
    %v3081 = vunpack.c.h.b16 %v2898
    %v3082 = vunpack.c.l.b16 %v2899
    %v3083 = vunpack.c.h.b16 %v2899
    %v3084 = vunpack.c.l.b16 %v2900
    %v3085 = vunpack.c.h.b16 %v2900
    %v3086 = vunpack.c.l.b16 %v2901
    %v3087 = vunpack.c.h.b16 %v2901
    %v3088 = vunpack.c.l.b16 %v2902
    %v3089 = vunpack.c.h.b16 %v2902
    %v3090 = vunpack.c.l.b16 %v2903
    %v3091 = vunpack.c.h.b16 %v2903
    %v3092 = vunpack.c.l.b16 %v2904
    %v3093 = vunpack.c.h.b16 %v2904
    %v3094 = vunpack.c.l.b16 %v2905
    %v3095 = vunpack.c.h.b16 %v2905
    %v3096 = vunpack.c.l.b16 %v2906
    %v3097 = vunpack.c.h.b16 %v2906
    %v3098 = vunpack.c.l.b16 %v2907
    %v3099 = vunpack.c.h.b16 %v2907
    %v3100 = vpack.c.b16 %v2980, %v2972
    %v3101 = vpack.c.b16 %v2981, %v2973
    %v3102 = vpack.c.b16 %v2982, %v2974
    %v3103 = vpack.c.b16 %v2983, %v2975
    %v3104 = vpack.c.b16 %v2984, %v2976
    %v3105 = vpack.c.b16 %v2985, %v2977
    %v3106 = vpack.c.b16 %v2986, %v2978
    %v3107 = vpack.c.b16 %v2987, %v2979
    %v3108 = vpack.c.b16 %v2996, %v2988
    %v3109 = vpack.c.b16 %v2997, %v2989
    %v3110 = vpack.c.b16 %v2998, %v2990
    %v3111 = vpack.c.b16 %v2999, %v2991
    %v3112 = vpack.c.b16 %v3000, %v2992
    %v3113 = vpack.c.b16 %v3001, %v2993
    %v3114 = vpack.c.b16 %v3002, %v2994
    %v3115 = vpack.c.b16 %v3003, %v2995
    %v3116 = vpack.c.b16 %v3012, %v3004
    %v3117 = vpack.c.b16 %v3013, %v3005
    %v3118 = vpack.c.b16 %v3014, %v3006
    %v3119 = vpack.c.b16 %v3015, %v3007
    %v3120 = vpack.c.b16 %v3016, %v3008
    %v3121 = vpack.c.b16 %v3017, %v3009
    %v3122 = vpack.c.b16 %v3018, %v3010
    %v3123 = vpack.c.b16 %v3019, %v3011
    %v3124 = vpack.c.b16 %v3028, %v3020
    %v3125 = vpack.c.b16 %v3029, %v3021
    %v3126 = vpack.c.b16 %v3030, %v3022
    %v3127 = vpack.c.b16 %v3031, %v3023
    %v3128 = vpack.c.b16 %v3032, %v3024
    %v3129 = vpack.c.b16 %v3033, %v3025
    %v3130 = vpack.c.b16 %v3034, %v3026
    %v3131 = vpack.c.b16 %v3035, %v3027
    %v3132 = vpack.c.b16 %v3044, %v3036
    %v3133 = vpack.c.b16 %v3045, %v3037
    %v3134 = vpack.c.b16 %v3046, %v3038
    %v3135 = vpack.c.b16 %v3047, %v3039
    %v3136 = vpack.c.b16 %v3048, %v3040
    %v3137 = vpack.c.b16 %v3049, %v3041
    %v3138 = vpack.c.b16 %v3050, %v3042
    %v3139 = vpack.c.b16 %v3051, %v3043
    %v3140 = vpack.c.b16 %v3060, %v3052
    %v3141 = vpack.c.b16 %v3061, %v3053
    %v3142 = vpack.c.b16 %v3062, %v3054
    %v3143 = vpack.c.b16 %v3063, %v3055
    %v3144 = vpack.c.b16 %v3064, %v3056
    %v3145 = vpack.c.b16 %v3065, %v3057
    %v3146 = vpack.c.b16 %v3066, %v3058
    %v3147 = vpack.c.b16 %v3067, %v3059
    %v3148 = vpack.c.b16 %v3076, %v3068
    %v3149 = vpack.c.b16 %v3077, %v3069
    %v3150 = vpack.c.b16 %v3078, %v3070
    %v3151 = vpack.c.b16 %v3079, %v3071
    %v3152 = vpack.c.b16 %v3080, %v3072
    %v3153 = vpack.c.b16 %v3081, %v3073
    %v3154 = vpack.c.b16 %v3082, %v3074
    %v3155 = vpack.c.b16 %v3083, %v3075
    %v3156 = vpack.c.b16 %v3092, %v3084
    %v3157 = vpack.c.b16 %v3093, %v3085
    %v3158 = vpack.c.b16 %v3094, %v3086
    %v3159 = vpack.c.b16 %v3095, %v3087
    %v3160 = vpack.c.b16 %v3096, %v3088
    %v3161 = vpack.c.b16 %v3097, %v3089
    %v3162 = vpack.c.b16 %v3098, %v3090
    %v3163 = vpack.c.b16 %v3099, %v3091
    %3228 = vmatprep.subr.bf16.mxu0 %v3101
    %3229 = vmatpush1.bf16.msra.mxu0 %v3100
    %3230 = vmatprep.subr.bf16.mxu0 %v3109
    %3231 = vmatpush1.bf16.msra.mxu0 %v3108
    %3232 = vmatprep.subr.bf16.mxu0 %v3117
    %3233 = vmatpush1.bf16.msra.mxu0 %v3116
    %3234 = vmatprep.subr.bf16.mxu0 %v3125
    %3235 = vmatpush1.bf16.msra.mxu0 %v3124
    %3236 = vmatprep.subr.bf16.mxu0 %v3133
    %3237 = vmatpush1.bf16.msra.mxu0 %v3132
    %3238 = vmatprep.subr.bf16.mxu0 %v3141
    %3239 = vmatpush1.bf16.msra.mxu0 %v3140
    %3240 = vmatprep.subr.bf16.mxu0 %v3149
    %3241 = vmatpush1.bf16.msra.mxu0 %v3148
    %3242 = vmatprep.subr.bf16.mxu0 %v3157
    %3243 = vmatpush1.bf16.msra.mxu0 %v3156
    %3244 = vmatprep.subr.bf16.mxu0 0
    %3245 = vmatpush1.bf16.msra.mxu0 0
    %3246 = vmatprep.subr.bf16.mxu0 0
    %3247 = vmatpush1.bf16.msra.mxu0 0
    %3248 = vmatprep.subr.bf16.mxu0 0
    %3249 = vmatpush1.bf16.msra.mxu0 0
    %3250 = vmatprep.subr.bf16.mxu0 0
    %3251 = vmatpush1.bf16.msra.mxu0 0
    %3252 = vmatprep.subr.bf16.mxu0 0
    %3253 = vmatpush1.bf16.msra.mxu0 0
    %3254 = vmatprep.subr.bf16.mxu0 0
    %3255 = vmatpush1.bf16.msra.mxu0 0
    %3256 = vmatprep.subr.bf16.mxu0 0
    %3257 = vmatpush1.bf16.msra.mxu0 0
    %3258 = vmatprep.subr.bf16.mxu0 0
    %3259 = vmatpush1.bf16.msra.mxu0 0
    %3260 = vmatprep.mubr.bf16.mxu0 0
    %3261 = vmatmul.mubr.bf16.gmra.mrb[0].mxu0 %v2842
    %v3262 = vpop.f32.mrb[0].mxu0
    %v3263 = vadd.f32 0.0, %v3262
    %v3264 = vpop.f32.mrb[0].mxu0
    %v3265 = vadd.f32 0.0, %v3264
    %v3266 = vpop.f32.mrb[0].mxu0
    %v3267 = vadd.f32 0.0, %v3266
    %v3268 = vpop.f32.mrb[0].mxu0
    %v3269 = vadd.f32 0.0, %v3268
    %3270 = vmatprep.mubr.bf16.mxu0 0
    %3271 = vmatmul.mubr.bf16.gmra.mrb[0].mxu0 %v2843
    %v3272 = vpop.f32.mrb[0].mxu0
    %v3273 = vadd.f32 0.0, %v3272
    %v3274 = vpop.f32.mrb[0].mxu0
    %v3275 = vadd.f32 0.0, %v3274
    %v3276 = vpop.f32.mrb[0].mxu0
    %v3277 = vadd.f32 0.0, %v3276
    %v3278 = vpop.f32.mrb[0].mxu0
    %v3279 = vadd.f32 0.0, %v3278
    %3280 = vdwg.mxu0
    %3281 = vmatprep.subr.bf16.mxu0 %v3103
    %3282 = vmatpush1.bf16.msra.mxu0 %v3102
    %3283 = vmatprep.subr.bf16.mxu0 %v3111
    %3284 = vmatpush1.bf16.msra.mxu0 %v3110
    %3285 = vmatprep.subr.bf16.mxu0 %v3119
    %3286 = vmatpush1.bf16.msra.mxu0 %v3118
    %3287 = vmatprep.subr.bf16.mxu0 %v3127
    %3288 = vmatpush1.bf16.msra.mxu0 %v3126
    %3289 = vmatprep.subr.bf16.mxu0 %v3135
    %3290 = vmatpush1.bf16.msra.mxu0 %v3134
    %3291 = vmatprep.subr.bf16.mxu0 %v3143
    %3292 = vmatpush1.bf16.msra.mxu0 %v3142
    %3293 = vmatprep.subr.bf16.mxu0 %v3151
    %3294 = vmatpush1.bf16.msra.mxu0 %v3150
    %3295 = vmatprep.subr.bf16.mxu0 %v3159
    %3296 = vmatpush1.bf16.msra.mxu0 %v3158
    %3297 = vmatprep.subr.bf16.mxu0 0
    %3298 = vmatpush1.bf16.msra.mxu0 0
    %3299 = vmatprep.subr.bf16.mxu0 0
    %3300 = vmatpush1.bf16.msra.mxu0 0
    %3301 = vmatprep.subr.bf16.mxu0 0
    %3302 = vmatpush1.bf16.msra.mxu0 0
    %3303 = vmatprep.subr.bf16.mxu0 0
    %3304 = vmatpush1.bf16.msra.mxu0 0
    %3305 = vmatprep.subr.bf16.mxu0 0
    %3306 = vmatpush1.bf16.msra.mxu0 0
    %3307 = vmatprep.subr.bf16.mxu0 0
    %3308 = vmatpush1.bf16.msra.mxu0 0
    %3309 = vmatprep.subr.bf16.mxu0 0
    %3310 = vmatpush1.bf16.msra.mxu0 0
    %3311 = vmatprep.subr.bf16.mxu0 0
    %3312 = vmatpush1.bf16.msra.mxu0 0
    %3313 = vmatprep.mubr.bf16.mxu0 0
    %3314 = vmatmul.mubr.bf16.gmra.mrb[0].mxu0 %v2842
    %v3315 = vpop.f32.mrb[0].mxu0
    %v3316 = vadd.f32 0.0, %v3315
    %v3317 = vpop.f32.mrb[0].mxu0
    %v3318 = vadd.f32 0.0, %v3317
    %v3319 = vpop.f32.mrb[0].mxu0
    %v3320 = vadd.f32 0.0, %v3319
    %v3321 = vpop.f32.mrb[0].mxu0
    %v3322 = vadd.f32 0.0, %v3321
    %3323 = vmatprep.mubr.bf16.mxu0 0
    %3324 = vmatmul.mubr.bf16.gmra.mrb[0].mxu0 %v2843
    %v3325 = vpop.f32.mrb[0].mxu0
    %v3326 = vadd.f32 0.0, %v3325
    %v3327 = vpop.f32.mrb[0].mxu0
    %v3328 = vadd.f32 0.0, %v3327
    %v3329 = vpop.f32.mrb[0].mxu0
    %v3330 = vadd.f32 0.0, %v3329
    %v3331 = vpop.f32.mrb[0].mxu0
    %v3332 = vadd.f32 0.0, %v3331
    %3333 = vdwg.mxu0
    %3334 = vmatprep.subr.bf16.mxu0 %v3105
    %3335 = vmatpush1.bf16.msra.mxu0 %v3104
    %3336 = vmatprep.subr.bf16.mxu0 %v3113
    %3337 = vmatpush1.bf16.msra.mxu0 %v3112
    %3338 = vmatprep.subr.bf16.mxu0 %v3121
    %3339 = vmatpush1.bf16.msra.mxu0 %v3120
    %3340 = vmatprep.subr.bf16.mxu0 %v3129
    %3341 = vmatpush1.bf16.msra.mxu0 %v3128
    %3342 = vmatprep.subr.bf16.mxu0 %v3137
    %3343 = vmatpush1.bf16.msra.mxu0 %v3136
    %3344 = vmatprep.subr.bf16.mxu0 %v3145
    %3345 = vmatpush1.bf16.msra.mxu0 %v3144
    %3346 = vmatprep.subr.bf16.mxu0 %v3153
    %3347 = vmatpush1.bf16.msra.mxu0 %v3152
    %3348 = vmatprep.subr.bf16.mxu0 %v3161
    %3349 = vmatpush1.bf16.msra.mxu0 %v3160
    %3350 = vmatprep.subr.bf16.mxu0 0
    %3351 = vmatpush1.bf16.msra.mxu0 0
    %3352 = vmatprep.subr.bf16.mxu0 0
    %3353 = vmatpush1.bf16.msra.mxu0 0
    %3354 = vmatprep.subr.bf16.mxu0 0
    %3355 = vmatpush1.bf16.msra.mxu0 0
    %3356 = vmatprep.subr.bf16.mxu0 0
    %3357 = vmatpush1.bf16.msra.mxu0 0
    %3358 = vmatprep.subr.bf16.mxu0 0
    %3359 = vmatpush1.bf16.msra.mxu0 0
    %3360 = vmatprep.subr.bf16.mxu0 0
    %3361 = vmatpush1.bf16.msra.mxu0 0
    %3362 = vmatprep.subr.bf16.mxu0 0
    %3363 = vmatpush1.bf16.msra.mxu0 0
    %3364 = vmatprep.subr.bf16.mxu0 0
    %3365 = vmatpush1.bf16.msra.mxu0 0
    %3366 = vmatprep.mubr.bf16.mxu0 0
    %3367 = vmatmul.mubr.bf16.gmra.mrb[0].mxu0 %v2842
    %v3368 = vpop.f32.mrb[0].mxu0
    %v3369 = vadd.f32 0.0, %v3368
    %v3370 = vpop.f32.mrb[0].mxu0
    %v3371 = vadd.f32 0.0, %v3370
    %v3372 = vpop.f32.mrb[0].mxu0
    %v3373 = vadd.f32 0.0, %v3372
    %v3374 = vpop.f32.mrb[0].mxu0
    %v3375 = vadd.f32 0.0, %v3374
    %3376 = vmatprep.mubr.bf16.mxu0 0
    %3377 = vmatmul.mubr.bf16.gmra.mrb[0].mxu0 %v2843
    %v3378 = vpop.f32.mrb[0].mxu0
    %v3379 = vadd.f32 0.0, %v3378
    %v3380 = vpop.f32.mrb[0].mxu0
    %v3381 = vadd.f32 0.0, %v3380
    %v3382 = vpop.f32.mrb[0].mxu0
    %v3383 = vadd.f32 0.0, %v3382
    %v3384 = vpop.f32.mrb[0].mxu0
    %v3385 = vadd.f32 0.0, %v3384
    %3386 = vdwg.mxu0
    %3387 = vmatprep.subr.bf16.mxu0 %v3107
    %3388 = vmatpush1.bf16.msra.mxu0 %v3106
    %3389 = vmatprep.subr.bf16.mxu0 %v3115
    %3390 = vmatpush1.bf16.msra.mxu0 %v3114
    %3391 = vmatprep.subr.bf16.mxu0 %v3123
    %3392 = vmatpush1.bf16.msra.mxu0 %v3122
    %3393 = vmatprep.subr.bf16.mxu0 %v3131
    %3394 = vmatpush1.bf16.msra.mxu0 %v3130
    %3395 = vmatprep.subr.bf16.mxu0 %v3139
    %3396 = vmatpush1.bf16.msra.mxu0 %v3138
    %3397 = vmatprep.subr.bf16.mxu0 %v3147
    %3398 = vmatpush1.bf16.msra.mxu0 %v3146
    %3399 = vmatprep.subr.bf16.mxu0 %v3155
    %3400 = vmatpush1.bf16.msra.mxu0 %v3154
    %3401 = vmatprep.subr.bf16.mxu0 %v3163
    %3402 = vmatpush1.bf16.msra.mxu0 %v3162
    %3403 = vmatprep.subr.bf16.mxu0 0
    %3404 = vmatpush1.bf16.msra.mxu0 0
    %3405 = vmatprep.subr.bf16.mxu0 0
    %3406 = vmatpush1.bf16.msra.mxu0 0
    %3407 = vmatprep.subr.bf16.mxu0 0
    %3408 = vmatpush1.bf16.msra.mxu0 0
    %3409 = vmatprep.subr.bf16.mxu0 0
    %3410 = vmatpush1.bf16.msra.mxu0 0
    %3411 = vmatprep.subr.bf16.mxu0 0
    %3412 = vmatpush1.bf16.msra.mxu0 0
    %3413 = vmatprep.subr.bf16.mxu0 0
    %3414 = vmatpush1.bf16.msra.mxu0 0
    %3415 = vmatprep.subr.bf16.mxu0 0
    %3416 = vmatpush1.bf16.msra.mxu0 0
    %3417 = vmatprep.subr.bf16.mxu0 0
    %3418 = vmatpush1.bf16.msra.mxu0 0
    %3419 = vmatprep.mubr.bf16.mxu0 0
    %3420 = vmatmul.mubr.bf16.gmra.mrb[0].mxu0 %v2842
    %v3421 = vpop.f32.mrb[0].mxu0
    %v3422 = vadd.f32 0.0, %v3421
    %v3423 = vpop.f32.mrb[0].mxu0
    %v3424 = vadd.f32 0.0, %v3423
    %v3425 = vpop.f32.mrb[0].mxu0
    %v3426 = vadd.f32 0.0, %v3425
    %v3427 = vpop.f32.mrb[0].mxu0
    %v3428 = vadd.f32 0.0, %v3427
    %3429 = vmatprep.mubr.bf16.mxu0 0
    %3430 = vmatmul.mubr.bf16.gmra.mrb[0].mxu0 %v2843
    %v3431 = vpop.f32.mrb[0].mxu0
    %v3432 = vadd.f32 0.0, %v3431
    %v3433 = vpop.f32.mrb[0].mxu0
    %v3434 = vadd.f32 0.0, %v3433
    %v3435 = vpop.f32.mrb[0].mxu0
    %v3436 = vadd.f32 0.0, %v3435
    %v3437 = vpop.f32.mrb[0].mxu0
    %v3438 = vadd.f32 0.0, %v3437
    %3439 = vdwg.mxu0
    %3441 = vset.pattern.permute.xlu0 4
    %3442 = vperm.xlu0 %3441, %v2810
    %v3443 = vpop.permute.xlu0 %3442
    %3446 = vset.pattern.permute.xlu0 4
    %3447 = vperm.xlu0 %3446, %v2811
    %v3448 = vpop.permute.xlu0 %3447
    %3451 = vset.pattern.permute.xlu0 4
    %3452 = vperm.xlu0 %3451, %v2812
    %v3453 = vpop.permute.xlu0 %3452
    %3456 = vset.pattern.permute.xlu0 4
    %3457 = vperm.xlu0 %3456, %v2813
    %v3458 = vpop.permute.xlu0 %3457
    %v3460 = vmul.f32 %v3443, %v2838
    %v3461 = vmul.f32 %v3448, %v2839
    %v3462 = vmul.f32 %v3453, %v2840
    %v3463 = vmul.f32 %v3458, %v2841
    %3464 = vset.pattern.permute.xlu0 0
    %3465 = vperm.xlu0 %3464, %v2810
    %v3466 = vpop.permute.xlu0 %3465
    %3468 = vset.pattern.permute.xlu0 0
    %3469 = vperm.xlu0 %3468, %v2811
    %v3470 = vpop.permute.xlu0 %3469
    %3472 = vset.pattern.permute.xlu0 0
    %3473 = vperm.xlu0 %3472, %v2812
    %v3474 = vpop.permute.xlu0 %3473
    %3476 = vset.pattern.permute.xlu0 0
    %3477 = vperm.xlu0 %3476, %v2813
    %v3478 = vpop.permute.xlu0 %3477
    %v3480 = vmul.f32 %v3466, %v3263
    %v3481 = vmul.f32 %v3470, %v3267
    %v3482 = vmul.f32 %v3474, %v3273
    %v3483 = vmul.f32 %v3478, %v3277
    %v3484 = vadd.f32 %v3460, %v3480
    %v3485 = vadd.f32 %v3461, %v3481
    %v3486 = vadd.f32 %v3462, %v3482
    %v3487 = vadd.f32 %v3463, %v3483
    %3488 = vset.pattern.permute.xlu0 1
    %3489 = vperm.xlu0 %3488, %v2810
    %v3490 = vpop.permute.xlu0 %3489
    %3492 = vset.pattern.permute.xlu0 1
    %3493 = vperm.xlu0 %3492, %v2811
    %v3494 = vpop.permute.xlu0 %3493
    %3496 = vset.pattern.permute.xlu0 1
    %3497 = vperm.xlu0 %3496, %v2812
    %v3498 = vpop.permute.xlu0 %3497
    %3500 = vset.pattern.permute.xlu0 1
    %3501 = vperm.xlu0 %3500, %v2813
    %v3502 = vpop.permute.xlu0 %3501
    %v3504 = vmul.f32 %v3490, %v3265
    %v3505 = vmul.f32 %v3494, %v3269
    %v3506 = vmul.f32 %v3498, %v3275
    %v3507 = vmul.f32 %v3502, %v3279
    %v3508 = vadd.f32 %v3484, %v3504
    %v3509 = vadd.f32 %v3485, %v3505
    %v3510 = vadd.f32 %v3486, %v3506
    %v3511 = vadd.f32 %v3487, %v3507
    %3512 = vset.pattern.permute.xlu0 2
    %3513 = vperm.xlu0 %3512, %v2810
    %v3514 = vpop.permute.xlu0 %3513
    %3516 = vset.pattern.permute.xlu0 2
    %3517 = vperm.xlu0 %3516, %v2811
    %v3518 = vpop.permute.xlu0 %3517
    %3520 = vset.pattern.permute.xlu0 2
    %3521 = vperm.xlu0 %3520, %v2812
    %v3522 = vpop.permute.xlu0 %3521
    %3524 = vset.pattern.permute.xlu0 2
    %3525 = vperm.xlu0 %3524, %v2813
    %v3526 = vpop.permute.xlu0 %3525
    %v3528 = vmul.f32 %v3514, %v3316
    %v3529 = vmul.f32 %v3518, %v3320
    %v3530 = vmul.f32 %v3522, %v3326
    %v3531 = vmul.f32 %v3526, %v3330
    %v3532 = vadd.f32 %v3508, %v3528
    %v3533 = vadd.f32 %v3509, %v3529
    %v3534 = vadd.f32 %v3510, %v3530
    %v3535 = vadd.f32 %v3511, %v3531
    %3536 = vset.pattern.permute.xlu0 3
    %3537 = vperm.xlu0 %3536, %v2810
    %v3538 = vpop.permute.xlu0 %3537
    %3540 = vset.pattern.permute.xlu0 3
    %3541 = vperm.xlu0 %3540, %v2811
    %v3542 = vpop.permute.xlu0 %3541
    %3544 = vset.pattern.permute.xlu0 3
    %3545 = vperm.xlu0 %3544, %v2812
    %v3546 = vpop.permute.xlu0 %3545
    %3548 = vset.pattern.permute.xlu0 3
    %3549 = vperm.xlu0 %3548, %v2813
    %v3550 = vpop.permute.xlu0 %3549
    %v3552 = vmul.f32 %v3538, %v3318
    %v3553 = vmul.f32 %v3542, %v3322
    %v3554 = vmul.f32 %v3546, %v3328
    %v3555 = vmul.f32 %v3550, %v3332
    %v3556 = vadd.f32 %v3532, %v3552
    %v3557 = vadd.f32 %v3533, %v3553
    %v3558 = vadd.f32 %v3534, %v3554
    %v3559 = vadd.f32 %v3535, %v3555
    %3560 = vset.pattern.permute.xlu0 5
    %3561 = vperm.xlu0 %3560, %v2810
    %v3562 = vpop.permute.xlu0 %3561
    %3564 = vset.pattern.permute.xlu0 5
    %3565 = vperm.xlu0 %3564, %v2811
    %v3566 = vpop.permute.xlu0 %3565
    %3568 = vset.pattern.permute.xlu0 5
    %3569 = vperm.xlu0 %3568, %v2812
    %v3570 = vpop.permute.xlu0 %3569
    %3572 = vset.pattern.permute.xlu0 5
    %3573 = vperm.xlu0 %3572, %v2813
    %v3574 = vpop.permute.xlu0 %3573
    %v3576 = vmul.f32 %v3562, %v3369
    %v3577 = vmul.f32 %v3566, %v3373
    %v3578 = vmul.f32 %v3570, %v3379
    %v3579 = vmul.f32 %v3574, %v3383
    %v3580 = vadd.f32 %v3556, %v3576
    %v3581 = vadd.f32 %v3557, %v3577
    %v3582 = vadd.f32 %v3558, %v3578
    %v3583 = vadd.f32 %v3559, %v3579
    %3584 = vset.pattern.permute.xlu0 6
    %3585 = vperm.xlu0 %3584, %v2810
    %v3586 = vpop.permute.xlu0 %3585
    %3588 = vset.pattern.permute.xlu0 6
    %3589 = vperm.xlu0 %3588, %v2811
    %v3590 = vpop.permute.xlu0 %3589
    %3592 = vset.pattern.permute.xlu0 6
    %3593 = vperm.xlu0 %3592, %v2812
    %v3594 = vpop.permute.xlu0 %3593
    %3596 = vset.pattern.permute.xlu0 6
    %3597 = vperm.xlu0 %3596, %v2813
    %v3598 = vpop.permute.xlu0 %3597
    %v3600 = vmul.f32 %v3586, %v3371
    %v3601 = vmul.f32 %v3590, %v3375
    %v3602 = vmul.f32 %v3594, %v3381
    %v3603 = vmul.f32 %v3598, %v3385
    %v3604 = vadd.f32 %v3580, %v3600
    %v3605 = vadd.f32 %v3581, %v3601
    %v3606 = vadd.f32 %v3582, %v3602
    %v3607 = vadd.f32 %v3583, %v3603
    %3608 = vset.pattern.permute.xlu0 7
    %3609 = vperm.xlu0 %3608, %v2810
    %v3610 = vpop.permute.xlu0 %3609
    %3612 = vset.pattern.permute.xlu0 7
    %3613 = vperm.xlu0 %3612, %v2811
    %v3614 = vpop.permute.xlu0 %3613
    %3616 = vset.pattern.permute.xlu0 7
    %3617 = vperm.xlu0 %3616, %v2812
    %v3618 = vpop.permute.xlu0 %3617
    %3620 = vset.pattern.permute.xlu0 7
    %3621 = vperm.xlu0 %3620, %v2813
    %v3622 = vpop.permute.xlu0 %3621
    %v3624 = vmul.f32 %v3610, %v3422
    %v3625 = vmul.f32 %v3614, %v3426
    %v3626 = vmul.f32 %v3618, %v3432
    %v3627 = vmul.f32 %v3622, %v3436
    %v3628 = vadd.f32 %v3604, %v3624
    %v3629 = vadd.f32 %v3605, %v3625
    %v3630 = vadd.f32 %v3606, %v3626
    %v3631 = vadd.f32 %v3607, %v3627
    %3632 = vset.pattern.permute.xlu0 8
    %3633 = vperm.xlu0 %3632, %v2810
    %v3634 = vpop.permute.xlu0 %3633
    %3636 = vset.pattern.permute.xlu0 8
    %3637 = vperm.xlu0 %3636, %v2811
    %v3638 = vpop.permute.xlu0 %3637
    %3640 = vset.pattern.permute.xlu0 8
    %3641 = vperm.xlu0 %3640, %v2812
    %v3642 = vpop.permute.xlu0 %3641
    %3644 = vset.pattern.permute.xlu0 8
    %3645 = vperm.xlu0 %3644, %v2813
    %v3646 = vpop.permute.xlu0 %3645
    %v3648 = vmul.f32 %v3634, %v3424
    %v3649 = vmul.f32 %v3638, %v3428
    %v3650 = vmul.f32 %v3642, %v3434
    %v3651 = vmul.f32 %v3646, %v3438
    %v3652 = vadd.f32 %v3628, %v3648
    %v3653 = vadd.f32 %v3629, %v3649
    %v3654 = vadd.f32 %v3630, %v3650
    %v3655 = vadd.f32 %v3631, %v3651
    %v3656 = vpack.c.bf16 %v3653, %v3652
    %v3657 = vpack.c.bf16 %v3655, %v3654
    %v3662 = vunpack.c.l.b16 %v2814
    %v3663 = vunpack.c.l.b16 %v2815
    %v3664 = vunpack.c.l.b16 %v2816
    %v3665 = vunpack.c.l.b16 %v2817
    %v3666 = vpack.c.b16 %v3663, %v3662
    %v3667 = vpack.c.b16 %v3665, %v3664
    %vm3668 = vcmask 261120
    %v3670 = vsel %vm3668, %v3666, 0
    %v3673 = vsel %vm3668, %v3667, 0
    %3675 = vmatprep.subr.bf16.mxu0 0
    %3676 = vmatpush1.bf16.msra.mxu0 %v3656
    %3677 = vmatprep.subr.bf16.mxu0 0
    %3678 = vmatpush1.bf16.msra.mxu0 %v3657
    %3679 = vmatprep.subr.bf16.mxu0 0
    %3680 = vmatpush1.bf16.msra.mxu0 0
    %3681 = vmatprep.subr.bf16.mxu0 0
    %3682 = vmatpush1.bf16.msra.mxu0 0
    %3683 = vmatprep.subr.bf16.mxu0 0
    %3684 = vmatpush1.bf16.msra.mxu0 0
    %3685 = vmatprep.subr.bf16.mxu0 0
    %3686 = vmatpush1.bf16.msra.mxu0 0
    %3687 = vmatprep.subr.bf16.mxu0 0
    %3688 = vmatpush1.bf16.msra.mxu0 0
    %3689 = vmatprep.subr.bf16.mxu0 0
    %3690 = vmatpush1.bf16.msra.mxu0 0
    %3691 = vmatprep.subr.bf16.mxu0 0
    %3692 = vmatpush1.bf16.msra.mxu0 0
    %3693 = vmatprep.subr.bf16.mxu0 0
    %3694 = vmatpush1.bf16.msra.mxu0 0
    %3695 = vmatprep.subr.bf16.mxu0 0
    %3696 = vmatpush1.bf16.msra.mxu0 0
    %3697 = vmatprep.subr.bf16.mxu0 0
    %3698 = vmatpush1.bf16.msra.mxu0 0
    %3699 = vmatprep.subr.bf16.mxu0 0
    %3700 = vmatpush1.bf16.msra.mxu0 0
    %3701 = vmatprep.subr.bf16.mxu0 0
    %3702 = vmatpush1.bf16.msra.mxu0 0
    %3703 = vmatprep.subr.bf16.mxu0 0
    %3704 = vmatpush1.bf16.msra.mxu0 0
    %3705 = vmatprep.subr.bf16.mxu0 0
    %3706 = vmatpush1.bf16.msra.mxu0 0
    %3707 = vmatprep.mubr.bf16.mxu0 0
    %3708 = vmatmul.mubr.bf16.gmra.mrb[0].mxu0 %v3670
    %v3709 = vpop.f32.mrb[0].mxu0
    %v3710 = vadd.f32 0.0, %v3709
    %v3711 = vpop.f32.mrb[0].mxu0
    %v3712 = vpop.f32.mrb[0].mxu0
    %v3713 = vadd.f32 0.0, %v3712
    %v3714 = vpop.f32.mrb[0].mxu0
    %3715 = vmatprep.mubr.bf16.mxu0 0
    %3716 = vmatmul.mubr.bf16.gmra.mrb[0].mxu0 %v3673
    %v3717 = vpop.f32.mrb[0].mxu0
    %v3718 = vadd.f32 0.0, %v3717
    %v3719 = vpop.f32.mrb[0].mxu0
    %v3720 = vpop.f32.mrb[0].mxu0
    %v3721 = vadd.f32 0.0, %v3720
    %v3722 = vpop.f32.mrb[0].mxu0
    %3723 = vdwg.mxu0
    %3724 = vadd.xlane.f32.xlu0 %v3710
    %v3725 = vpop.xlane.xlu0 %3724
    %3726 = vadd.xlane.f32.xlu0 %v3713
    %v3727 = vpop.xlane.xlu0 %3726
    %3728 = vadd.xlane.f32.xlu0 %v3718
    %v3729 = vpop.xlane.xlu0 %3728
    %3730 = vadd.xlane.f32.xlu0 %v3721
    %v3731 = vpop.xlane.xlu0 %3730
    %v3732 = vmul.f32 %v3725, %v215
    %v3733 = vmul.f32 %v3727, %v215
    %v3734 = vmul.f32 %v3729, %v215
    %v3735 = vmul.f32 %v3731, %v215
    %v3736 = vmul.f32 %v3710, %v3710
    %v3737 = vmul.f32 %v3713, %v3713
    %v3738 = vmul.f32 %v3718, %v3718
    %v3739 = vmul.f32 %v3721, %v3721
    %3740 = vadd.xlane.f32.xlu0 %v3736
    %v3741 = vpop.xlane.xlu0 %3740
    %3742 = vadd.xlane.f32.xlu0 %v3737
    %v3743 = vpop.xlane.xlu0 %3742
    %3744 = vadd.xlane.f32.xlu0 %v3738
    %v3745 = vpop.xlane.xlu0 %3744
    %3746 = vadd.xlane.f32.xlu0 %v3739
    %v3747 = vpop.xlane.xlu0 %3746
    %v3748 = vmul.f32 %v3741, %v215
    %v3749 = vmul.f32 %v3743, %v215
    %v3750 = vmul.f32 %v3745, %v215
    %v3751 = vmul.f32 %v3747, %v215
    %v3752 = vmul.f32 %v3732, %v3732
    %v3753 = vmul.f32 %v3733, %v3733
    %v3754 = vmul.f32 %v3734, %v3734
    %v3755 = vmul.f32 %v3735, %v3735
    %v3756 = vsub.f32 %v3748, %v3752
    %v3757 = vsub.f32 %v3749, %v3753
    %v3758 = vsub.f32 %v3750, %v3754
    %v3759 = vsub.f32 %v3751, %v3755
    %v3760 = vmax.f32 %v3756, 0.0
    %v3761 = vmax.f32 %v3757, 0.0
    %v3762 = vmax.f32 %v3758, 0.0
    %v3763 = vmax.f32 %v3759, 0.0
    %v3764 = vsub.f32 %v3710, %v3732
    %v3765 = vsub.f32 %v3713, %v3733
    %v3766 = vsub.f32 %v3718, %v3734
    %v3767 = vsub.f32 %v3721, %v3735
    %v3768 = vadd.f32 %v3760, 1e-05
    %v3769 = vadd.f32 %v3761, 1e-05
    %v3770 = vadd.f32 %v3762, 1e-05
    %v3771 = vadd.f32 %v3763, 1e-05
    %v3772 = vrsqrt.pop %v3768
    %v3773 = vrsqrt.pop %v3769
    %v3774 = vrsqrt.pop %v3770
    %v3775 = vrsqrt.pop %v3771
    %v3776 = vmul.f32 %v3764, %v3772
    %v3777 = vmul.f32 %v3765, %v3773
    %v3778 = vmul.f32 %v3766, %v3774
    %v3779 = vmul.f32 %v3767, %v3775
    %v3780 = vmax.f32 %v3776, 0.0
    %v3781 = vmax.f32 %v3777, 0.0
    %v3782 = vmax.f32 %v3778, 0.0
    %v3783 = vmax.f32 %v3779, 0.0
    %v3784 = vpack.c.bf16 %v3781, %v3780
    %v3785 = vpack.c.bf16 %v3783, %v3782
    %3786 = vmatprep.subr.bf16.mxu0 %v3101
    %3787 = vmatpush1.bf16.msra.mxu0 %v3100
    %3788 = vmatprep.subr.bf16.mxu0 %v3109
    %3789 = vmatpush1.bf16.msra.mxu0 %v3108
    %3790 = vmatprep.subr.bf16.mxu0 %v3117
    %3791 = vmatpush1.bf16.msra.mxu0 %v3116
    %3792 = vmatprep.subr.bf16.mxu0 %v3125
    %3793 = vmatpush1.bf16.msra.mxu0 %v3124
    %3794 = vmatprep.subr.bf16.mxu0 %v3133
    %3795 = vmatpush1.bf16.msra.mxu0 %v3132
    %3796 = vmatprep.subr.bf16.mxu0 %v3141
    %3797 = vmatpush1.bf16.msra.mxu0 %v3140
    %3798 = vmatprep.subr.bf16.mxu0 %v3149
    %3799 = vmatpush1.bf16.msra.mxu0 %v3148
    %3800 = vmatprep.subr.bf16.mxu0 %v3157
    %3801 = vmatpush1.bf16.msra.mxu0 %v3156
    %3802 = vmatprep.subr.bf16.mxu0 0
    %3803 = vmatpush1.bf16.msra.mxu0 0
    %3804 = vmatprep.subr.bf16.mxu0 0
    %3805 = vmatpush1.bf16.msra.mxu0 0
    %3806 = vmatprep.subr.bf16.mxu0 0
    %3807 = vmatpush1.bf16.msra.mxu0 0
    %3808 = vmatprep.subr.bf16.mxu0 0
    %3809 = vmatpush1.bf16.msra.mxu0 0
    %3810 = vmatprep.subr.bf16.mxu0 0
    %3811 = vmatpush1.bf16.msra.mxu0 0
    %3812 = vmatprep.subr.bf16.mxu0 0
    %3813 = vmatpush1.bf16.msra.mxu0 0
    %3814 = vmatprep.subr.bf16.mxu0 0
    %3815 = vmatpush1.bf16.msra.mxu0 0
    %3816 = vmatprep.subr.bf16.mxu0 0
    %3817 = vmatpush1.bf16.msra.mxu0 0
    %3818 = vmatprep.mubr.bf16.mxu0 0
    %3819 = vmatmul.mubr.bf16.gmra.mrb[0].mxu0 %v3784
    %v3820 = vpop.f32.mrb[0].mxu0
    %v3821 = vadd.f32 0.0, %v3820
    %v3822 = vpop.f32.mrb[0].mxu0
    %v3823 = vadd.f32 0.0, %v3822
    %v3824 = vpop.f32.mrb[0].mxu0
    %v3825 = vadd.f32 0.0, %v3824
    %v3826 = vpop.f32.mrb[0].mxu0
    %v3827 = vadd.f32 0.0, %v3826
    %3828 = vmatprep.mubr.bf16.mxu0 0
    %3829 = vmatmul.mubr.bf16.gmra.mrb[0].mxu0 %v3785
    %v3830 = vpop.f32.mrb[0].mxu0
    %v3831 = vadd.f32 0.0, %v3830
    %v3832 = vpop.f32.mrb[0].mxu0
    %v3833 = vadd.f32 0.0, %v3832
    %v3834 = vpop.f32.mrb[0].mxu0
    %v3835 = vadd.f32 0.0, %v3834
    %v3836 = vpop.f32.mrb[0].mxu0
    %v3837 = vadd.f32 0.0, %v3836
    %3838 = vdwg.mxu0
    %3839 = vmatprep.subr.bf16.mxu0 %v3103
    %3840 = vmatpush1.bf16.msra.mxu0 %v3102
    %3841 = vmatprep.subr.bf16.mxu0 %v3111
    %3842 = vmatpush1.bf16.msra.mxu0 %v3110
    %3843 = vmatprep.subr.bf16.mxu0 %v3119
    %3844 = vmatpush1.bf16.msra.mxu0 %v3118
    %3845 = vmatprep.subr.bf16.mxu0 %v3127
    %3846 = vmatpush1.bf16.msra.mxu0 %v3126
    %3847 = vmatprep.subr.bf16.mxu0 %v3135
    %3848 = vmatpush1.bf16.msra.mxu0 %v3134
    %3849 = vmatprep.subr.bf16.mxu0 %v3143
    %3850 = vmatpush1.bf16.msra.mxu0 %v3142
    %3851 = vmatprep.subr.bf16.mxu0 %v3151
    %3852 = vmatpush1.bf16.msra.mxu0 %v3150
    %3853 = vmatprep.subr.bf16.mxu0 %v3159
    %3854 = vmatpush1.bf16.msra.mxu0 %v3158
    %3855 = vmatprep.subr.bf16.mxu0 0
    %3856 = vmatpush1.bf16.msra.mxu0 0
    %3857 = vmatprep.subr.bf16.mxu0 0
    %3858 = vmatpush1.bf16.msra.mxu0 0
    %3859 = vmatprep.subr.bf16.mxu0 0
    %3860 = vmatpush1.bf16.msra.mxu0 0
    %3861 = vmatprep.subr.bf16.mxu0 0
    %3862 = vmatpush1.bf16.msra.mxu0 0
    %3863 = vmatprep.subr.bf16.mxu0 0
    %3864 = vmatpush1.bf16.msra.mxu0 0
    %3865 = vmatprep.subr.bf16.mxu0 0
    %3866 = vmatpush1.bf16.msra.mxu0 0
    %3867 = vmatprep.subr.bf16.mxu0 0
    %3868 = vmatpush1.bf16.msra.mxu0 0
    %3869 = vmatprep.subr.bf16.mxu0 0
    %3870 = vmatpush1.bf16.msra.mxu0 0
    %3871 = vmatprep.mubr.bf16.mxu0 0
    %3872 = vmatmul.mubr.bf16.gmra.mrb[0].mxu0 %v3784
    %v3873 = vpop.f32.mrb[0].mxu0
    %v3874 = vadd.f32 0.0, %v3873
    %v3875 = vpop.f32.mrb[0].mxu0
    %v3876 = vadd.f32 0.0, %v3875
    %v3877 = vpop.f32.mrb[0].mxu0
    %v3878 = vadd.f32 0.0, %v3877
    %v3879 = vpop.f32.mrb[0].mxu0
    %v3880 = vadd.f32 0.0, %v3879
    %3881 = vmatprep.mubr.bf16.mxu0 0
    %3882 = vmatmul.mubr.bf16.gmra.mrb[0].mxu0 %v3785
    %v3883 = vpop.f32.mrb[0].mxu0
    %v3884 = vadd.f32 0.0, %v3883
    %v3885 = vpop.f32.mrb[0].mxu0
    %v3886 = vadd.f32 0.0, %v3885
    %v3887 = vpop.f32.mrb[0].mxu0
    %v3888 = vadd.f32 0.0, %v3887
    %v3889 = vpop.f32.mrb[0].mxu0
    %v3890 = vadd.f32 0.0, %v3889
    %3891 = vdwg.mxu0
    %3892 = vmatprep.subr.bf16.mxu0 %v3105
    %3893 = vmatpush1.bf16.msra.mxu0 %v3104
    %3894 = vmatprep.subr.bf16.mxu0 %v3113
    %3895 = vmatpush1.bf16.msra.mxu0 %v3112
    %3896 = vmatprep.subr.bf16.mxu0 %v3121
    %3897 = vmatpush1.bf16.msra.mxu0 %v3120
    %3898 = vmatprep.subr.bf16.mxu0 %v3129
    %3899 = vmatpush1.bf16.msra.mxu0 %v3128
    %3900 = vmatprep.subr.bf16.mxu0 %v3137
    %3901 = vmatpush1.bf16.msra.mxu0 %v3136
    %3902 = vmatprep.subr.bf16.mxu0 %v3145
    %3903 = vmatpush1.bf16.msra.mxu0 %v3144
    %3904 = vmatprep.subr.bf16.mxu0 %v3153
    %3905 = vmatpush1.bf16.msra.mxu0 %v3152
    %3906 = vmatprep.subr.bf16.mxu0 %v3161
    %3907 = vmatpush1.bf16.msra.mxu0 %v3160
    %3908 = vmatprep.subr.bf16.mxu0 0
    %3909 = vmatpush1.bf16.msra.mxu0 0
    %3910 = vmatprep.subr.bf16.mxu0 0
    %3911 = vmatpush1.bf16.msra.mxu0 0
    %3912 = vmatprep.subr.bf16.mxu0 0
    %3913 = vmatpush1.bf16.msra.mxu0 0
    %3914 = vmatprep.subr.bf16.mxu0 0
    %3915 = vmatpush1.bf16.msra.mxu0 0
    %3916 = vmatprep.subr.bf16.mxu0 0
    %3917 = vmatpush1.bf16.msra.mxu0 0
    %3918 = vmatprep.subr.bf16.mxu0 0
    %3919 = vmatpush1.bf16.msra.mxu0 0
    %3920 = vmatprep.subr.bf16.mxu0 0
    %3921 = vmatpush1.bf16.msra.mxu0 0
    %3922 = vmatprep.subr.bf16.mxu0 0
    %3923 = vmatpush1.bf16.msra.mxu0 0
    %3924 = vmatprep.mubr.bf16.mxu0 0
    %3925 = vmatmul.mubr.bf16.gmra.mrb[0].mxu0 %v3784
    %v3926 = vpop.f32.mrb[0].mxu0
    %v3927 = vadd.f32 0.0, %v3926
    %v3928 = vpop.f32.mrb[0].mxu0
    %v3929 = vadd.f32 0.0, %v3928
    %v3930 = vpop.f32.mrb[0].mxu0
    %v3931 = vadd.f32 0.0, %v3930
    %v3932 = vpop.f32.mrb[0].mxu0
    %v3933 = vadd.f32 0.0, %v3932
    %3934 = vmatprep.mubr.bf16.mxu0 0
    %3935 = vmatmul.mubr.bf16.gmra.mrb[0].mxu0 %v3785
    %v3936 = vpop.f32.mrb[0].mxu0
    %v3937 = vadd.f32 0.0, %v3936
    %v3938 = vpop.f32.mrb[0].mxu0
    %v3939 = vadd.f32 0.0, %v3938
    %v3940 = vpop.f32.mrb[0].mxu0
    %v3941 = vadd.f32 0.0, %v3940
    %v3942 = vpop.f32.mrb[0].mxu0
    %v3943 = vadd.f32 0.0, %v3942
    %3944 = vdwg.mxu0
    %3945 = vmatprep.subr.bf16.mxu0 %v3107
    %3946 = vmatpush1.bf16.msra.mxu0 %v3106
    %3947 = vmatprep.subr.bf16.mxu0 %v3115
    %3948 = vmatpush1.bf16.msra.mxu0 %v3114
    %3949 = vmatprep.subr.bf16.mxu0 %v3123
    %3950 = vmatpush1.bf16.msra.mxu0 %v3122
    %3951 = vmatprep.subr.bf16.mxu0 %v3131
    %3952 = vmatpush1.bf16.msra.mxu0 %v3130
    %3953 = vmatprep.subr.bf16.mxu0 %v3139
    %3954 = vmatpush1.bf16.msra.mxu0 %v3138
    %3955 = vmatprep.subr.bf16.mxu0 %v3147
    %3956 = vmatpush1.bf16.msra.mxu0 %v3146
    %3957 = vmatprep.subr.bf16.mxu0 %v3155
    %3958 = vmatpush1.bf16.msra.mxu0 %v3154
    %3959 = vmatprep.subr.bf16.mxu0 %v3163
    %3960 = vmatpush1.bf16.msra.mxu0 %v3162
    %3961 = vmatprep.subr.bf16.mxu0 0
    %3962 = vmatpush1.bf16.msra.mxu0 0
    %3963 = vmatprep.subr.bf16.mxu0 0
    %3964 = vmatpush1.bf16.msra.mxu0 0
    %3965 = vmatprep.subr.bf16.mxu0 0
    %3966 = vmatpush1.bf16.msra.mxu0 0
    %3967 = vmatprep.subr.bf16.mxu0 0
    %3968 = vmatpush1.bf16.msra.mxu0 0
    %3969 = vmatprep.subr.bf16.mxu0 0
    %3970 = vmatpush1.bf16.msra.mxu0 0
    %3971 = vmatprep.subr.bf16.mxu0 0
    %3972 = vmatpush1.bf16.msra.mxu0 0
    %3973 = vmatprep.subr.bf16.mxu0 0
    %3974 = vmatpush1.bf16.msra.mxu0 0
    %3975 = vmatprep.subr.bf16.mxu0 0
    %3976 = vmatpush1.bf16.msra.mxu0 0
    %3977 = vmatprep.mubr.bf16.mxu0 0
    %3978 = vmatmul.mubr.bf16.gmra.mrb[0].mxu0 %v3784
    %v3979 = vpop.f32.mrb[0].mxu0
    %v3980 = vadd.f32 0.0, %v3979
    %v3981 = vpop.f32.mrb[0].mxu0
    %v3982 = vadd.f32 0.0, %v3981
    %v3983 = vpop.f32.mrb[0].mxu0
    %v3984 = vadd.f32 0.0, %v3983
    %v3985 = vpop.f32.mrb[0].mxu0
    %v3986 = vadd.f32 0.0, %v3985
    %3987 = vmatprep.mubr.bf16.mxu0 0
    %3988 = vmatmul.mubr.bf16.gmra.mrb[0].mxu0 %v3785
    %v3989 = vpop.f32.mrb[0].mxu0
    %v3990 = vadd.f32 0.0, %v3989
    %v3991 = vpop.f32.mrb[0].mxu0
    %v3992 = vadd.f32 0.0, %v3991
    %v3993 = vpop.f32.mrb[0].mxu0
    %v3994 = vadd.f32 0.0, %v3993
    %v3995 = vpop.f32.mrb[0].mxu0
    %v3996 = vadd.f32 0.0, %v3995
    %3997 = vdwg.mxu0
    %3999 = vset.pattern.permute.xlu0 4
    %4000 = vperm.xlu0 %3999, %v2818
    %v4001 = vpop.permute.xlu0 %4000
    %4004 = vset.pattern.permute.xlu0 4
    %4005 = vperm.xlu0 %4004, %v2819
    %v4006 = vpop.permute.xlu0 %4005
    %4009 = vset.pattern.permute.xlu0 4
    %4010 = vperm.xlu0 %4009, %v2820
    %v4011 = vpop.permute.xlu0 %4010
    %4014 = vset.pattern.permute.xlu0 4
    %4015 = vperm.xlu0 %4014, %v2821
    %v4016 = vpop.permute.xlu0 %4015
    %v4018 = vmul.f32 %v4001, %v3780
    %v4019 = vmul.f32 %v4006, %v3781
    %v4020 = vmul.f32 %v4011, %v3782
    %v4021 = vmul.f32 %v4016, %v3783
    %4022 = vset.pattern.permute.xlu0 0
    %4023 = vperm.xlu0 %4022, %v2818
    %v4024 = vpop.permute.xlu0 %4023
    %4026 = vset.pattern.permute.xlu0 0
    %4027 = vperm.xlu0 %4026, %v2819
    %v4028 = vpop.permute.xlu0 %4027
    %4030 = vset.pattern.permute.xlu0 0
    %4031 = vperm.xlu0 %4030, %v2820
    %v4032 = vpop.permute.xlu0 %4031
    %4034 = vset.pattern.permute.xlu0 0
    %4035 = vperm.xlu0 %4034, %v2821
    %v4036 = vpop.permute.xlu0 %4035
    %v4038 = vmul.f32 %v4024, %v3821
    %v4039 = vmul.f32 %v4028, %v3825
    %v4040 = vmul.f32 %v4032, %v3831
    %v4041 = vmul.f32 %v4036, %v3835
    %v4042 = vadd.f32 %v4018, %v4038
    %v4043 = vadd.f32 %v4019, %v4039
    %v4044 = vadd.f32 %v4020, %v4040
    %v4045 = vadd.f32 %v4021, %v4041
    %4046 = vset.pattern.permute.xlu0 1
    %4047 = vperm.xlu0 %4046, %v2818
    %v4048 = vpop.permute.xlu0 %4047
    %4050 = vset.pattern.permute.xlu0 1
    %4051 = vperm.xlu0 %4050, %v2819
    %v4052 = vpop.permute.xlu0 %4051
    %4054 = vset.pattern.permute.xlu0 1
    %4055 = vperm.xlu0 %4054, %v2820
    %v4056 = vpop.permute.xlu0 %4055
    %4058 = vset.pattern.permute.xlu0 1
    %4059 = vperm.xlu0 %4058, %v2821
    %v4060 = vpop.permute.xlu0 %4059
    %v4062 = vmul.f32 %v4048, %v3823
    %v4063 = vmul.f32 %v4052, %v3827
    %v4064 = vmul.f32 %v4056, %v3833
    %v4065 = vmul.f32 %v4060, %v3837
    %v4066 = vadd.f32 %v4042, %v4062
    %v4067 = vadd.f32 %v4043, %v4063
    %v4068 = vadd.f32 %v4044, %v4064
    %v4069 = vadd.f32 %v4045, %v4065
    %4070 = vset.pattern.permute.xlu0 2
    %4071 = vperm.xlu0 %4070, %v2818
    %v4072 = vpop.permute.xlu0 %4071
    %4074 = vset.pattern.permute.xlu0 2
    %4075 = vperm.xlu0 %4074, %v2819
    %v4076 = vpop.permute.xlu0 %4075
    %4078 = vset.pattern.permute.xlu0 2
    %4079 = vperm.xlu0 %4078, %v2820
    %v4080 = vpop.permute.xlu0 %4079
    %4082 = vset.pattern.permute.xlu0 2
    %4083 = vperm.xlu0 %4082, %v2821
    %v4084 = vpop.permute.xlu0 %4083
    %v4086 = vmul.f32 %v4072, %v3874
    %v4087 = vmul.f32 %v4076, %v3878
    %v4088 = vmul.f32 %v4080, %v3884
    %v4089 = vmul.f32 %v4084, %v3888
    %v4090 = vadd.f32 %v4066, %v4086
    %v4091 = vadd.f32 %v4067, %v4087
    %v4092 = vadd.f32 %v4068, %v4088
    %v4093 = vadd.f32 %v4069, %v4089
    %4094 = vset.pattern.permute.xlu0 3
    %4095 = vperm.xlu0 %4094, %v2818
    %v4096 = vpop.permute.xlu0 %4095
    %4098 = vset.pattern.permute.xlu0 3
    %4099 = vperm.xlu0 %4098, %v2819
    %v4100 = vpop.permute.xlu0 %4099
    %4102 = vset.pattern.permute.xlu0 3
    %4103 = vperm.xlu0 %4102, %v2820
    %v4104 = vpop.permute.xlu0 %4103
    %4106 = vset.pattern.permute.xlu0 3
    %4107 = vperm.xlu0 %4106, %v2821
    %v4108 = vpop.permute.xlu0 %4107
    %v4110 = vmul.f32 %v4096, %v3876
    %v4111 = vmul.f32 %v4100, %v3880
    %v4112 = vmul.f32 %v4104, %v3886
    %v4113 = vmul.f32 %v4108, %v3890
    %v4114 = vadd.f32 %v4090, %v4110
    %v4115 = vadd.f32 %v4091, %v4111
    %v4116 = vadd.f32 %v4092, %v4112
    %v4117 = vadd.f32 %v4093, %v4113
    %4118 = vset.pattern.permute.xlu0 5
    %4119 = vperm.xlu0 %4118, %v2818
    %v4120 = vpop.permute.xlu0 %4119
    %4122 = vset.pattern.permute.xlu0 5
    %4123 = vperm.xlu0 %4122, %v2819
    %v4124 = vpop.permute.xlu0 %4123
    %4126 = vset.pattern.permute.xlu0 5
    %4127 = vperm.xlu0 %4126, %v2820
    %v4128 = vpop.permute.xlu0 %4127
    %4130 = vset.pattern.permute.xlu0 5
    %4131 = vperm.xlu0 %4130, %v2821
    %v4132 = vpop.permute.xlu0 %4131
    %v4134 = vmul.f32 %v4120, %v3927
    %v4135 = vmul.f32 %v4124, %v3931
    %v4136 = vmul.f32 %v4128, %v3937
    %v4137 = vmul.f32 %v4132, %v3941
    %v4138 = vadd.f32 %v4114, %v4134
    %v4139 = vadd.f32 %v4115, %v4135
    %v4140 = vadd.f32 %v4116, %v4136
    %v4141 = vadd.f32 %v4117, %v4137
    %4142 = vset.pattern.permute.xlu0 6
    %4143 = vperm.xlu0 %4142, %v2818
    %v4144 = vpop.permute.xlu0 %4143
    %4146 = vset.pattern.permute.xlu0 6
    %4147 = vperm.xlu0 %4146, %v2819
    %v4148 = vpop.permute.xlu0 %4147
    %4150 = vset.pattern.permute.xlu0 6
    %4151 = vperm.xlu0 %4150, %v2820
    %v4152 = vpop.permute.xlu0 %4151
    %4154 = vset.pattern.permute.xlu0 6
    %4155 = vperm.xlu0 %4154, %v2821
    %v4156 = vpop.permute.xlu0 %4155
    %v4158 = vmul.f32 %v4144, %v3929
    %v4159 = vmul.f32 %v4148, %v3933
    %v4160 = vmul.f32 %v4152, %v3939
    %v4161 = vmul.f32 %v4156, %v3943
    %v4162 = vadd.f32 %v4138, %v4158
    %v4163 = vadd.f32 %v4139, %v4159
    %v4164 = vadd.f32 %v4140, %v4160
    %v4165 = vadd.f32 %v4141, %v4161
    %4166 = vset.pattern.permute.xlu0 7
    %4167 = vperm.xlu0 %4166, %v2818
    %v4168 = vpop.permute.xlu0 %4167
    %4170 = vset.pattern.permute.xlu0 7
    %4171 = vperm.xlu0 %4170, %v2819
    %v4172 = vpop.permute.xlu0 %4171
    %4174 = vset.pattern.permute.xlu0 7
    %4175 = vperm.xlu0 %4174, %v2820
    %v4176 = vpop.permute.xlu0 %4175
    %4178 = vset.pattern.permute.xlu0 7
    %4179 = vperm.xlu0 %4178, %v2821
    %v4180 = vpop.permute.xlu0 %4179
    %v4182 = vmul.f32 %v4168, %v3980
    %v4183 = vmul.f32 %v4172, %v3984
    %v4184 = vmul.f32 %v4176, %v3990
    %v4185 = vmul.f32 %v4180, %v3994
    %v4186 = vadd.f32 %v4162, %v4182
    %v4187 = vadd.f32 %v4163, %v4183
    %v4188 = vadd.f32 %v4164, %v4184
    %v4189 = vadd.f32 %v4165, %v4185
    %4190 = vset.pattern.permute.xlu0 8
    %4191 = vperm.xlu0 %4190, %v2818
    %v4192 = vpop.permute.xlu0 %4191
    %4194 = vset.pattern.permute.xlu0 8
    %4195 = vperm.xlu0 %4194, %v2819
    %v4196 = vpop.permute.xlu0 %4195
    %4198 = vset.pattern.permute.xlu0 8
    %4199 = vperm.xlu0 %4198, %v2820
    %v4200 = vpop.permute.xlu0 %4199
    %4202 = vset.pattern.permute.xlu0 8
    %4203 = vperm.xlu0 %4202, %v2821
    %v4204 = vpop.permute.xlu0 %4203
    %v4206 = vmul.f32 %v4192, %v3982
    %v4207 = vmul.f32 %v4196, %v3986
    %v4208 = vmul.f32 %v4200, %v3992
    %v4209 = vmul.f32 %v4204, %v3996
    %v4210 = vadd.f32 %v4186, %v4206
    %v4211 = vadd.f32 %v4187, %v4207
    %v4212 = vadd.f32 %v4188, %v4208
    %v4213 = vadd.f32 %v4189, %v4209
    %v4214 = vpack.c.bf16 %v4211, %v4210
    %v4215 = vpack.c.bf16 %v4213, %v4212
    %v4220 = vunpack.c.l.b16 %v2822
    %v4221 = vunpack.c.l.b16 %v2823
    %v4222 = vunpack.c.l.b16 %v2824
    %v4223 = vunpack.c.l.b16 %v2825
    %v4224 = vpack.c.b16 %v4221, %v4220
    %v4225 = vpack.c.b16 %v4223, %v4222
    %v4227 = vsel %vm3668, %v4224, 0
    %v4230 = vsel %vm3668, %v4225, 0
    %4232 = vmatprep.subr.bf16.mxu0 0
    %4233 = vmatpush1.bf16.msra.mxu0 %v4214
    %4234 = vmatprep.subr.bf16.mxu0 0
    %4235 = vmatpush1.bf16.msra.mxu0 %v4215
    %4236 = vmatprep.subr.bf16.mxu0 0
    %4237 = vmatpush1.bf16.msra.mxu0 0
    %4238 = vmatprep.subr.bf16.mxu0 0
    %4239 = vmatpush1.bf16.msra.mxu0 0
    %4240 = vmatprep.subr.bf16.mxu0 0
    %4241 = vmatpush1.bf16.msra.mxu0 0
    %4242 = vmatprep.subr.bf16.mxu0 0
    %4243 = vmatpush1.bf16.msra.mxu0 0
    %4244 = vmatprep.subr.bf16.mxu0 0
    %4245 = vmatpush1.bf16.msra.mxu0 0
    %4246 = vmatprep.subr.bf16.mxu0 0
    %4247 = vmatpush1.bf16.msra.mxu0 0
    %4248 = vmatprep.subr.bf16.mxu0 0
    %4249 = vmatpush1.bf16.msra.mxu0 0
    %4250 = vmatprep.subr.bf16.mxu0 0
    %4251 = vmatpush1.bf16.msra.mxu0 0
    %4252 = vmatprep.subr.bf16.mxu0 0
    %4253 = vmatpush1.bf16.msra.mxu0 0
    %4254 = vmatprep.subr.bf16.mxu0 0
    %4255 = vmatpush1.bf16.msra.mxu0 0
    %4256 = vmatprep.subr.bf16.mxu0 0
    %4257 = vmatpush1.bf16.msra.mxu0 0
    %4258 = vmatprep.subr.bf16.mxu0 0
    %4259 = vmatpush1.bf16.msra.mxu0 0
    %4260 = vmatprep.subr.bf16.mxu0 0
    %4261 = vmatpush1.bf16.msra.mxu0 0
    %4262 = vmatprep.subr.bf16.mxu0 0
    %4263 = vmatpush1.bf16.msra.mxu0 0
    %4264 = vmatprep.mubr.bf16.mxu0 0
    %4265 = vmatmul.mubr.bf16.gmra.mrb[0].mxu0 %v4227
    %v4266 = vpop.f32.mrb[0].mxu0
    %v4267 = vadd.f32 0.0, %v4266
    %v4268 = vpop.f32.mrb[0].mxu0
    %v4269 = vpop.f32.mrb[0].mxu0
    %v4270 = vadd.f32 0.0, %v4269
    %v4271 = vpop.f32.mrb[0].mxu0
    %4272 = vmatprep.mubr.bf16.mxu0 0
    %4273 = vmatmul.mubr.bf16.gmra.mrb[0].mxu0 %v4230
    %v4274 = vpop.f32.mrb[0].mxu0
    %v4275 = vadd.f32 0.0, %v4274
    %v4276 = vpop.f32.mrb[0].mxu0
    %v4277 = vpop.f32.mrb[0].mxu0
    %v4278 = vadd.f32 0.0, %v4277
    %v4279 = vpop.f32.mrb[0].mxu0
    %4280 = vdwg.mxu0
    %4281 = vadd.xlane.f32.xlu0 %v4267
    %v4282 = vpop.xlane.xlu0 %4281
    %4283 = vadd.xlane.f32.xlu0 %v4270
    %v4284 = vpop.xlane.xlu0 %4283
    %4285 = vadd.xlane.f32.xlu0 %v4275
    %v4286 = vpop.xlane.xlu0 %4285
    %4287 = vadd.xlane.f32.xlu0 %v4278
    %v4288 = vpop.xlane.xlu0 %4287
    %v4289 = vmul.f32 %v4282, %v215
    %v4290 = vmul.f32 %v4284, %v215
    %v4291 = vmul.f32 %v4286, %v215
    %v4292 = vmul.f32 %v4288, %v215
    %v4293 = vmul.f32 %v4267, %v4267
    %v4294 = vmul.f32 %v4270, %v4270
    %v4295 = vmul.f32 %v4275, %v4275
    %v4296 = vmul.f32 %v4278, %v4278
    %4297 = vadd.xlane.f32.xlu0 %v4293
    %v4298 = vpop.xlane.xlu0 %4297
    %4299 = vadd.xlane.f32.xlu0 %v4294
    %v4300 = vpop.xlane.xlu0 %4299
    %4301 = vadd.xlane.f32.xlu0 %v4295
    %v4302 = vpop.xlane.xlu0 %4301
    %4303 = vadd.xlane.f32.xlu0 %v4296
    %v4304 = vpop.xlane.xlu0 %4303
    %v4305 = vmul.f32 %v4298, %v215
    %v4306 = vmul.f32 %v4300, %v215
    %v4307 = vmul.f32 %v4302, %v215
    %v4308 = vmul.f32 %v4304, %v215
    %v4309 = vmul.f32 %v4289, %v4289
    %v4310 = vmul.f32 %v4290, %v4290
    %v4311 = vmul.f32 %v4291, %v4291
    %v4312 = vmul.f32 %v4292, %v4292
    %v4313 = vsub.f32 %v4305, %v4309
    %v4314 = vsub.f32 %v4306, %v4310
    %v4315 = vsub.f32 %v4307, %v4311
    %v4316 = vsub.f32 %v4308, %v4312
    %v4317 = vmax.f32 %v4313, 0.0
    %v4318 = vmax.f32 %v4314, 0.0
    %v4319 = vmax.f32 %v4315, 0.0
    %v4320 = vmax.f32 %v4316, 0.0
    %v4321 = vsub.f32 %v4267, %v4289
    %v4322 = vsub.f32 %v4270, %v4290
    %v4323 = vsub.f32 %v4275, %v4291
    %v4324 = vsub.f32 %v4278, %v4292
    %v4325 = vadd.f32 %v4317, 1e-05
    %v4326 = vadd.f32 %v4318, 1e-05
    %v4327 = vadd.f32 %v4319, 1e-05
    %v4328 = vadd.f32 %v4320, 1e-05
    %v4329 = vrsqrt.pop %v4325
    %v4330 = vrsqrt.pop %v4326
    %v4331 = vrsqrt.pop %v4327
    %v4332 = vrsqrt.pop %v4328
    %v4333 = vmul.f32 %v4321, %v4329
    %v4334 = vmul.f32 %v4322, %v4330
    %v4335 = vmul.f32 %v4323, %v4331
    %v4336 = vmul.f32 %v4324, %v4332
    %v4337 = vstv %s2826
    %v4338 = vmul.f32 %v4337, %v2834
    %v4339 = vstv %s2830
    %v4340 = vmul.f32 %v4339, %v4333
    %v4341 = vadd.f32 %v4338, %v4340
    %v4342 = vstv %s2827
    %v4343 = vmul.f32 %v4342, %v2835
    %v4344 = vadd.f32 %v4341, %v4343
    %v4345 = vstv %s2831
    %v4346 = vmul.f32 %v4345, %v4334
    %v4347 = vadd.f32 %v4344, %v4346
    %v4348 = vstv %s2828
    %v4349 = vmul.f32 %v4348, %v2836
    %v4350 = vadd.f32 %v4347, %v4349
    %v4351 = vstv %s2832
    %v4352 = vmul.f32 %v4351, %v4335
    %v4353 = vadd.f32 %v4350, %v4352
    %v4354 = vstv %s2829
    %v4355 = vmul.f32 %v4354, %v2837
    %v4356 = vadd.f32 %v4353, %v4355
    %v4357 = vstv %s2833
    %v4358 = vmul.f32 %v4357, %v4336
    %v4359 = vadd.f32 %v4356, %v4358
    %4360 = vst [vmem:[#allocation2 + $0x20] sm:$0xff] %v4359
    %v4361 = vld [vmem:[%s18] sm:$0xff]
    %v4362 = vld [vmem:[%s18 + $0x8] sm:$0xff]
    %v4363 = vld [vmem:[%s18 + $0x10] sm:$0xff]
    %v4364 = vld [vmem:[%s18 + $0x18] sm:$0xff]
    %v4365 = vld [vmem:[%s18 + $0x20] sm:$0xff]
    %v4366 = vld [vmem:[%s19] sm:$0xf]
    %v4367 = vld [vmem:[%s19 + $0x4] sm:$0xf]
    %v4368 = vld [vmem:[%s19 + $0x8] sm:$0xf]
    %v4369 = vld [vmem:[%s19 + $0xc] sm:$0xf]
    %v4370 = vld [vmem:[%s19 + $0x10] sm:$0xf]
    %v4371 = vld [vmem:[%s20] sm:$0xff]
    %v4372 = vld [vmem:[%s20 + $0x8] sm:$0xff]
    %v4373 = vld [vmem:[%s20 + $0x10] sm:$0xff]
    %v4374 = vld [vmem:[%s20 + $0x18] sm:$0xff]
    %v4375 = vld [vmem:[%s20 + $0x20] sm:$0xff]
    %v4376 = vld [vmem:[%s21] sm:$0xf]
    %v4377 = vld [vmem:[%s21 + $0x4] sm:$0xf]
    %v4378 = vld [vmem:[%s21 + $0x8] sm:$0xf]
    %v4379 = vld [vmem:[%s21 + $0xc] sm:$0xf]
    %v4380 = vld [vmem:[%s21 + $0x10] sm:$0xf]
    %s4381 = sld [smem:[#allocation3 + $0x1c]]
    %s4382 = sld [smem:[#allocation3 + $0x1f]]
    %s4383 = sld [smem:[#allocation3 + $0x22]]
    %s4384 = sld [smem:[#allocation3 + $0x25]]
    %s4385 = sld [smem:[#allocation3 + $0x28]]
    %s4386 = sld [smem:[#allocation3 + $0x1d]]
    %s4387 = sld [smem:[#allocation3 + $0x20]]
    %s4388 = sld [smem:[#allocation3 + $0x23]]
    %s4389 = sld [smem:[#allocation3 + $0x26]]
    %s4390 = sld [smem:[#allocation3 + $0x29]]
    %v4391 = vld [vmem:[#allocation2] sm:$0xff]
    %v4392 = vld [vmem:[#allocation2 + $0x8] sm:$0xff]
    %v4393 = vld [vmem:[#allocation2 + $0x10] sm:$0xff]
    %v4394 = vld [vmem:[#allocation2 + $0x18] sm:$0xff]
    %v4395 = vld [vmem:[#allocation2 + $0x20] sm:$0xff]
    %v4396 = vmax.f32 %v4391, 0.0
    %v4397 = vmax.f32 %v4392, 0.0
    %v4398 = vmax.f32 %v4393, 0.0
    %v4399 = vmax.f32 %v4394, 0.0
    %v4400 = vmax.f32 %v4395, 0.0
    %v4401 = vpack.c.bf16 %v4397, %v4396
    %v4402 = vpack.c.bf16 %v4399, %v4398
    %v4403 = vpack.c.bf16 %v4400, %v4400
    %v4404 = vld [vmem:[%s5] sm:$0xff]
    %v4405 = vld [vmem:[%s5 + $0x8] sm:$0xff]
    %v4406 = vld [vmem:[%s5 + $0x10] sm:$0xff]
    %v4407 = vld [vmem:[%s5 + $0x18] sm:$0xff]
    %v4408 = vld [vmem:[%s5 + $0x20] sm:$0xff]
    %v4409 = vld [vmem:[%s5 + $0x28] sm:$0xff]
    %v4410 = vld [vmem:[%s5 + $0x30] sm:$0xff]
    %v4411 = vld [vmem:[%s5 + $0x38] sm:$0xff]
    %v4412 = vld [vmem:[%s5 + $0x40] sm:$0xff]
    %v4413 = vld [vmem:[%s5 + $0x48] sm:$0xff]
    %v4414 = vld [vmem:[%s5 + $0x50] sm:$0xff]
    %v4415 = vld [vmem:[%s5 + $0x58] sm:$0xff]
    %v4416 = vld [vmem:[%s5 + $0x60] sm:$0xff]
    %v4417 = vld [vmem:[%s5 + $0x68] sm:$0xff]
    %v4418 = vld [vmem:[%s5 + $0x70] sm:$0xff]
    %v4419 = vld [vmem:[%s5 + $0x78] sm:$0xff]
    %v4420 = vld [vmem:[%s5 + $0x80] sm:$0xff]
    %v4421 = vld [vmem:[%s5 + $0x88] sm:$0xff]
    %v4422 = vld [vmem:[%s5 + $0x90] sm:$0xff]
    %v4423 = vld [vmem:[%s5 + $0x98] sm:$0xff]
    %v4424 = vld [vmem:[%s5 + $0xa0] sm:$0xff]
    %v4425 = vld [vmem:[%s5 + $0xa8] sm:$0xff]
    %v4426 = vld [vmem:[%s5 + $0xb0] sm:$0xff]
    %v4427 = vld [vmem:[%s5 + $0xb8] sm:$0xff]
    %v4428 = vld [vmem:[%s5 + $0xc0] sm:$0xff]
    %v4429 = vld [vmem:[%s5 + $0xc8] sm:$0xff]
    %v4430 = vld [vmem:[%s5 + $0xd0] sm:$0xff]
    %v4431 = vld [vmem:[%s5 + $0xd8] sm:$0xff]
    %v4432 = vld [vmem:[%s5 + $0xe0] sm:$0xff]
    %v4433 = vld [vmem:[%s5 + $0xe8] sm:$0xff]
    %v4434 = vld [vmem:[%s5 + $0xf0] sm:$0xff]
    %v4435 = vld [vmem:[%s5 + $0xf8] sm:$0xff]
    %v4436 = vld [vmem:[%s5 + $0x100] sm:$0xff]
    %v4437 = vld [vmem:[%s5 + $0x108] sm:$0xff]
    %v4438 = vld [vmem:[%s5 + $0x110] sm:$0xff]
    %v4439 = vld [vmem:[%s5 + $0x118] sm:$0xff]
    %v4440 = vld [vmem:[%s5 + $0x120] sm:$0xff]
    %v4441 = vld [vmem:[%s5 + $0x128] sm:$0xff]
    %v4442 = vld [vmem:[%s5 + $0x130] sm:$0xff]
    %v4443 = vld [vmem:[%s5 + $0x138] sm:$0xff]
    %v4444 = vld [vmem:[%s5 + $0x140] sm:$0xff]
    %v4445 = vld [vmem:[%s5 + $0x148] sm:$0xff]
    %v4446 = vld [vmem:[%s5 + $0x150] sm:$0xff]
    %v4447 = vld [vmem:[%s5 + $0x158] sm:$0xff]
    %v4448 = vld [vmem:[%s5 + $0x160] sm:$0xff]
    %v4449 = vld [vmem:[%s5 + $0x168] sm:$0xff]
    %v4450 = vld [vmem:[%s5 + $0x170] sm:$0xff]
    %v4451 = vld [vmem:[%s5 + $0x178] sm:$0xff]
    %v4452 = vld [vmem:[%s5 + $0x180] sm:$0xff]
    %v4453 = vld [vmem:[%s5 + $0x188] sm:$0xff]
    %v4454 = vld [vmem:[%s5 + $0x190] sm:$0xff]
    %v4455 = vld [vmem:[%s5 + $0x198] sm:$0xff]
    %v4456 = vld [vmem:[%s5 + $0x1a0] sm:$0xff]
    %v4457 = vld [vmem:[%s5 + $0x1a8] sm:$0xff]
    %v4458 = vld [vmem:[%s5 + $0x1b0] sm:$0xff]
    %v4459 = vld [vmem:[%s5 + $0x1b8] sm:$0xff]
    %v4460 = vld [vmem:[%s5 + $0x1c0] sm:$0xff]
    %v4461 = vld [vmem:[%s5 + $0x1c8] sm:$0xff]
    %v4462 = vld [vmem:[%s5 + $0x1d0] sm:$0xff]
    %v4463 = vld [vmem:[%s5 + $0x1d8] sm:$0xff]
    %v4464 = vld [vmem:[%s5 + $0x1e0] sm:$0xff]
    %v4465 = vld [vmem:[%s5 + $0x1e8] sm:$0xff]
    %v4466 = vld [vmem:[%s5 + $0x1f0] sm:$0xff]
    %v4467 = vld [vmem:[%s5 + $0x1f8] sm:$0xff]
    %v4532 = vunpack.c.l.b16 %v4404
    %v4533 = vunpack.c.h.b16 %v4404
    %v4534 = vunpack.c.l.b16 %v4405
    %v4535 = vunpack.c.h.b16 %v4405
    %v4536 = vunpack.c.l.b16 %v4406
    %v4537 = vunpack.c.h.b16 %v4406
    %v4538 = vunpack.c.l.b16 %v4407
    %v4539 = vunpack.c.h.b16 %v4407
    %v4540 = vunpack.c.l.b16 %v4408
    %v4541 = vunpack.c.h.b16 %v4408
    %v4542 = vunpack.c.l.b16 %v4409
    %v4543 = vunpack.c.h.b16 %v4409
    %v4544 = vunpack.c.l.b16 %v4410
    %v4545 = vunpack.c.h.b16 %v4410
    %v4546 = vunpack.c.l.b16 %v4411
    %v4547 = vunpack.c.h.b16 %v4411
    %v4548 = vunpack.c.l.b16 %v4412
    %v4549 = vunpack.c.h.b16 %v4412
    %v4550 = vunpack.c.l.b16 %v4413
    %v4551 = vunpack.c.h.b16 %v4413
    %v4552 = vunpack.c.l.b16 %v4414
    %v4553 = vunpack.c.h.b16 %v4414
    %v4554 = vunpack.c.l.b16 %v4415
    %v4555 = vunpack.c.h.b16 %v4415
    %v4556 = vunpack.c.l.b16 %v4416
    %v4557 = vunpack.c.h.b16 %v4416
    %v4558 = vunpack.c.l.b16 %v4417
    %v4559 = vunpack.c.h.b16 %v4417
    %v4560 = vunpack.c.l.b16 %v4418
    %v4561 = vunpack.c.h.b16 %v4418
    %v4562 = vunpack.c.l.b16 %v4419
    %v4563 = vunpack.c.h.b16 %v4419
    %v4564 = vunpack.c.l.b16 %v4420
    %v4565 = vunpack.c.h.b16 %v4420
    %v4566 = vunpack.c.l.b16 %v4421
    %v4567 = vunpack.c.h.b16 %v4421
    %v4568 = vunpack.c.l.b16 %v4422
    %v4569 = vunpack.c.h.b16 %v4422
    %v4570 = vunpack.c.l.b16 %v4423
    %v4571 = vunpack.c.h.b16 %v4423
    %v4572 = vunpack.c.l.b16 %v4424
    %v4573 = vunpack.c.h.b16 %v4424
    %v4574 = vunpack.c.l.b16 %v4425
    %v4575 = vunpack.c.h.b16 %v4425
    %v4576 = vunpack.c.l.b16 %v4426
    %v4577 = vunpack.c.h.b16 %v4426
    %v4578 = vunpack.c.l.b16 %v4427
    %v4579 = vunpack.c.h.b16 %v4427
    %v4580 = vunpack.c.l.b16 %v4428
    %v4581 = vunpack.c.h.b16 %v4428
    %v4582 = vunpack.c.l.b16 %v4429
    %v4583 = vunpack.c.h.b16 %v4429
    %v4584 = vunpack.c.l.b16 %v4430
    %v4585 = vunpack.c.h.b16 %v4430
    %v4586 = vunpack.c.l.b16 %v4431
    %v4587 = vunpack.c.h.b16 %v4431
    %v4588 = vunpack.c.l.b16 %v4432
    %v4589 = vunpack.c.h.b16 %v4432
    %v4590 = vunpack.c.l.b16 %v4433
    %v4591 = vunpack.c.h.b16 %v4433
    %v4592 = vunpack.c.l.b16 %v4434
    %v4593 = vunpack.c.h.b16 %v4434
    %v4594 = vunpack.c.l.b16 %v4435
    %v4595 = vunpack.c.h.b16 %v4435
    %v4596 = vunpack.c.l.b16 %v4436
    %v4597 = vunpack.c.h.b16 %v4436
    %v4598 = vunpack.c.l.b16 %v4437
    %v4599 = vunpack.c.h.b16 %v4437
    %v4600 = vunpack.c.l.b16 %v4438
    %v4601 = vunpack.c.h.b16 %v4438
    %v4602 = vunpack.c.l.b16 %v4439
    %v4603 = vunpack.c.h.b16 %v4439
    %v4604 = vunpack.c.l.b16 %v4440
    %v4605 = vunpack.c.h.b16 %v4440
    %v4606 = vunpack.c.l.b16 %v4441
    %v4607 = vunpack.c.h.b16 %v4441
    %v4608 = vunpack.c.l.b16 %v4442
    %v4609 = vunpack.c.h.b16 %v4442
    %v4610 = vunpack.c.l.b16 %v4443
    %v4611 = vunpack.c.h.b16 %v4443
    %v4612 = vunpack.c.l.b16 %v4444
    %v4613 = vunpack.c.h.b16 %v4444
    %v4614 = vunpack.c.l.b16 %v4445
    %v4615 = vunpack.c.h.b16 %v4445
    %v4616 = vunpack.c.l.b16 %v4446
    %v4617 = vunpack.c.h.b16 %v4446
    %v4618 = vunpack.c.l.b16 %v4447
    %v4619 = vunpack.c.h.b16 %v4447
    %v4620 = vunpack.c.l.b16 %v4448
    %v4621 = vunpack.c.h.b16 %v4448
    %v4622 = vunpack.c.l.b16 %v4449
    %v4623 = vunpack.c.h.b16 %v4449
    %v4624 = vunpack.c.l.b16 %v4450
    %v4625 = vunpack.c.h.b16 %v4450
    %v4626 = vunpack.c.l.b16 %v4451
    %v4627 = vunpack.c.h.b16 %v4451
    %v4628 = vunpack.c.l.b16 %v4452
    %v4629 = vunpack.c.h.b16 %v4452
    %v4630 = vunpack.c.l.b16 %v4453
    %v4631 = vunpack.c.h.b16 %v4453
    %v4632 = vunpack.c.l.b16 %v4454
    %v4633 = vunpack.c.h.b16 %v4454
    %v4634 = vunpack.c.l.b16 %v4455
    %v4635 = vunpack.c.h.b16 %v4455
    %v4636 = vunpack.c.l.b16 %v4456
    %v4637 = vunpack.c.h.b16 %v4456
    %v4638 = vunpack.c.l.b16 %v4457
    %v4639 = vunpack.c.h.b16 %v4457
    %v4640 = vunpack.c.l.b16 %v4458
    %v4641 = vunpack.c.h.b16 %v4458
    %v4642 = vunpack.c.l.b16 %v4459
    %v4643 = vunpack.c.h.b16 %v4459
    %v4644 = vunpack.c.l.b16 %v4460
    %v4645 = vunpack.c.h.b16 %v4460
    %v4646 = vunpack.c.l.b16 %v4461
    %v4647 = vunpack.c.h.b16 %v4461
    %v4648 = vunpack.c.l.b16 %v4462
    %v4649 = vunpack.c.h.b16 %v4462
    %v4650 = vunpack.c.l.b16 %v4463
    %v4651 = vunpack.c.h.b16 %v4463
    %v4652 = vunpack.c.l.b16 %v4464
    %v4653 = vunpack.c.h.b16 %v4464
    %v4654 = vunpack.c.l.b16 %v4465
    %v4655 = vunpack.c.h.b16 %v4465
    %v4656 = vunpack.c.l.b16 %v4466
    %v4657 = vunpack.c.h.b16 %v4466
    %v4658 = vunpack.c.l.b16 %v4467
    %v4659 = vunpack.c.h.b16 %v4467
    %v4660 = vpack.c.b16 %v4540, %v4532
    %v4661 = vpack.c.b16 %v4541, %v4533
    %v4662 = vpack.c.b16 %v4542, %v4534
    %v4663 = vpack.c.b16 %v4543, %v4535
    %v4664 = vpack.c.b16 %v4544, %v4536
    %v4665 = vpack.c.b16 %v4545, %v4537
    %v4666 = vpack.c.b16 %v4546, %v4538
    %v4667 = vpack.c.b16 %v4547, %v4539
    %v4668 = vpack.c.b16 %v4556, %v4548
    %v4669 = vpack.c.b16 %v4557, %v4549
    %v4670 = vpack.c.b16 %v4558, %v4550
    %v4671 = vpack.c.b16 %v4559, %v4551
    %v4672 = vpack.c.b16 %v4560, %v4552
    %v4673 = vpack.c.b16 %v4561, %v4553
    %v4674 = vpack.c.b16 %v4562, %v4554
    %v4675 = vpack.c.b16 %v4563, %v4555
    %v4676 = vpack.c.b16 %v4572, %v4564
    %v4677 = vpack.c.b16 %v4573, %v4565
    %v4678 = vpack.c.b16 %v4574, %v4566
    %v4679 = vpack.c.b16 %v4575, %v4567
    %v4680 = vpack.c.b16 %v4576, %v4568
    %v4681 = vpack.c.b16 %v4577, %v4569
    %v4682 = vpack.c.b16 %v4578, %v4570
    %v4683 = vpack.c.b16 %v4579, %v4571
    %v4684 = vpack.c.b16 %v4588, %v4580
    %v4685 = vpack.c.b16 %v4589, %v4581
    %v4686 = vpack.c.b16 %v4590, %v4582
    %v4687 = vpack.c.b16 %v4591, %v4583
    %v4688 = vpack.c.b16 %v4592, %v4584
    %v4689 = vpack.c.b16 %v4593, %v4585
    %v4690 = vpack.c.b16 %v4594, %v4586
    %v4691 = vpack.c.b16 %v4595, %v4587
    %v4692 = vpack.c.b16 %v4604, %v4596
    %v4693 = vpack.c.b16 %v4605, %v4597
    %v4694 = vpack.c.b16 %v4606, %v4598
    %v4695 = vpack.c.b16 %v4607, %v4599
    %v4696 = vpack.c.b16 %v4608, %v4600
    %v4697 = vpack.c.b16 %v4609, %v4601
    %v4698 = vpack.c.b16 %v4610, %v4602
    %v4699 = vpack.c.b16 %v4611, %v4603
    %v4700 = vpack.c.b16 %v4620, %v4612
    %v4701 = vpack.c.b16 %v4621, %v4613
    %v4702 = vpack.c.b16 %v4622, %v4614
    %v4703 = vpack.c.b16 %v4623, %v4615
    %v4704 = vpack.c.b16 %v4624, %v4616
    %v4705 = vpack.c.b16 %v4625, %v4617
    %v4706 = vpack.c.b16 %v4626, %v4618
    %v4707 = vpack.c.b16 %v4627, %v4619
    %v4708 = vpack.c.b16 %v4636, %v4628
    %v4709 = vpack.c.b16 %v4637, %v4629
    %v4710 = vpack.c.b16 %v4638, %v4630
    %v4711 = vpack.c.b16 %v4639, %v4631
    %v4712 = vpack.c.b16 %v4640, %v4632
    %v4713 = vpack.c.b16 %v4641, %v4633
    %v4714 = vpack.c.b16 %v4642, %v4634
    %v4715 = vpack.c.b16 %v4643, %v4635
    %v4716 = vpack.c.b16 %v4652, %v4644
    %v4717 = vpack.c.b16 %v4653, %v4645
    %v4718 = vpack.c.b16 %v4654, %v4646
    %v4719 = vpack.c.b16 %v4655, %v4647
    %v4720 = vpack.c.b16 %v4656, %v4648
    %v4721 = vpack.c.b16 %v4657, %v4649
    %v4722 = vpack.c.b16 %v4658, %v4650
    %v4723 = vpack.c.b16 %v4659, %v4651
    %4788 = vmatprep.subr.bf16.mxu0 %v4661
    %4789 = vmatpush1.bf16.msra.mxu0 %v4660
    %4790 = vmatprep.subr.bf16.mxu0 %v4669
    %4791 = vmatpush1.bf16.msra.mxu0 %v4668
    %4792 = vmatprep.subr.bf16.mxu0 %v4677
    %4793 = vmatpush1.bf16.msra.mxu0 %v4676
    %4794 = vmatprep.subr.bf16.mxu0 %v4685
    %4795 = vmatpush1.bf16.msra.mxu0 %v4684
    %4796 = vmatprep.subr.bf16.mxu0 %v4693
    %4797 = vmatpush1.bf16.msra.mxu0 %v4692
    %4798 = vmatprep.subr.bf16.mxu0 %v4701
    %4799 = vmatpush1.bf16.msra.mxu0 %v4700
    %4800 = vmatprep.subr.bf16.mxu0 %v4709
    %4801 = vmatpush1.bf16.msra.mxu0 %v4708
    %4802 = vmatprep.subr.bf16.mxu0 %v4717
    %4803 = vmatpush1.bf16.msra.mxu0 %v4716
    %4804 = vmatprep.subr.bf16.mxu0 0
    %4805 = vmatpush1.bf16.msra.mxu0 0
    %4806 = vmatprep.subr.bf16.mxu0 0
    %4807 = vmatpush1.bf16.msra.mxu0 0
    %4808 = vmatprep.subr.bf16.mxu0 0
    %4809 = vmatpush1.bf16.msra.mxu0 0
    %4810 = vmatprep.subr.bf16.mxu0 0
    %4811 = vmatpush1.bf16.msra.mxu0 0
    %4812 = vmatprep.subr.bf16.mxu0 0
    %4813 = vmatpush1.bf16.msra.mxu0 0
    %4814 = vmatprep.subr.bf16.mxu0 0
    %4815 = vmatpush1.bf16.msra.mxu0 0
    %4816 = vmatprep.subr.bf16.mxu0 0
    %4817 = vmatpush1.bf16.msra.mxu0 0
    %4818 = vmatprep.subr.bf16.mxu0 0
    %4819 = vmatpush1.bf16.msra.mxu0 0
    %4820 = vmatprep.mubr.bf16.mxu0 0
    %4821 = vmatmul.mubr.bf16.gmra.mrb[0].mxu0 %v4401
    %v4822 = vpop.f32.mrb[0].mxu0
    %v4823 = vadd.f32 0.0, %v4822
    %v4824 = vpop.f32.mrb[0].mxu0
    %v4825 = vadd.f32 0.0, %v4824
    %v4826 = vpop.f32.mrb[0].mxu0
    %v4827 = vadd.f32 0.0, %v4826
    %v4828 = vpop.f32.mrb[0].mxu0
    %v4829 = vadd.f32 0.0, %v4828
    %4830 = vmatprep.mubr.bf16.mxu0 0
    %4831 = vmatmul.mubr.bf16.gmra.mrb[0].mxu0 %v4402
    %v4832 = vpop.f32.mrb[0].mxu0
    %v4833 = vadd.f32 0.0, %v4832
    %v4834 = vpop.f32.mrb[0].mxu0
    %v4835 = vadd.f32 0.0, %v4834
    %v4836 = vpop.f32.mrb[0].mxu0
    %v4837 = vadd.f32 0.0, %v4836
    %v4838 = vpop.f32.mrb[0].mxu0
    %v4839 = vadd.f32 0.0, %v4838
    %4840 = vmatprep.mubr.bf16.mxu0 0
    %4841 = vmatmul.mubr.bf16.gmra.mrb[0].mxu0 %v4403
    %v4842 = vpop.f32.mrb[0].mxu0
    %v4843 = vadd.f32 0.0, %v4842
    %v4844 = vpop.f32.mrb[0].mxu0
    %v4845 = vadd.f32 0.0, %v4844
    %v4846 = vpop.f32.mrb[0].mxu0
    %v4847 = vpop.f32.mrb[0].mxu0
    %4848 = vdwg.mxu0
    %4849 = vmatprep.subr.bf16.mxu0 %v4663
    %4850 = vmatpush1.bf16.msra.mxu0 %v4662
    %4851 = vmatprep.subr.bf16.mxu0 %v4671
    %4852 = vmatpush1.bf16.msra.mxu0 %v4670
    %4853 = vmatprep.subr.bf16.mxu0 %v4679
    %4854 = vmatpush1.bf16.msra.mxu0 %v4678
    %4855 = vmatprep.subr.bf16.mxu0 %v4687
    %4856 = vmatpush1.bf16.msra.mxu0 %v4686
    %4857 = vmatprep.subr.bf16.mxu0 %v4695
    %4858 = vmatpush1.bf16.msra.mxu0 %v4694
    %4859 = vmatprep.subr.bf16.mxu0 %v4703
    %4860 = vmatpush1.bf16.msra.mxu0 %v4702
    %4861 = vmatprep.subr.bf16.mxu0 %v4711
    %4862 = vmatpush1.bf16.msra.mxu0 %v4710
    %4863 = vmatprep.subr.bf16.mxu0 %v4719
    %4864 = vmatpush1.bf16.msra.mxu0 %v4718
    %4865 = vmatprep.subr.bf16.mxu0 0
    %4866 = vmatpush1.bf16.msra.mxu0 0
    %4867 = vmatprep.subr.bf16.mxu0 0
    %4868 = vmatpush1.bf16.msra.mxu0 0
    %4869 = vmatprep.subr.bf16.mxu0 0
    %4870 = vmatpush1.bf16.msra.mxu0 0
    %4871 = vmatprep.subr.bf16.mxu0 0
    %4872 = vmatpush1.bf16.msra.mxu0 0
    %4873 = vmatprep.subr.bf16.mxu0 0
    %4874 = vmatpush1.bf16.msra.mxu0 0
    %4875 = vmatprep.subr.bf16.mxu0 0
    %4876 = vmatpush1.bf16.msra.mxu0 0
    %4877 = vmatprep.subr.bf16.mxu0 0
    %4878 = vmatpush1.bf16.msra.mxu0 0
    %4879 = vmatprep.subr.bf16.mxu0 0
    %4880 = vmatpush1.bf16.msra.mxu0 0
    %4881 = vmatprep.mubr.bf16.mxu0 0
    %4882 = vmatmul.mubr.bf16.gmra.mrb[0].mxu0 %v4401
    %v4883 = vpop.f32.mrb[0].mxu0
    %v4884 = vadd.f32 0.0, %v4883
    %v4885 = vpop.f32.mrb[0].mxu0
    %v4886 = vadd.f32 0.0, %v4885
    %v4887 = vpop.f32.mrb[0].mxu0
    %v4888 = vadd.f32 0.0, %v4887
    %v4889 = vpop.f32.mrb[0].mxu0
    %v4890 = vadd.f32 0.0, %v4889
    %4891 = vmatprep.mubr.bf16.mxu0 0
    %4892 = vmatmul.mubr.bf16.gmra.mrb[0].mxu0 %v4402
    %v4893 = vpop.f32.mrb[0].mxu0
    %v4894 = vadd.f32 0.0, %v4893
    %v4895 = vpop.f32.mrb[0].mxu0
    %v4896 = vadd.f32 0.0, %v4895
    %v4897 = vpop.f32.mrb[0].mxu0
    %v4898 = vadd.f32 0.0, %v4897
    %v4899 = vpop.f32.mrb[0].mxu0
    %v4900 = vadd.f32 0.0, %v4899
    %4901 = vmatprep.mubr.bf16.mxu0 0
    %4902 = vmatmul.mubr.bf16.gmra.mrb[0].mxu0 %v4403
    %v4903 = vpop.f32.mrb[0].mxu0
    %v4904 = vadd.f32 0.0, %v4903
    %v4905 = vpop.f32.mrb[0].mxu0
    %v4906 = vadd.f32 0.0, %v4905
    %v4907 = vpop.f32.mrb[0].mxu0
    %v4908 = vpop.f32.mrb[0].mxu0
    %4909 = vdwg.mxu0
    %4910 = vmatprep.subr.bf16.mxu0 %v4665
    %4911 = vmatpush1.bf16.msra.mxu0 %v4664
    %4912 = vmatprep.subr.bf16.mxu0 %v4673
    %4913 = vmatpush1.bf16.msra.mxu0 %v4672
    %4914 = vmatprep.subr.bf16.mxu0 %v4681
    %4915 = vmatpush1.bf16.msra.mxu0 %v4680
    %4916 = vmatprep.subr.bf16.mxu0 %v4689
    %4917 = vmatpush1.bf16.msra.mxu0 %v4688
    %4918 = vmatprep.subr.bf16.mxu0 %v4697
    %4919 = vmatpush1.bf16.msra.mxu0 %v4696
    %4920 = vmatprep.subr.bf16.mxu0 %v4705
    %4921 = vmatpush1.bf16.msra.mxu0 %v4704
    %4922 = vmatprep.subr.bf16.mxu0 %v4713
    %4923 = vmatpush1.bf16.msra.mxu0 %v4712
    %4924 = vmatprep.subr.bf16.mxu0 %v4721
    %4925 = vmatpush1.bf16.msra.mxu0 %v4720
    %4926 = vmatprep.subr.bf16.mxu0 0
    %4927 = vmatpush1.bf16.msra.mxu0 0
    %4928 = vmatprep.subr.bf16.mxu0 0
    %4929 = vmatpush1.bf16.msra.mxu0 0
    %4930 = vmatprep.subr.bf16.mxu0 0
    %4931 = vmatpush1.bf16.msra.mxu0 0
    %4932 = vmatprep.subr.bf16.mxu0 0
    %4933 = vmatpush1.bf16.msra.mxu0 0
    %4934 = vmatprep.subr.bf16.mxu0 0
    %4935 = vmatpush1.bf16.msra.mxu0 0
    %4936 = vmatprep.subr.bf16.mxu0 0
    %4937 = vmatpush1.bf16.msra.mxu0 0
    %4938 = vmatprep.subr.bf16.mxu0 0
    %4939 = vmatpush1.bf16.msra.mxu0 0
    %4940 = vmatprep.subr.bf16.mxu0 0
    %4941 = vmatpush1.bf16.msra.mxu0 0
    %4942 = vmatprep.mubr.bf16.mxu0 0
    %4943 = vmatmul.mubr.bf16.gmra.mrb[0].mxu0 %v4401
    %v4944 = vpop.f32.mrb[0].mxu0
    %v4945 = vadd.f32 0.0, %v4944
    %v4946 = vpop.f32.mrb[0].mxu0
    %v4947 = vadd.f32 0.0, %v4946
    %v4948 = vpop.f32.mrb[0].mxu0
    %v4949 = vadd.f32 0.0, %v4948
    %v4950 = vpop.f32.mrb[0].mxu0
    %v4951 = vadd.f32 0.0, %v4950
    %4952 = vmatprep.mubr.bf16.mxu0 0
    %4953 = vmatmul.mubr.bf16.gmra.mrb[0].mxu0 %v4402
    %v4954 = vpop.f32.mrb[0].mxu0
    %v4955 = vadd.f32 0.0, %v4954
    %v4956 = vpop.f32.mrb[0].mxu0
    %v4957 = vadd.f32 0.0, %v4956
    %v4958 = vpop.f32.mrb[0].mxu0
    %v4959 = vadd.f32 0.0, %v4958
    %v4960 = vpop.f32.mrb[0].mxu0
    %v4961 = vadd.f32 0.0, %v4960
    %4962 = vmatprep.mubr.bf16.mxu0 0
    %4963 = vmatmul.mubr.bf16.gmra.mrb[0].mxu0 %v4403
    %v4964 = vpop.f32.mrb[0].mxu0
    %v4965 = vadd.f32 0.0, %v4964
    %v4966 = vpop.f32.mrb[0].mxu0
    %v4967 = vadd.f32 0.0, %v4966
    %v4968 = vpop.f32.mrb[0].mxu0
    %v4969 = vpop.f32.mrb[0].mxu0
    %4970 = vdwg.mxu0
    %4971 = vmatprep.subr.bf16.mxu0 %v4667
    %4972 = vmatpush1.bf16.msra.mxu0 %v4666
    %4973 = vmatprep.subr.bf16.mxu0 %v4675
    %4974 = vmatpush1.bf16.msra.mxu0 %v4674
    %4975 = vmatprep.subr.bf16.mxu0 %v4683
    %4976 = vmatpush1.bf16.msra.mxu0 %v4682
    %4977 = vmatprep.subr.bf16.mxu0 %v4691
    %4978 = vmatpush1.bf16.msra.mxu0 %v4690
    %4979 = vmatprep.subr.bf16.mxu0 %v4699
    %4980 = vmatpush1.bf16.msra.mxu0 %v4698
    %4981 = vmatprep.subr.bf16.mxu0 %v4707
    %4982 = vmatpush1.bf16.msra.mxu0 %v4706
    %4983 = vmatprep.subr.bf16.mxu0 %v4715
    %4984 = vmatpush1.bf16.msra.mxu0 %v4714
    %4985 = vmatprep.subr.bf16.mxu0 %v4723
    %4986 = vmatpush1.bf16.msra.mxu0 %v4722
    %4987 = vmatprep.subr.bf16.mxu0 0
    %4988 = vmatpush1.bf16.msra.mxu0 0
    %4989 = vmatprep.subr.bf16.mxu0 0
    %4990 = vmatpush1.bf16.msra.mxu0 0
    %4991 = vmatprep.subr.bf16.mxu0 0
    %4992 = vmatpush1.bf16.msra.mxu0 0
    %4993 = vmatprep.subr.bf16.mxu0 0
    %4994 = vmatpush1.bf16.msra.mxu0 0
    %4995 = vmatprep.subr.bf16.mxu0 0
    %4996 = vmatpush1.bf16.msra.mxu0 0
    %4997 = vmatprep.subr.bf16.mxu0 0
    %4998 = vmatpush1.bf16.msra.mxu0 0
    %4999 = vmatprep.subr.bf16.mxu0 0
    %5000 = vmatpush1.bf16.msra.mxu0 0
    %5001 = vmatprep.subr.bf16.mxu0 0
    %5002 = vmatpush1.bf16.msra.mxu0 0
    %5003 = vmatprep.mubr.bf16.mxu0 0
    %5004 = vmatmul.mubr.bf16.gmra.mrb[0].mxu0 %v4401
    %v5005 = vpop.f32.mrb[0].mxu0
    %v5006 = vadd.f32 0.0, %v5005
    %v5007 = vpop.f32.mrb[0].mxu0
    %v5008 = vadd.f32 0.0, %v5007
    %v5009 = vpop.f32.mrb[0].mxu0
    %v5010 = vadd.f32 0.0, %v5009
    %v5011 = vpop.f32.mrb[0].mxu0
    %v5012 = vadd.f32 0.0, %v5011
    %5013 = vmatprep.mubr.bf16.mxu0 0
    %5014 = vmatmul.mubr.bf16.gmra.mrb[0].mxu0 %v4402
    %v5015 = vpop.f32.mrb[0].mxu0
    %v5016 = vadd.f32 0.0, %v5015
    %v5017 = vpop.f32.mrb[0].mxu0
    %v5018 = vadd.f32 0.0, %v5017
    %v5019 = vpop.f32.mrb[0].mxu0
    %v5020 = vadd.f32 0.0, %v5019
    %v5021 = vpop.f32.mrb[0].mxu0
    %v5022 = vadd.f32 0.0, %v5021
    %5023 = vmatprep.mubr.bf16.mxu0 0
    %5024 = vmatmul.mubr.bf16.gmra.mrb[0].mxu0 %v4403
    %v5025 = vpop.f32.mrb[0].mxu0
    %v5026 = vadd.f32 0.0, %v5025
    %v5027 = vpop.f32.mrb[0].mxu0
    %v5028 = vadd.f32 0.0, %v5027
    %v5029 = vpop.f32.mrb[0].mxu0
    %v5030 = vpop.f32.mrb[0].mxu0
    %5031 = vdwg.mxu0
    %5033 = vset.pattern.permute.xlu0 4
    %5034 = vperm.xlu0 %5033, %v4361
    %v5035 = vpop.permute.xlu0 %5034
    %5038 = vset.pattern.permute.xlu0 4
    %5039 = vperm.xlu0 %5038, %v4362
    %v5040 = vpop.permute.xlu0 %5039
    %5043 = vset.pattern.permute.xlu0 4
    %5044 = vperm.xlu0 %5043, %v4363
    %v5045 = vpop.permute.xlu0 %5044
    %5048 = vset.pattern.permute.xlu0 4
    %5049 = vperm.xlu0 %5048, %v4364
    %v5050 = vpop.permute.xlu0 %5049
    %5053 = vset.pattern.permute.xlu0 4
    %5054 = vperm.xlu0 %5053, %v4365
    %v5055 = vpop.permute.xlu0 %5054
    %v5057 = vmul.f32 %v5035, %v4396
    %v5058 = vmul.f32 %v5040, %v4397
    %v5059 = vmul.f32 %v5045, %v4398
    %v5060 = vmul.f32 %v5050, %v4399
    %v5061 = vmul.f32 %v5055, %v4400
    %5062 = vset.pattern.permute.xlu0 0
    %5063 = vperm.xlu0 %5062, %v4361
    %v5064 = vpop.permute.xlu0 %5063
    %5066 = vset.pattern.permute.xlu0 0
    %5067 = vperm.xlu0 %5066, %v4362
    %v5068 = vpop.permute.xlu0 %5067
    %5070 = vset.pattern.permute.xlu0 0
    %5071 = vperm.xlu0 %5070, %v4363
    %v5072 = vpop.permute.xlu0 %5071
    %5074 = vset.pattern.permute.xlu0 0
    %5075 = vperm.xlu0 %5074, %v4364
    %v5076 = vpop.permute.xlu0 %5075
    %5078 = vset.pattern.permute.xlu0 0
    %5079 = vperm.xlu0 %5078, %v4365
    %v5080 = vpop.permute.xlu0 %5079
    %v5082 = vmul.f32 %v5064, %v4823
    %v5083 = vmul.f32 %v5068, %v4827
    %v5084 = vmul.f32 %v5072, %v4833
    %v5085 = vmul.f32 %v5076, %v4837
    %v5086 = vmul.f32 %v5080, %v4843
    %v5087 = vadd.f32 %v5057, %v5082
    %v5088 = vadd.f32 %v5058, %v5083
    %v5089 = vadd.f32 %v5059, %v5084
    %v5090 = vadd.f32 %v5060, %v5085
    %v5091 = vadd.f32 %v5061, %v5086
    %5092 = vset.pattern.permute.xlu0 1
    %5093 = vperm.xlu0 %5092, %v4361
    %v5094 = vpop.permute.xlu0 %5093
    %5096 = vset.pattern.permute.xlu0 1
    %5097 = vperm.xlu0 %5096, %v4362
    %v5098 = vpop.permute.xlu0 %5097
    %5100 = vset.pattern.permute.xlu0 1
    %5101 = vperm.xlu0 %5100, %v4363
    %v5102 = vpop.permute.xlu0 %5101
    %5104 = vset.pattern.permute.xlu0 1
    %5105 = vperm.xlu0 %5104, %v4364
    %v5106 = vpop.permute.xlu0 %5105
    %5108 = vset.pattern.permute.xlu0 1
    %5109 = vperm.xlu0 %5108, %v4365
    %v5110 = vpop.permute.xlu0 %5109
    %v5112 = vmul.f32 %v5094, %v4825
    %v5113 = vmul.f32 %v5098, %v4829
    %v5114 = vmul.f32 %v5102, %v4835
    %v5115 = vmul.f32 %v5106, %v4839
    %v5116 = vmul.f32 %v5110, %v4845
    %v5117 = vadd.f32 %v5087, %v5112
    %v5118 = vadd.f32 %v5088, %v5113
    %v5119 = vadd.f32 %v5089, %v5114
    %v5120 = vadd.f32 %v5090, %v5115
    %v5121 = vadd.f32 %v5091, %v5116
    %5122 = vset.pattern.permute.xlu0 2
    %5123 = vperm.xlu0 %5122, %v4361
    %v5124 = vpop.permute.xlu0 %5123
    %5126 = vset.pattern.permute.xlu0 2
    %5127 = vperm.xlu0 %5126, %v4362
    %v5128 = vpop.permute.xlu0 %5127
    %5130 = vset.pattern.permute.xlu0 2
    %5131 = vperm.xlu0 %5130, %v4363
    %v5132 = vpop.permute.xlu0 %5131
    %5134 = vset.pattern.permute.xlu0 2
    %5135 = vperm.xlu0 %5134, %v4364
    %v5136 = vpop.permute.xlu0 %5135
    %5138 = vset.pattern.permute.xlu0 2
    %5139 = vperm.xlu0 %5138, %v4365
    %v5140 = vpop.permute.xlu0 %5139
    %v5142 = vmul.f32 %v5124, %v4884
    %v5143 = vmul.f32 %v5128, %v4888
    %v5144 = vmul.f32 %v5132, %v4894
    %v5145 = vmul.f32 %v5136, %v4898
    %v5146 = vmul.f32 %v5140, %v4904
    %v5147 = vadd.f32 %v5117, %v5142
    %v5148 = vadd.f32 %v5118, %v5143
    %v5149 = vadd.f32 %v5119, %v5144
    %v5150 = vadd.f32 %v5120, %v5145
    %v5151 = vadd.f32 %v5121, %v5146
    %5152 = vset.pattern.permute.xlu0 3
    %5153 = vperm.xlu0 %5152, %v4361
    %v5154 = vpop.permute.xlu0 %5153
    %5156 = vset.pattern.permute.xlu0 3
    %5157 = vperm.xlu0 %5156, %v4362
    %v5158 = vpop.permute.xlu0 %5157
    %5160 = vset.pattern.permute.xlu0 3
    %5161 = vperm.xlu0 %5160, %v4363
    %v5162 = vpop.permute.xlu0 %5161
    %5164 = vset.pattern.permute.xlu0 3
    %5165 = vperm.xlu0 %5164, %v4364
    %v5166 = vpop.permute.xlu0 %5165
    %5168 = vset.pattern.permute.xlu0 3
    %5169 = vperm.xlu0 %5168, %v4365
    %v5170 = vpop.permute.xlu0 %5169
    %v5172 = vmul.f32 %v5154, %v4886
    %v5173 = vmul.f32 %v5158, %v4890
    %v5174 = vmul.f32 %v5162, %v4896
    %v5175 = vmul.f32 %v5166, %v4900
    %v5176 = vmul.f32 %v5170, %v4906
    %v5177 = vadd.f32 %v5147, %v5172
    %v5178 = vadd.f32 %v5148, %v5173
    %v5179 = vadd.f32 %v5149, %v5174
    %v5180 = vadd.f32 %v5150, %v5175
    %v5181 = vadd.f32 %v5151, %v5176
    %5182 = vset.pattern.permute.xlu0 5
    %5183 = vperm.xlu0 %5182, %v4361
    %v5184 = vpop.permute.xlu0 %5183
    %5186 = vset.pattern.permute.xlu0 5
    %5187 = vperm.xlu0 %5186, %v4362
    %v5188 = vpop.permute.xlu0 %5187
    %5190 = vset.pattern.permute.xlu0 5
    %5191 = vperm.xlu0 %5190, %v4363
    %v5192 = vpop.permute.xlu0 %5191
    %5194 = vset.pattern.permute.xlu0 5
    %5195 = vperm.xlu0 %5194, %v4364
    %v5196 = vpop.permute.xlu0 %5195
    %5198 = vset.pattern.permute.xlu0 5
    %5199 = vperm.xlu0 %5198, %v4365
    %v5200 = vpop.permute.xlu0 %5199
    %v5202 = vmul.f32 %v5184, %v4945
    %v5203 = vmul.f32 %v5188, %v4949
    %v5204 = vmul.f32 %v5192, %v4955
    %v5205 = vmul.f32 %v5196, %v4959
    %v5206 = vmul.f32 %v5200, %v4965
    %v5207 = vadd.f32 %v5177, %v5202
    %v5208 = vadd.f32 %v5178, %v5203
    %v5209 = vadd.f32 %v5179, %v5204
    %v5210 = vadd.f32 %v5180, %v5205
    %v5211 = vadd.f32 %v5181, %v5206
    %5212 = vset.pattern.permute.xlu0 6
    %5213 = vperm.xlu0 %5212, %v4361
    %v5214 = vpop.permute.xlu0 %5213
    %5216 = vset.pattern.permute.xlu0 6
    %5217 = vperm.xlu0 %5216, %v4362
    %v5218 = vpop.permute.xlu0 %5217
    %5220 = vset.pattern.permute.xlu0 6
    %5221 = vperm.xlu0 %5220, %v4363
    %v5222 = vpop.permute.xlu0 %5221
    %5224 = vset.pattern.permute.xlu0 6
    %5225 = vperm.xlu0 %5224, %v4364
    %v5226 = vpop.permute.xlu0 %5225
    %5228 = vset.pattern.permute.xlu0 6
    %5229 = vperm.xlu0 %5228, %v4365
    %v5230 = vpop.permute.xlu0 %5229
    %v5232 = vmul.f32 %v5214, %v4947
    %v5233 = vmul.f32 %v5218, %v4951
    %v5234 = vmul.f32 %v5222, %v4957
    %v5235 = vmul.f32 %v5226, %v4961
    %v5236 = vmul.f32 %v5230, %v4967
    %v5237 = vadd.f32 %v5207, %v5232
    %v5238 = vadd.f32 %v5208, %v5233
    %v5239 = vadd.f32 %v5209, %v5234
    %v5240 = vadd.f32 %v5210, %v5235
    %v5241 = vadd.f32 %v5211, %v5236
    %5242 = vset.pattern.permute.xlu0 7
    %5243 = vperm.xlu0 %5242, %v4361
    %v5244 = vpop.permute.xlu0 %5243
    %5246 = vset.pattern.permute.xlu0 7
    %5247 = vperm.xlu0 %5246, %v4362
    %v5248 = vpop.permute.xlu0 %5247
    %5250 = vset.pattern.permute.xlu0 7
    %5251 = vperm.xlu0 %5250, %v4363
    %v5252 = vpop.permute.xlu0 %5251
    %5254 = vset.pattern.permute.xlu0 7
    %5255 = vperm.xlu0 %5254, %v4364
    %v5256 = vpop.permute.xlu0 %5255
    %5258 = vset.pattern.permute.xlu0 7
    %5259 = vperm.xlu0 %5258, %v4365
    %v5260 = vpop.permute.xlu0 %5259
    %v5262 = vmul.f32 %v5244, %v5006
    %v5263 = vmul.f32 %v5248, %v5010
    %v5264 = vmul.f32 %v5252, %v5016
    %v5265 = vmul.f32 %v5256, %v5020
    %v5266 = vmul.f32 %v5260, %v5026
    %v5267 = vadd.f32 %v5237, %v5262
    %v5268 = vadd.f32 %v5238, %v5263
    %v5269 = vadd.f32 %v5239, %v5264
    %v5270 = vadd.f32 %v5240, %v5265
    %v5271 = vadd.f32 %v5241, %v5266
    %5272 = vset.pattern.permute.xlu0 8
    %5273 = vperm.xlu0 %5272, %v4361
    %v5274 = vpop.permute.xlu0 %5273
    %5276 = vset.pattern.permute.xlu0 8
    %5277 = vperm.xlu0 %5276, %v4362
    %v5278 = vpop.permute.xlu0 %5277
    %5280 = vset.pattern.permute.xlu0 8
    %5281 = vperm.xlu0 %5280, %v4363
    %v5282 = vpop.permute.xlu0 %5281
    %5284 = vset.pattern.permute.xlu0 8
    %5285 = vperm.xlu0 %5284, %v4364
    %v5286 = vpop.permute.xlu0 %5285
    %5288 = vset.pattern.permute.xlu0 8
    %5289 = vperm.xlu0 %5288, %v4365
    %v5290 = vpop.permute.xlu0 %5289
    %v5292 = vmul.f32 %v5274, %v5008
    %v5293 = vmul.f32 %v5278, %v5012
    %v5294 = vmul.f32 %v5282, %v5018
    %v5295 = vmul.f32 %v5286, %v5022
    %v5296 = vmul.f32 %v5290, %v5028
    %v5297 = vadd.f32 %v5267, %v5292
    %v5298 = vadd.f32 %v5268, %v5293
    %v5299 = vadd.f32 %v5269, %v5294
    %v5300 = vadd.f32 %v5270, %v5295
    %v5301 = vadd.f32 %v5271, %v5296
    %v5302 = vpack.c.bf16 %v5298, %v5297
    %v5303 = vpack.c.bf16 %v5300, %v5299
    %v5304 = vpack.c.bf16 %v5301, %v5301
    %v5310 = vunpack.c.l.b16 %v4366
    %v5311 = vunpack.c.l.b16 %v4367
    %v5312 = vunpack.c.l.b16 %v4368
    %v5313 = vunpack.c.l.b16 %v4369
    %v5314 = vunpack.c.l.b16 %v4370
    %v5315 = vpack.c.b16 %v5311, %v5310
    %v5316 = vpack.c.b16 %v5313, %v5312
    %v5317 = vpack.c.b16 %v5314, %v5314
    %vm5318 = vcmask 326656
    %v5320 = vsel %vm5318, %v5315, 0
    %v5323 = vsel %vm5318, %v5316, 0
    %v5326 = vsel %vm5318, %v5317, 0
    %v5329 = vsel %vm2218, %v5304, 0
    %5331 = vmatprep.subr.bf16.mxu0 0
    %5332 = vmatpush1.bf16.msra.mxu0 %v5302
    %5333 = vmatprep.subr.bf16.mxu0 0
    %5334 = vmatpush1.bf16.msra.mxu0 %v5303
    %5335 = vmatprep.subr.bf16.mxu0 0
    %5336 = vmatpush1.bf16.msra.mxu0 %v5329
    %5337 = vmatprep.subr.bf16.mxu0 0
    %5338 = vmatpush1.bf16.msra.mxu0 0
    %5339 = vmatprep.subr.bf16.mxu0 0
    %5340 = vmatpush1.bf16.msra.mxu0 0
    %5341 = vmatprep.subr.bf16.mxu0 0
    %5342 = vmatpush1.bf16.msra.mxu0 0
    %5343 = vmatprep.subr.bf16.mxu0 0
    %5344 = vmatpush1.bf16.msra.mxu0 0
    %5345 = vmatprep.subr.bf16.mxu0 0
    %5346 = vmatpush1.bf16.msra.mxu0 0
    %5347 = vmatprep.subr.bf16.mxu0 0
    %5348 = vmatpush1.bf16.msra.mxu0 0
    %5349 = vmatprep.subr.bf16.mxu0 0
    %5350 = vmatpush1.bf16.msra.mxu0 0
    %5351 = vmatprep.subr.bf16.mxu0 0
    %5352 = vmatpush1.bf16.msra.mxu0 0
    %5353 = vmatprep.subr.bf16.mxu0 0
    %5354 = vmatpush1.bf16.msra.mxu0 0
    %5355 = vmatprep.subr.bf16.mxu0 0
    %5356 = vmatpush1.bf16.msra.mxu0 0
    %5357 = vmatprep.subr.bf16.mxu0 0
    %5358 = vmatpush1.bf16.msra.mxu0 0
    %5359 = vmatprep.subr.bf16.mxu0 0
    %5360 = vmatpush1.bf16.msra.mxu0 0
    %5361 = vmatprep.subr.bf16.mxu0 0
    %5362 = vmatpush1.bf16.msra.mxu0 0
    %5363 = vmatprep.mubr.bf16.mxu0 0
    %5364 = vmatmul.mubr.bf16.gmra.mrb[0].mxu0 %v5320
    %v5365 = vpop.f32.mrb[0].mxu0
    %v5366 = vadd.f32 0.0, %v5365
    %v5367 = vpop.f32.mrb[0].mxu0
    %v5368 = vpop.f32.mrb[0].mxu0
    %v5369 = vadd.f32 0.0, %v5368
    %v5370 = vpop.f32.mrb[0].mxu0
    %5371 = vmatprep.mubr.bf16.mxu0 0
    %5372 = vmatmul.mubr.bf16.gmra.mrb[0].mxu0 %v5323
    %v5373 = vpop.f32.mrb[0].mxu0
    %v5374 = vadd.f32 0.0, %v5373
    %v5375 = vpop.f32.mrb[0].mxu0
    %v5376 = vpop.f32.mrb[0].mxu0
    %v5377 = vadd.f32 0.0, %v5376
    %v5378 = vpop.f32.mrb[0].mxu0
    %5379 = vmatprep.mubr.bf16.mxu0 0
    %5380 = vmatmul.mubr.bf16.gmra.mrb[0].mxu0 %v5326
    %v5381 = vpop.f32.mrb[0].mxu0
    %v5382 = vadd.f32 0.0, %v5381
    %v5383 = vpop.f32.mrb[0].mxu0
    %v5384 = vpop.f32.mrb[0].mxu0
    %v5385 = vpop.f32.mrb[0].mxu0
    %5386 = vdwg.mxu0
    %5387 = vadd.xlane.f32.xlu0 %v5366
    %v5388 = vpop.xlane.xlu0 %5387
    %5389 = vadd.xlane.f32.xlu0 %v5369
    %v5390 = vpop.xlane.xlu0 %5389
    %5391 = vadd.xlane.f32.xlu0 %v5374
    %v5392 = vpop.xlane.xlu0 %5391
    %5393 = vadd.xlane.f32.xlu0 %v5377
    %v5394 = vpop.xlane.xlu0 %5393
    %5395 = vadd.xlane.f32.xlu0 %v5382
    %v5396 = vpop.xlane.xlu0 %5395
    %v5397 = vmul.f32 %v5388, %v215
    %v5398 = vmul.f32 %v5390, %v215
    %v5399 = vmul.f32 %v5392, %v215
    %v5400 = vmul.f32 %v5394, %v215
    %v5401 = vmul.f32 %v5396, %v215
    %v5402 = vmul.f32 %v5366, %v5366
    %v5403 = vmul.f32 %v5369, %v5369
    %v5404 = vmul.f32 %v5374, %v5374
    %v5405 = vmul.f32 %v5377, %v5377
    %v5406 = vmul.f32 %v5382, %v5382
    %5407 = vadd.xlane.f32.xlu0 %v5402
    %v5408 = vpop.xlane.xlu0 %5407
    %5409 = vadd.xlane.f32.xlu0 %v5403
    %v5410 = vpop.xlane.xlu0 %5409
    %5411 = vadd.xlane.f32.xlu0 %v5404
    %v5412 = vpop.xlane.xlu0 %5411
    %5413 = vadd.xlane.f32.xlu0 %v5405
    %v5414 = vpop.xlane.xlu0 %5413
    %5415 = vadd.xlane.f32.xlu0 %v5406
    %v5416 = vpop.xlane.xlu0 %5415
    %v5417 = vmul.f32 %v5408, %v215
    %v5418 = vmul.f32 %v5410, %v215
    %v5419 = vmul.f32 %v5412, %v215
    %v5420 = vmul.f32 %v5414, %v215
    %v5421 = vmul.f32 %v5416, %v215
    %v5422 = vmul.f32 %v5397, %v5397
    %v5423 = vmul.f32 %v5398, %v5398
    %v5424 = vmul.f32 %v5399, %v5399
    %v5425 = vmul.f32 %v5400, %v5400
    %v5426 = vmul.f32 %v5401, %v5401
    %v5427 = vsub.f32 %v5417, %v5422
    %v5428 = vsub.f32 %v5418, %v5423
    %v5429 = vsub.f32 %v5419, %v5424
    %v5430 = vsub.f32 %v5420, %v5425
    %v5431 = vsub.f32 %v5421, %v5426
    %v5432 = vmax.f32 %v5427, 0.0
    %v5433 = vmax.f32 %v5428, 0.0
    %v5434 = vmax.f32 %v5429, 0.0
    %v5435 = vmax.f32 %v5430, 0.0
    %v5436 = vmax.f32 %v5431, 0.0
    %v5437 = vsub.f32 %v5366, %v5397
    %v5438 = vsub.f32 %v5369, %v5398
    %v5439 = vsub.f32 %v5374, %v5399
    %v5440 = vsub.f32 %v5377, %v5400
    %v5441 = vsub.f32 %v5382, %v5401
    %v5442 = vadd.f32 %v5432, 1e-05
    %v5443 = vadd.f32 %v5433, 1e-05
    %v5444 = vadd.f32 %v5434, 1e-05
    %v5445 = vadd.f32 %v5435, 1e-05
    %v5446 = vadd.f32 %v5436, 1e-05
    %v5447 = vrsqrt.pop %v5442
    %v5448 = vrsqrt.pop %v5443
    %v5449 = vrsqrt.pop %v5444
    %v5450 = vrsqrt.pop %v5445
    %v5451 = vrsqrt.pop %v5446
    %v5452 = vmul.f32 %v5437, %v5447
    %v5453 = vmul.f32 %v5438, %v5448
    %v5454 = vmul.f32 %v5439, %v5449
    %v5455 = vmul.f32 %v5440, %v5450
    %v5456 = vmul.f32 %v5441, %v5451
    %v5457 = vmax.f32 %v5452, 0.0
    %v5458 = vmax.f32 %v5453, 0.0
    %v5459 = vmax.f32 %v5454, 0.0
    %v5460 = vmax.f32 %v5455, 0.0
    %v5461 = vmax.f32 %v5456, 0.0
    %v5462 = vpack.c.bf16 %v5458, %v5457
    %v5463 = vpack.c.bf16 %v5460, %v5459
    %v5464 = vpack.c.bf16 %v5461, %v5461
    %5465 = vmatprep.subr.bf16.mxu0 %v4661
    %5466 = vmatpush1.bf16.msra.mxu0 %v4660
    %5467 = vmatprep.subr.bf16.mxu0 %v4669
    %5468 = vmatpush1.bf16.msra.mxu0 %v4668
    %5469 = vmatprep.subr.bf16.mxu0 %v4677
    %5470 = vmatpush1.bf16.msra.mxu0 %v4676
    %5471 = vmatprep.subr.bf16.mxu0 %v4685
    %5472 = vmatpush1.bf16.msra.mxu0 %v4684
    %5473 = vmatprep.subr.bf16.mxu0 %v4693
    %5474 = vmatpush1.bf16.msra.mxu0 %v4692
    %5475 = vmatprep.subr.bf16.mxu0 %v4701
    %5476 = vmatpush1.bf16.msra.mxu0 %v4700
    %5477 = vmatprep.subr.bf16.mxu0 %v4709
    %5478 = vmatpush1.bf16.msra.mxu0 %v4708
    %5479 = vmatprep.subr.bf16.mxu0 %v4717
    %5480 = vmatpush1.bf16.msra.mxu0 %v4716
    %5481 = vmatprep.subr.bf16.mxu0 0
    %5482 = vmatpush1.bf16.msra.mxu0 0
    %5483 = vmatprep.subr.bf16.mxu0 0
    %5484 = vmatpush1.bf16.msra.mxu0 0
    %5485 = vmatprep.subr.bf16.mxu0 0
    %5486 = vmatpush1.bf16.msra.mxu0 0
    %5487 = vmatprep.subr.bf16.mxu0 0
    %5488 = vmatpush1.bf16.msra.mxu0 0
    %5489 = vmatprep.subr.bf16.mxu0 0
    %5490 = vmatpush1.bf16.msra.mxu0 0
    %5491 = vmatprep.subr.bf16.mxu0 0
    %5492 = vmatpush1.bf16.msra.mxu0 0
    %5493 = vmatprep.subr.bf16.mxu0 0
    %5494 = vmatpush1.bf16.msra.mxu0 0
    %5495 = vmatprep.subr.bf16.mxu0 0
    %5496 = vmatpush1.bf16.msra.mxu0 0
    %5497 = vmatprep.mubr.bf16.mxu0 0
    %5498 = vmatmul.mubr.bf16.gmra.mrb[0].mxu0 %v5462
    %v5499 = vpop.f32.mrb[0].mxu0
    %v5500 = vadd.f32 0.0, %v5499
    %v5501 = vpop.f32.mrb[0].mxu0
    %v5502 = vadd.f32 0.0, %v5501
    %v5503 = vpop.f32.mrb[0].mxu0
    %v5504 = vadd.f32 0.0, %v5503
    %v5505 = vpop.f32.mrb[0].mxu0
    %v5506 = vadd.f32 0.0, %v5505
    %5507 = vmatprep.mubr.bf16.mxu0 0
    %5508 = vmatmul.mubr.bf16.gmra.mrb[0].mxu0 %v5463
    %v5509 = vpop.f32.mrb[0].mxu0
    %v5510 = vadd.f32 0.0, %v5509
    %v5511 = vpop.f32.mrb[0].mxu0
    %v5512 = vadd.f32 0.0, %v5511
    %v5513 = vpop.f32.mrb[0].mxu0
    %v5514 = vadd.f32 0.0, %v5513
    %v5515 = vpop.f32.mrb[0].mxu0
    %v5516 = vadd.f32 0.0, %v5515
    %5517 = vmatprep.mubr.bf16.mxu0 0
    %5518 = vmatmul.mubr.bf16.gmra.mrb[0].mxu0 %v5464
    %v5519 = vpop.f32.mrb[0].mxu0
    %v5520 = vadd.f32 0.0, %v5519
    %v5521 = vpop.f32.mrb[0].mxu0
    %v5522 = vadd.f32 0.0, %v5521
    %v5523 = vpop.f32.mrb[0].mxu0
    %v5524 = vpop.f32.mrb[0].mxu0
    %5525 = vdwg.mxu0
    %5526 = vmatprep.subr.bf16.mxu0 %v4663
    %5527 = vmatpush1.bf16.msra.mxu0 %v4662
    %5528 = vmatprep.subr.bf16.mxu0 %v4671
    %5529 = vmatpush1.bf16.msra.mxu0 %v4670
    %5530 = vmatprep.subr.bf16.mxu0 %v4679
    %5531 = vmatpush1.bf16.msra.mxu0 %v4678
    %5532 = vmatprep.subr.bf16.mxu0 %v4687
    %5533 = vmatpush1.bf16.msra.mxu0 %v4686
    %5534 = vmatprep.subr.bf16.mxu0 %v4695
    %5535 = vmatpush1.bf16.msra.mxu0 %v4694
    %5536 = vmatprep.subr.bf16.mxu0 %v4703
    %5537 = vmatpush1.bf16.msra.mxu0 %v4702
    %5538 = vmatprep.subr.bf16.mxu0 %v4711
    %5539 = vmatpush1.bf16.msra.mxu0 %v4710
    %5540 = vmatprep.subr.bf16.mxu0 %v4719
    %5541 = vmatpush1.bf16.msra.mxu0 %v4718
    %5542 = vmatprep.subr.bf16.mxu0 0
    %5543 = vmatpush1.bf16.msra.mxu0 0
    %5544 = vmatprep.subr.bf16.mxu0 0
    %5545 = vmatpush1.bf16.msra.mxu0 0
    %5546 = vmatprep.subr.bf16.mxu0 0
    %5547 = vmatpush1.bf16.msra.mxu0 0
    %5548 = vmatprep.subr.bf16.mxu0 0
    %5549 = vmatpush1.bf16.msra.mxu0 0
    %5550 = vmatprep.subr.bf16.mxu0 0
    %5551 = vmatpush1.bf16.msra.mxu0 0
    %5552 = vmatprep.subr.bf16.mxu0 0
    %5553 = vmatpush1.bf16.msra.mxu0 0
    %5554 = vmatprep.subr.bf16.mxu0 0
    %5555 = vmatpush1.bf16.msra.mxu0 0
    %5556 = vmatprep.subr.bf16.mxu0 0
    %5557 = vmatpush1.bf16.msra.mxu0 0
    %5558 = vmatprep.mubr.bf16.mxu0 0
    %5559 = vmatmul.mubr.bf16.gmra.mrb[0].mxu0 %v5462
    %v5560 = vpop.f32.mrb[0].mxu0
    %v5561 = vadd.f32 0.0, %v5560
    %v5562 = vpop.f32.mrb[0].mxu0
    %v5563 = vadd.f32 0.0, %v5562
    %v5564 = vpop.f32.mrb[0].mxu0
    %v5565 = vadd.f32 0.0, %v5564
    %v5566 = vpop.f32.mrb[0].mxu0
    %v5567 = vadd.f32 0.0, %v5566
    %5568 = vmatprep.mubr.bf16.mxu0 0
    %5569 = vmatmul.mubr.bf16.gmra.mrb[0].mxu0 %v5463
    %v5570 = vpop.f32.mrb[0].mxu0
    %v5571 = vadd.f32 0.0, %v5570
    %v5572 = vpop.f32.mrb[0].mxu0
    %v5573 = vadd.f32 0.0, %v5572
    %v5574 = vpop.f32.mrb[0].mxu0
    %v5575 = vadd.f32 0.0, %v5574
    %v5576 = vpop.f32.mrb[0].mxu0
    %v5577 = vadd.f32 0.0, %v5576
    %5578 = vmatprep.mubr.bf16.mxu0 0
    %5579 = vmatmul.mubr.bf16.gmra.mrb[0].mxu0 %v5464
    %v5580 = vpop.f32.mrb[0].mxu0
    %v5581 = vadd.f32 0.0, %v5580
    %v5582 = vpop.f32.mrb[0].mxu0
    %v5583 = vadd.f32 0.0, %v5582
    %v5584 = vpop.f32.mrb[0].mxu0
    %v5585 = vpop.f32.mrb[0].mxu0
    %5586 = vdwg.mxu0
    %5587 = vmatprep.subr.bf16.mxu0 %v4665
    %5588 = vmatpush1.bf16.msra.mxu0 %v4664
    %5589 = vmatprep.subr.bf16.mxu0 %v4673
    %5590 = vmatpush1.bf16.msra.mxu0 %v4672
    %5591 = vmatprep.subr.bf16.mxu0 %v4681
    %5592 = vmatpush1.bf16.msra.mxu0 %v4680
    %5593 = vmatprep.subr.bf16.mxu0 %v4689
    %5594 = vmatpush1.bf16.msra.mxu0 %v4688
    %5595 = vmatprep.subr.bf16.mxu0 %v4697
    %5596 = vmatpush1.bf16.msra.mxu0 %v4696
    %5597 = vmatprep.subr.bf16.mxu0 %v4705
    %5598 = vmatpush1.bf16.msra.mxu0 %v4704
    %5599 = vmatprep.subr.bf16.mxu0 %v4713
    %5600 = vmatpush1.bf16.msra.mxu0 %v4712
    %5601 = vmatprep.subr.bf16.mxu0 %v4721
    %5602 = vmatpush1.bf16.msra.mxu0 %v4720
    %5603 = vmatprep.subr.bf16.mxu0 0
    %5604 = vmatpush1.bf16.msra.mxu0 0
    %5605 = vmatprep.subr.bf16.mxu0 0
    %5606 = vmatpush1.bf16.msra.mxu0 0
    %5607 = vmatprep.subr.bf16.mxu0 0
    %5608 = vmatpush1.bf16.msra.mxu0 0
    %5609 = vmatprep.subr.bf16.mxu0 0
    %5610 = vmatpush1.bf16.msra.mxu0 0
    %5611 = vmatprep.subr.bf16.mxu0 0
    %5612 = vmatpush1.bf16.msra.mxu0 0
    %5613 = vmatprep.subr.bf16.mxu0 0
    %5614 = vmatpush1.bf16.msra.mxu0 0
    %5615 = vmatprep.subr.bf16.mxu0 0
    %5616 = vmatpush1.bf16.msra.mxu0 0
    %5617 = vmatprep.subr.bf16.mxu0 0
    %5618 = vmatpush1.bf16.msra.mxu0 0
    %5619 = vmatprep.mubr.bf16.mxu0 0
    %5620 = vmatmul.mubr.bf16.gmra.mrb[0].mxu0 %v5462
    %v5621 = vpop.f32.mrb[0].mxu0
    %v5622 = vadd.f32 0.0, %v5621
    %v5623 = vpop.f32.mrb[0].mxu0
    %v5624 = vadd.f32 0.0, %v5623
    %v5625 = vpop.f32.mrb[0].mxu0
    %v5626 = vadd.f32 0.0, %v5625
    %v5627 = vpop.f32.mrb[0].mxu0
    %v5628 = vadd.f32 0.0, %v5627
    %5629 = vmatprep.mubr.bf16.mxu0 0
    %5630 = vmatmul.mubr.bf16.gmra.mrb[0].mxu0 %v5463
    %v5631 = vpop.f32.mrb[0].mxu0
    %v5632 = vadd.f32 0.0, %v5631
    %v5633 = vpop.f32.mrb[0].mxu0
    %v5634 = vadd.f32 0.0, %v5633
    %v5635 = vpop.f32.mrb[0].mxu0
    %v5636 = vadd.f32 0.0, %v5635
    %v5637 = vpop.f32.mrb[0].mxu0
    %v5638 = vadd.f32 0.0, %v5637
    %5639 = vmatprep.mubr.bf16.mxu0 0
    %5640 = vmatmul.mubr.bf16.gmra.mrb[0].mxu0 %v5464
    %v5641 = vpop.f32.mrb[0].mxu0
    %v5642 = vadd.f32 0.0, %v5641
    %v5643 = vpop.f32.mrb[0].mxu0
    %v5644 = vadd.f32 0.0, %v5643
    %v5645 = vpop.f32.mrb[0].mxu0
    %v5646 = vpop.f32.mrb[0].mxu0
    %5647 = vdwg.mxu0
    %5648 = vmatprep.subr.bf16.mxu0 %v4667
    %5649 = vmatpush1.bf16.msra.mxu0 %v4666
    %5650 = vmatprep.subr.bf16.mxu0 %v4675
    %5651 = vmatpush1.bf16.msra.mxu0 %v4674
    %5652 = vmatprep.subr.bf16.mxu0 %v4683
    %5653 = vmatpush1.bf16.msra.mxu0 %v4682
    %5654 = vmatprep.subr.bf16.mxu0 %v4691
    %5655 = vmatpush1.bf16.msra.mxu0 %v4690
    %5656 = vmatprep.subr.bf16.mxu0 %v4699
    %5657 = vmatpush1.bf16.msra.mxu0 %v4698
    %5658 = vmatprep.subr.bf16.mxu0 %v4707
    %5659 = vmatpush1.bf16.msra.mxu0 %v4706
    %5660 = vmatprep.subr.bf16.mxu0 %v4715
    %5661 = vmatpush1.bf16.msra.mxu0 %v4714
    %5662 = vmatprep.subr.bf16.mxu0 %v4723
    %5663 = vmatpush1.bf16.msra.mxu0 %v4722
    %5664 = vmatprep.subr.bf16.mxu0 0
    %5665 = vmatpush1.bf16.msra.mxu0 0
    %5666 = vmatprep.subr.bf16.mxu0 0
    %5667 = vmatpush1.bf16.msra.mxu0 0
    %5668 = vmatprep.subr.bf16.mxu0 0
    %5669 = vmatpush1.bf16.msra.mxu0 0
    %5670 = vmatprep.subr.bf16.mxu0 0
    %5671 = vmatpush1.bf16.msra.mxu0 0
    %5672 = vmatprep.subr.bf16.mxu0 0
    %5673 = vmatpush1.bf16.msra.mxu0 0
    %5674 = vmatprep.subr.bf16.mxu0 0
    %5675 = vmatpush1.bf16.msra.mxu0 0
    %5676 = vmatprep.subr.bf16.mxu0 0
    %5677 = vmatpush1.bf16.msra.mxu0 0
    %5678 = vmatprep.subr.bf16.mxu0 0
    %5679 = vmatpush1.bf16.msra.mxu0 0
    %5680 = vmatprep.mubr.bf16.mxu0 0
    %5681 = vmatmul.mubr.bf16.gmra.mrb[0].mxu0 %v5462
    %v5682 = vpop.f32.mrb[0].mxu0
    %v5683 = vadd.f32 0.0, %v5682
    %v5684 = vpop.f32.mrb[0].mxu0
    %v5685 = vadd.f32 0.0, %v5684
    %v5686 = vpop.f32.mrb[0].mxu0
    %v5687 = vadd.f32 0.0, %v5686
    %v5688 = vpop.f32.mrb[0].mxu0
    %v5689 = vadd.f32 0.0, %v5688
    %5690 = vmatprep.mubr.bf16.mxu0 0
    %5691 = vmatmul.mubr.bf16.gmra.mrb[0].mxu0 %v5463
    %v5692 = vpop.f32.mrb[0].mxu0
    %v5693 = vadd.f32 0.0, %v5692
    %v5694 = vpop.f32.mrb[0].mxu0
    %v5695 = vadd.f32 0.0, %v5694
    %v5696 = vpop.f32.mrb[0].mxu0
    %v5697 = vadd.f32 0.0, %v5696
    %v5698 = vpop.f32.mrb[0].mxu0
    %v5699 = vadd.f32 0.0, %v5698
    %5700 = vmatprep.mubr.bf16.mxu0 0
    %5701 = vmatmul.mubr.bf16.gmra.mrb[0].mxu0 %v5464
    %v5702 = vpop.f32.mrb[0].mxu0
    %v5703 = vadd.f32 0.0, %v5702
    %v5704 = vpop.f32.mrb[0].mxu0
    %v5705 = vadd.f32 0.0, %v5704
    %v5706 = vpop.f32.mrb[0].mxu0
    %v5707 = vpop.f32.mrb[0].mxu0
    %5708 = vdwg.mxu0
    %5710 = vset.pattern.permute.xlu0 4
    %5711 = vperm.xlu0 %5710, %v4371
    %v5712 = vpop.permute.xlu0 %5711
    %5715 = vset.pattern.permute.xlu0 4
    %5716 = vperm.xlu0 %5715, %v4372
    %v5717 = vpop.permute.xlu0 %5716
    %5720 = vset.pattern.permute.xlu0 4
    %5721 = vperm.xlu0 %5720, %v4373
    %v5722 = vpop.permute.xlu0 %5721
    %5725 = vset.pattern.permute.xlu0 4
    %5726 = vperm.xlu0 %5725, %v4374
    %v5727 = vpop.permute.xlu0 %5726
    %5730 = vset.pattern.permute.xlu0 4
    %5731 = vperm.xlu0 %5730, %v4375
    %v5732 = vpop.permute.xlu0 %5731
    %v5734 = vmul.f32 %v5712, %v5457
    %v5735 = vmul.f32 %v5717, %v5458
    %v5736 = vmul.f32 %v5722, %v5459
    %v5737 = vmul.f32 %v5727, %v5460
    %v5738 = vmul.f32 %v5732, %v5461
    %5739 = vset.pattern.permute.xlu0 0
    %5740 = vperm.xlu0 %5739, %v4371
    %v5741 = vpop.permute.xlu0 %5740
    %5743 = vset.pattern.permute.xlu0 0
    %5744 = vperm.xlu0 %5743, %v4372
    %v5745 = vpop.permute.xlu0 %5744
    %5747 = vset.pattern.permute.xlu0 0
    %5748 = vperm.xlu0 %5747, %v4373
    %v5749 = vpop.permute.xlu0 %5748
    %5751 = vset.pattern.permute.xlu0 0
    %5752 = vperm.xlu0 %5751, %v4374
    %v5753 = vpop.permute.xlu0 %5752
    %5755 = vset.pattern.permute.xlu0 0
    %5756 = vperm.xlu0 %5755, %v4375
    %v5757 = vpop.permute.xlu0 %5756
    %v5759 = vmul.f32 %v5741, %v5500
    %v5760 = vmul.f32 %v5745, %v5504
    %v5761 = vmul.f32 %v5749, %v5510
    %v5762 = vmul.f32 %v5753, %v5514
    %v5763 = vmul.f32 %v5757, %v5520
    %v5764 = vadd.f32 %v5734, %v5759
    %v5765 = vadd.f32 %v5735, %v5760
    %v5766 = vadd.f32 %v5736, %v5761
    %v5767 = vadd.f32 %v5737, %v5762
    %v5768 = vadd.f32 %v5738, %v5763
    %5769 = vset.pattern.permute.xlu0 1
    %5770 = vperm.xlu0 %5769, %v4371
    %v5771 = vpop.permute.xlu0 %5770
    %5773 = vset.pattern.permute.xlu0 1
    %5774 = vperm.xlu0 %5773, %v4372
    %v5775 = vpop.permute.xlu0 %5774
    %5777 = vset.pattern.permute.xlu0 1
    %5778 = vperm.xlu0 %5777, %v4373
    %v5779 = vpop.permute.xlu0 %5778
    %5781 = vset.pattern.permute.xlu0 1
    %5782 = vperm.xlu0 %5781, %v4374
    %v5783 = vpop.permute.xlu0 %5782
    %5785 = vset.pattern.permute.xlu0 1
    %5786 = vperm.xlu0 %5785, %v4375
    %v5787 = vpop.permute.xlu0 %5786
    %v5789 = vmul.f32 %v5771, %v5502
    %v5790 = vmul.f32 %v5775, %v5506
    %v5791 = vmul.f32 %v5779, %v5512
    %v5792 = vmul.f32 %v5783, %v5516
    %v5793 = vmul.f32 %v5787, %v5522
    %v5794 = vadd.f32 %v5764, %v5789
    %v5795 = vadd.f32 %v5765, %v5790
    %v5796 = vadd.f32 %v5766, %v5791
    %v5797 = vadd.f32 %v5767, %v5792
    %v5798 = vadd.f32 %v5768, %v5793
    %5799 = vset.pattern.permute.xlu0 2
    %5800 = vperm.xlu0 %5799, %v4371
    %v5801 = vpop.permute.xlu0 %5800
    %5803 = vset.pattern.permute.xlu0 2
    %5804 = vperm.xlu0 %5803, %v4372
    %v5805 = vpop.permute.xlu0 %5804
    %5807 = vset.pattern.permute.xlu0 2
    %5808 = vperm.xlu0 %5807, %v4373
    %v5809 = vpop.permute.xlu0 %5808
    %5811 = vset.pattern.permute.xlu0 2
    %5812 = vperm.xlu0 %5811, %v4374
    %v5813 = vpop.permute.xlu0 %5812
    %5815 = vset.pattern.permute.xlu0 2
    %5816 = vperm.xlu0 %5815, %v4375
    %v5817 = vpop.permute.xlu0 %5816
    %v5819 = vmul.f32 %v5801, %v5561
    %v5820 = vmul.f32 %v5805, %v5565
    %v5821 = vmul.f32 %v5809, %v5571
    %v5822 = vmul.f32 %v5813, %v5575
    %v5823 = vmul.f32 %v5817, %v5581
    %v5824 = vadd.f32 %v5794, %v5819
    %v5825 = vadd.f32 %v5795, %v5820
    %v5826 = vadd.f32 %v5796, %v5821
    %v5827 = vadd.f32 %v5797, %v5822
    %v5828 = vadd.f32 %v5798, %v5823
    %5829 = vset.pattern.permute.xlu0 3
    %5830 = vperm.xlu0 %5829, %v4371
    %v5831 = vpop.permute.xlu0 %5830
    %5833 = vset.pattern.permute.xlu0 3
    %5834 = vperm.xlu0 %5833, %v4372
    %v5835 = vpop.permute.xlu0 %5834
    %5837 = vset.pattern.permute.xlu0 3
    %5838 = vperm.xlu0 %5837, %v4373
    %v5839 = vpop.permute.xlu0 %5838
    %5841 = vset.pattern.permute.xlu0 3
    %5842 = vperm.xlu0 %5841, %v4374
    %v5843 = vpop.permute.xlu0 %5842
    %5845 = vset.pattern.permute.xlu0 3
    %5846 = vperm.xlu0 %5845, %v4375
    %v5847 = vpop.permute.xlu0 %5846
    %v5849 = vmul.f32 %v5831, %v5563
    %v5850 = vmul.f32 %v5835, %v5567
    %v5851 = vmul.f32 %v5839, %v5573
    %v5852 = vmul.f32 %v5843, %v5577
    %v5853 = vmul.f32 %v5847, %v5583
    %v5854 = vadd.f32 %v5824, %v5849
    %v5855 = vadd.f32 %v5825, %v5850
    %v5856 = vadd.f32 %v5826, %v5851
    %v5857 = vadd.f32 %v5827, %v5852
    %v5858 = vadd.f32 %v5828, %v5853
    %5859 = vset.pattern.permute.xlu0 5
    %5860 = vperm.xlu0 %5859, %v4371
    %v5861 = vpop.permute.xlu0 %5860
    %5863 = vset.pattern.permute.xlu0 5
    %5864 = vperm.xlu0 %5863, %v4372
    %v5865 = vpop.permute.xlu0 %5864
    %5867 = vset.pattern.permute.xlu0 5
    %5868 = vperm.xlu0 %5867, %v4373
    %v5869 = vpop.permute.xlu0 %5868
    %5871 = vset.pattern.permute.xlu0 5
    %5872 = vperm.xlu0 %5871, %v4374
    %v5873 = vpop.permute.xlu0 %5872
    %5875 = vset.pattern.permute.xlu0 5
    %5876 = vperm.xlu0 %5875, %v4375
    %v5877 = vpop.permute.xlu0 %5876
    %v5879 = vmul.f32 %v5861, %v5622
    %v5880 = vmul.f32 %v5865, %v5626
    %v5881 = vmul.f32 %v5869, %v5632
    %v5882 = vmul.f32 %v5873, %v5636
    %v5883 = vmul.f32 %v5877, %v5642
    %v5884 = vadd.f32 %v5854, %v5879
    %v5885 = vadd.f32 %v5855, %v5880
    %v5886 = vadd.f32 %v5856, %v5881
    %v5887 = vadd.f32 %v5857, %v5882
    %v5888 = vadd.f32 %v5858, %v5883
    %5889 = vset.pattern.permute.xlu0 6
    %5890 = vperm.xlu0 %5889, %v4371
    %v5891 = vpop.permute.xlu0 %5890
    %5893 = vset.pattern.permute.xlu0 6
    %5894 = vperm.xlu0 %5893, %v4372
    %v5895 = vpop.permute.xlu0 %5894
    %5897 = vset.pattern.permute.xlu0 6
    %5898 = vperm.xlu0 %5897, %v4373
    %v5899 = vpop.permute.xlu0 %5898
    %5901 = vset.pattern.permute.xlu0 6
    %5902 = vperm.xlu0 %5901, %v4374
    %v5903 = vpop.permute.xlu0 %5902
    %5905 = vset.pattern.permute.xlu0 6
    %5906 = vperm.xlu0 %5905, %v4375
    %v5907 = vpop.permute.xlu0 %5906
    %v5909 = vmul.f32 %v5891, %v5624
    %v5910 = vmul.f32 %v5895, %v5628
    %v5911 = vmul.f32 %v5899, %v5634
    %v5912 = vmul.f32 %v5903, %v5638
    %v5913 = vmul.f32 %v5907, %v5644
    %v5914 = vadd.f32 %v5884, %v5909
    %v5915 = vadd.f32 %v5885, %v5910
    %v5916 = vadd.f32 %v5886, %v5911
    %v5917 = vadd.f32 %v5887, %v5912
    %v5918 = vadd.f32 %v5888, %v5913
    %5919 = vset.pattern.permute.xlu0 7
    %5920 = vperm.xlu0 %5919, %v4371
    %v5921 = vpop.permute.xlu0 %5920
    %5923 = vset.pattern.permute.xlu0 7
    %5924 = vperm.xlu0 %5923, %v4372
    %v5925 = vpop.permute.xlu0 %5924
    %5927 = vset.pattern.permute.xlu0 7
    %5928 = vperm.xlu0 %5927, %v4373
    %v5929 = vpop.permute.xlu0 %5928
    %5931 = vset.pattern.permute.xlu0 7
    %5932 = vperm.xlu0 %5931, %v4374
    %v5933 = vpop.permute.xlu0 %5932
    %5935 = vset.pattern.permute.xlu0 7
    %5936 = vperm.xlu0 %5935, %v4375
    %v5937 = vpop.permute.xlu0 %5936
    %v5939 = vmul.f32 %v5921, %v5683
    %v5940 = vmul.f32 %v5925, %v5687
    %v5941 = vmul.f32 %v5929, %v5693
    %v5942 = vmul.f32 %v5933, %v5697
    %v5943 = vmul.f32 %v5937, %v5703
    %v5944 = vadd.f32 %v5914, %v5939
    %v5945 = vadd.f32 %v5915, %v5940
    %v5946 = vadd.f32 %v5916, %v5941
    %v5947 = vadd.f32 %v5917, %v5942
    %v5948 = vadd.f32 %v5918, %v5943
    %5949 = vset.pattern.permute.xlu0 8
    %5950 = vperm.xlu0 %5949, %v4371
    %v5951 = vpop.permute.xlu0 %5950
    %5953 = vset.pattern.permute.xlu0 8
    %5954 = vperm.xlu0 %5953, %v4372
    %v5955 = vpop.permute.xlu0 %5954
    %5957 = vset.pattern.permute.xlu0 8
    %5958 = vperm.xlu0 %5957, %v4373
    %v5959 = vpop.permute.xlu0 %5958
    %5961 = vset.pattern.permute.xlu0 8
    %5962 = vperm.xlu0 %5961, %v4374
    %v5963 = vpop.permute.xlu0 %5962
    %5965 = vset.pattern.permute.xlu0 8
    %5966 = vperm.xlu0 %5965, %v4375
    %v5967 = vpop.permute.xlu0 %5966
    %v5969 = vmul.f32 %v5951, %v5685
    %v5970 = vmul.f32 %v5955, %v5689
    %v5971 = vmul.f32 %v5959, %v5695
    %v5972 = vmul.f32 %v5963, %v5699
    %v5973 = vmul.f32 %v5967, %v5705
    %v5974 = vadd.f32 %v5944, %v5969
    %v5975 = vadd.f32 %v5945, %v5970
    %v5976 = vadd.f32 %v5946, %v5971
    %v5977 = vadd.f32 %v5947, %v5972
    %v5978 = vadd.f32 %v5948, %v5973
    %v5979 = vpack.c.bf16 %v5975, %v5974
    %v5980 = vpack.c.bf16 %v5977, %v5976
    %v5981 = vpack.c.bf16 %v5978, %v5978
    %v5987 = vunpack.c.l.b16 %v4376
    %v5988 = vunpack.c.l.b16 %v4377
    %v5989 = vunpack.c.l.b16 %v4378
    %v5990 = vunpack.c.l.b16 %v4379
    %v5991 = vunpack.c.l.b16 %v4380
    %v5992 = vpack.c.b16 %v5988, %v5987
    %v5993 = vpack.c.b16 %v5990, %v5989
    %v5994 = vpack.c.b16 %v5991, %v5991
    %v5996 = vsel %vm5318, %v5992, 0
    %v5999 = vsel %vm5318, %v5993, 0
    %v6002 = vsel %vm5318, %v5994, 0
    %v6005 = vsel %vm2218, %v5981, 0
    %6007 = vmatprep.subr.bf16.mxu0 0
    %6008 = vmatpush1.bf16.msra.mxu0 %v5979
    %6009 = vmatprep.subr.bf16.mxu0 0
    %6010 = vmatpush1.bf16.msra.mxu0 %v5980
    %6011 = vmatprep.subr.bf16.mxu0 0
    %6012 = vmatpush1.bf16.msra.mxu0 %v6005
    %6013 = vmatprep.subr.bf16.mxu0 0
    %6014 = vmatpush1.bf16.msra.mxu0 0
    %6015 = vmatprep.subr.bf16.mxu0 0
    %6016 = vmatpush1.bf16.msra.mxu0 0
    %6017 = vmatprep.subr.bf16.mxu0 0
    %6018 = vmatpush1.bf16.msra.mxu0 0
    %6019 = vmatprep.subr.bf16.mxu0 0
    %6020 = vmatpush1.bf16.msra.mxu0 0
    %6021 = vmatprep.subr.bf16.mxu0 0
    %6022 = vmatpush1.bf16.msra.mxu0 0
    %6023 = vmatprep.subr.bf16.mxu0 0
    %6024 = vmatpush1.bf16.msra.mxu0 0
    %6025 = vmatprep.subr.bf16.mxu0 0
    %6026 = vmatpush1.bf16.msra.mxu0 0
    %6027 = vmatprep.subr.bf16.mxu0 0
    %6028 = vmatpush1.bf16.msra.mxu0 0
    %6029 = vmatprep.subr.bf16.mxu0 0
    %6030 = vmatpush1.bf16.msra.mxu0 0
    %6031 = vmatprep.subr.bf16.mxu0 0
    %6032 = vmatpush1.bf16.msra.mxu0 0
    %6033 = vmatprep.subr.bf16.mxu0 0
    %6034 = vmatpush1.bf16.msra.mxu0 0
    %6035 = vmatprep.subr.bf16.mxu0 0
    %6036 = vmatpush1.bf16.msra.mxu0 0
    %6037 = vmatprep.subr.bf16.mxu0 0
    %6038 = vmatpush1.bf16.msra.mxu0 0
    %6039 = vmatprep.mubr.bf16.mxu0 0
    %6040 = vmatmul.mubr.bf16.gmra.mrb[0].mxu0 %v5996
    %v6041 = vpop.f32.mrb[0].mxu0
    %v6042 = vadd.f32 0.0, %v6041
    %v6043 = vpop.f32.mrb[0].mxu0
    %v6044 = vpop.f32.mrb[0].mxu0
    %v6045 = vadd.f32 0.0, %v6044
    %v6046 = vpop.f32.mrb[0].mxu0
    %6047 = vmatprep.mubr.bf16.mxu0 0
    %6048 = vmatmul.mubr.bf16.gmra.mrb[0].mxu0 %v5999
    %v6049 = vpop.f32.mrb[0].mxu0
    %v6050 = vadd.f32 0.0, %v6049
    %v6051 = vpop.f32.mrb[0].mxu0
    %v6052 = vpop.f32.mrb[0].mxu0
    %v6053 = vadd.f32 0.0, %v6052
    %v6054 = vpop.f32.mrb[0].mxu0
    %6055 = vmatprep.mubr.bf16.mxu0 0
    %6056 = vmatmul.mubr.bf16.gmra.mrb[0].mxu0 %v6002
    %v6057 = vpop.f32.mrb[0].mxu0
    %v6058 = vadd.f32 0.0, %v6057
    %v6059 = vpop.f32.mrb[0].mxu0
    %v6060 = vpop.f32.mrb[0].mxu0
    %v6061 = vpop.f32.mrb[0].mxu0
    %6062 = vdwg.mxu0
    %6063 = vadd.xlane.f32.xlu0 %v6042
    %v6064 = vpop.xlane.xlu0 %6063
    %6065 = vadd.xlane.f32.xlu0 %v6045
    %v6066 = vpop.xlane.xlu0 %6065
    %6067 = vadd.xlane.f32.xlu0 %v6050
    %v6068 = vpop.xlane.xlu0 %6067
    %6069 = vadd.xlane.f32.xlu0 %v6053
    %v6070 = vpop.xlane.xlu0 %6069
    %6071 = vadd.xlane.f32.xlu0 %v6058
    %v6072 = vpop.xlane.xlu0 %6071
    %v6073 = vmul.f32 %v6064, %v215
    %v6074 = vmul.f32 %v6066, %v215
    %v6075 = vmul.f32 %v6068, %v215
    %v6076 = vmul.f32 %v6070, %v215
    %v6077 = vmul.f32 %v6072, %v215
    %v6078 = vmul.f32 %v6042, %v6042
    %v6079 = vmul.f32 %v6045, %v6045
    %v6080 = vmul.f32 %v6050, %v6050
    %v6081 = vmul.f32 %v6053, %v6053
    %v6082 = vmul.f32 %v6058, %v6058
    %6083 = vadd.xlane.f32.xlu0 %v6078
    %v6084 = vpop.xlane.xlu0 %6083
    %6085 = vadd.xlane.f32.xlu0 %v6079
    %v6086 = vpop.xlane.xlu0 %6085
    %6087 = vadd.xlane.f32.xlu0 %v6080
    %v6088 = vpop.xlane.xlu0 %6087
    %6089 = vadd.xlane.f32.xlu0 %v6081
    %v6090 = vpop.xlane.xlu0 %6089
    %6091 = vadd.xlane.f32.xlu0 %v6082
    %v6092 = vpop.xlane.xlu0 %6091
    %v6093 = vmul.f32 %v6084, %v215
    %v6094 = vmul.f32 %v6086, %v215
    %v6095 = vmul.f32 %v6088, %v215
    %v6096 = vmul.f32 %v6090, %v215
    %v6097 = vmul.f32 %v6092, %v215
    %v6098 = vmul.f32 %v6073, %v6073
    %v6099 = vmul.f32 %v6074, %v6074
    %v6100 = vmul.f32 %v6075, %v6075
    %v6101 = vmul.f32 %v6076, %v6076
    %v6102 = vmul.f32 %v6077, %v6077
    %v6103 = vsub.f32 %v6093, %v6098
    %v6104 = vsub.f32 %v6094, %v6099
    %v6105 = vsub.f32 %v6095, %v6100
    %v6106 = vsub.f32 %v6096, %v6101
    %v6107 = vsub.f32 %v6097, %v6102
    %v6108 = vmax.f32 %v6103, 0.0
    %v6109 = vmax.f32 %v6104, 0.0
    %v6110 = vmax.f32 %v6105, 0.0
    %v6111 = vmax.f32 %v6106, 0.0
    %v6112 = vmax.f32 %v6107, 0.0
    %v6113 = vsub.f32 %v6042, %v6073
    %v6114 = vsub.f32 %v6045, %v6074
    %v6115 = vsub.f32 %v6050, %v6075
    %v6116 = vsub.f32 %v6053, %v6076
    %v6117 = vsub.f32 %v6058, %v6077
    %v6118 = vadd.f32 %v6108, 1e-05
    %v6119 = vadd.f32 %v6109, 1e-05
    %v6120 = vadd.f32 %v6110, 1e-05
    %v6121 = vadd.f32 %v6111, 1e-05
    %v6122 = vadd.f32 %v6112, 1e-05
    %v6123 = vrsqrt.pop %v6118
    %v6124 = vrsqrt.pop %v6119
    %v6125 = vrsqrt.pop %v6120
    %v6126 = vrsqrt.pop %v6121
    %v6127 = vrsqrt.pop %v6122
    %v6128 = vmul.f32 %v6113, %v6123
    %v6129 = vmul.f32 %v6114, %v6124
    %v6130 = vmul.f32 %v6115, %v6125
    %v6131 = vmul.f32 %v6116, %v6126
    %v6132 = vmul.f32 %v6117, %v6127
    %v6133 = vstv %s4381
    %v6134 = vmul.f32 %v6133, %v4391
    %v6135 = vstv %s4386
    %v6136 = vmul.f32 %v6135, %v6128
    %v6137 = vadd.f32 %v6134, %v6136
    %v6138 = vstv %s4382
    %v6139 = vmul.f32 %v6138, %v4392
    %v6140 = vadd.f32 %v6137, %v6139
    %v6141 = vstv %s4387
    %v6142 = vmul.f32 %v6141, %v6129
    %v6143 = vadd.f32 %v6140, %v6142
    %v6144 = vstv %s4383
    %v6145 = vmul.f32 %v6144, %v4393
    %v6146 = vadd.f32 %v6143, %v6145
    %v6147 = vstv %s4388
    %v6148 = vmul.f32 %v6147, %v6130
    %v6149 = vadd.f32 %v6146, %v6148
    %v6150 = vstv %s4384
    %v6151 = vmul.f32 %v6150, %v4394
    %v6152 = vadd.f32 %v6149, %v6151
    %v6153 = vstv %s4389
    %v6154 = vmul.f32 %v6153, %v6131
    %v6155 = vadd.f32 %v6152, %v6154
    %v6156 = vstv %s4385
    %v6157 = vmul.f32 %v6156, %v4395
    %v6158 = vadd.f32 %v6155, %v6157
    %v6159 = vstv %s4390
    %v6160 = vmul.f32 %v6159, %v6132
    %v6161 = vadd.f32 %v6158, %v6160
    %6162 = vst [vmem:[#allocation2 + $0x28] sm:$0xff] %v6161
    %v6163 = vld [vmem:[#allocation2 + $0x10] sm:$0xff]
    %v6164 = vld [vmem:[#allocation2 + $0x18] sm:$0xff]
    %v6165 = vld [vmem:[#allocation2 + $0x20] sm:$0xff]
    %v6166 = vld [vmem:[#allocation2 + $0x28] sm:$0xff]
    %6167 = vst [vmem:[%s22] sm:$0xff] %v6163
    %6168 = vst [vmem:[%s22 + $0x8] sm:$0xff] %v6164
    %6169 = vst [vmem:[%s22 + $0x10] sm:$0xff] %v6165
    %6170 = vst [vmem:[%s22 + $0x18] sm:$0xff] %v6166
    // Predicated region
    $region118: #{cell_forward.1} parent=1 // pred_check
      _
    $region119: #{cell_forward.1} parent=1 // pred_check_branch
      %6172 = sbr.rel (0) target = $region121
    $region120: #{cell_forward.1} parent=1 // pred_region
      _
    $region121: #{cell_forward.1} parent=1 // pred_fallthru
      _
    // Predicated region
    $region122: #{cell_forward.1} parent=1 // pred_check
      _
    $region123: #{cell_forward.1} parent=1 // pred_check_branch
      %6174 = sbr.rel (0) target = $region125
    $region124: #{cell_forward.1} parent=1 // pred_region
      _
    $region125: #{cell_forward.1} parent=1 // pred_fallthru
      _
    %6175 = vsyncpa [#allocation4], 1
    %6176 = vsyncpa [#allocation8], 1
    %6177 = vsyncpa [#allocation11], 1
    %6178 = vsyncpa [#allocation14], 1
    %6179 = vsyncpa [#allocation5], 1

</llo_original>
